<compile_context>
chip_gen: v7x
topology: tpu7x:2x2x1
jax: 0.10.0
libtpu: 0.0.40
codegen_flags: <defaults>
</compile_context>

<pallas_src>
import functools

import jax
import jax.numpy as jnp
from jax.experimental import pallas as pl
from jax.experimental.pallas import tpu as pltpu


# ----------------------------------------------------------------------------
# Small helpers used inside the kernels.
# ----------------------------------------------------------------------------
def _swap_major(a):
    """(A, B, C) -> (B, A, C): swap the two major dims, lane axis unchanged."""
    return pltpu.einshape("abc->bac", a)


def _half_step(h_bf, x_bf, w_zr_h, w_q_h, w_x_all, b_all, ch):
    """One separable-ConvGRU half-step on an (L, M, C) tile.

    The 5-tap conv runs along the LEADING axis L (shifted reads are free
    views).  Matmul operands are bf16 (fp32 accumulation), gate math is fp32.

    h_bf:    (L, M, Ch)   bf16
    x_bf:    (L, M, Cx)   bf16
    w_zr_h:  (5*Ch, 2*Ch) bf16  (z|r gates, h-part, taps folded into K)
    w_q_h:   (5*Ch,   Ch) bf16  (q gate, h-part)
    w_x_all: (5*Cx, 3*Ch) bf16  (z|r|q gates, x-part, computed once)
    b_all:   (1, 3*Ch)    f32   (bz|br|bq)
    returns  (L, M, Ch)   f32
    """
    L = h_bf.shape[0]
    dn = (((2,), (0,)), ((), ()))            # contract the lane (channel) axis

    def pad2(a):                             # zero-pad the conv (leading) axis
        z = jnp.zeros((2,) + a.shape[1:], a.dtype)
        return jnp.concatenate([z, a, z], axis=0)

    def im2col(a):                           # (L, M, C) -> (L, M, 5*C)
        ap = pad2(a)
        return jnp.concatenate([ap[k:k + L] for k in range(5)], axis=-1)

    # x-side conv for all three gates at once: K = 5*Cx, Cout = 3*Ch.
    conv_x = jax.lax.dot_general(im2col(x_bf), w_x_all, dn,
                                 preferred_element_type=jnp.float32)
    # h-side conv for z|r: K = 5*Ch, Cout = 2*Ch.
    zr_h = jax.lax.dot_general(im2col(h_bf), w_zr_h, dn,
                               preferred_element_type=jnp.float32)

    zr = jax.nn.sigmoid(zr_h + conv_x[..., :2 * ch] + b_all[:, :2 * ch])
    z = zr[..., :ch]
    r = zr[..., ch:]

    # q gate: h-side conv on (r*h) in bf16; x-side contribution reused.
    q_h = jax.lax.dot_general(im2col(r.astype(jnp.bfloat16) * h_bf), w_q_h, dn,
                              preferred_element_type=jnp.float32)
    q = jnp.tanh(q_h + conv_x[..., 2 * ch:] + b_all[:, 2 * ch:])

    h32 = h_bf.astype(jnp.float32)
    return h32 + z * (q - h32)               # (1-z)*h + z*q, fewer VPU ops


# ----------------------------------------------------------------------------
# Pallas kernels.
# ----------------------------------------------------------------------------
def _fused_kernel(h_ref, x_ref,
                  wzr1_ref, wq1_ref, wx1_ref, b1_ref,
                  wzr2_ref, wq2_ref, wx2_ref, b2_ref,
                  o_ref, *, hidden_dim):
    """Both GRU half-steps on one full (H, W, C) slab; h stays in VMEM."""
    ch = hidden_dim

    # ---- pass 1: (1,5) conv over W.  Swap the major dims once so W is the
    # leading axis (free shifted reads instead of misaligned sublane slices).
    h_t = _swap_major(h_ref[...])            # (W, H, Ch) bf16
    x_t = _swap_major(x_ref[...])            # (W, H, Cx) bf16
    h1_t = _half_step(h_t, x_t, wzr1_ref[...], wq1_ref[...], wx1_ref[...],
                      b1_ref[...], ch)
    h1 = _swap_major(h1_t.astype(jnp.bfloat16))          # (H, W, Ch) bf16

    # ---- pass 2: (5,1) conv over H (already the leading axis); no HBM
    # round trip of h between the two half-steps.
    h2 = _half_step(h1, x_ref[...], wzr2_ref[...], wq2_ref[...], wx2_ref[...],
                    b2_ref[...], ch)
    o_ref[...] = h2.astype(o_ref.dtype)


def _halfstep_kernel(h_ref, x_ref, wzr_ref, wq_ref, wx_ref, b_ref, o_ref, *,
                     hidden_dim, transpose_hw):
    """Single GRU half-step (tiled fallback path for large spatial extents)."""
    h = h_ref[...]
    x = x_ref[...]
    if transpose_hw:                         # make the conv axis the leading dim
        h = _swap_major(h)
        x = _swap_major(x)
    hn = _half_step(h, x, wzr_ref[...], wq_ref[...], wx_ref[...], b_ref[...],
                    hidden_dim)
    hn = hn.astype(o_ref.dtype)
    if transpose_hw:
        hn = _swap_major(hn)
    o_ref[...] = hn


# ----------------------------------------------------------------------------
# VMEM-aware sizing (budget counted once: weights + double-buffered IO).
# ----------------------------------------------------------------------------
def _vmem_limit_bytes():
    try:
        cap = int(pltpu.get_tpu_info().vmem_capacity_bytes)
    except Exception:
        cap = 64 * 1024 * 1024               # conservative (v7x per-TC VMEM)
    return int(min(cap * 3 // 4, 100 * 1024 * 1024))


def _weight_bytes(ch, cx, passes):
    per_pass = 30 * ch * (ch + cx) + 12 * ch         # bf16 weights + f32 bias
    return 2 * passes * per_pass                     # double-buffered blocks


def _halfstep_tile_bytes(px, ch, cx):
    """Generous VMEM estimate for one half-step on a tile of `px` pixels."""
    bf, f4 = 2, 4
    io = 2 * px * (2 * ch + cx) * bf          # double-buffered h/x in + h out
    tr = px * (2 * ch + cx) * bf + px * ch * f4   # in-kernel swapped copies
    im2 = px * 5 * (ch + cx) * bf             # im2col buffers (peak)
    f32 = px * 8 * ch * f4                    # conv_x, zr, q, h32, blend temps
    return io + tr + im2 + f32


def _fused_tile_bytes(px, ch, cx):
    # both half-steps run back-to-back on one (H, W) slab per batch element
    return _halfstep_tile_bytes(px, ch, cx) + px * ch * (2 + 4)


def _pick_tile(total, bytes_fn, budget, *, need_mult8, prefer_split):
    """Largest divisor of `total` (mult. of 8 if required, or full) in budget."""
    cands = [t for t in range(total, 0, -1)
             if total % t == 0 and (t == total or not need_mult8 or t % 8 == 0)]
    if prefer_split and len(cands) > 1:
        cands = cands[1:]                     # guarantee >=2 grid steps (v7x TCs)
    for t in cands:
        if bytes_fn(t) <= budget:
            return t
    return cands[-1]                          # smallest valid divisor; Mosaic will
                                              # report VMEM OOM if it still overflows


# ----------------------------------------------------------------------------
# pallas_call wrappers.
# ----------------------------------------------------------------------------
def _fused_call(h, x, p1, p2, vmem_limit):
    N, H, W, Ch = h.shape
    Cx = x.shape[-1]
    kernel = functools.partial(_fused_kernel, hidden_dim=Ch)

    data = lambda c: pl.BlockSpec((None, H, W, c), lambda n: (n, 0, 0, 0))
    wspec = lambda a: pl.BlockSpec(a.shape, lambda n, _nd=a.ndim: (0,) * _nd)

    return pl.pallas_call(
        kernel,
        out_shape=jax.ShapeDtypeStruct((N, H, W, Ch), jnp.bfloat16),
        grid_spec=pltpu.PrefetchScalarGridSpec(
            num_scalar_prefetch=0,
            grid=(N,),                         # N>=2 keeps both v7x TCs busy
            in_specs=[data(Ch), data(Cx)] + [wspec(a) for a in (*p1, *p2)],
            out_specs=data(Ch)),
        compiler_params=pltpu.CompilerParams(
            dimension_semantics=("parallel",),
            vmem_limit_bytes=vmem_limit),
    )(h, x, *p1, *p2)


def _halfstep_call(h, x, p, *, conv_over, vmem_limit):
    N, H, W, Ch = h.shape
    Cx = x.shape[-1]
    wzr, wq, wx, b = p
    budget = max(vmem_limit - _weight_bytes(Ch, Cx, 1) - (2 << 20), 1 << 20)

    if conv_over == "w":                      # horizontal (1,5) conv; tile H rows
        tile = _pick_tile(H, lambda t: _halfstep_tile_bytes(t * W, Ch, Cx),
                          budget, need_mult8=False, prefer_split=(N == 1))
        grid = (N, H // tile)
        blk = lambda c: (None, tile, W, c)
        idx = lambda n, i: (n, i, 0, 0)
        transpose_hw = True                   # conv axis made leading in-kernel
    else:                                     # vertical (5,1) conv; tile W cols
        tile = _pick_tile(W, lambda t: _halfstep_tile_bytes(H * t, Ch, Cx),
                          budget, need_mult8=True, prefer_split=(N == 1))
        grid = (N, W // tile)
        blk = lambda c: (None, H, tile, c)
        idx = lambda n, j: (n, 0, j, 0)
        transpose_hw = False                  # conv axis already leading

    kernel = functools.partial(_halfstep_kernel, hidden_dim=Ch,
                               transpose_hw=transpose_hw)
    wspec = lambda a: pl.BlockSpec(a.shape, lambda n, i, _nd=a.ndim: (0,) * _nd)

    return pl.pallas_call(
        kernel,
        out_shape=jax.ShapeDtypeStruct((N, H, W, Ch), jnp.bfloat16),
        grid_spec=pltpu.PrefetchScalarGridSpec(
            num_scalar_prefetch=0,
            grid=grid,
            in_specs=[pl.BlockSpec(blk(Ch), idx), pl.BlockSpec(blk(Cx), idx),
                      wspec(wzr), wspec(wq), wspec(wx), wspec(b)],
            out_specs=pl.BlockSpec(blk(Ch), idx)),
        compiler_params=pltpu.CompilerParams(
            dimension_semantics=("parallel", "parallel"),
            vmem_limit_bytes=vmem_limit),
    )(h, x, wzr, wq, wx, b)


# ----------------------------------------------------------------------------
# Parameter packing: fuse gate weights, fold taps into the contraction dim.
# ----------------------------------------------------------------------------
def _prep_pass(wz, wr, wq, bz, br, bq, ch):
    """(5, Cin, Ch) weights -> K-folded, gate-fused bf16 matrices."""
    cx = wz.shape[1] - ch
    w_zr = jnp.concatenate([wz, wr], axis=-1)                    # (5, Cin, 2Ch)
    w_zr_h = w_zr[:, :ch, :].reshape(5 * ch, 2 * ch)             # z|r, h-part
    w_q_h = wq[:, :ch, :].reshape(5 * ch, ch)                    # q,   h-part
    w_x_all = jnp.concatenate([w_zr[:, ch:, :], wq[:, ch:, :]],
                              axis=-1).reshape(5 * cx, 3 * ch)   # z|r|q, x-part
    b_all = jnp.concatenate([bz, br, bq], axis=-1)               # (1, 3Ch) f32
    return (w_zr_h.astype(jnp.bfloat16), w_q_h.astype(jnp.bfloat16),
            w_x_all.astype(jnp.bfloat16), b_all.astype(jnp.float32))


# ----------------------------------------------------------------------------
# Full SepConvGRU forward (NCHW in / NCHW out), parameters as a dict.
# ----------------------------------------------------------------------------
@jax.jit
def sep_conv_gru_forward(params, h_nchw, x_nchw):
    ch = params["wz1"].shape[-1]
    N, _, H, W = h_nchw.shape
    cx = x_nchw.shape[1]

    h = jnp.transpose(h_nchw, (0, 2, 3, 1)).astype(jnp.bfloat16)   # NHWC bf16
    x = jnp.transpose(x_nchw, (0, 2, 3, 1)).astype(jnp.bfloat16)

    p1 = _prep_pass(params["wz1"], params["wr1"], params["wq1"],
                    params["bz1"], params["br1"], params["bq1"], ch)
    p2 = _prep_pass(params["wz2"], params["wr2"], params["wq2"],
                    params["bz2"], params["br2"], params["bq2"], ch)

    vmem_limit = _vmem_limit_bytes()
    budget = vmem_limit - _weight_bytes(ch, cx, 2) - (4 << 20)

    if _fused_tile_bytes(H * W, ch, cx) <= budget:
        # Fast path: one kernel, h never round-trips to HBM between half-steps.
        h_out = _fused_call(h, x, p1, p2, vmem_limit)
    else:
        # Large spatial extents: two tiled half-step kernels (bf16 h in HBM).
        # TODO(synk): a halo-exchanging fused tiling would also avoid this
        # intermediate HBM round trip for very large H*W.
        h_out = _halfstep_call(h, x, p1, conv_over="w", vmem_limit=vmem_limit)
        h_out = _halfstep_call(h_out, x, p2, conv_over="h",
                               vmem_limit=vmem_limit)

    return jnp.transpose(h_out, (0, 3, 1, 2)).astype(jnp.float32)   # NCHW fp32


# ----------------------------------------------------------------------------
# Parameter construction (deterministic, PyTorch-like uniform init).
# ----------------------------------------------------------------------------
def make_params(key, hidden_dim, input_dim):
    cin = hidden_dim + input_dim
    bound = 1.0 / jnp.sqrt(cin * 5.0)        # fan_in = Cin * 1 * 5
    params = {}
    names = ["z1", "r1", "q1", "z2", "r2", "q2"]
    keys = jax.random.split(key, 2 * len(names))
    for i, name in enumerate(names):
        # weights stored as (5, Cin, Cout) == (tap, in channels, out channels)
        w = jax.random.uniform(keys[2 * i], (5, cin, hidden_dim),
                               jnp.float32, -bound, bound)
        b = jax.random.uniform(keys[2 * i + 1], (1, hidden_dim),
                               jnp.float32, -bound, bound)
        params["w" + name] = w
        params["b" + name] = b
    return params


# ----------------------------------------------------------------------------
# Pure-JAX (lax.conv, fp32) reference following PyTorch NCHW semantics exactly.
# ----------------------------------------------------------------------------
def _to_oihw(w_kio, horizontal):
    # (5, Cin, Cout) -> (Cout, Cin, 1, 5) or (Cout, Cin, 5, 1)
    w = jnp.transpose(w_kio, (2, 1, 0))                 # (Cout, Cin, 5)
    return w[:, :, None, :] if horizontal else w[:, :, :, None]


def _conv_ref(x, w_oihw, b, pad_hw):
    out = jax.lax.conv_general_dilated(
        x, w_oihw, window_strides=(1, 1), padding=pad_hw,
        dimension_numbers=("NCHW", "OIHW", "NCHW"))
    return out + b.reshape(1, -1, 1, 1)


def sep_conv_gru_reference(params, h, x):
    def step(h, x, wz, wr, wq, bz, br, bq, horizontal):
        pad = ((0, 0), (2, 2)) if horizontal else ((2, 2), (0, 0))
        wz, wr, wq = (_to_oihw(w, horizontal) for w in (wz, wr, wq))
        hx = jnp.concatenate([h, x], axis=1)
        z = jax.nn.sigmoid(_conv_ref(hx, wz, bz, pad))
        r = jax.nn.sigmoid(_conv_ref(hx, wr, br, pad))
        q = jnp.tanh(_conv_ref(jnp.concatenate([r * h, x], axis=1), wq, bq, pad))
        return (1.0 - z) * h + z * q

    h = step(h, x, params["wz1"], params["wr1"], params["wq1"],
             params["bz1"], params["br1"], params["bq1"], True)
    h = step(h, x, params["wz2"], params["wr2"], params["wq2"],
             params["bz2"], params["br2"], params["bq2"], False)
    return h


# ----------------------------------------------------------------------------
if __name__ == "__main__":
    hidden_dim, input_dim = 128, 64           # lane-dense channel axes
    N, H, W = 2, 16, 16

    key = jax.random.PRNGKey(0)
    kp, kh, kx = jax.random.split(key, 3)

    params = make_params(kp, hidden_dim, input_dim)
    h0 = jax.random.normal(kh, (N, hidden_dim, H, W), jnp.float32)
    x0 = jax.random.normal(kx, (N, input_dim, H, W), jnp.float32)

    out = jax.block_until_ready(sep_conv_gru_forward(params, h0, x0))
    ref = jax.block_until_ready(sep_conv_gru_reference(params, h0, x0))

    assert out.shape == (N, hidden_dim, H, W)
    # bf16 MXU operands / bf16 h carry (fp32 accumulation + gate math) vs. the
    # fp32 reference -> small drift.
    max_err = float(jnp.max(jnp.abs(out - ref)))
    assert jnp.allclose(out, ref, atol=5e-2, rtol=5e-2), max_err

    print("KERNEL_OK")
</pallas_src>

<mosaic_0001>
module attributes {stable_mosaic.version = 11 : i64} {
  func.func @_fused_kernel(%arg0: i32, %arg1: memref<1x16x16x128xbf16, #tpu.memory_space<vmem>>, %arg2: memref<1x16x16x64xbf16, #tpu.memory_space<vmem>>, %arg3: memref<640x256xbf16, #tpu.memory_space<vmem>>, %arg4: memref<640x128xbf16, #tpu.memory_space<vmem>>, %arg5: memref<320x384xbf16, #tpu.memory_space<vmem>>, %arg6: memref<1x384xf32, #tpu.memory_space<vmem>>, %arg7: memref<640x256xbf16, #tpu.memory_space<vmem>>, %arg8: memref<640x128xbf16, #tpu.memory_space<vmem>>, %arg9: memref<320x384xbf16, #tpu.memory_space<vmem>>, %arg10: memref<1x384xf32, #tpu.memory_space<vmem>>, %arg11: memref<1x16x16x128xbf16, #tpu.memory_space<vmem>>) attributes {dimension_semantics = [#tpu.dimension_semantics<parallel>], iteration_bounds = array<i64: 2>, scalar_prefetch = 0 : i64, scratch_operands = 0 : i64, tpu.core_type = #tpu.core_type<tc>, window_params = [{transform_indices = @transform_0, window_bounds = array<i64: 1, 16, 16, 128>}, {transform_indices = @transform_1, window_bounds = array<i64: 1, 16, 16, 64>}, {pipeline_mode = #tpu.pipeline_mode<synchronous>, transform_indices = @transform_2, window_bounds = array<i64: 640, 256>}, {pipeline_mode = #tpu.pipeline_mode<synchronous>, transform_indices = @transform_3, window_bounds = array<i64: 640, 128>}, {pipeline_mode = #tpu.pipeline_mode<synchronous>, transform_indices = @transform_4, window_bounds = array<i64: 320, 384>}, {pipeline_mode = #tpu.pipeline_mode<synchronous>, transform_indices = @transform_5, window_bounds = array<i64: 1, 384>}, {pipeline_mode = #tpu.pipeline_mode<synchronous>, transform_indices = @transform_6, window_bounds = array<i64: 640, 256>}, {pipeline_mode = #tpu.pipeline_mode<synchronous>, transform_indices = @transform_7, window_bounds = array<i64: 640, 128>}, {pipeline_mode = #tpu.pipeline_mode<synchronous>, transform_indices = @transform_8, window_bounds = array<i64: 320, 384>}, {pipeline_mode = #tpu.pipeline_mode<synchronous>, transform_indices = @transform_9, window_bounds = array<i64: 1, 384>}, {transform_indices = @transform_10, window_bounds = array<i64: 1, 16, 16, 128>}]} {
    %c0 = arith.constant 0 : index
    %c0_0 = arith.constant 0 : index
    %c0_1 = arith.constant 0 : index
    %c0_2 = arith.constant 0 : index
    %0 = vector.load %arg1[%c0, %c0_0, %c0_1, %c0_2] : memref<1x16x16x128xbf16, #tpu.memory_space<vmem>>, vector<1x16x16x128xbf16>
    %1 = vector.shape_cast %0 : vector<1x16x16x128xbf16> to vector<16x16x128xbf16>
    %2 = tpu.transpose %1, [1, 0, 2] : vector<16x16x128xbf16> -> vector<16x16x128xbf16>
    %c0_3 = arith.constant 0 : index
    %c0_4 = arith.constant 0 : index
    %c0_5 = arith.constant 0 : index
    %c0_6 = arith.constant 0 : index
    %3 = vector.load %arg2[%c0_3, %c0_4, %c0_5, %c0_6] : memref<1x16x16x64xbf16, #tpu.memory_space<vmem>>, vector<1x16x16x64xbf16>
    %4 = vector.shape_cast %3 : vector<1x16x16x64xbf16> to vector<16x16x64xbf16>
    %5 = tpu.transpose %4, [1, 0, 2] : vector<16x16x64xbf16> -> vector<16x16x64xbf16>
    %c0_7 = arith.constant 0 : index
    %c0_8 = arith.constant 0 : index
    %6 = vector.load %arg3[%c0_7, %c0_8] : memref<640x256xbf16, #tpu.memory_space<vmem>>, vector<640x256xbf16>
    %c0_9 = arith.constant 0 : index
    %c0_10 = arith.constant 0 : index
    %7 = vector.load %arg4[%c0_9, %c0_10] : memref<640x128xbf16, #tpu.memory_space<vmem>>, vector<640x128xbf16>
    %c0_11 = arith.constant 0 : index
    %c0_12 = arith.constant 0 : index
    %8 = vector.load %arg5[%c0_11, %c0_12] : memref<320x384xbf16, #tpu.memory_space<vmem>>, vector<320x384xbf16>
    %c0_13 = arith.constant 0 : index
    %c0_14 = arith.constant 0 : index
    %9 = vector.load %arg6[%c0_13, %c0_14] : memref<1x384xf32, #tpu.memory_space<vmem>>, vector<1x384xf32>
    %cst = arith.constant 0.000000e+00 : bf16
    %10 = vector.broadcast %cst : bf16 to vector<2x16x64xbf16>
    %11 = tpu.concatenate %10, %5, %10 in 0 : vector<2x16x64xbf16>, vector<16x16x64xbf16>, vector<2x16x64xbf16> -> vector<20x16x64xbf16>
    %12 = vector.extract_strided_slice %11 {offsets = [0, 0, 0], sizes = [16, 16, 64], strides = [1, 1, 1]} : vector<20x16x64xbf16> to vector<16x16x64xbf16>
    %13 = vector.extract_strided_slice %11 {offsets = [1, 0, 0], sizes = [16, 16, 64], strides = [1, 1, 1]} : vector<20x16x64xbf16> to vector<16x16x64xbf16>
    %14 = vector.extract_strided_slice %11 {offsets = [2, 0, 0], sizes = [16, 16, 64], strides = [1, 1, 1]} : vector<20x16x64xbf16> to vector<16x16x64xbf16>
    %15 = vector.extract_strided_slice %11 {offsets = [3, 0, 0], sizes = [16, 16, 64], strides = [1, 1, 1]} : vector<20x16x64xbf16> to vector<16x16x64xbf16>
    %16 = vector.extract_strided_slice %11 {offsets = [4, 0, 0], sizes = [16, 16, 64], strides = [1, 1, 1]} : vector<20x16x64xbf16> to vector<16x16x64xbf16>
    %17 = tpu.concatenate %12, %13, %14, %15, %16 in 2 : vector<16x16x64xbf16>, vector<16x16x64xbf16>, vector<16x16x64xbf16>, vector<16x16x64xbf16>, vector<16x16x64xbf16> -> vector<16x16x320xbf16>
    %cst_15 = arith.constant dense<0.000000e+00> : vector<16x16x384xf32>
    %18 = tpu.matmul %17, %8, %cst_15 {dimension_numbers = #tpu.dot_dimension_numbers<[2], [0], [0, 1], [1], [0, 0, 0, 1, 1, 1], [], []>} : vector<16x16x320xbf16>, vector<320x384xbf16>, vector<16x16x384xf32> -> vector<16x16x384xf32>
    %cst_16 = arith.constant 0.000000e+00 : bf16
    %19 = vector.broadcast %cst_16 : bf16 to vector<2x16x128xbf16>
    %20 = tpu.concatenate %19, %2, %19 in 0 : vector<2x16x128xbf16>, vector<16x16x128xbf16>, vector<2x16x128xbf16> -> vector<20x16x128xbf16>
    %21 = vector.extract_strided_slice %20 {offsets = [0, 0, 0], sizes = [16, 16, 128], strides = [1, 1, 1]} : vector<20x16x128xbf16> to vector<16x16x128xbf16>
    %22 = vector.extract_strided_slice %20 {offsets = [1, 0, 0], sizes = [16, 16, 128], strides = [1, 1, 1]} : vector<20x16x128xbf16> to vector<16x16x128xbf16>
    %23 = vector.extract_strided_slice %20 {offsets = [2, 0, 0], sizes = [16, 16, 128], strides = [1, 1, 1]} : vector<20x16x128xbf16> to vector<16x16x128xbf16>
    %24 = vector.extract_strided_slice %20 {offsets = [3, 0, 0], sizes = [16, 16, 128], strides = [1, 1, 1]} : vector<20x16x128xbf16> to vector<16x16x128xbf16>
    %25 = vector.extract_strided_slice %20 {offsets = [4, 0, 0], sizes = [16, 16, 128], strides = [1, 1, 1]} : vector<20x16x128xbf16> to vector<16x16x128xbf16>
    %26 = tpu.concatenate %21, %22, %23, %24, %25 in 2 : vector<16x16x128xbf16>, vector<16x16x128xbf16>, vector<16x16x128xbf16>, vector<16x16x128xbf16>, vector<16x16x128xbf16> -> vector<16x16x640xbf16>
    %cst_17 = arith.constant dense<0.000000e+00> : vector<16x16x256xf32>
    %27 = tpu.matmul %26, %6, %cst_17 {dimension_numbers = #tpu.dot_dimension_numbers<[2], [0], [0, 1], [1], [0, 0, 0, 1, 1, 1], [], []>} : vector<16x16x640xbf16>, vector<640x256xbf16>, vector<16x16x256xf32> -> vector<16x16x256xf32>
    %28 = vector.extract_strided_slice %18 {offsets = [0, 0, 0], sizes = [16, 16, 256], strides = [1, 1, 1]} : vector<16x16x384xf32> to vector<16x16x256xf32>
    %29 = arith.addf %27, %28 : vector<16x16x256xf32>
    %30 = vector.extract_strided_slice %9 {offsets = [0, 0], sizes = [1, 256], strides = [1, 1]} : vector<1x384xf32> to vector<1x256xf32>
    %31 = vector.shape_cast %30 : vector<1x256xf32> to vector<1x1x256xf32>
    %32 = vector.broadcast %31 : vector<1x1x256xf32> to vector<16x16x256xf32>
    %33 = arith.addf %29, %32 : vector<16x16x256xf32>
    %34 = arith.negf %33 : vector<16x16x256xf32>
    %35 = math.exp %34 : vector<16x16x256xf32>
    %cst_18 = arith.constant 1.000000e+00 : f32
    %36 = vector.broadcast %cst_18 : f32 to vector<16x16x256xf32>
    %37 = arith.addf %36, %35 : vector<16x16x256xf32>
    %38 = arith.divf %36, %37 : vector<16x16x256xf32>
    %39 = vector.extract_strided_slice %38 {offsets = [0, 0, 0], sizes = [16, 16, 128], strides = [1, 1, 1]} : vector<16x16x256xf32> to vector<16x16x128xf32>
    %40 = vector.extract_strided_slice %38 {offsets = [0, 0, 128], sizes = [16, 16, 128], strides = [1, 1, 1]} : vector<16x16x256xf32> to vector<16x16x128xf32>
    %41 = arith.truncf %40 : vector<16x16x128xf32> to vector<16x16x128xbf16>
    %42 = arith.mulf %41, %2 : vector<16x16x128xbf16>
    %cst_19 = arith.constant 0.000000e+00 : bf16
    %43 = vector.broadcast %cst_19 : bf16 to vector<2x16x128xbf16>
    %44 = tpu.concatenate %43, %42, %43 in 0 : vector<2x16x128xbf16>, vector<16x16x128xbf16>, vector<2x16x128xbf16> -> vector<20x16x128xbf16>
    %45 = vector.extract_strided_slice %44 {offsets = [0, 0, 0], sizes = [16, 16, 128], strides = [1, 1, 1]} : vector<20x16x128xbf16> to vector<16x16x128xbf16>
    %46 = vector.extract_strided_slice %44 {offsets = [1, 0, 0], sizes = [16, 16, 128], strides = [1, 1, 1]} : vector<20x16x128xbf16> to vector<16x16x128xbf16>
    %47 = vector.extract_strided_slice %44 {offsets = [2, 0, 0], sizes = [16, 16, 128], strides = [1, 1, 1]} : vector<20x16x128xbf16> to vector<16x16x128xbf16>
    %48 = vector.extract_strided_slice %44 {offsets = [3, 0, 0], sizes = [16, 16, 128], strides = [1, 1, 1]} : vector<20x16x128xbf16> to vector<16x16x128xbf16>
    %49 = vector.extract_strided_slice %44 {offsets = [4, 0, 0], sizes = [16, 16, 128], strides = [1, 1, 1]} : vector<20x16x128xbf16> to vector<16x16x128xbf16>
    %50 = tpu.concatenate %45, %46, %47, %48, %49 in 2 : vector<16x16x128xbf16>, vector<16x16x128xbf16>, vector<16x16x128xbf16>, vector<16x16x128xbf16>, vector<16x16x128xbf16> -> vector<16x16x640xbf16>
    %cst_20 = arith.constant dense<0.000000e+00> : vector<16x16x128xf32>
    %51 = tpu.matmul %50, %7, %cst_20 {dimension_numbers = #tpu.dot_dimension_numbers<[2], [0], [0, 1], [1], [0, 0, 0, 1, 1, 1], [], []>} : vector<16x16x640xbf16>, vector<640x128xbf16>, vector<16x16x128xf32> -> vector<16x16x128xf32>
    %52 = vector.extract_strided_slice %18 {offsets = [0, 0, 256], sizes = [16, 16, 128], strides = [1, 1, 1]} : vector<16x16x384xf32> to vector<16x16x128xf32>
    %53 = arith.addf %51, %52 : vector<16x16x128xf32>
    %54 = vector.extract_strided_slice %9 {offsets = [0, 256], sizes = [1, 128], strides = [1, 1]} : vector<1x384xf32> to vector<1x128xf32>
    %55 = vector.shape_cast %54 : vector<1x128xf32> to vector<1x1x128xf32>
    %56 = vector.broadcast %55 : vector<1x1x128xf32> to vector<16x16x128xf32>
    %57 = arith.addf %53, %56 : vector<16x16x128xf32>
    %58 = math.tanh %57 : vector<16x16x128xf32>
    %59 = arith.extf %2 : vector<16x16x128xbf16> to vector<16x16x128xf32>
    %60 = arith.subf %58, %59 : vector<16x16x128xf32>
    %61 = arith.mulf %39, %60 : vector<16x16x128xf32>
    %62 = arith.addf %59, %61 : vector<16x16x128xf32>
    %63 = arith.truncf %62 : vector<16x16x128xf32> to vector<16x16x128xbf16>
    %64 = tpu.transpose %63, [1, 0, 2] : vector<16x16x128xbf16> -> vector<16x16x128xbf16>
    %c0_21 = arith.constant 0 : index
    %c0_22 = arith.constant 0 : index
    %c0_23 = arith.constant 0 : index
    %c0_24 = arith.constant 0 : index
    %65 = vector.load %arg2[%c0_21, %c0_22, %c0_23, %c0_24] : memref<1x16x16x64xbf16, #tpu.memory_space<vmem>>, vector<1x16x16x64xbf16>
    %66 = vector.shape_cast %65 : vector<1x16x16x64xbf16> to vector<16x16x64xbf16>
    %c0_25 = arith.constant 0 : index
    %c0_26 = arith.constant 0 : index
    %67 = vector.load %arg7[%c0_25, %c0_26] : memref<640x256xbf16, #tpu.memory_space<vmem>>, vector<640x256xbf16>
    %c0_27 = arith.constant 0 : index
    %c0_28 = arith.constant 0 : index
    %68 = vector.load %arg8[%c0_27, %c0_28] : memref<640x128xbf16, #tpu.memory_space<vmem>>, vector<640x128xbf16>
    %c0_29 = arith.constant 0 : index
    %c0_30 = arith.constant 0 : index
    %69 = vector.load %arg9[%c0_29, %c0_30] : memref<320x384xbf16, #tpu.memory_space<vmem>>, vector<320x384xbf16>
    %c0_31 = arith.constant 0 : index
    %c0_32 = arith.constant 0 : index
    %70 = vector.load %arg10[%c0_31, %c0_32] : memref<1x384xf32, #tpu.memory_space<vmem>>, vector<1x384xf32>
    %cst_33 = arith.constant 0.000000e+00 : bf16
    %71 = vector.broadcast %cst_33 : bf16 to vector<2x16x64xbf16>
    %72 = tpu.concatenate %71, %66, %71 in 0 : vector<2x16x64xbf16>, vector<16x16x64xbf16>, vector<2x16x64xbf16> -> vector<20x16x64xbf16>
    %73 = vector.extract_strided_slice %72 {offsets = [0, 0, 0], sizes = [16, 16, 64], strides = [1, 1, 1]} : vector<20x16x64xbf16> to vector<16x16x64xbf16>
    %74 = vector.extract_strided_slice %72 {offsets = [1, 0, 0], sizes = [16, 16, 64], strides = [1, 1, 1]} : vector<20x16x64xbf16> to vector<16x16x64xbf16>
    %75 = vector.extract_strided_slice %72 {offsets = [2, 0, 0], sizes = [16, 16, 64], strides = [1, 1, 1]} : vector<20x16x64xbf16> to vector<16x16x64xbf16>
    %76 = vector.extract_strided_slice %72 {offsets = [3, 0, 0], sizes = [16, 16, 64], strides = [1, 1, 1]} : vector<20x16x64xbf16> to vector<16x16x64xbf16>
    %77 = vector.extract_strided_slice %72 {offsets = [4, 0, 0], sizes = [16, 16, 64], strides = [1, 1, 1]} : vector<20x16x64xbf16> to vector<16x16x64xbf16>
    %78 = tpu.concatenate %73, %74, %75, %76, %77 in 2 : vector<16x16x64xbf16>, vector<16x16x64xbf16>, vector<16x16x64xbf16>, vector<16x16x64xbf16>, vector<16x16x64xbf16> -> vector<16x16x320xbf16>
    %cst_34 = arith.constant dense<0.000000e+00> : vector<16x16x384xf32>
    %79 = tpu.matmul %78, %69, %cst_34 {dimension_numbers = #tpu.dot_dimension_numbers<[2], [0], [0, 1], [1], [0, 0, 0, 1, 1, 1], [], []>} : vector<16x16x320xbf16>, vector<320x384xbf16>, vector<16x16x384xf32> -> vector<16x16x384xf32>
    %cst_35 = arith.constant 0.000000e+00 : bf16
    %80 = vector.broadcast %cst_35 : bf16 to vector<2x16x128xbf16>
    %81 = tpu.concatenate %80, %64, %80 in 0 : vector<2x16x128xbf16>, vector<16x16x128xbf16>, vector<2x16x128xbf16> -> vector<20x16x128xbf16>
    %82 = vector.extract_strided_slice %81 {offsets = [0, 0, 0], sizes = [16, 16, 128], strides = [1, 1, 1]} : vector<20x16x128xbf16> to vector<16x16x128xbf16>
    %83 = vector.extract_strided_slice %81 {offsets = [1, 0, 0], sizes = [16, 16, 128], strides = [1, 1, 1]} : vector<20x16x128xbf16> to vector<16x16x128xbf16>
    %84 = vector.extract_strided_slice %81 {offsets = [2, 0, 0], sizes = [16, 16, 128], strides = [1, 1, 1]} : vector<20x16x128xbf16> to vector<16x16x128xbf16>
    %85 = vector.extract_strided_slice %81 {offsets = [3, 0, 0], sizes = [16, 16, 128], strides = [1, 1, 1]} : vector<20x16x128xbf16> to vector<16x16x128xbf16>
    %86 = vector.extract_strided_slice %81 {offsets = [4, 0, 0], sizes = [16, 16, 128], strides = [1, 1, 1]} : vector<20x16x128xbf16> to vector<16x16x128xbf16>
    %87 = tpu.concatenate %82, %83, %84, %85, %86 in 2 : vector<16x16x128xbf16>, vector<16x16x128xbf16>, vector<16x16x128xbf16>, vector<16x16x128xbf16>, vector<16x16x128xbf16> -> vector<16x16x640xbf16>
    %cst_36 = arith.constant dense<0.000000e+00> : vector<16x16x256xf32>
    %88 = tpu.matmul %87, %67, %cst_36 {dimension_numbers = #tpu.dot_dimension_numbers<[2], [0], [0, 1], [1], [0, 0, 0, 1, 1, 1], [], []>} : vector<16x16x640xbf16>, vector<640x256xbf16>, vector<16x16x256xf32> -> vector<16x16x256xf32>
    %89 = vector.extract_strided_slice %79 {offsets = [0, 0, 0], sizes = [16, 16, 256], strides = [1, 1, 1]} : vector<16x16x384xf32> to vector<16x16x256xf32>
    %90 = arith.addf %88, %89 : vector<16x16x256xf32>
    %91 = vector.extract_strided_slice %70 {offsets = [0, 0], sizes = [1, 256], strides = [1, 1]} : vector<1x384xf32> to vector<1x256xf32>
    %92 = vector.shape_cast %91 : vector<1x256xf32> to vector<1x1x256xf32>
    %93 = vector.broadcast %92 : vector<1x1x256xf32> to vector<16x16x256xf32>
    %94 = arith.addf %90, %93 : vector<16x16x256xf32>
    %95 = arith.negf %94 : vector<16x16x256xf32>
    %96 = math.exp %95 : vector<16x16x256xf32>
    %cst_37 = arith.constant 1.000000e+00 : f32
    %97 = vector.broadcast %cst_37 : f32 to vector<16x16x256xf32>
    %98 = arith.addf %97, %96 : vector<16x16x256xf32>
    %99 = arith.divf %97, %98 : vector<16x16x256xf32>
    %100 = vector.extract_strided_slice %99 {offsets = [0, 0, 0], sizes = [16, 16, 128], strides = [1, 1, 1]} : vector<16x16x256xf32> to vector<16x16x128xf32>
    %101 = vector.extract_strided_slice %99 {offsets = [0, 0, 128], sizes = [16, 16, 128], strides = [1, 1, 1]} : vector<16x16x256xf32> to vector<16x16x128xf32>
    %102 = arith.truncf %101 : vector<16x16x128xf32> to vector<16x16x128xbf16>
    %103 = arith.mulf %102, %64 : vector<16x16x128xbf16>
    %cst_38 = arith.constant 0.000000e+00 : bf16
    %104 = vector.broadcast %cst_38 : bf16 to vector<2x16x128xbf16>
    %105 = tpu.concatenate %104, %103, %104 in 0 : vector<2x16x128xbf16>, vector<16x16x128xbf16>, vector<2x16x128xbf16> -> vector<20x16x128xbf16>
    %106 = vector.extract_strided_slice %105 {offsets = [0, 0, 0], sizes = [16, 16, 128], strides = [1, 1, 1]} : vector<20x16x128xbf16> to vector<16x16x128xbf16>
    %107 = vector.extract_strided_slice %105 {offsets = [1, 0, 0], sizes = [16, 16, 128], strides = [1, 1, 1]} : vector<20x16x128xbf16> to vector<16x16x128xbf16>
    %108 = vector.extract_strided_slice %105 {offsets = [2, 0, 0], sizes = [16, 16, 128], strides = [1, 1, 1]} : vector<20x16x128xbf16> to vector<16x16x128xbf16>
    %109 = vector.extract_strided_slice %105 {offsets = [3, 0, 0], sizes = [16, 16, 128], strides = [1, 1, 1]} : vector<20x16x128xbf16> to vector<16x16x128xbf16>
    %110 = vector.extract_strided_slice %105 {offsets = [4, 0, 0], sizes = [16, 16, 128], strides = [1, 1, 1]} : vector<20x16x128xbf16> to vector<16x16x128xbf16>
    %111 = tpu.concatenate %106, %107, %108, %109, %110 in 2 : vector<16x16x128xbf16>, vector<16x16x128xbf16>, vector<16x16x128xbf16>, vector<16x16x128xbf16>, vector<16x16x128xbf16> -> vector<16x16x640xbf16>
    %cst_39 = arith.constant dense<0.000000e+00> : vector<16x16x128xf32>
    %112 = tpu.matmul %111, %68, %cst_39 {dimension_numbers = #tpu.dot_dimension_numbers<[2], [0], [0, 1], [1], [0, 0, 0, 1, 1, 1], [], []>} : vector<16x16x640xbf16>, vector<640x128xbf16>, vector<16x16x128xf32> -> vector<16x16x128xf32>
    %113 = vector.extract_strided_slice %79 {offsets = [0, 0, 256], sizes = [16, 16, 128], strides = [1, 1, 1]} : vector<16x16x384xf32> to vector<16x16x128xf32>
    %114 = arith.addf %112, %113 : vector<16x16x128xf32>
    %115 = vector.extract_strided_slice %70 {offsets = [0, 256], sizes = [1, 128], strides = [1, 1]} : vector<1x384xf32> to vector<1x128xf32>
    %116 = vector.shape_cast %115 : vector<1x128xf32> to vector<1x1x128xf32>
    %117 = vector.broadcast %116 : vector<1x1x128xf32> to vector<16x16x128xf32>
    %118 = arith.addf %114, %117 : vector<16x16x128xf32>
    %119 = math.tanh %118 : vector<16x16x128xf32>
    %120 = arith.extf %64 : vector<16x16x128xbf16> to vector<16x16x128xf32>
    %121 = arith.subf %119, %120 : vector<16x16x128xf32>
    %122 = arith.mulf %100, %121 : vector<16x16x128xf32>
    %123 = arith.addf %120, %122 : vector<16x16x128xf32>
    %124 = arith.truncf %123 : vector<16x16x128xf32> to vector<16x16x128xbf16>
    %c0_40 = arith.constant 0 : index
    %c0_41 = arith.constant 0 : index
    %c0_42 = arith.constant 0 : index
    %c0_43 = arith.constant 0 : index
    %125 = vector.load %arg11[%c0_40, %c0_41, %c0_42, %c0_43] : memref<1x16x16x128xbf16, #tpu.memory_space<vmem>>, vector<1x16x16x128xbf16>
    %126 = vector.shape_cast %125 : vector<1x16x16x128xbf16> to vector<16x16x128xbf16>
    %127 = vector.shape_cast %124 : vector<16x16x128xbf16> to vector<1x16x16x128xbf16>
    tpu.vector_store %arg11[%c0_40, %c0_41, %c0_42, %c0_43], %127 {strides = array<i32>} : memref<1x16x16x128xbf16, #tpu.memory_space<vmem>>, vector<1x16x16x128xbf16>,
    return
  }
  func.func @transform_0(%arg0: i32) -> (i32, i32, i32, i32) {
    %c0_i32 = arith.constant 0 : i32
    %c0_i32_0 = arith.constant 0 : i32
    %c0_i32_1 = arith.constant 0 : i32
    %c0_i32_2 = arith.constant 0 : i32
    return %arg0, %c0_i32, %c0_i32_0, %c0_i32_1 : i32, i32, i32, i32
  }
  func.func @transform_1(%arg0: i32) -> (i32, i32, i32, i32) {
    %c0_i32 = arith.constant 0 : i32
    %c0_i32_0 = arith.constant 0 : i32
    %c0_i32_1 = arith.constant 0 : i32
    %c0_i32_2 = arith.constant 0 : i32
    return %arg0, %c0_i32, %c0_i32_0, %c0_i32_1 : i32, i32, i32, i32
  }
  func.func @transform_2(%arg0: i32) -> (i32, i32) {
    %c0_i32 = arith.constant 0 : i32
    %c0_i32_0 = arith.constant 0 : i32
    %c0_i32_1 = arith.constant 0 : i32
    return %c0_i32, %c0_i32_0 : i32, i32
  }
  func.func @transform_3(%arg0: i32) -> (i32, i32) {
    %c0_i32 = arith.constant 0 : i32
    %c0_i32_0 = arith.constant 0 : i32
    %c0_i32_1 = arith.constant 0 : i32
    return %c0_i32, %c0_i32_0 : i32, i32
  }
  func.func @transform_4(%arg0: i32) -> (i32, i32) {
    %c0_i32 = arith.constant 0 : i32
    %c0_i32_0 = arith.constant 0 : i32
    %c0_i32_1 = arith.constant 0 : i32
    return %c0_i32, %c0_i32_0 : i32, i32
  }
  func.func @transform_5(%arg0: i32) -> (i32, i32) {
    %c0_i32 = arith.constant 0 : i32
    %c0_i32_0 = arith.constant 0 : i32
    %c0_i32_1 = arith.constant 0 : i32
    return %c0_i32, %c0_i32_0 : i32, i32
  }
  func.func @transform_6(%arg0: i32) -> (i32, i32) {
    %c0_i32 = arith.constant 0 : i32
    %c0_i32_0 = arith.constant 0 : i32
    %c0_i32_1 = arith.constant 0 : i32
    return %c0_i32, %c0_i32_0 : i32, i32
  }
  func.func @transform_7(%arg0: i32) -> (i32, i32) {
    %c0_i32 = arith.constant 0 : i32
    %c0_i32_0 = arith.constant 0 : i32
    %c0_i32_1 = arith.constant 0 : i32
    return %c0_i32, %c0_i32_0 : i32, i32
  }
  func.func @transform_8(%arg0: i32) -> (i32, i32) {
    %c0_i32 = arith.constant 0 : i32
    %c0_i32_0 = arith.constant 0 : i32
    %c0_i32_1 = arith.constant 0 : i32
    return %c0_i32, %c0_i32_0 : i32, i32
  }
  func.func @transform_9(%arg0: i32) -> (i32, i32) {
    %c0_i32 = arith.constant 0 : i32
    %c0_i32_0 = arith.constant 0 : i32
    %c0_i32_1 = arith.constant 0 : i32
    return %c0_i32, %c0_i32_0 : i32, i32
  }
  func.func @transform_10(%arg0: i32) -> (i32, i32, i32, i32) {
    %c0_i32 = arith.constant 0 : i32
    %c0_i32_0 = arith.constant 0 : i32
    %c0_i32_1 = arith.constant 0 : i32
    %c0_i32_2 = arith.constant 0 : i32
    return %arg0, %c0_i32, %c0_i32_0, %c0_i32_1 : i32, i32, i32, i32
  }
}

</mosaic_0001>

<llo_original>
// kernel: sep_conv_gru_forward.1
$region0: #{sep_conv_gru_forward.1}
  #allocation0 [shape = 'u32[]', space=smem, size = 0x4, offset = 0x4, fixed_abs, tag = 'smem constant byte address 0x4 - core index']
  #allocation1 [shape = 'u32[144,128]{1,0:T(1,128)}', space=vmem, size = 0x12000, scoped, tag = 'internal scratch']
  %s0 = inlined_call_operand.vmem [shape: bf16[2,16,16,128], index: 0, kind: input, shape index: {}]
  %s1 = inlined_call_operand.vmem [shape: bf16[2,16,16,64], index: 1, kind: input, shape index: {}]
  %s2 = inlined_call_operand.vmem [shape: bf16[640,256], index: 2, kind: input, shape index: {}]
  %s3 = inlined_call_operand.vmem [shape: bf16[640,128], index: 3, kind: input, shape index: {}]
  %s4 = inlined_call_operand.vmem [shape: bf16[320,384], index: 4, kind: input, shape index: {}]
  %s5 = inlined_call_operand.vmem [shape: f32[1,384], index: 5, kind: input, shape index: {}]
  %s6 = inlined_call_operand.vmem [shape: bf16[640,256], index: 6, kind: input, shape index: {}]
  %s7 = inlined_call_operand.vmem [shape: bf16[640,128], index: 7, kind: input, shape index: {}]
  %s8 = inlined_call_operand.vmem [shape: bf16[320,384], index: 8, kind: input, shape index: {}]
  %s9 = inlined_call_operand.vmem [shape: f32[1,384], index: 9, kind: input, shape index: {}]
  %s10 = inlined_call_operand.vmem [shape: bf16[2,16,16,128], index: 10, kind: output, shape index: {}]
  %s11 = sld [smem:[#allocation0]]
  $region73: #{sep_conv_gru_forward.1} parent=0
    _
  %s13 = ssub.s32 1, %s11
  %s14 = scalar_select 0, %s13, %s11
  loop: start=0, step=1, limit=4
  $region2: #{sep_conv_gru_forward.1} parent=0 // loop_pre_header
    _
  $region3: #{sep_conv_gru_forward.1} parent=0 // loop_header
    %s16 = sphi 0, %s20
    %p17 = scmp.ge.s32.totalorder %s16, 4
    %s26 = sphi 0, %s28
    %s29 = sphi 0, %s26
    %s30 = sphi 0, %s29
    %s46 = sphi 0, %s30
    %s52 = sphi 0, %s54
    %s55 = sphi 0, %s52
    %s56 = sphi 0, %s55
    %s72 = sphi 0, %s56
    %s76 = sphi 0, %s76
    %s78 = sphi 0, %s76
    %s79 = sphi 0, %s78
    %s93 = sphi 0, %s79
    %s97 = sphi 0, %s97
    %s99 = sphi 0, %s97
    %s100 = sphi 0, %s99
    %s114 = sphi 0, %s100
    %s118 = sphi 0, %s118
    %s120 = sphi 0, %s118
    %s121 = sphi 0, %s120
    %s135 = sphi 0, %s121
    %s139 = sphi 0, %s139
    %s141 = sphi 0, %s139
    %s142 = sphi 0, %s141
    %s156 = sphi 0, %s142
    %s160 = sphi 0, %s160
    %s162 = sphi 0, %s160
    %s163 = sphi 0, %s162
    %s177 = sphi 0, %s163
    %s181 = sphi 0, %s181
    %s183 = sphi 0, %s181
    %s184 = sphi 0, %s183
    %s198 = sphi 0, %s184
    %s202 = sphi 0, %s202
    %s204 = sphi 0, %s202
    %s205 = sphi 0, %s204
    %s219 = sphi 0, %s205
    %s223 = sphi 0, %s223
    %s225 = sphi 0, %s223
    %s226 = sphi 0, %s225
    %s240 = sphi 0, %s226
    %s246 = sphi 0, %s248
    %s249 = sphi 0, %s246
    %s250 = sphi 0, %s249
    %s266 = sphi 0, %s250
  $region4: #{sep_conv_gru_forward.1} parent=0 // loop_header_branch
    %19 = sbr.rel (%p17) target = $region8
  $region5: #{sep_conv_gru_forward.1} parent=0 // loop_body
    %s21 = ssub.s32 %s16, 1
    %s22 = ssub.s32 %s16, 2
    %s23 = sadd.s32 %s16, 1
    %s24 = ssub.s32 %s16, %s23
    %p25 = scmp.eq.s32.totalorder %s24, 0
    %s27 = sadd.s32 %s26, 1
    %s28 = scalar_select %p25, %s26, %s27
    %p31 = pneg %p25
    %p32 = scmp.eq.s32.totalorder %s16, 1
    %p33 = por %p31, %p32
    %p34 = scmp.ne.s32.totalorder %s26, %s29
    %p35 = scmp.eq.s32.totalorder %s16, 0
    %p36 = por %p34, %p35
    %p37 = scmp.ne.s32.totalorder %s26, %s29
    %p38 = scmp.eq.s32.totalorder %s21, 1
    %p39 = por %p37, %p38
    %p40 = scmp.ne.s32.totalorder %s29, %s30
    %p41 = scmp.eq.s32.totalorder %s21, 0
    %p42 = por %p40, %p41
    %p43 = scmp.ne.s32.totalorder %s29, %s30
    %p44 = scmp.eq.s32.totalorder %s22, 1
    %p45 = por %p43, %p44
    %p47 = scmp.ne.s32.totalorder %s30, %s46
    %p48 = scmp.eq.s32.totalorder %s22, 0
    %p49 = por %p47, %p48
    %s50 = ssub.s32 %s16, %s23
    %p51 = scmp.eq.s32.totalorder %s50, 0
    %s53 = sadd.s32 %s52, 1
    %s54 = scalar_select %p51, %s52, %s53
    %p57 = pneg %p51
    %p58 = scmp.eq.s32.totalorder %s16, 1
    %p59 = por %p57, %p58
    %p60 = scmp.ne.s32.totalorder %s52, %s55
    %p61 = scmp.eq.s32.totalorder %s16, 0
    %p62 = por %p60, %p61
    %p63 = scmp.ne.s32.totalorder %s52, %s55
    %p64 = scmp.eq.s32.totalorder %s21, 1
    %p65 = por %p63, %p64
    %p66 = scmp.ne.s32.totalorder %s55, %s56
    %p67 = scmp.eq.s32.totalorder %s21, 0
    %p68 = por %p66, %p67
    %p69 = scmp.ne.s32.totalorder %s55, %s56
    %p70 = scmp.eq.s32.totalorder %s22, 1
    %p71 = por %p69, %p70
    %p73 = scmp.ne.s32.totalorder %s56, %s72
    %p74 = scmp.eq.s32.totalorder %s22, 0
    %p75 = por %p73, %p74
    %s77 = sadd.s32 %s76, 1
    %p80 = scmp.eq.s32.totalorder %s16, 1
    %p81 = scmp.ne.s32.totalorder %s76, %s78
    %p82 = scmp.eq.s32.totalorder %s16, 0
    %p83 = por %p81, %p82
    %p84 = scmp.ne.s32.totalorder %s76, %s78
    %p85 = scmp.eq.s32.totalorder %s21, 1
    %p86 = por %p84, %p85
    %p87 = scmp.ne.s32.totalorder %s78, %s79
    %p88 = scmp.eq.s32.totalorder %s21, 0
    %p89 = por %p87, %p88
    %p90 = scmp.ne.s32.totalorder %s78, %s79
    %p91 = scmp.eq.s32.totalorder %s22, 1
    %p92 = por %p90, %p91
    %p94 = scmp.ne.s32.totalorder %s79, %s93
    %p95 = scmp.eq.s32.totalorder %s22, 0
    %p96 = por %p94, %p95
    %s98 = sadd.s32 %s97, 1
    %p101 = scmp.eq.s32.totalorder %s16, 1
    %p102 = scmp.ne.s32.totalorder %s97, %s99
    %p103 = scmp.eq.s32.totalorder %s16, 0
    %p104 = por %p102, %p103
    %p105 = scmp.ne.s32.totalorder %s97, %s99
    %p106 = scmp.eq.s32.totalorder %s21, 1
    %p107 = por %p105, %p106
    %p108 = scmp.ne.s32.totalorder %s99, %s100
    %p109 = scmp.eq.s32.totalorder %s21, 0
    %p110 = por %p108, %p109
    %p111 = scmp.ne.s32.totalorder %s99, %s100
    %p112 = scmp.eq.s32.totalorder %s22, 1
    %p113 = por %p111, %p112
    %p115 = scmp.ne.s32.totalorder %s100, %s114
    %p116 = scmp.eq.s32.totalorder %s22, 0
    %p117 = por %p115, %p116
    %s119 = sadd.s32 %s118, 1
    %p122 = scmp.eq.s32.totalorder %s16, 1
    %p123 = scmp.ne.s32.totalorder %s118, %s120
    %p124 = scmp.eq.s32.totalorder %s16, 0
    %p125 = por %p123, %p124
    %p126 = scmp.ne.s32.totalorder %s118, %s120
    %p127 = scmp.eq.s32.totalorder %s21, 1
    %p128 = por %p126, %p127
    %p129 = scmp.ne.s32.totalorder %s120, %s121
    %p130 = scmp.eq.s32.totalorder %s21, 0
    %p131 = por %p129, %p130
    %p132 = scmp.ne.s32.totalorder %s120, %s121
    %p133 = scmp.eq.s32.totalorder %s22, 1
    %p134 = por %p132, %p133
    %p136 = scmp.ne.s32.totalorder %s121, %s135
    %p137 = scmp.eq.s32.totalorder %s22, 0
    %p138 = por %p136, %p137
    %s140 = sadd.s32 %s139, 1
    %p143 = scmp.eq.s32.totalorder %s16, 1
    %p144 = scmp.ne.s32.totalorder %s139, %s141
    %p145 = scmp.eq.s32.totalorder %s16, 0
    %p146 = por %p144, %p145
    %p147 = scmp.ne.s32.totalorder %s139, %s141
    %p148 = scmp.eq.s32.totalorder %s21, 1
    %p149 = por %p147, %p148
    %p150 = scmp.ne.s32.totalorder %s141, %s142
    %p151 = scmp.eq.s32.totalorder %s21, 0
    %p152 = por %p150, %p151
    %p153 = scmp.ne.s32.totalorder %s141, %s142
    %p154 = scmp.eq.s32.totalorder %s22, 1
    %p155 = por %p153, %p154
    %p157 = scmp.ne.s32.totalorder %s142, %s156
    %p158 = scmp.eq.s32.totalorder %s22, 0
    %p159 = por %p157, %p158
    %s161 = sadd.s32 %s160, 1
    %p164 = scmp.eq.s32.totalorder %s16, 1
    %p165 = scmp.ne.s32.totalorder %s160, %s162
    %p166 = scmp.eq.s32.totalorder %s16, 0
    %p167 = por %p165, %p166
    %p168 = scmp.ne.s32.totalorder %s160, %s162
    %p169 = scmp.eq.s32.totalorder %s21, 1
    %p170 = por %p168, %p169
    %p171 = scmp.ne.s32.totalorder %s162, %s163
    %p172 = scmp.eq.s32.totalorder %s21, 0
    %p173 = por %p171, %p172
    %p174 = scmp.ne.s32.totalorder %s162, %s163
    %p175 = scmp.eq.s32.totalorder %s22, 1
    %p176 = por %p174, %p175
    %p178 = scmp.ne.s32.totalorder %s163, %s177
    %p179 = scmp.eq.s32.totalorder %s22, 0
    %p180 = por %p178, %p179
    %s182 = sadd.s32 %s181, 1
    %p185 = scmp.eq.s32.totalorder %s16, 1
    %p186 = scmp.ne.s32.totalorder %s181, %s183
    %p187 = scmp.eq.s32.totalorder %s16, 0
    %p188 = por %p186, %p187
    %p189 = scmp.ne.s32.totalorder %s181, %s183
    %p190 = scmp.eq.s32.totalorder %s21, 1
    %p191 = por %p189, %p190
    %p192 = scmp.ne.s32.totalorder %s183, %s184
    %p193 = scmp.eq.s32.totalorder %s21, 0
    %p194 = por %p192, %p193
    %p195 = scmp.ne.s32.totalorder %s183, %s184
    %p196 = scmp.eq.s32.totalorder %s22, 1
    %p197 = por %p195, %p196
    %p199 = scmp.ne.s32.totalorder %s184, %s198
    %p200 = scmp.eq.s32.totalorder %s22, 0
    %p201 = por %p199, %p200
    %s203 = sadd.s32 %s202, 1
    %p206 = scmp.eq.s32.totalorder %s16, 1
    %p207 = scmp.ne.s32.totalorder %s202, %s204
    %p208 = scmp.eq.s32.totalorder %s16, 0
    %p209 = por %p207, %p208
    %p210 = scmp.ne.s32.totalorder %s202, %s204
    %p211 = scmp.eq.s32.totalorder %s21, 1
    %p212 = por %p210, %p211
    %p213 = scmp.ne.s32.totalorder %s204, %s205
    %p214 = scmp.eq.s32.totalorder %s21, 0
    %p215 = por %p213, %p214
    %p216 = scmp.ne.s32.totalorder %s204, %s205
    %p217 = scmp.eq.s32.totalorder %s22, 1
    %p218 = por %p216, %p217
    %p220 = scmp.ne.s32.totalorder %s205, %s219
    %p221 = scmp.eq.s32.totalorder %s22, 0
    %p222 = por %p220, %p221
    %s224 = sadd.s32 %s223, 1
    %p227 = scmp.eq.s32.totalorder %s16, 1
    %p228 = scmp.ne.s32.totalorder %s223, %s225
    %p229 = scmp.eq.s32.totalorder %s16, 0
    %p230 = por %p228, %p229
    %p231 = scmp.ne.s32.totalorder %s223, %s225
    %p232 = scmp.eq.s32.totalorder %s21, 1
    %p233 = por %p231, %p232
    %p234 = scmp.ne.s32.totalorder %s225, %s226
    %p235 = scmp.eq.s32.totalorder %s21, 0
    %p236 = por %p234, %p235
    %p237 = scmp.ne.s32.totalorder %s225, %s226
    %p238 = scmp.eq.s32.totalorder %s22, 1
    %p239 = por %p237, %p238
    %p241 = scmp.ne.s32.totalorder %s226, %s240
    %p242 = scmp.eq.s32.totalorder %s22, 0
    %p243 = por %p241, %p242
    %s244 = ssub.s32 %s16, %s23
    %p245 = scmp.eq.s32.totalorder %s244, 0
    %s247 = sadd.s32 %s246, 1
    %s248 = scalar_select %p245, %s246, %s247
    %p251 = pneg %p245
    %p252 = scmp.eq.s32.totalorder %s16, 1
    %p253 = por %p251, %p252
    %p254 = scmp.ne.s32.totalorder %s246, %s249
    %p255 = scmp.eq.s32.totalorder %s16, 0
    %p256 = por %p254, %p255
    %p257 = scmp.ne.s32.totalorder %s246, %s249
    %p258 = scmp.eq.s32.totalorder %s21, 1
    %p259 = por %p257, %p258
    %p260 = scmp.ne.s32.totalorder %s249, %s250
    %p261 = scmp.eq.s32.totalorder %s21, 0
    %p262 = por %p260, %p261
    %p263 = scmp.ne.s32.totalorder %s249, %s250
    %p264 = scmp.eq.s32.totalorder %s22, 1
    %p265 = por %p263, %p264
    %p267 = scmp.ne.s32.totalorder %s250, %s266
    %p268 = scmp.eq.s32.totalorder %s22, 0
    %p269 = por %p267, %p268
    %p270 = scmp.le.s32.totalorder 1, %s16
    %p271 = scmp.lt.s32.totalorder %s16, 3
    %p272 = pnand %p270, %p271
    %p273 = pneg %p272
    // Predicated region
    $region9: #{sep_conv_gru_forward.1} parent=5 // pred_check
      _
    $region10: #{sep_conv_gru_forward.1} parent=5 // pred_check_branch
      %275 = sbr.rel (%p272) target = $region12
    $region11: #{sep_conv_gru_forward.1} parent=5 // pred_region
      %s276 = ssub.s32 %s16, 1
      // Predicated region
      $region13: #{sep_conv_gru_forward.1} parent=11 // pred_check
        %p277 = pneg %p89
      $region14: #{sep_conv_gru_forward.1} parent=11 // pred_check_branch
        %279 = sbr.rel (%p277) target = $region16
      $region15: #{sep_conv_gru_forward.1} parent=11 // pred_region
        _
      $region16: #{sep_conv_gru_forward.1} parent=11 // pred_fallthru
        _
      // Predicated region
      $region17: #{sep_conv_gru_forward.1} parent=11 // pred_check
        %p280 = pneg %p110
      $region18: #{sep_conv_gru_forward.1} parent=11 // pred_check_branch
        %282 = sbr.rel (%p280) target = $region20
      $region19: #{sep_conv_gru_forward.1} parent=11 // pred_region
        _
      $region20: #{sep_conv_gru_forward.1} parent=11 // pred_fallthru
        _
      // Predicated region
      $region21: #{sep_conv_gru_forward.1} parent=11 // pred_check
        %p283 = pneg %p131
      $region22: #{sep_conv_gru_forward.1} parent=11 // pred_check_branch
        %285 = sbr.rel (%p283) target = $region24
      $region23: #{sep_conv_gru_forward.1} parent=11 // pred_region
        _
      $region24: #{sep_conv_gru_forward.1} parent=11 // pred_fallthru
        _
      // Predicated region
      $region25: #{sep_conv_gru_forward.1} parent=11 // pred_check
        %p286 = pneg %p152
      $region26: #{sep_conv_gru_forward.1} parent=11 // pred_check_branch
        %288 = sbr.rel (%p286) target = $region28
      $region27: #{sep_conv_gru_forward.1} parent=11 // pred_region
        _
      $region28: #{sep_conv_gru_forward.1} parent=11 // pred_fallthru
        _
      // Predicated region
      $region29: #{sep_conv_gru_forward.1} parent=11 // pred_check
        %p289 = pneg %p173
      $region30: #{sep_conv_gru_forward.1} parent=11 // pred_check_branch
        %291 = sbr.rel (%p289) target = $region32
      $region31: #{sep_conv_gru_forward.1} parent=11 // pred_region
        _
      $region32: #{sep_conv_gru_forward.1} parent=11 // pred_fallthru
        _
      // Predicated region
      $region33: #{sep_conv_gru_forward.1} parent=11 // pred_check
        %p292 = pneg %p194
      $region34: #{sep_conv_gru_forward.1} parent=11 // pred_check_branch
        %294 = sbr.rel (%p292) target = $region36
      $region35: #{sep_conv_gru_forward.1} parent=11 // pred_region
        _
      $region36: #{sep_conv_gru_forward.1} parent=11 // pred_fallthru
        _
      // Predicated region
      $region37: #{sep_conv_gru_forward.1} parent=11 // pred_check
        %p295 = pneg %p215
      $region38: #{sep_conv_gru_forward.1} parent=11 // pred_check_branch
        %297 = sbr.rel (%p295) target = $region40
      $region39: #{sep_conv_gru_forward.1} parent=11 // pred_region
        _
      $region40: #{sep_conv_gru_forward.1} parent=11 // pred_fallthru
        _
      // Predicated region
      $region41: #{sep_conv_gru_forward.1} parent=11 // pred_check
        %p298 = pneg %p236
      $region42: #{sep_conv_gru_forward.1} parent=11 // pred_check_branch
        %300 = sbr.rel (%p298) target = $region44
      $region43: #{sep_conv_gru_forward.1} parent=11 // pred_region
        _
      $region44: #{sep_conv_gru_forward.1} parent=11 // pred_fallthru
        _
    $region12: #{sep_conv_gru_forward.1} parent=5 // pred_fallthru
      _
    %p301 = scmp.lt.s32.totalorder %s16, 2
    // Predicated region
    $region45: #{sep_conv_gru_forward.1} parent=5 // pred_check
      %p302 = pneg %p301
    $region46: #{sep_conv_gru_forward.1} parent=5 // pred_check_branch
      %304 = sbr.rel (%p302) target = $region48
    $region47: #{sep_conv_gru_forward.1} parent=5 // pred_region
      // Predicated region
      $region49: #{sep_conv_gru_forward.1} parent=47 // pred_check
        %p305 = pneg %p36
      $region50: #{sep_conv_gru_forward.1} parent=47 // pred_check_branch
        %307 = sbr.rel (%p305) target = $region52
      $region51: #{sep_conv_gru_forward.1} parent=47 // pred_region
        %p308 = scmp.lt.s32.totalorder %s16, 1
        %s309 = scalar_select %p308, %s16, 1
        %s310 = smul.addr %s309, 32
        %s311 = smul.addr %s310, 4
        %s312 = scalar_lea.vmem %s0, %s311
      $region52: #{sep_conv_gru_forward.1} parent=47 // pred_fallthru
        _
      // Predicated region
      $region53: #{sep_conv_gru_forward.1} parent=47 // pred_check
        %p313 = pneg %p62
      $region54: #{sep_conv_gru_forward.1} parent=47 // pred_check_branch
        %315 = sbr.rel (%p313) target = $region56
      $region55: #{sep_conv_gru_forward.1} parent=47 // pred_region
        %p316 = scmp.lt.s32.totalorder %s16, 1
        %s317 = scalar_select %p316, %s16, 1
        %s318 = smul.addr %s317, 32
        %s319 = smul.addr %s318, 4
        %s320 = scalar_lea.vmem %s1, %s319
      $region56: #{sep_conv_gru_forward.1} parent=47 // pred_fallthru
        _
    $region48: #{sep_conv_gru_forward.1} parent=5 // pred_fallthru
      _
    %p321 = scmp.le.s32.totalorder 1, %s16
    %p322 = scmp.lt.s32.totalorder %s16, 3
    %p323 = pnand %p321, %p322
    %p324 = pneg %p323
    // Predicated region
    $region57: #{sep_conv_gru_forward.1} parent=5 // pred_check
      _
    $region58: #{sep_conv_gru_forward.1} parent=5 // pred_check_branch
      %326 = sbr.rel (%p323) target = $region60
    $region59: #{sep_conv_gru_forward.1} parent=5 // pred_region
      %s327 = ssub.s32 %s16, 1
      %p328 = scmp.lt.s32.totalorder %s21, 1
      %s329 = scalar_select %p328, %s21, 1
      %s330 = smul.addr %s329, 32
      %s331 = smul.addr %s330, 4
      %s332 = scalar_lea.vmem %s0, %s331
      %p333 = pneg %p42
      %p334 = pneg %p39
      %p335 = scmp.lt.s32.totalorder %s21, 1
      %s336 = scalar_select %p335, %s21, 1
      %s337 = smul.addr %s336, 32
      %s338 = smul.addr %s337, 4
      %s339 = scalar_lea.vmem %s1, %s338
      %p340 = pneg %p68
      %p341 = pneg %p65
      %p342 = pneg %p89
      %p343 = pneg %p86
      %p344 = pneg %p110
      %p345 = pneg %p107
      %p346 = pneg %p131
      %p347 = pneg %p128
      %p348 = pneg %p152
      %p349 = pneg %p149
      %p350 = pneg %p173
      %p351 = pneg %p170
      %p352 = pneg %p194
      %p353 = pneg %p191
      %p354 = pneg %p215
      %p355 = pneg %p212
      %p356 = pneg %p236
      %p357 = pneg %p233
      %p358 = pneg %p262
      %p359 = pneg %p259
      %p360 = scmp.lt.s32.totalorder %s21, 1
      %s361 = scalar_select %p360, %s21, 1
      %s362 = smul.addr %s361, 32
      %s363 = smul.addr %s362, 4
      %s364 = scalar_lea.vmem %s10, %s363
      %p365 = scmp.lt.s32.totalorder %s21, 1
      %s366 = scalar_select %p365, %s21, 1
      %s367 = smul.addr %s366, 32
      %s368 = smul.addr %s367, 4
      %s369 = scalar_lea.vmem %s0, %s368
      %p370 = scmp.lt.s32.totalorder %s21, 1
      %s371 = scalar_select %p370, %s21, 1
      %s372 = smul.addr %s371, 32
      %s373 = smul.addr %s372, 4
      %s374 = scalar_lea.vmem %s1, %s373
      %p375 = scmp.lt.s32.totalorder %s21, 1
      %s376 = scalar_select %p375, %s21, 1
      %s377 = smul.addr %s376, 32
      %s378 = smul.addr %s377, 4
      %s379 = scalar_lea.vmem %s10, %s378
      %v381 = vld [vmem:[%s369] sm:$0xf]
      %v382 = vld [vmem:[%s369 + $0x4] sm:$0xf]
      %v383 = vld [vmem:[%s369 + $0x8] sm:$0xf]
      %v384 = vld [vmem:[%s369 + $0xc] sm:$0xf]
      %v385 = vld [vmem:[%s369 + $0x10] sm:$0xf]
      %v386 = vld [vmem:[%s369 + $0x14] sm:$0xf]
      %v387 = vld [vmem:[%s369 + $0x18] sm:$0xf]
      %v388 = vld [vmem:[%s369 + $0x1c] sm:$0xf]
      %v389 = vld [vmem:[%s369 + $0x20] sm:$0xf]
      %v390 = vld [vmem:[%s369 + $0x24] sm:$0xf]
      %v391 = vld [vmem:[%s369 + $0x28] sm:$0xf]
      %v392 = vld [vmem:[%s369 + $0x2c] sm:$0xf]
      %v393 = vld [vmem:[%s369 + $0x30] sm:$0xf]
      %v394 = vld [vmem:[%s369 + $0x34] sm:$0xf]
      %v395 = vld [vmem:[%s369 + $0x38] sm:$0xf]
      %v396 = vld [vmem:[%s369 + $0x3c] sm:$0xf]
      %v397 = vld [vmem:[%s369 + $0x40] sm:$0xf]
      %v398 = vld [vmem:[%s369 + $0x44] sm:$0xf]
      %v399 = vld [vmem:[%s369 + $0x48] sm:$0xf]
      %v400 = vld [vmem:[%s369 + $0x4c] sm:$0xf]
      %v401 = vld [vmem:[%s369 + $0x50] sm:$0xf]
      %v402 = vld [vmem:[%s369 + $0x54] sm:$0xf]
      %v403 = vld [vmem:[%s369 + $0x58] sm:$0xf]
      %v404 = vld [vmem:[%s369 + $0x5c] sm:$0xf]
      %v405 = vld [vmem:[%s369 + $0x60] sm:$0xf]
      %v406 = vld [vmem:[%s369 + $0x64] sm:$0xf]
      %v407 = vld [vmem:[%s369 + $0x68] sm:$0xf]
      %v408 = vld [vmem:[%s369 + $0x6c] sm:$0xf]
      %v409 = vld [vmem:[%s369 + $0x70] sm:$0xf]
      %v410 = vld [vmem:[%s369 + $0x74] sm:$0xf]
      %v411 = vld [vmem:[%s369 + $0x78] sm:$0xf]
      %v412 = vld [vmem:[%s369 + $0x7c] sm:$0xf]
      %v413 = vcombine.low %v381, %v389
      %v415 = vunpack.c.l.s4 1983009808
      %v416 = vunpack.c.0.s8 %v415
      %v417 = vlaneseq
      %v418 = vshrl.u32 %v417, 7
      %v419 = vsub.s32 %v416, %v418
      %v420 = vrot.slane %v413, %v419
      %v421 = vcombine.low %v385, %v393
      %v423 = vunpack.c.l.s4 1983009808
      %v424 = vunpack.c.0.s8 %v423
      %v425 = vlaneseq
      %v426 = vshrl.u32 %v425, 7
      %v427 = vsub.s32 %v424, %v426
      %v428 = vrot.slane %v421, %v427
      %v429 = vcombine.low %v420, %v428
      %v430 = vcombine.high %v420, %v428
      %v432 = vunpack.c.l.s4 1934713408
      %v433 = vunpack.c.0.s8 %v432
      %v434 = vlaneseq
      %v435 = vshrl.u32 %v434, 7
      %v436 = vsub.s32 %v433, %v435
      %v437 = vrot.slane %v429, %v436
      %v439 = vunpack.c.l.s4 1934713408
      %v440 = vunpack.c.0.s8 %v439
      %v441 = vlaneseq
      %v442 = vshrl.u32 %v441, 7
      %v443 = vsub.s32 %v440, %v442
      %v444 = vrot.slane %v430, %v443
      %v445 = vcombine.high %v437, 0
      %v446 = vcombine.high %v444, 0
      %v447 = vcombine.low %v383, %v391
      %v449 = vunpack.c.l.s4 1983009808
      %v450 = vunpack.c.0.s8 %v449
      %v451 = vlaneseq
      %v452 = vshrl.u32 %v451, 7
      %v453 = vsub.s32 %v450, %v452
      %v454 = vrot.slane %v447, %v453
      %v455 = vcombine.low %v387, %v395
      %v457 = vunpack.c.l.s4 1983009808
      %v458 = vunpack.c.0.s8 %v457
      %v459 = vlaneseq
      %v460 = vshrl.u32 %v459, 7
      %v461 = vsub.s32 %v458, %v460
      %v462 = vrot.slane %v455, %v461
      %v463 = vcombine.low %v454, %v462
      %v464 = vcombine.high %v454, %v462
      %v466 = vunpack.c.l.s4 1934713408
      %v467 = vunpack.c.0.s8 %v466
      %v468 = vlaneseq
      %v469 = vshrl.u32 %v468, 7
      %v470 = vsub.s32 %v467, %v469
      %v471 = vrot.slane %v463, %v470
      %v473 = vunpack.c.l.s4 1934713408
      %v474 = vunpack.c.0.s8 %v473
      %v475 = vlaneseq
      %v476 = vshrl.u32 %v475, 7
      %v477 = vsub.s32 %v474, %v476
      %v478 = vrot.slane %v464, %v477
      %v479 = vcombine.high %v471, 0
      %v480 = vcombine.high %v478, 0
      %v481 = vcombine.low %v397, %v405
      %v483 = vunpack.c.l.s4 1983009808
      %v484 = vunpack.c.0.s8 %v483
      %v485 = vlaneseq
      %v486 = vshrl.u32 %v485, 7
      %v487 = vsub.s32 %v484, %v486
      %v488 = vrot.slane %v481, %v487
      %v489 = vcombine.low %v401, %v409
      %v491 = vunpack.c.l.s4 1983009808
      %v492 = vunpack.c.0.s8 %v491
      %v493 = vlaneseq
      %v494 = vshrl.u32 %v493, 7
      %v495 = vsub.s32 %v492, %v494
      %v496 = vrot.slane %v489, %v495
      %v497 = vcombine.low %v488, %v496
      %v498 = vcombine.high %v488, %v496
      %v500 = vunpack.c.l.s4 1934713408
      %v501 = vunpack.c.0.s8 %v500
      %v502 = vlaneseq
      %v503 = vshrl.u32 %v502, 7
      %v504 = vsub.s32 %v501, %v503
      %v505 = vrot.slane %v497, %v504
      %v507 = vunpack.c.l.s4 1934713408
      %v508 = vunpack.c.0.s8 %v507
      %v509 = vlaneseq
      %v510 = vshrl.u32 %v509, 7
      %v511 = vsub.s32 %v508, %v510
      %v512 = vrot.slane %v498, %v511
      %v513 = vcombine.high %v505, 0
      %v514 = vcombine.high %v512, 0
      %v515 = vcombine.low %v399, %v407
      %v517 = vunpack.c.l.s4 1983009808
      %v518 = vunpack.c.0.s8 %v517
      %v519 = vlaneseq
      %v520 = vshrl.u32 %v519, 7
      %v521 = vsub.s32 %v518, %v520
      %v522 = vrot.slane %v515, %v521
      %v523 = vcombine.low %v403, %v411
      %v525 = vunpack.c.l.s4 1983009808
      %v526 = vunpack.c.0.s8 %v525
      %v527 = vlaneseq
      %v528 = vshrl.u32 %v527, 7
      %v529 = vsub.s32 %v526, %v528
      %v530 = vrot.slane %v523, %v529
      %v531 = vcombine.low %v522, %v530
      %v532 = vcombine.high %v522, %v530
      %v534 = vunpack.c.l.s4 1934713408
      %v535 = vunpack.c.0.s8 %v534
      %v536 = vlaneseq
      %v537 = vshrl.u32 %v536, 7
      %v538 = vsub.s32 %v535, %v537
      %v539 = vrot.slane %v531, %v538
      %v541 = vunpack.c.l.s4 1934713408
      %v542 = vunpack.c.0.s8 %v541
      %v543 = vlaneseq
      %v544 = vshrl.u32 %v543, 7
      %v545 = vsub.s32 %v542, %v544
      %v546 = vrot.slane %v532, %v545
      %v547 = vcombine.high %v539, 0
      %v548 = vcombine.high %v546, 0
      %v549 = vcombine.low %v382, %v390
      %v551 = vunpack.c.l.s4 1983009808
      %v552 = vunpack.c.0.s8 %v551
      %v553 = vlaneseq
      %v554 = vshrl.u32 %v553, 7
      %v555 = vsub.s32 %v552, %v554
      %v556 = vrot.slane %v549, %v555
      %v557 = vcombine.low %v386, %v394
      %v559 = vunpack.c.l.s4 1983009808
      %v560 = vunpack.c.0.s8 %v559
      %v561 = vlaneseq
      %v562 = vshrl.u32 %v561, 7
      %v563 = vsub.s32 %v560, %v562
      %v564 = vrot.slane %v557, %v563
      %v565 = vcombine.low %v556, %v564
      %v566 = vcombine.high %v556, %v564
      %v568 = vunpack.c.l.s4 1934713408
      %v569 = vunpack.c.0.s8 %v568
      %v570 = vlaneseq
      %v571 = vshrl.u32 %v570, 7
      %v572 = vsub.s32 %v569, %v571
      %v573 = vrot.slane %v565, %v572
      %v575 = vunpack.c.l.s4 1934713408
      %v576 = vunpack.c.0.s8 %v575
      %v577 = vlaneseq
      %v578 = vshrl.u32 %v577, 7
      %v579 = vsub.s32 %v576, %v578
      %v580 = vrot.slane %v566, %v579
      %v581 = vcombine.high %v573, 0
      %v582 = vcombine.high %v580, 0
      %v583 = vcombine.low %v384, %v392
      %v585 = vunpack.c.l.s4 1983009808
      %v586 = vunpack.c.0.s8 %v585
      %v587 = vlaneseq
      %v588 = vshrl.u32 %v587, 7
      %v589 = vsub.s32 %v586, %v588
      %v590 = vrot.slane %v583, %v589
      %v591 = vcombine.low %v388, %v396
      %v593 = vunpack.c.l.s4 1983009808
      %v594 = vunpack.c.0.s8 %v593
      %v595 = vlaneseq
      %v596 = vshrl.u32 %v595, 7
      %v597 = vsub.s32 %v594, %v596
      %v598 = vrot.slane %v591, %v597
      %v599 = vcombine.low %v590, %v598
      %v600 = vcombine.high %v590, %v598
      %v602 = vunpack.c.l.s4 1934713408
      %v603 = vunpack.c.0.s8 %v602
      %v604 = vlaneseq
      %v605 = vshrl.u32 %v604, 7
      %v606 = vsub.s32 %v603, %v605
      %v607 = vrot.slane %v599, %v606
      %v609 = vunpack.c.l.s4 1934713408
      %v610 = vunpack.c.0.s8 %v609
      %v611 = vlaneseq
      %v612 = vshrl.u32 %v611, 7
      %v613 = vsub.s32 %v610, %v612
      %v614 = vrot.slane %v600, %v613
      %v615 = vcombine.high %v607, 0
      %v616 = vcombine.high %v614, 0
      %v617 = vcombine.low %v398, %v406
      %v619 = vunpack.c.l.s4 1983009808
      %v620 = vunpack.c.0.s8 %v619
      %v621 = vlaneseq
      %v622 = vshrl.u32 %v621, 7
      %v623 = vsub.s32 %v620, %v622
      %v624 = vrot.slane %v617, %v623
      %v625 = vcombine.low %v402, %v410
      %v627 = vunpack.c.l.s4 1983009808
      %v628 = vunpack.c.0.s8 %v627
      %v629 = vlaneseq
      %v630 = vshrl.u32 %v629, 7
      %v631 = vsub.s32 %v628, %v630
      %v632 = vrot.slane %v625, %v631
      %v633 = vcombine.low %v624, %v632
      %v634 = vcombine.high %v624, %v632
      %v636 = vunpack.c.l.s4 1934713408
      %v637 = vunpack.c.0.s8 %v636
      %v638 = vlaneseq
      %v639 = vshrl.u32 %v638, 7
      %v640 = vsub.s32 %v637, %v639
      %v641 = vrot.slane %v633, %v640
      %v643 = vunpack.c.l.s4 1934713408
      %v644 = vunpack.c.0.s8 %v643
      %v645 = vlaneseq
      %v646 = vshrl.u32 %v645, 7
      %v647 = vsub.s32 %v644, %v646
      %v648 = vrot.slane %v634, %v647
      %v649 = vcombine.high %v641, 0
      %v650 = vcombine.high %v648, 0
      %v651 = vcombine.low %v400, %v408
      %v653 = vunpack.c.l.s4 1983009808
      %v654 = vunpack.c.0.s8 %v653
      %v655 = vlaneseq
      %v656 = vshrl.u32 %v655, 7
      %v657 = vsub.s32 %v654, %v656
      %v658 = vrot.slane %v651, %v657
      %v659 = vcombine.low %v404, %v412
      %v661 = vunpack.c.l.s4 1983009808
      %v662 = vunpack.c.0.s8 %v661
      %v663 = vlaneseq
      %v664 = vshrl.u32 %v663, 7
      %v665 = vsub.s32 %v662, %v664
      %v666 = vrot.slane %v659, %v665
      %v667 = vcombine.low %v658, %v666
      %v668 = vcombine.high %v658, %v666
      %v670 = vunpack.c.l.s4 1934713408
      %v671 = vunpack.c.0.s8 %v670
      %v672 = vlaneseq
      %v673 = vshrl.u32 %v672, 7
      %v674 = vsub.s32 %v671, %v673
      %v675 = vrot.slane %v667, %v674
      %v677 = vunpack.c.l.s4 1934713408
      %v678 = vunpack.c.0.s8 %v677
      %v679 = vlaneseq
      %v680 = vshrl.u32 %v679, 7
      %v681 = vsub.s32 %v678, %v680
      %v682 = vrot.slane %v668, %v681
      %v683 = vcombine.high %v675, 0
      %v684 = vcombine.high %v682, 0
      %v687 = vpack.i.b16 %v471, %v437
      %v689 = vshrl.u32 %v437, 16
      %v690 = vshrl.u32 %v471, 16
      %v691 = vpack.i.b16 %v690, %v689
      %v695 = vpack.i.b16 %v479, %v445
      %v697 = vshrl.u32 %v445, 16
      %v698 = vshrl.u32 %v479, 16
      %v699 = vpack.i.b16 %v698, %v697
      %v703 = vpack.i.b16 %v478, %v444
      %v705 = vshrl.u32 %v444, 16
      %v706 = vshrl.u32 %v478, 16
      %v707 = vpack.i.b16 %v706, %v705
      %v711 = vpack.i.b16 %v480, %v446
      %v713 = vshrl.u32 %v446, 16
      %v714 = vshrl.u32 %v480, 16
      %v715 = vpack.i.b16 %v714, %v713
      %v719 = vpack.i.b16 %v607, %v573
      %v721 = vshrl.u32 %v573, 16
      %v722 = vshrl.u32 %v607, 16
      %v723 = vpack.i.b16 %v722, %v721
      %v727 = vpack.i.b16 %v615, %v581
      %v729 = vshrl.u32 %v581, 16
      %v730 = vshrl.u32 %v615, 16
      %v731 = vpack.i.b16 %v730, %v729
      %v735 = vpack.i.b16 %v614, %v580
      %v737 = vshrl.u32 %v580, 16
      %v738 = vshrl.u32 %v614, 16
      %v739 = vpack.i.b16 %v738, %v737
      %v743 = vpack.i.b16 %v616, %v582
      %v745 = vshrl.u32 %v582, 16
      %v746 = vshrl.u32 %v616, 16
      %v747 = vpack.i.b16 %v746, %v745
      %v751 = vpack.i.b16 %v539, %v505
      %v753 = vshrl.u32 %v505, 16
      %v754 = vshrl.u32 %v539, 16
      %v755 = vpack.i.b16 %v754, %v753
      %v759 = vpack.i.b16 %v547, %v513
      %v761 = vshrl.u32 %v513, 16
      %v762 = vshrl.u32 %v547, 16
      %v763 = vpack.i.b16 %v762, %v761
      %v767 = vpack.i.b16 %v546, %v512
      %v769 = vshrl.u32 %v512, 16
      %v770 = vshrl.u32 %v546, 16
      %v771 = vpack.i.b16 %v770, %v769
      %v775 = vpack.i.b16 %v548, %v514
      %v777 = vshrl.u32 %v514, 16
      %v778 = vshrl.u32 %v548, 16
      %v779 = vpack.i.b16 %v778, %v777
      %v783 = vpack.i.b16 %v675, %v641
      %v785 = vshrl.u32 %v641, 16
      %v786 = vshrl.u32 %v675, 16
      %v787 = vpack.i.b16 %v786, %v785
      %v791 = vpack.i.b16 %v683, %v649
      %v793 = vshrl.u32 %v649, 16
      %v794 = vshrl.u32 %v683, 16
      %v795 = vpack.i.b16 %v794, %v793
      %v799 = vpack.i.b16 %v682, %v648
      %v801 = vshrl.u32 %v648, 16
      %v802 = vshrl.u32 %v682, 16
      %v803 = vpack.i.b16 %v802, %v801
      %v807 = vpack.i.b16 %v684, %v650
      %v809 = vshrl.u32 %v650, 16
      %v810 = vshrl.u32 %v684, 16
      %v811 = vpack.i.b16 %v810, %v809
      %v813 = vld [vmem:[%s374] sm:$0xf]
      %v814 = vld [vmem:[%s374 + $0x4] sm:$0xf]
      %v815 = vld [vmem:[%s374 + $0x8] sm:$0xf]
      %v816 = vld [vmem:[%s374 + $0xc] sm:$0xf]
      %v817 = vld [vmem:[%s374 + $0x10] sm:$0xf]
      %v818 = vld [vmem:[%s374 + $0x14] sm:$0xf]
      %v819 = vld [vmem:[%s374 + $0x18] sm:$0xf]
      %v820 = vld [vmem:[%s374 + $0x1c] sm:$0xf]
      %v821 = vld [vmem:[%s374 + $0x20] sm:$0xf]
      %v822 = vld [vmem:[%s374 + $0x24] sm:$0xf]
      %v823 = vld [vmem:[%s374 + $0x28] sm:$0xf]
      %v824 = vld [vmem:[%s374 + $0x2c] sm:$0xf]
      %v825 = vld [vmem:[%s374 + $0x30] sm:$0xf]
      %v826 = vld [vmem:[%s374 + $0x34] sm:$0xf]
      %v827 = vld [vmem:[%s374 + $0x38] sm:$0xf]
      %v828 = vld [vmem:[%s374 + $0x3c] sm:$0xf]
      %v829 = vld [vmem:[%s374 + $0x40] sm:$0xf]
      %v830 = vld [vmem:[%s374 + $0x44] sm:$0xf]
      %v831 = vld [vmem:[%s374 + $0x48] sm:$0xf]
      %v832 = vld [vmem:[%s374 + $0x4c] sm:$0xf]
      %v833 = vld [vmem:[%s374 + $0x50] sm:$0xf]
      %v834 = vld [vmem:[%s374 + $0x54] sm:$0xf]
      %v835 = vld [vmem:[%s374 + $0x58] sm:$0xf]
      %v836 = vld [vmem:[%s374 + $0x5c] sm:$0xf]
      %v837 = vld [vmem:[%s374 + $0x60] sm:$0xf]
      %v838 = vld [vmem:[%s374 + $0x64] sm:$0xf]
      %v839 = vld [vmem:[%s374 + $0x68] sm:$0xf]
      %v840 = vld [vmem:[%s374 + $0x6c] sm:$0xf]
      %v841 = vld [vmem:[%s374 + $0x70] sm:$0xf]
      %v842 = vld [vmem:[%s374 + $0x74] sm:$0xf]
      %v843 = vld [vmem:[%s374 + $0x78] sm:$0xf]
      %v844 = vld [vmem:[%s374 + $0x7c] sm:$0xf]
      %v845 = vcombine.low %v813, %v821
      %v847 = vunpack.c.l.s4 1983009808
      %v848 = vunpack.c.0.s8 %v847
      %v849 = vlaneseq
      %v850 = vshrl.u32 %v849, 7
      %v851 = vsub.s32 %v848, %v850
      %v852 = vrot.slane %v845, %v851
      %v853 = vcombine.low %v817, %v825
      %v855 = vunpack.c.l.s4 1983009808
      %v856 = vunpack.c.0.s8 %v855
      %v857 = vlaneseq
      %v858 = vshrl.u32 %v857, 7
      %v859 = vsub.s32 %v856, %v858
      %v860 = vrot.slane %v853, %v859
      %v861 = vcombine.low %v852, %v860
      %v862 = vcombine.high %v852, %v860
      %v864 = vunpack.c.l.s4 1934713408
      %v865 = vunpack.c.0.s8 %v864
      %v866 = vlaneseq
      %v867 = vshrl.u32 %v866, 7
      %v868 = vsub.s32 %v865, %v867
      %v869 = vrot.slane %v861, %v868
      %v871 = vunpack.c.l.s4 1934713408
      %v872 = vunpack.c.0.s8 %v871
      %v873 = vlaneseq
      %v874 = vshrl.u32 %v873, 7
      %v875 = vsub.s32 %v872, %v874
      %v876 = vrot.slane %v862, %v875
      %v877 = vcombine.high %v869, 0
      %v878 = vcombine.high %v876, 0
      %v879 = vcombine.low %v815, %v823
      %v881 = vunpack.c.l.s4 1983009808
      %v882 = vunpack.c.0.s8 %v881
      %v883 = vlaneseq
      %v884 = vshrl.u32 %v883, 7
      %v885 = vsub.s32 %v882, %v884
      %v886 = vrot.slane %v879, %v885
      %v887 = vcombine.low %v819, %v827
      %v889 = vunpack.c.l.s4 1983009808
      %v890 = vunpack.c.0.s8 %v889
      %v891 = vlaneseq
      %v892 = vshrl.u32 %v891, 7
      %v893 = vsub.s32 %v890, %v892
      %v894 = vrot.slane %v887, %v893
      %v895 = vcombine.low %v886, %v894
      %v896 = vcombine.high %v886, %v894
      %v898 = vunpack.c.l.s4 1934713408
      %v899 = vunpack.c.0.s8 %v898
      %v900 = vlaneseq
      %v901 = vshrl.u32 %v900, 7
      %v902 = vsub.s32 %v899, %v901
      %v903 = vrot.slane %v895, %v902
      %v905 = vunpack.c.l.s4 1934713408
      %v906 = vunpack.c.0.s8 %v905
      %v907 = vlaneseq
      %v908 = vshrl.u32 %v907, 7
      %v909 = vsub.s32 %v906, %v908
      %v910 = vrot.slane %v896, %v909
      %v911 = vcombine.high %v903, 0
      %v912 = vcombine.high %v910, 0
      %v913 = vcombine.low %v829, %v837
      %v915 = vunpack.c.l.s4 1983009808
      %v916 = vunpack.c.0.s8 %v915
      %v917 = vlaneseq
      %v918 = vshrl.u32 %v917, 7
      %v919 = vsub.s32 %v916, %v918
      %v920 = vrot.slane %v913, %v919
      %v921 = vcombine.low %v833, %v841
      %v923 = vunpack.c.l.s4 1983009808
      %v924 = vunpack.c.0.s8 %v923
      %v925 = vlaneseq
      %v926 = vshrl.u32 %v925, 7
      %v927 = vsub.s32 %v924, %v926
      %v928 = vrot.slane %v921, %v927
      %v929 = vcombine.low %v920, %v928
      %v930 = vcombine.high %v920, %v928
      %v932 = vunpack.c.l.s4 1934713408
      %v933 = vunpack.c.0.s8 %v932
      %v934 = vlaneseq
      %v935 = vshrl.u32 %v934, 7
      %v936 = vsub.s32 %v933, %v935
      %v937 = vrot.slane %v929, %v936
      %v939 = vunpack.c.l.s4 1934713408
      %v940 = vunpack.c.0.s8 %v939
      %v941 = vlaneseq
      %v942 = vshrl.u32 %v941, 7
      %v943 = vsub.s32 %v940, %v942
      %v944 = vrot.slane %v930, %v943
      %v945 = vcombine.high %v937, 0
      %v946 = vcombine.high %v944, 0
      %v947 = vcombine.low %v831, %v839
      %v949 = vunpack.c.l.s4 1983009808
      %v950 = vunpack.c.0.s8 %v949
      %v951 = vlaneseq
      %v952 = vshrl.u32 %v951, 7
      %v953 = vsub.s32 %v950, %v952
      %v954 = vrot.slane %v947, %v953
      %v955 = vcombine.low %v835, %v843
      %v957 = vunpack.c.l.s4 1983009808
      %v958 = vunpack.c.0.s8 %v957
      %v959 = vlaneseq
      %v960 = vshrl.u32 %v959, 7
      %v961 = vsub.s32 %v958, %v960
      %v962 = vrot.slane %v955, %v961
      %v963 = vcombine.low %v954, %v962
      %v964 = vcombine.high %v954, %v962
      %v966 = vunpack.c.l.s4 1934713408
      %v967 = vunpack.c.0.s8 %v966
      %v968 = vlaneseq
      %v969 = vshrl.u32 %v968, 7
      %v970 = vsub.s32 %v967, %v969
      %v971 = vrot.slane %v963, %v970
      %v973 = vunpack.c.l.s4 1934713408
      %v974 = vunpack.c.0.s8 %v973
      %v975 = vlaneseq
      %v976 = vshrl.u32 %v975, 7
      %v977 = vsub.s32 %v974, %v976
      %v978 = vrot.slane %v964, %v977
      %v979 = vcombine.high %v971, 0
      %v980 = vcombine.high %v978, 0
      %v981 = vcombine.low %v814, %v822
      %v983 = vunpack.c.l.s4 1983009808
      %v984 = vunpack.c.0.s8 %v983
      %v985 = vlaneseq
      %v986 = vshrl.u32 %v985, 7
      %v987 = vsub.s32 %v984, %v986
      %v988 = vrot.slane %v981, %v987
      %v989 = vcombine.low %v818, %v826
      %v991 = vunpack.c.l.s4 1983009808
      %v992 = vunpack.c.0.s8 %v991
      %v993 = vlaneseq
      %v994 = vshrl.u32 %v993, 7
      %v995 = vsub.s32 %v992, %v994
      %v996 = vrot.slane %v989, %v995
      %v997 = vcombine.low %v988, %v996
      %v998 = vcombine.high %v988, %v996
      %v1000 = vunpack.c.l.s4 1934713408
      %v1001 = vunpack.c.0.s8 %v1000
      %v1002 = vlaneseq
      %v1003 = vshrl.u32 %v1002, 7
      %v1004 = vsub.s32 %v1001, %v1003
      %v1005 = vrot.slane %v997, %v1004
      %v1007 = vunpack.c.l.s4 1934713408
      %v1008 = vunpack.c.0.s8 %v1007
      %v1009 = vlaneseq
      %v1010 = vshrl.u32 %v1009, 7
      %v1011 = vsub.s32 %v1008, %v1010
      %v1012 = vrot.slane %v998, %v1011
      %v1013 = vcombine.high %v1005, 0
      %v1014 = vcombine.high %v1012, 0
      %v1015 = vcombine.low %v816, %v824
      %v1017 = vunpack.c.l.s4 1983009808
      %v1018 = vunpack.c.0.s8 %v1017
      %v1019 = vlaneseq
      %v1020 = vshrl.u32 %v1019, 7
      %v1021 = vsub.s32 %v1018, %v1020
      %v1022 = vrot.slane %v1015, %v1021
      %v1023 = vcombine.low %v820, %v828
      %v1025 = vunpack.c.l.s4 1983009808
      %v1026 = vunpack.c.0.s8 %v1025
      %v1027 = vlaneseq
      %v1028 = vshrl.u32 %v1027, 7
      %v1029 = vsub.s32 %v1026, %v1028
      %v1030 = vrot.slane %v1023, %v1029
      %v1031 = vcombine.low %v1022, %v1030
      %v1032 = vcombine.high %v1022, %v1030
      %v1034 = vunpack.c.l.s4 1934713408
      %v1035 = vunpack.c.0.s8 %v1034
      %v1036 = vlaneseq
      %v1037 = vshrl.u32 %v1036, 7
      %v1038 = vsub.s32 %v1035, %v1037
      %v1039 = vrot.slane %v1031, %v1038
      %v1041 = vunpack.c.l.s4 1934713408
      %v1042 = vunpack.c.0.s8 %v1041
      %v1043 = vlaneseq
      %v1044 = vshrl.u32 %v1043, 7
      %v1045 = vsub.s32 %v1042, %v1044
      %v1046 = vrot.slane %v1032, %v1045
      %v1047 = vcombine.high %v1039, 0
      %v1048 = vcombine.high %v1046, 0
      %v1049 = vcombine.low %v830, %v838
      %v1051 = vunpack.c.l.s4 1983009808
      %v1052 = vunpack.c.0.s8 %v1051
      %v1053 = vlaneseq
      %v1054 = vshrl.u32 %v1053, 7
      %v1055 = vsub.s32 %v1052, %v1054
      %v1056 = vrot.slane %v1049, %v1055
      %v1057 = vcombine.low %v834, %v842
      %v1059 = vunpack.c.l.s4 1983009808
      %v1060 = vunpack.c.0.s8 %v1059
      %v1061 = vlaneseq
      %v1062 = vshrl.u32 %v1061, 7
      %v1063 = vsub.s32 %v1060, %v1062
      %v1064 = vrot.slane %v1057, %v1063
      %v1065 = vcombine.low %v1056, %v1064
      %v1066 = vcombine.high %v1056, %v1064
      %v1068 = vunpack.c.l.s4 1934713408
      %v1069 = vunpack.c.0.s8 %v1068
      %v1070 = vlaneseq
      %v1071 = vshrl.u32 %v1070, 7
      %v1072 = vsub.s32 %v1069, %v1071
      %v1073 = vrot.slane %v1065, %v1072
      %v1075 = vunpack.c.l.s4 1934713408
      %v1076 = vunpack.c.0.s8 %v1075
      %v1077 = vlaneseq
      %v1078 = vshrl.u32 %v1077, 7
      %v1079 = vsub.s32 %v1076, %v1078
      %v1080 = vrot.slane %v1066, %v1079
      %v1081 = vcombine.high %v1073, 0
      %v1082 = vcombine.high %v1080, 0
      %v1083 = vcombine.low %v832, %v840
      %v1085 = vunpack.c.l.s4 1983009808
      %v1086 = vunpack.c.0.s8 %v1085
      %v1087 = vlaneseq
      %v1088 = vshrl.u32 %v1087, 7
      %v1089 = vsub.s32 %v1086, %v1088
      %v1090 = vrot.slane %v1083, %v1089
      %v1091 = vcombine.low %v836, %v844
      %v1093 = vunpack.c.l.s4 1983009808
      %v1094 = vunpack.c.0.s8 %v1093
      %v1095 = vlaneseq
      %v1096 = vshrl.u32 %v1095, 7
      %v1097 = vsub.s32 %v1094, %v1096
      %v1098 = vrot.slane %v1091, %v1097
      %v1099 = vcombine.low %v1090, %v1098
      %v1100 = vcombine.high %v1090, %v1098
      %v1102 = vunpack.c.l.s4 1934713408
      %v1103 = vunpack.c.0.s8 %v1102
      %v1104 = vlaneseq
      %v1105 = vshrl.u32 %v1104, 7
      %v1106 = vsub.s32 %v1103, %v1105
      %v1107 = vrot.slane %v1099, %v1106
      %v1109 = vunpack.c.l.s4 1934713408
      %v1110 = vunpack.c.0.s8 %v1109
      %v1111 = vlaneseq
      %v1112 = vshrl.u32 %v1111, 7
      %v1113 = vsub.s32 %v1110, %v1112
      %v1114 = vrot.slane %v1100, %v1113
      %v1115 = vcombine.high %v1107, 0
      %v1116 = vcombine.high %v1114, 0
      %v1119 = vpack.i.b16 %v903, %v869
      %v1120 = vshrl.u32 %v869, 16
      %v1121 = vshrl.u32 %v903, 16
      %v1122 = vpack.i.b16 %v1121, %v1120
      %v1125 = vpack.i.b16 %v911, %v877
      %v1126 = vshrl.u32 %v877, 16
      %v1127 = vshrl.u32 %v911, 16
      %v1128 = vpack.i.b16 %v1127, %v1126
      %v1131 = vpack.i.b16 %v910, %v876
      %v1132 = vshrl.u32 %v876, 16
      %v1133 = vshrl.u32 %v910, 16
      %v1134 = vpack.i.b16 %v1133, %v1132
      %v1137 = vpack.i.b16 %v912, %v878
      %v1138 = vshrl.u32 %v878, 16
      %v1139 = vshrl.u32 %v912, 16
      %v1140 = vpack.i.b16 %v1139, %v1138
      %v1143 = vpack.i.b16 %v1039, %v1005
      %v1144 = vshrl.u32 %v1005, 16
      %v1145 = vshrl.u32 %v1039, 16
      %v1146 = vpack.i.b16 %v1145, %v1144
      %v1149 = vpack.i.b16 %v1047, %v1013
      %v1150 = vshrl.u32 %v1013, 16
      %v1151 = vshrl.u32 %v1047, 16
      %v1152 = vpack.i.b16 %v1151, %v1150
      %v1155 = vpack.i.b16 %v1046, %v1012
      %v1156 = vshrl.u32 %v1012, 16
      %v1157 = vshrl.u32 %v1046, 16
      %v1158 = vpack.i.b16 %v1157, %v1156
      %v1161 = vpack.i.b16 %v1048, %v1014
      %v1162 = vshrl.u32 %v1014, 16
      %v1163 = vshrl.u32 %v1048, 16
      %v1164 = vpack.i.b16 %v1163, %v1162
      %v1167 = vpack.i.b16 %v971, %v937
      %v1168 = vshrl.u32 %v937, 16
      %v1169 = vshrl.u32 %v971, 16
      %v1170 = vpack.i.b16 %v1169, %v1168
      %v1173 = vpack.i.b16 %v979, %v945
      %v1174 = vshrl.u32 %v945, 16
      %v1175 = vshrl.u32 %v979, 16
      %v1176 = vpack.i.b16 %v1175, %v1174
      %v1179 = vpack.i.b16 %v978, %v944
      %v1180 = vshrl.u32 %v944, 16
      %v1181 = vshrl.u32 %v978, 16
      %v1182 = vpack.i.b16 %v1181, %v1180
      %v1185 = vpack.i.b16 %v980, %v946
      %v1186 = vshrl.u32 %v946, 16
      %v1187 = vshrl.u32 %v980, 16
      %v1188 = vpack.i.b16 %v1187, %v1186
      %v1191 = vpack.i.b16 %v1107, %v1073
      %v1192 = vshrl.u32 %v1073, 16
      %v1193 = vshrl.u32 %v1107, 16
      %v1194 = vpack.i.b16 %v1193, %v1192
      %v1197 = vpack.i.b16 %v1115, %v1081
      %v1198 = vshrl.u32 %v1081, 16
      %v1199 = vshrl.u32 %v1115, 16
      %v1200 = vpack.i.b16 %v1199, %v1198
      %v1203 = vpack.i.b16 %v1114, %v1080
      %v1204 = vshrl.u32 %v1080, 16
      %v1205 = vshrl.u32 %v1114, 16
      %v1206 = vpack.i.b16 %v1205, %v1204
      %v1209 = vpack.i.b16 %v1116, %v1082
      %v1210 = vshrl.u32 %v1082, 16
      %v1211 = vshrl.u32 %v1116, 16
      %v1212 = vpack.i.b16 %v1211, %v1210
      %v1213 = vld [vmem:[%s2] sm:$0xff]
      %v1214 = vld [vmem:[%s2 + $0x8] sm:$0xff]
      %v1215 = vld [vmem:[%s2 + $0x10] sm:$0xff]
      %v1216 = vld [vmem:[%s2 + $0x18] sm:$0xff]
      %v1217 = vld [vmem:[%s2 + $0x20] sm:$0xff]
      %v1218 = vld [vmem:[%s2 + $0x28] sm:$0xff]
      %v1219 = vld [vmem:[%s2 + $0x30] sm:$0xff]
      %v1220 = vld [vmem:[%s2 + $0x38] sm:$0xff]
      %v1221 = vld [vmem:[%s2 + $0x40] sm:$0xff]
      %v1222 = vld [vmem:[%s2 + $0x48] sm:$0xff]
      %v1223 = vld [vmem:[%s2 + $0x50] sm:$0xff]
      %v1224 = vld [vmem:[%s2 + $0x58] sm:$0xff]
      %v1225 = vld [vmem:[%s2 + $0x60] sm:$0xff]
      %v1226 = vld [vmem:[%s2 + $0x68] sm:$0xff]
      %v1227 = vld [vmem:[%s2 + $0x70] sm:$0xff]
      %v1228 = vld [vmem:[%s2 + $0x78] sm:$0xff]
      %v1229 = vld [vmem:[%s2 + $0x80] sm:$0xff]
      %v1230 = vld [vmem:[%s2 + $0x88] sm:$0xff]
      %v1231 = vld [vmem:[%s2 + $0x90] sm:$0xff]
      %v1232 = vld [vmem:[%s2 + $0x98] sm:$0xff]
      %v1233 = vld [vmem:[%s2 + $0xa0] sm:$0xff]
      %v1234 = vld [vmem:[%s2 + $0xa8] sm:$0xff]
      %v1235 = vld [vmem:[%s2 + $0xb0] sm:$0xff]
      %v1236 = vld [vmem:[%s2 + $0xb8] sm:$0xff]
      %v1237 = vld [vmem:[%s2 + $0xc0] sm:$0xff]
      %v1238 = vld [vmem:[%s2 + $0xc8] sm:$0xff]
      %v1239 = vld [vmem:[%s2 + $0xd0] sm:$0xff]
      %v1240 = vld [vmem:[%s2 + $0xd8] sm:$0xff]
      %v1241 = vld [vmem:[%s2 + $0xe0] sm:$0xff]
      %v1242 = vld [vmem:[%s2 + $0xe8] sm:$0xff]
      %v1243 = vld [vmem:[%s2 + $0xf0] sm:$0xff]
      %v1244 = vld [vmem:[%s2 + $0xf8] sm:$0xff]
      %v1245 = vld [vmem:[%s2 + $0x100] sm:$0xff]
      %v1246 = vld [vmem:[%s2 + $0x108] sm:$0xff]
      %v1247 = vld [vmem:[%s2 + $0x110] sm:$0xff]
      %v1248 = vld [vmem:[%s2 + $0x118] sm:$0xff]
      %v1249 = vld [vmem:[%s2 + $0x120] sm:$0xff]
      %v1250 = vld [vmem:[%s2 + $0x128] sm:$0xff]
      %v1251 = vld [vmem:[%s2 + $0x130] sm:$0xff]
      %v1252 = vld [vmem:[%s2 + $0x138] sm:$0xff]
      %v1253 = vld [vmem:[%s2 + $0x140] sm:$0xff]
      %v1254 = vld [vmem:[%s2 + $0x148] sm:$0xff]
      %v1255 = vld [vmem:[%s2 + $0x150] sm:$0xff]
      %v1256 = vld [vmem:[%s2 + $0x158] sm:$0xff]
      %v1257 = vld [vmem:[%s2 + $0x160] sm:$0xff]
      %v1258 = vld [vmem:[%s2 + $0x168] sm:$0xff]
      %v1259 = vld [vmem:[%s2 + $0x170] sm:$0xff]
      %v1260 = vld [vmem:[%s2 + $0x178] sm:$0xff]
      %v1261 = vld [vmem:[%s2 + $0x180] sm:$0xff]
      %v1262 = vld [vmem:[%s2 + $0x188] sm:$0xff]
      %v1263 = vld [vmem:[%s2 + $0x190] sm:$0xff]
      %v1264 = vld [vmem:[%s2 + $0x198] sm:$0xff]
      %v1265 = vld [vmem:[%s2 + $0x1a0] sm:$0xff]
      %v1266 = vld [vmem:[%s2 + $0x1a8] sm:$0xff]
      %v1267 = vld [vmem:[%s2 + $0x1b0] sm:$0xff]
      %v1268 = vld [vmem:[%s2 + $0x1b8] sm:$0xff]
      %v1269 = vld [vmem:[%s2 + $0x1c0] sm:$0xff]
      %v1270 = vld [vmem:[%s2 + $0x1c8] sm:$0xff]
      %v1271 = vld [vmem:[%s2 + $0x1d0] sm:$0xff]
      %v1272 = vld [vmem:[%s2 + $0x1d8] sm:$0xff]
      %v1273 = vld [vmem:[%s2 + $0x1e0] sm:$0xff]
      %v1274 = vld [vmem:[%s2 + $0x1e8] sm:$0xff]
      %v1275 = vld [vmem:[%s2 + $0x1f0] sm:$0xff]
      %v1276 = vld [vmem:[%s2 + $0x1f8] sm:$0xff]
      %v1277 = vld [vmem:[%s2 + $0x200] sm:$0xff]
      %v1278 = vld [vmem:[%s2 + $0x208] sm:$0xff]
      %v1279 = vld [vmem:[%s2 + $0x210] sm:$0xff]
      %v1280 = vld [vmem:[%s2 + $0x218] sm:$0xff]
      %v1281 = vld [vmem:[%s2 + $0x220] sm:$0xff]
      %v1282 = vld [vmem:[%s2 + $0x228] sm:$0xff]
      %v1283 = vld [vmem:[%s2 + $0x230] sm:$0xff]
      %v1284 = vld [vmem:[%s2 + $0x238] sm:$0xff]
      %v1285 = vld [vmem:[%s2 + $0x240] sm:$0xff]
      %v1286 = vld [vmem:[%s2 + $0x248] sm:$0xff]
      %v1287 = vld [vmem:[%s2 + $0x250] sm:$0xff]
      %v1288 = vld [vmem:[%s2 + $0x258] sm:$0xff]
      %v1289 = vld [vmem:[%s2 + $0x260] sm:$0xff]
      %v1290 = vld [vmem:[%s2 + $0x268] sm:$0xff]
      %v1291 = vld [vmem:[%s2 + $0x270] sm:$0xff]
      %v1292 = vld [vmem:[%s2 + $0x278] sm:$0xff]
      %v1293 = vld [vmem:[%s3] sm:$0xf]
      %v1294 = vld [vmem:[%s3 + $0x4] sm:$0xf]
      %v1295 = vld [vmem:[%s3 + $0x8] sm:$0xf]
      %v1296 = vld [vmem:[%s3 + $0xc] sm:$0xf]
      %v1297 = vld [vmem:[%s3 + $0x10] sm:$0xf]
      %v1298 = vld [vmem:[%s3 + $0x14] sm:$0xf]
      %v1299 = vld [vmem:[%s3 + $0x18] sm:$0xf]
      %v1300 = vld [vmem:[%s3 + $0x1c] sm:$0xf]
      %v1301 = vld [vmem:[%s3 + $0x20] sm:$0xf]
      %v1302 = vld [vmem:[%s3 + $0x24] sm:$0xf]
      %v1303 = vld [vmem:[%s3 + $0x28] sm:$0xf]
      %v1304 = vld [vmem:[%s3 + $0x2c] sm:$0xf]
      %v1305 = vld [vmem:[%s3 + $0x30] sm:$0xf]
      %v1306 = vld [vmem:[%s3 + $0x34] sm:$0xf]
      %v1307 = vld [vmem:[%s3 + $0x38] sm:$0xf]
      %v1308 = vld [vmem:[%s3 + $0x3c] sm:$0xf]
      %v1309 = vld [vmem:[%s3 + $0x40] sm:$0xf]
      %v1310 = vld [vmem:[%s3 + $0x44] sm:$0xf]
      %v1311 = vld [vmem:[%s3 + $0x48] sm:$0xf]
      %v1312 = vld [vmem:[%s3 + $0x4c] sm:$0xf]
      %v1313 = vld [vmem:[%s3 + $0x50] sm:$0xf]
      %v1314 = vld [vmem:[%s3 + $0x54] sm:$0xf]
      %v1315 = vld [vmem:[%s3 + $0x58] sm:$0xf]
      %v1316 = vld [vmem:[%s3 + $0x5c] sm:$0xf]
      %v1317 = vld [vmem:[%s3 + $0x60] sm:$0xf]
      %v1318 = vld [vmem:[%s3 + $0x64] sm:$0xf]
      %v1319 = vld [vmem:[%s3 + $0x68] sm:$0xf]
      %v1320 = vld [vmem:[%s3 + $0x6c] sm:$0xf]
      %v1321 = vld [vmem:[%s3 + $0x70] sm:$0xf]
      %v1322 = vld [vmem:[%s3 + $0x74] sm:$0xf]
      %v1323 = vld [vmem:[%s3 + $0x78] sm:$0xf]
      %v1324 = vld [vmem:[%s3 + $0x7c] sm:$0xf]
      %v1325 = vld [vmem:[%s3 + $0x80] sm:$0xf]
      %v1326 = vld [vmem:[%s3 + $0x84] sm:$0xf]
      %v1327 = vld [vmem:[%s3 + $0x88] sm:$0xf]
      %v1328 = vld [vmem:[%s3 + $0x8c] sm:$0xf]
      %v1329 = vld [vmem:[%s3 + $0x90] sm:$0xf]
      %v1330 = vld [vmem:[%s3 + $0x94] sm:$0xf]
      %v1331 = vld [vmem:[%s3 + $0x98] sm:$0xf]
      %v1332 = vld [vmem:[%s3 + $0x9c] sm:$0xf]
      %v1333 = vld [vmem:[%s3 + $0xa0] sm:$0xf]
      %v1334 = vld [vmem:[%s3 + $0xa4] sm:$0xf]
      %v1335 = vld [vmem:[%s3 + $0xa8] sm:$0xf]
      %v1336 = vld [vmem:[%s3 + $0xac] sm:$0xf]
      %v1337 = vld [vmem:[%s3 + $0xb0] sm:$0xf]
      %v1338 = vld [vmem:[%s3 + $0xb4] sm:$0xf]
      %v1339 = vld [vmem:[%s3 + $0xb8] sm:$0xf]
      %v1340 = vld [vmem:[%s3 + $0xbc] sm:$0xf]
      %v1341 = vld [vmem:[%s3 + $0xc0] sm:$0xf]
      %v1342 = vld [vmem:[%s3 + $0xc4] sm:$0xf]
      %v1343 = vld [vmem:[%s3 + $0xc8] sm:$0xf]
      %v1344 = vld [vmem:[%s3 + $0xcc] sm:$0xf]
      %v1345 = vld [vmem:[%s3 + $0xd0] sm:$0xf]
      %v1346 = vld [vmem:[%s3 + $0xd4] sm:$0xf]
      %v1347 = vld [vmem:[%s3 + $0xd8] sm:$0xf]
      %v1348 = vld [vmem:[%s3 + $0xdc] sm:$0xf]
      %v1349 = vld [vmem:[%s3 + $0xe0] sm:$0xf]
      %v1350 = vld [vmem:[%s3 + $0xe4] sm:$0xf]
      %v1351 = vld [vmem:[%s3 + $0xe8] sm:$0xf]
      %v1352 = vld [vmem:[%s3 + $0xec] sm:$0xf]
      %v1353 = vld [vmem:[%s3 + $0xf0] sm:$0xf]
      %v1354 = vld [vmem:[%s3 + $0xf4] sm:$0xf]
      %v1355 = vld [vmem:[%s3 + $0xf8] sm:$0xf]
      %v1356 = vld [vmem:[%s3 + $0xfc] sm:$0xf]
      %v1357 = vld [vmem:[%s3 + $0x100] sm:$0xf]
      %v1358 = vld [vmem:[%s3 + $0x104] sm:$0xf]
      %v1359 = vld [vmem:[%s3 + $0x108] sm:$0xf]
      %v1360 = vld [vmem:[%s3 + $0x10c] sm:$0xf]
      %v1361 = vld [vmem:[%s3 + $0x110] sm:$0xf]
      %v1362 = vld [vmem:[%s3 + $0x114] sm:$0xf]
      %v1363 = vld [vmem:[%s3 + $0x118] sm:$0xf]
      %v1364 = vld [vmem:[%s3 + $0x11c] sm:$0xf]
      %v1365 = vld [vmem:[%s3 + $0x120] sm:$0xf]
      %v1366 = vld [vmem:[%s3 + $0x124] sm:$0xf]
      %v1367 = vld [vmem:[%s3 + $0x128] sm:$0xf]
      %v1368 = vld [vmem:[%s3 + $0x12c] sm:$0xf]
      %v1369 = vld [vmem:[%s3 + $0x130] sm:$0xf]
      %v1370 = vld [vmem:[%s3 + $0x134] sm:$0xf]
      %v1371 = vld [vmem:[%s3 + $0x138] sm:$0xf]
      %v1372 = vld [vmem:[%s3 + $0x13c] sm:$0xf]
      %v1373 = vld [vmem:[%s4] sm:$0xff]
      %v1374 = vld [vmem:[%s4 + $0x8] sm:$0xf]
      %v1375 = vld [vmem:[%s4 + $0xc] sm:$0xff]
      %v1376 = vld [vmem:[%s4 + $0x14] sm:$0xf]
      %v1377 = vld [vmem:[%s4 + $0x18] sm:$0xff]
      %v1378 = vld [vmem:[%s4 + $0x20] sm:$0xf]
      %v1379 = vld [vmem:[%s4 + $0x24] sm:$0xff]
      %v1380 = vld [vmem:[%s4 + $0x2c] sm:$0xf]
      %v1381 = vld [vmem:[%s4 + $0x30] sm:$0xff]
      %v1382 = vld [vmem:[%s4 + $0x38] sm:$0xf]
      %v1383 = vld [vmem:[%s4 + $0x3c] sm:$0xff]
      %v1384 = vld [vmem:[%s4 + $0x44] sm:$0xf]
      %v1385 = vld [vmem:[%s4 + $0x48] sm:$0xff]
      %v1386 = vld [vmem:[%s4 + $0x50] sm:$0xf]
      %v1387 = vld [vmem:[%s4 + $0x54] sm:$0xff]
      %v1388 = vld [vmem:[%s4 + $0x5c] sm:$0xf]
      %v1389 = vld [vmem:[%s4 + $0x60] sm:$0xff]
      %v1390 = vld [vmem:[%s4 + $0x68] sm:$0xf]
      %v1391 = vld [vmem:[%s4 + $0x6c] sm:$0xff]
      %v1392 = vld [vmem:[%s4 + $0x74] sm:$0xf]
      %v1393 = vld [vmem:[%s4 + $0x78] sm:$0xff]
      %v1394 = vld [vmem:[%s4 + $0x80] sm:$0xf]
      %v1395 = vld [vmem:[%s4 + $0x84] sm:$0xff]
      %v1396 = vld [vmem:[%s4 + $0x8c] sm:$0xf]
      %v1397 = vld [vmem:[%s4 + $0x90] sm:$0xff]
      %v1398 = vld [vmem:[%s4 + $0x98] sm:$0xf]
      %v1399 = vld [vmem:[%s4 + $0x9c] sm:$0xff]
      %v1400 = vld [vmem:[%s4 + $0xa4] sm:$0xf]
      %v1401 = vld [vmem:[%s4 + $0xa8] sm:$0xff]
      %v1402 = vld [vmem:[%s4 + $0xb0] sm:$0xf]
      %v1403 = vld [vmem:[%s4 + $0xb4] sm:$0xff]
      %v1404 = vld [vmem:[%s4 + $0xbc] sm:$0xf]
      %v1405 = vld [vmem:[%s4 + $0xc0] sm:$0xff]
      %v1406 = vld [vmem:[%s4 + $0xc8] sm:$0xf]
      %v1407 = vld [vmem:[%s4 + $0xcc] sm:$0xff]
      %v1408 = vld [vmem:[%s4 + $0xd4] sm:$0xf]
      %v1409 = vld [vmem:[%s4 + $0xd8] sm:$0xff]
      %v1410 = vld [vmem:[%s4 + $0xe0] sm:$0xf]
      %v1411 = vld [vmem:[%s4 + $0xe4] sm:$0xff]
      %v1412 = vld [vmem:[%s4 + $0xec] sm:$0xf]
      %v1413 = vld [vmem:[%s4 + $0xf0] sm:$0xff]
      %v1414 = vld [vmem:[%s4 + $0xf8] sm:$0xf]
      %v1415 = vld [vmem:[%s4 + $0xfc] sm:$0xff]
      %v1416 = vld [vmem:[%s4 + $0x104] sm:$0xf]
      %v1417 = vld [vmem:[%s4 + $0x108] sm:$0xff]
      %v1418 = vld [vmem:[%s4 + $0x110] sm:$0xf]
      %v1419 = vld [vmem:[%s4 + $0x114] sm:$0xff]
      %v1420 = vld [vmem:[%s4 + $0x11c] sm:$0xf]
      %v1421 = vld [vmem:[%s4 + $0x120] sm:$0xff]
      %v1422 = vld [vmem:[%s4 + $0x128] sm:$0xf]
      %v1423 = vld [vmem:[%s4 + $0x12c] sm:$0xff]
      %v1424 = vld [vmem:[%s4 + $0x134] sm:$0xf]
      %v1425 = vld [vmem:[%s4 + $0x138] sm:$0xff]
      %v1426 = vld [vmem:[%s4 + $0x140] sm:$0xf]
      %v1427 = vld [vmem:[%s4 + $0x144] sm:$0xff]
      %v1428 = vld [vmem:[%s4 + $0x14c] sm:$0xf]
      %v1429 = vld [vmem:[%s4 + $0x150] sm:$0xff]
      %v1430 = vld [vmem:[%s4 + $0x158] sm:$0xf]
      %v1431 = vld [vmem:[%s4 + $0x15c] sm:$0xff]
      %v1432 = vld [vmem:[%s4 + $0x164] sm:$0xf]
      %v1433 = vld [vmem:[%s4 + $0x168] sm:$0xff]
      %v1434 = vld [vmem:[%s4 + $0x170] sm:$0xf]
      %v1435 = vld [vmem:[%s4 + $0x174] sm:$0xff]
      %v1436 = vld [vmem:[%s4 + $0x17c] sm:$0xf]
      %v1437 = vld [vmem:[%s4 + $0x180] sm:$0xff]
      %v1438 = vld [vmem:[%s4 + $0x188] sm:$0xf]
      %v1439 = vld [vmem:[%s4 + $0x18c] sm:$0xff]
      %v1440 = vld [vmem:[%s4 + $0x194] sm:$0xf]
      %v1441 = vld [vmem:[%s4 + $0x198] sm:$0xff]
      %v1442 = vld [vmem:[%s4 + $0x1a0] sm:$0xf]
      %v1443 = vld [vmem:[%s4 + $0x1a4] sm:$0xff]
      %v1444 = vld [vmem:[%s4 + $0x1ac] sm:$0xf]
      %v1445 = vld [vmem:[%s4 + $0x1b0] sm:$0xff]
      %v1446 = vld [vmem:[%s4 + $0x1b8] sm:$0xf]
      %v1447 = vld [vmem:[%s4 + $0x1bc] sm:$0xff]
      %v1448 = vld [vmem:[%s4 + $0x1c4] sm:$0xf]
      %v1449 = vld [vmem:[%s4 + $0x1c8] sm:$0xff]
      %v1450 = vld [vmem:[%s4 + $0x1d0] sm:$0xf]
      %v1451 = vld [vmem:[%s4 + $0x1d4] sm:$0xff]
      %v1452 = vld [vmem:[%s4 + $0x1dc] sm:$0xf]
      %v1453 = vld [vmem:[%s5] sm:$0x7]
      %v1454 = vunpack.c.l.b16 %v1119
      %v1455 = vunpack.c.l.b16 %v1167
      %v1456 = vunpack.c.l.b16 %v1122
      %v1457 = vunpack.c.l.b16 %v1170
      %v1458 = vunpack.c.l.b16 %v1125
      %v1459 = vunpack.c.l.b16 %v1173
      %v1460 = vunpack.c.l.b16 %v1128
      %v1461 = vunpack.c.l.b16 %v1176
      %v1462 = vunpack.c.l.b16 %v1131
      %v1463 = vunpack.c.l.b16 %v1179
      %v1464 = vunpack.c.l.b16 %v1134
      %v1465 = vunpack.c.l.b16 %v1182
      %v1466 = vunpack.c.l.b16 %v1137
      %v1467 = vunpack.c.l.b16 %v1185
      %v1468 = vunpack.c.l.b16 %v1140
      %v1469 = vunpack.c.l.b16 %v1188
      %v1470 = vunpack.c.l.b16 %v1143
      %v1471 = vunpack.c.l.b16 %v1191
      %v1472 = vunpack.c.l.b16 %v1146
      %v1473 = vunpack.c.l.b16 %v1194
      %v1474 = vunpack.c.l.b16 %v1149
      %v1475 = vunpack.c.l.b16 %v1197
      %v1476 = vunpack.c.l.b16 %v1152
      %v1477 = vunpack.c.l.b16 %v1200
      %v1478 = vunpack.c.l.b16 %v1155
      %v1479 = vunpack.c.l.b16 %v1203
      %v1480 = vunpack.c.l.b16 %v1158
      %v1481 = vunpack.c.l.b16 %v1206
      %v1482 = vunpack.c.l.b16 %v1161
      %v1483 = vunpack.c.l.b16 %v1209
      %v1484 = vunpack.c.l.b16 %v1164
      %v1485 = vunpack.c.l.b16 %v1212
      %v1486 = vpack.c.b16 %v1455, %v1454
      %v1487 = vpack.c.b16 %v1457, %v1456
      %v1488 = vpack.c.b16 %v1459, %v1458
      %v1489 = vpack.c.b16 %v1461, %v1460
      %v1490 = vpack.c.b16 %v1463, %v1462
      %v1491 = vpack.c.b16 %v1465, %v1464
      %v1492 = vpack.c.b16 %v1467, %v1466
      %v1493 = vpack.c.b16 %v1469, %v1468
      %v1494 = vpack.c.b16 %v1471, %v1470
      %v1495 = vpack.c.b16 %v1473, %v1472
      %v1496 = vpack.c.b16 %v1475, %v1474
      %v1497 = vpack.c.b16 %v1477, %v1476
      %v1498 = vpack.c.b16 %v1479, %v1478
      %v1499 = vpack.c.b16 %v1481, %v1480
      %v1500 = vpack.c.b16 %v1483, %v1482
      %v1501 = vpack.c.b16 %v1485, %v1484
      %1503 = vrot.lane.b32.xlu0 0, 64
      %v1504 = vpop.permute.xlu0 %1503
      %1505 = vrot.lane.b32.xlu0 %v1486, 64
      %v1506 = vpop.permute.xlu0 %1505
      %1507 = vrot.lane.b32.xlu0 %v1487, 64
      %v1508 = vpop.permute.xlu0 %1507
      %1509 = vrot.lane.b32.xlu0 %v1488, 64
      %v1510 = vpop.permute.xlu0 %1509
      %1511 = vrot.lane.b32.xlu0 %v1489, 64
      %v1512 = vpop.permute.xlu0 %1511
      %1513 = vrot.lane.b32.xlu0 %v1490, 64
      %v1514 = vpop.permute.xlu0 %1513
      %1515 = vrot.lane.b32.xlu0 %v1491, 64
      %v1516 = vpop.permute.xlu0 %1515
      %1517 = vrot.lane.b32.xlu0 %v1492, 64
      %v1518 = vpop.permute.xlu0 %1517
      %1519 = vrot.lane.b32.xlu0 %v1493, 64
      %v1520 = vpop.permute.xlu0 %1519
      %1521 = vrot.lane.b32.xlu0 %v1494, 64
      %v1522 = vpop.permute.xlu0 %1521
      %1523 = vrot.lane.b32.xlu0 %v1495, 64
      %v1524 = vpop.permute.xlu0 %1523
      %1525 = vrot.lane.b32.xlu0 %v1496, 64
      %v1526 = vpop.permute.xlu0 %1525
      %1527 = vrot.lane.b32.xlu0 %v1497, 64
      %v1528 = vpop.permute.xlu0 %1527
      %1529 = vrot.lane.b32.xlu0 %v1498, 64
      %v1530 = vpop.permute.xlu0 %1529
      %1531 = vrot.lane.b32.xlu0 %v1499, 64
      %v1532 = vpop.permute.xlu0 %1531
      %1533 = vrot.lane.b32.xlu0 %v1500, 64
      %v1534 = vpop.permute.xlu0 %1533
      %1535 = vrot.lane.b32.xlu0 %v1501, 64
      %v1536 = vpop.permute.xlu0 %1535
      %vm1537 = vcmask 523264
      %v1540 = vsel %vm1537, 0, %v1504
      %v1543 = vsel %vm1537, 0, %v1506
      %v1547 = vsel %vm1537, %v1486, %v1508
      %v1551 = vsel %vm1537, %v1487, %v1510
      %v1555 = vsel %vm1537, %v1488, %v1512
      %v1559 = vsel %vm1537, %v1489, %v1514
      %v1563 = vsel %vm1537, %v1490, %v1516
      %v1567 = vsel %vm1537, %v1491, %v1518
      %v1571 = vsel %vm1537, %v1492, %v1520
      %v1575 = vsel %vm1537, %v1493, %v1522
      %v1579 = vsel %vm1537, %v1494, %v1524
      %v1583 = vsel %vm1537, %v1495, %v1526
      %v1587 = vsel %vm1537, %v1496, %v1528
      %v1591 = vsel %vm1537, %v1497, %v1530
      %v1595 = vsel %vm1537, %v1498, %v1532
      %v1599 = vsel %vm1537, %v1499, %v1534
      %v1603 = vsel %vm1537, %v1500, %v1536
      %v1606 = vsel %vm1537, %v1501, %v1504
      %v1688 = vunpack.c.l.b16 %v1373
      %v1689 = vunpack.c.h.b16 %v1373
      %v1690 = vunpack.c.l.b16 %v1374
      %v1691 = vunpack.c.l.b16 %v1375
      %v1692 = vunpack.c.h.b16 %v1375
      %v1693 = vunpack.c.l.b16 %v1376
      %v1694 = vunpack.c.l.b16 %v1377
      %v1695 = vunpack.c.h.b16 %v1377
      %v1696 = vunpack.c.l.b16 %v1378
      %v1697 = vunpack.c.l.b16 %v1379
      %v1698 = vunpack.c.h.b16 %v1379
      %v1699 = vunpack.c.l.b16 %v1380
      %v1700 = vunpack.c.l.b16 %v1381
      %v1701 = vunpack.c.h.b16 %v1381
      %v1702 = vunpack.c.l.b16 %v1382
      %v1703 = vunpack.c.l.b16 %v1383
      %v1704 = vunpack.c.h.b16 %v1383
      %v1705 = vunpack.c.l.b16 %v1384
      %v1706 = vunpack.c.l.b16 %v1385
      %v1707 = vunpack.c.h.b16 %v1385
      %v1708 = vunpack.c.l.b16 %v1386
      %v1709 = vunpack.c.l.b16 %v1387
      %v1710 = vunpack.c.h.b16 %v1387
      %v1711 = vunpack.c.l.b16 %v1388
      %v1712 = vunpack.c.l.b16 %v1389
      %v1713 = vunpack.c.h.b16 %v1389
      %v1714 = vunpack.c.l.b16 %v1390
      %v1715 = vunpack.c.l.b16 %v1391
      %v1716 = vunpack.c.h.b16 %v1391
      %v1717 = vunpack.c.l.b16 %v1392
      %v1718 = vunpack.c.l.b16 %v1393
      %v1719 = vunpack.c.h.b16 %v1393
      %v1720 = vunpack.c.l.b16 %v1394
      %v1721 = vunpack.c.l.b16 %v1395
      %v1722 = vunpack.c.h.b16 %v1395
      %v1723 = vunpack.c.l.b16 %v1396
      %v1724 = vunpack.c.l.b16 %v1397
      %v1725 = vunpack.c.h.b16 %v1397
      %v1726 = vunpack.c.l.b16 %v1398
      %v1727 = vunpack.c.l.b16 %v1399
      %v1728 = vunpack.c.h.b16 %v1399
      %v1729 = vunpack.c.l.b16 %v1400
      %v1730 = vunpack.c.l.b16 %v1401
      %v1731 = vunpack.c.h.b16 %v1401
      %v1732 = vunpack.c.l.b16 %v1402
      %v1733 = vunpack.c.l.b16 %v1403
      %v1734 = vunpack.c.h.b16 %v1403
      %v1735 = vunpack.c.l.b16 %v1404
      %v1736 = vunpack.c.l.b16 %v1405
      %v1737 = vunpack.c.h.b16 %v1405
      %v1738 = vunpack.c.l.b16 %v1406
      %v1739 = vunpack.c.l.b16 %v1407
      %v1740 = vunpack.c.h.b16 %v1407
      %v1741 = vunpack.c.l.b16 %v1408
      %v1742 = vunpack.c.l.b16 %v1409
      %v1743 = vunpack.c.h.b16 %v1409
      %v1744 = vunpack.c.l.b16 %v1410
      %v1745 = vunpack.c.l.b16 %v1411
      %v1746 = vunpack.c.h.b16 %v1411
      %v1747 = vunpack.c.l.b16 %v1412
      %v1748 = vunpack.c.l.b16 %v1413
      %v1749 = vunpack.c.h.b16 %v1413
      %v1750 = vunpack.c.l.b16 %v1414
      %v1751 = vunpack.c.l.b16 %v1415
      %v1752 = vunpack.c.h.b16 %v1415
      %v1753 = vunpack.c.l.b16 %v1416
      %v1754 = vunpack.c.l.b16 %v1417
      %v1755 = vunpack.c.h.b16 %v1417
      %v1756 = vunpack.c.l.b16 %v1418
      %v1757 = vunpack.c.l.b16 %v1419
      %v1758 = vunpack.c.h.b16 %v1419
      %v1759 = vunpack.c.l.b16 %v1420
      %v1760 = vunpack.c.l.b16 %v1421
      %v1761 = vunpack.c.h.b16 %v1421
      %v1762 = vunpack.c.l.b16 %v1422
      %v1763 = vunpack.c.l.b16 %v1423
      %v1764 = vunpack.c.h.b16 %v1423
      %v1765 = vunpack.c.l.b16 %v1424
      %v1766 = vunpack.c.l.b16 %v1425
      %v1767 = vunpack.c.h.b16 %v1425
      %v1768 = vunpack.c.l.b16 %v1426
      %v1769 = vunpack.c.l.b16 %v1427
      %v1770 = vunpack.c.h.b16 %v1427
      %v1771 = vunpack.c.l.b16 %v1428
      %v1772 = vunpack.c.l.b16 %v1429
      %v1773 = vunpack.c.h.b16 %v1429
      %v1774 = vunpack.c.l.b16 %v1430
      %v1775 = vunpack.c.l.b16 %v1431
      %v1776 = vunpack.c.h.b16 %v1431
      %v1777 = vunpack.c.l.b16 %v1432
      %v1778 = vunpack.c.l.b16 %v1433
      %v1779 = vunpack.c.h.b16 %v1433
      %v1780 = vunpack.c.l.b16 %v1434
      %v1781 = vunpack.c.l.b16 %v1435
      %v1782 = vunpack.c.h.b16 %v1435
      %v1783 = vunpack.c.l.b16 %v1436
      %v1784 = vunpack.c.l.b16 %v1437
      %v1785 = vunpack.c.h.b16 %v1437
      %v1786 = vunpack.c.l.b16 %v1438
      %v1787 = vunpack.c.l.b16 %v1439
      %v1788 = vunpack.c.h.b16 %v1439
      %v1789 = vunpack.c.l.b16 %v1440
      %v1790 = vunpack.c.l.b16 %v1441
      %v1791 = vunpack.c.h.b16 %v1441
      %v1792 = vunpack.c.l.b16 %v1442
      %v1793 = vunpack.c.l.b16 %v1443
      %v1794 = vunpack.c.h.b16 %v1443
      %v1795 = vunpack.c.l.b16 %v1444
      %v1796 = vunpack.c.l.b16 %v1445
      %v1797 = vunpack.c.h.b16 %v1445
      %v1798 = vunpack.c.l.b16 %v1446
      %v1799 = vunpack.c.l.b16 %v1447
      %v1800 = vunpack.c.h.b16 %v1447
      %v1801 = vunpack.c.l.b16 %v1448
      %v1802 = vunpack.c.l.b16 %v1449
      %v1803 = vunpack.c.h.b16 %v1449
      %v1804 = vunpack.c.l.b16 %v1450
      %v1805 = vunpack.c.l.b16 %v1451
      %v1806 = vunpack.c.h.b16 %v1451
      %v1807 = vunpack.c.l.b16 %v1452
      %v1808 = vpack.c.b16 %v1691, %v1688
      %v1809 = vpack.c.b16 %v1692, %v1689
      %v1810 = vpack.c.b16 %v1693, %v1690
      %v1811 = vpack.c.b16 %v1697, %v1694
      %v1812 = vpack.c.b16 %v1698, %v1695
      %v1813 = vpack.c.b16 %v1699, %v1696
      %v1814 = vpack.c.b16 %v1703, %v1700
      %v1815 = vpack.c.b16 %v1704, %v1701
      %v1816 = vpack.c.b16 %v1705, %v1702
      %v1817 = vpack.c.b16 %v1709, %v1706
      %v1818 = vpack.c.b16 %v1710, %v1707
      %v1819 = vpack.c.b16 %v1711, %v1708
      %v1820 = vpack.c.b16 %v1715, %v1712
      %v1821 = vpack.c.b16 %v1716, %v1713
      %v1822 = vpack.c.b16 %v1717, %v1714
      %v1823 = vpack.c.b16 %v1721, %v1718
      %v1824 = vpack.c.b16 %v1722, %v1719
      %v1825 = vpack.c.b16 %v1723, %v1720
      %v1826 = vpack.c.b16 %v1727, %v1724
      %v1827 = vpack.c.b16 %v1728, %v1725
      %v1828 = vpack.c.b16 %v1729, %v1726
      %v1829 = vpack.c.b16 %v1733, %v1730
      %v1830 = vpack.c.b16 %v1734, %v1731
      %v1831 = vpack.c.b16 %v1735, %v1732
      %v1832 = vpack.c.b16 %v1739, %v1736
      %v1833 = vpack.c.b16 %v1740, %v1737
      %v1834 = vpack.c.b16 %v1741, %v1738
      %v1835 = vpack.c.b16 %v1745, %v1742
      %v1836 = vpack.c.b16 %v1746, %v1743
      %v1837 = vpack.c.b16 %v1747, %v1744
      %v1838 = vpack.c.b16 %v1751, %v1748
      %v1839 = vpack.c.b16 %v1752, %v1749
      %v1840 = vpack.c.b16 %v1753, %v1750
      %v1841 = vpack.c.b16 %v1757, %v1754
      %v1842 = vpack.c.b16 %v1758, %v1755
      %v1843 = vpack.c.b16 %v1759, %v1756
      %v1844 = vpack.c.b16 %v1763, %v1760
      %v1845 = vpack.c.b16 %v1764, %v1761
      %v1846 = vpack.c.b16 %v1765, %v1762
      %v1847 = vpack.c.b16 %v1769, %v1766
      %v1848 = vpack.c.b16 %v1770, %v1767
      %v1849 = vpack.c.b16 %v1771, %v1768
      %v1850 = vpack.c.b16 %v1775, %v1772
      %v1851 = vpack.c.b16 %v1776, %v1773
      %v1852 = vpack.c.b16 %v1777, %v1774
      %v1853 = vpack.c.b16 %v1781, %v1778
      %v1854 = vpack.c.b16 %v1782, %v1779
      %v1855 = vpack.c.b16 %v1783, %v1780
      %v1856 = vpack.c.b16 %v1787, %v1784
      %v1857 = vpack.c.b16 %v1788, %v1785
      %v1858 = vpack.c.b16 %v1789, %v1786
      %v1859 = vpack.c.b16 %v1793, %v1790
      %v1860 = vpack.c.b16 %v1794, %v1791
      %v1861 = vpack.c.b16 %v1795, %v1792
      %v1862 = vpack.c.b16 %v1799, %v1796
      %v1863 = vpack.c.b16 %v1800, %v1797
      %v1864 = vpack.c.b16 %v1801, %v1798
      %v1865 = vpack.c.b16 %v1805, %v1802
      %v1866 = vpack.c.b16 %v1806, %v1803
      %v1867 = vpack.c.b16 %v1807, %v1804
      %v1928 = vsel %vm1537, %v1488, 0
      %v1930 = vsel %vm1537, %v1489, 0
      %v1932 = vsel %vm1537, %v1490, 0
      %v1934 = vsel %vm1537, %v1491, 0
      %v1936 = vsel %vm1537, %v1492, 0
      %v1938 = vsel %vm1537, %v1493, 0
      %v1940 = vsel %vm1537, %v1494, 0
      %v1942 = vsel %vm1537, %v1495, 0
      %v1944 = vsel %vm1537, %v1496, 0
      %v1946 = vsel %vm1537, %v1497, 0
      %v1948 = vsel %vm1537, %v1498, 0
      %v1950 = vsel %vm1537, %v1499, 0
      %v1952 = vsel %vm1537, %v1500, 0
      %v1954 = vsel %vm1537, %v1501, 0
      %v1956 = vsel %vm1537, 0, 0
      %1958 = vmatprep.subr.bf16.mxu0 %v1809
      %1959 = vmatpush1.bf16.msra.mxu0 %v1808
      %1960 = vmatprep.subr.bf16.mxu0 %v1812
      %1961 = vmatpush1.bf16.msra.mxu0 %v1811
      %1962 = vmatprep.subr.bf16.mxu0 %v1815
      %1963 = vmatpush1.bf16.msra.mxu0 %v1814
      %1964 = vmatprep.subr.bf16.mxu0 %v1818
      %1965 = vmatpush1.bf16.msra.mxu0 %v1817
      %1966 = vmatprep.subr.bf16.mxu0 %v1821
      %1967 = vmatpush1.bf16.msra.mxu0 %v1820
      %1968 = vmatprep.subr.bf16.mxu0 %v1824
      %1969 = vmatpush1.bf16.msra.mxu0 %v1823
      %1970 = vmatprep.subr.bf16.mxu0 %v1827
      %1971 = vmatpush1.bf16.msra.mxu0 %v1826
      %1972 = vmatprep.subr.bf16.mxu0 %v1830
      %1973 = vmatpush1.bf16.msra.mxu0 %v1829
      %1974 = vmatprep.subr.bf16.mxu0 %v1833
      %1975 = vmatpush1.bf16.msra.mxu0 %v1832
      %1976 = vmatprep.subr.bf16.mxu0 %v1836
      %1977 = vmatpush1.bf16.msra.mxu0 %v1835
      %1978 = vmatprep.subr.bf16.mxu0 %v1839
      %1979 = vmatpush1.bf16.msra.mxu0 %v1838
      %1980 = vmatprep.subr.bf16.mxu0 %v1842
      %1981 = vmatpush1.bf16.msra.mxu0 %v1841
      %1982 = vmatprep.subr.bf16.mxu0 %v1845
      %1983 = vmatpush1.bf16.msra.mxu0 %v1844
      %1984 = vmatprep.subr.bf16.mxu0 %v1848
      %1985 = vmatpush1.bf16.msra.mxu0 %v1847
      %1986 = vmatprep.subr.bf16.mxu0 %v1851
      %1987 = vmatpush1.bf16.msra.mxu0 %v1850
      %1988 = vmatprep.subr.bf16.mxu0 %v1854
      %1989 = vmatpush1.bf16.msra.mxu0 %v1853
      %1990 = vmatprep.mubr.bf16.mxu0 %v1547
      %1991 = vmatmul.mubr.bf16.gmra.mrb[0].mxu0 %v1540
      %v1992 = vpop.f32.mrb[0].mxu0
      %v1993 = vadd.f32 0.0, %v1992
      %v1994 = vpop.f32.mrb[0].mxu0
      %v1995 = vadd.f32 0.0, %v1994
      %v1996 = vpop.f32.mrb[0].mxu0
      %v1997 = vadd.f32 0.0, %v1996
      %v1998 = vpop.f32.mrb[0].mxu0
      %v1999 = vadd.f32 0.0, %v1998
      %2000 = vmatprep.mubr.bf16.mxu0 %v1551
      %2001 = vmatmul.mubr.bf16.gmra.mrb[0].mxu0 %v1543
      %v2002 = vpop.f32.mrb[0].mxu0
      %v2003 = vadd.f32 0.0, %v2002
      %v2004 = vpop.f32.mrb[0].mxu0
      %v2005 = vadd.f32 0.0, %v2004
      %v2006 = vpop.f32.mrb[0].mxu0
      %v2007 = vadd.f32 0.0, %v2006
      %v2008 = vpop.f32.mrb[0].mxu0
      %v2009 = vadd.f32 0.0, %v2008
      %2010 = vmatprep.mubr.bf16.mxu0 %v1555
      %2011 = vmatmul.mubr.bf16.gmra.mrb[0].mxu0 %v1547
      %v2012 = vpop.f32.mrb[0].mxu0
      %v2013 = vadd.f32 0.0, %v2012
      %v2014 = vpop.f32.mrb[0].mxu0
      %v2015 = vadd.f32 0.0, %v2014
      %v2016 = vpop.f32.mrb[0].mxu0
      %v2017 = vadd.f32 0.0, %v2016
      %v2018 = vpop.f32.mrb[0].mxu0
      %v2019 = vadd.f32 0.0, %v2018
      %2020 = vmatprep.mubr.bf16.mxu0 %v1559
      %2021 = vmatmul.mubr.bf16.gmra.mrb[0].mxu0 %v1551
      %v2022 = vpop.f32.mrb[0].mxu0
      %v2023 = vadd.f32 0.0, %v2022
      %v2024 = vpop.f32.mrb[0].mxu0
      %v2025 = vadd.f32 0.0, %v2024
      %v2026 = vpop.f32.mrb[0].mxu0
      %v2027 = vadd.f32 0.0, %v2026
      %v2028 = vpop.f32.mrb[0].mxu0
      %v2029 = vadd.f32 0.0, %v2028
      %2030 = vmatprep.mubr.bf16.mxu0 %v1563
      %2031 = vmatmul.mubr.bf16.gmra.mrb[0].mxu0 %v1555
      %v2032 = vpop.f32.mrb[0].mxu0
      %v2033 = vadd.f32 0.0, %v2032
      %v2034 = vpop.f32.mrb[0].mxu0
      %v2035 = vadd.f32 0.0, %v2034
      %v2036 = vpop.f32.mrb[0].mxu0
      %v2037 = vadd.f32 0.0, %v2036
      %v2038 = vpop.f32.mrb[0].mxu0
      %v2039 = vadd.f32 0.0, %v2038
      %2040 = vmatprep.mubr.bf16.mxu0 %v1567
      %2041 = vmatmul.mubr.bf16.gmra.mrb[0].mxu0 %v1559
      %v2042 = vpop.f32.mrb[0].mxu0
      %v2043 = vadd.f32 0.0, %v2042
      %v2044 = vpop.f32.mrb[0].mxu0
      %v2045 = vadd.f32 0.0, %v2044
      %v2046 = vpop.f32.mrb[0].mxu0
      %v2047 = vadd.f32 0.0, %v2046
      %v2048 = vpop.f32.mrb[0].mxu0
      %v2049 = vadd.f32 0.0, %v2048
      %2050 = vmatprep.mubr.bf16.mxu0 %v1571
      %2051 = vmatmul.mubr.bf16.gmra.mrb[0].mxu0 %v1563
      %v2052 = vpop.f32.mrb[0].mxu0
      %v2053 = vadd.f32 0.0, %v2052
      %v2054 = vpop.f32.mrb[0].mxu0
      %v2055 = vadd.f32 0.0, %v2054
      %v2056 = vpop.f32.mrb[0].mxu0
      %v2057 = vadd.f32 0.0, %v2056
      %v2058 = vpop.f32.mrb[0].mxu0
      %v2059 = vadd.f32 0.0, %v2058
      %2060 = vmatprep.mubr.bf16.mxu0 %v1575
      %2061 = vmatmul.mubr.bf16.gmra.mrb[0].mxu0 %v1567
      %v2062 = vpop.f32.mrb[0].mxu0
      %v2063 = vadd.f32 0.0, %v2062
      %v2064 = vpop.f32.mrb[0].mxu0
      %v2065 = vadd.f32 0.0, %v2064
      %v2066 = vpop.f32.mrb[0].mxu0
      %v2067 = vadd.f32 0.0, %v2066
      %v2068 = vpop.f32.mrb[0].mxu0
      %v2069 = vadd.f32 0.0, %v2068
      %2070 = vmatprep.mubr.bf16.mxu0 %v1579
      %2071 = vmatmul.mubr.bf16.gmra.mrb[0].mxu0 %v1571
      %v2072 = vpop.f32.mrb[0].mxu0
      %v2073 = vadd.f32 0.0, %v2072
      %v2074 = vpop.f32.mrb[0].mxu0
      %v2075 = vadd.f32 0.0, %v2074
      %v2076 = vpop.f32.mrb[0].mxu0
      %v2077 = vadd.f32 0.0, %v2076
      %v2078 = vpop.f32.mrb[0].mxu0
      %v2079 = vadd.f32 0.0, %v2078
      %2080 = vmatprep.mubr.bf16.mxu0 %v1583
      %2081 = vmatmul.mubr.bf16.gmra.mrb[0].mxu0 %v1575
      %v2082 = vpop.f32.mrb[0].mxu0
      %v2083 = vadd.f32 0.0, %v2082
      %v2084 = vpop.f32.mrb[0].mxu0
      %v2085 = vadd.f32 0.0, %v2084
      %v2086 = vpop.f32.mrb[0].mxu0
      %v2087 = vadd.f32 0.0, %v2086
      %v2088 = vpop.f32.mrb[0].mxu0
      %v2089 = vadd.f32 0.0, %v2088
      %2090 = vmatprep.mubr.bf16.mxu0 %v1587
      %2091 = vmatmul.mubr.bf16.gmra.mrb[0].mxu0 %v1579
      %v2092 = vpop.f32.mrb[0].mxu0
      %v2093 = vadd.f32 0.0, %v2092
      %v2094 = vpop.f32.mrb[0].mxu0
      %v2095 = vadd.f32 0.0, %v2094
      %v2096 = vpop.f32.mrb[0].mxu0
      %v2097 = vadd.f32 0.0, %v2096
      %v2098 = vpop.f32.mrb[0].mxu0
      %v2099 = vadd.f32 0.0, %v2098
      %2100 = vmatprep.mubr.bf16.mxu0 %v1591
      %2101 = vmatmul.mubr.bf16.gmra.mrb[0].mxu0 %v1583
      %v2102 = vpop.f32.mrb[0].mxu0
      %v2103 = vadd.f32 0.0, %v2102
      %v2104 = vpop.f32.mrb[0].mxu0
      %v2105 = vadd.f32 0.0, %v2104
      %v2106 = vpop.f32.mrb[0].mxu0
      %v2107 = vadd.f32 0.0, %v2106
      %v2108 = vpop.f32.mrb[0].mxu0
      %v2109 = vadd.f32 0.0, %v2108
      %2110 = vmatprep.mubr.bf16.mxu0 %v1595
      %2111 = vmatmul.mubr.bf16.gmra.mrb[0].mxu0 %v1587
      %v2112 = vpop.f32.mrb[0].mxu0
      %v2113 = vadd.f32 0.0, %v2112
      %v2114 = vpop.f32.mrb[0].mxu0
      %v2115 = vadd.f32 0.0, %v2114
      %v2116 = vpop.f32.mrb[0].mxu0
      %v2117 = vadd.f32 0.0, %v2116
      %v2118 = vpop.f32.mrb[0].mxu0
      %v2119 = vadd.f32 0.0, %v2118
      %2120 = vmatprep.mubr.bf16.mxu0 %v1599
      %2121 = vmatmul.mubr.bf16.gmra.mrb[0].mxu0 %v1591
      %v2122 = vpop.f32.mrb[0].mxu0
      %v2123 = vadd.f32 0.0, %v2122
      %v2124 = vpop.f32.mrb[0].mxu0
      %v2125 = vadd.f32 0.0, %v2124
      %v2126 = vpop.f32.mrb[0].mxu0
      %v2127 = vadd.f32 0.0, %v2126
      %v2128 = vpop.f32.mrb[0].mxu0
      %v2129 = vadd.f32 0.0, %v2128
      %2130 = vmatprep.mubr.bf16.mxu0 %v1603
      %2131 = vmatmul.mubr.bf16.gmra.mrb[0].mxu0 %v1595
      %v2132 = vpop.f32.mrb[0].mxu0
      %v2133 = vadd.f32 0.0, %v2132
      %v2134 = vpop.f32.mrb[0].mxu0
      %v2135 = vadd.f32 0.0, %v2134
      %v2136 = vpop.f32.mrb[0].mxu0
      %v2137 = vadd.f32 0.0, %v2136
      %v2138 = vpop.f32.mrb[0].mxu0
      %v2139 = vadd.f32 0.0, %v2138
      %2140 = vmatprep.mubr.bf16.mxu0 %v1606
      %2141 = vmatmul.mubr.bf16.gmra.mrb[0].mxu0 %v1599
      %v2142 = vpop.f32.mrb[0].mxu0
      %v2143 = vadd.f32 0.0, %v2142
      %v2144 = vpop.f32.mrb[0].mxu0
      %v2145 = vadd.f32 0.0, %v2144
      %v2146 = vpop.f32.mrb[0].mxu0
      %v2147 = vadd.f32 0.0, %v2146
      %v2148 = vpop.f32.mrb[0].mxu0
      %v2149 = vadd.f32 0.0, %v2148
      %2150 = vdwg.mxu0
      %2151 = vmatprep.subr.bf16.mxu0 %v1857
      %2152 = vmatpush1.bf16.msra.mxu0 %v1856
      %2153 = vmatprep.subr.bf16.mxu0 %v1860
      %2154 = vmatpush1.bf16.msra.mxu0 %v1859
      %2155 = vmatprep.subr.bf16.mxu0 %v1863
      %2156 = vmatpush1.bf16.msra.mxu0 %v1862
      %2157 = vmatprep.subr.bf16.mxu0 %v1866
      %2158 = vmatpush1.bf16.msra.mxu0 %v1865
      %2159 = vmatprep.subr.bf16.mxu0 0
      %2160 = vmatpush1.bf16.msra.mxu0 0
      %2161 = vmatprep.subr.bf16.mxu0 0
      %2162 = vmatpush1.bf16.msra.mxu0 0
      %2163 = vmatprep.subr.bf16.mxu0 0
      %2164 = vmatpush1.bf16.msra.mxu0 0
      %2165 = vmatprep.subr.bf16.mxu0 0
      %2166 = vmatpush1.bf16.msra.mxu0 0
      %2167 = vmatprep.subr.bf16.mxu0 0
      %2168 = vmatpush1.bf16.msra.mxu0 0
      %2169 = vmatprep.subr.bf16.mxu0 0
      %2170 = vmatpush1.bf16.msra.mxu0 0
      %2171 = vmatprep.subr.bf16.mxu0 0
      %2172 = vmatpush1.bf16.msra.mxu0 0
      %2173 = vmatprep.subr.bf16.mxu0 0
      %2174 = vmatpush1.bf16.msra.mxu0 0
      %2175 = vmatprep.subr.bf16.mxu0 0
      %2176 = vmatpush1.bf16.msra.mxu0 0
      %2177 = vmatprep.subr.bf16.mxu0 0
      %2178 = vmatpush1.bf16.msra.mxu0 0
      %2179 = vmatprep.subr.bf16.mxu0 0
      %2180 = vmatpush1.bf16.msra.mxu0 0
      %2181 = vmatprep.subr.bf16.mxu0 0
      %2182 = vmatpush1.bf16.msra.mxu0 0
      %2183 = vmatprep.mubr.bf16.mxu0 0
      %2184 = vmatmul.mubr.bf16.gmra.mrb[0].mxu0 %v1928
      %v2185 = vpop.f32.mrb[0].mxu0
      %v2186 = vadd.f32 %v1993, %v2185
      %v2187 = vpop.f32.mrb[0].mxu0
      %v2188 = vadd.f32 %v1995, %v2187
      %v2189 = vpop.f32.mrb[0].mxu0
      %v2190 = vadd.f32 %v1997, %v2189
      %v2191 = vpop.f32.mrb[0].mxu0
      %v2192 = vadd.f32 %v1999, %v2191
      %2193 = vmatprep.mubr.bf16.mxu0 0
      %2194 = vmatmul.mubr.bf16.gmra.mrb[0].mxu0 %v1930
      %v2195 = vpop.f32.mrb[0].mxu0
      %v2196 = vadd.f32 %v2003, %v2195
      %v2197 = vpop.f32.mrb[0].mxu0
      %v2198 = vadd.f32 %v2005, %v2197
      %v2199 = vpop.f32.mrb[0].mxu0
      %v2200 = vadd.f32 %v2007, %v2199
      %v2201 = vpop.f32.mrb[0].mxu0
      %v2202 = vadd.f32 %v2009, %v2201
      %2203 = vmatprep.mubr.bf16.mxu0 0
      %2204 = vmatmul.mubr.bf16.gmra.mrb[0].mxu0 %v1932
      %v2205 = vpop.f32.mrb[0].mxu0
      %v2206 = vadd.f32 %v2013, %v2205
      %v2207 = vpop.f32.mrb[0].mxu0
      %v2208 = vadd.f32 %v2015, %v2207
      %v2209 = vpop.f32.mrb[0].mxu0
      %v2210 = vadd.f32 %v2017, %v2209
      %v2211 = vpop.f32.mrb[0].mxu0
      %v2212 = vadd.f32 %v2019, %v2211
      %2213 = vmatprep.mubr.bf16.mxu0 0
      %2214 = vmatmul.mubr.bf16.gmra.mrb[0].mxu0 %v1934
      %v2215 = vpop.f32.mrb[0].mxu0
      %v2216 = vadd.f32 %v2023, %v2215
      %v2217 = vpop.f32.mrb[0].mxu0
      %v2218 = vadd.f32 %v2025, %v2217
      %v2219 = vpop.f32.mrb[0].mxu0
      %v2220 = vadd.f32 %v2027, %v2219
      %v2221 = vpop.f32.mrb[0].mxu0
      %v2222 = vadd.f32 %v2029, %v2221
      %2223 = vmatprep.mubr.bf16.mxu0 0
      %2224 = vmatmul.mubr.bf16.gmra.mrb[0].mxu0 %v1936
      %v2225 = vpop.f32.mrb[0].mxu0
      %v2226 = vadd.f32 %v2033, %v2225
      %v2227 = vpop.f32.mrb[0].mxu0
      %v2228 = vadd.f32 %v2035, %v2227
      %v2229 = vpop.f32.mrb[0].mxu0
      %v2230 = vadd.f32 %v2037, %v2229
      %v2231 = vpop.f32.mrb[0].mxu0
      %v2232 = vadd.f32 %v2039, %v2231
      %2233 = vmatprep.mubr.bf16.mxu0 0
      %2234 = vmatmul.mubr.bf16.gmra.mrb[0].mxu0 %v1938
      %v2235 = vpop.f32.mrb[0].mxu0
      %v2236 = vadd.f32 %v2043, %v2235
      %v2237 = vpop.f32.mrb[0].mxu0
      %v2238 = vadd.f32 %v2045, %v2237
      %v2239 = vpop.f32.mrb[0].mxu0
      %v2240 = vadd.f32 %v2047, %v2239
      %v2241 = vpop.f32.mrb[0].mxu0
      %v2242 = vadd.f32 %v2049, %v2241
      %2243 = vmatprep.mubr.bf16.mxu0 0
      %2244 = vmatmul.mubr.bf16.gmra.mrb[0].mxu0 %v1940
      %v2245 = vpop.f32.mrb[0].mxu0
      %v2246 = vadd.f32 %v2053, %v2245
      %v2247 = vpop.f32.mrb[0].mxu0
      %v2248 = vadd.f32 %v2055, %v2247
      %v2249 = vpop.f32.mrb[0].mxu0
      %v2250 = vadd.f32 %v2057, %v2249
      %v2251 = vpop.f32.mrb[0].mxu0
      %v2252 = vadd.f32 %v2059, %v2251
      %2253 = vmatprep.mubr.bf16.mxu0 0
      %2254 = vmatmul.mubr.bf16.gmra.mrb[0].mxu0 %v1942
      %v2255 = vpop.f32.mrb[0].mxu0
      %v2256 = vadd.f32 %v2063, %v2255
      %v2257 = vpop.f32.mrb[0].mxu0
      %v2258 = vadd.f32 %v2065, %v2257
      %v2259 = vpop.f32.mrb[0].mxu0
      %v2260 = vadd.f32 %v2067, %v2259
      %v2261 = vpop.f32.mrb[0].mxu0
      %v2262 = vadd.f32 %v2069, %v2261
      %2263 = vmatprep.mubr.bf16.mxu0 0
      %2264 = vmatmul.mubr.bf16.gmra.mrb[0].mxu0 %v1944
      %v2265 = vpop.f32.mrb[0].mxu0
      %v2266 = vadd.f32 %v2073, %v2265
      %v2267 = vpop.f32.mrb[0].mxu0
      %v2268 = vadd.f32 %v2075, %v2267
      %v2269 = vpop.f32.mrb[0].mxu0
      %v2270 = vadd.f32 %v2077, %v2269
      %v2271 = vpop.f32.mrb[0].mxu0
      %v2272 = vadd.f32 %v2079, %v2271
      %2273 = vmatprep.mubr.bf16.mxu0 0
      %2274 = vmatmul.mubr.bf16.gmra.mrb[0].mxu0 %v1946
      %v2275 = vpop.f32.mrb[0].mxu0
      %v2276 = vadd.f32 %v2083, %v2275
      %v2277 = vpop.f32.mrb[0].mxu0
      %v2278 = vadd.f32 %v2085, %v2277
      %v2279 = vpop.f32.mrb[0].mxu0
      %v2280 = vadd.f32 %v2087, %v2279
      %v2281 = vpop.f32.mrb[0].mxu0
      %v2282 = vadd.f32 %v2089, %v2281
      %2283 = vmatprep.mubr.bf16.mxu0 0
      %2284 = vmatmul.mubr.bf16.gmra.mrb[0].mxu0 %v1948
      %v2285 = vpop.f32.mrb[0].mxu0
      %v2286 = vadd.f32 %v2093, %v2285
      %v2287 = vpop.f32.mrb[0].mxu0
      %v2288 = vadd.f32 %v2095, %v2287
      %v2289 = vpop.f32.mrb[0].mxu0
      %v2290 = vadd.f32 %v2097, %v2289
      %v2291 = vpop.f32.mrb[0].mxu0
      %v2292 = vadd.f32 %v2099, %v2291
      %2293 = vmatprep.mubr.bf16.mxu0 0
      %2294 = vmatmul.mubr.bf16.gmra.mrb[0].mxu0 %v1950
      %v2295 = vpop.f32.mrb[0].mxu0
      %v2296 = vadd.f32 %v2103, %v2295
      %v2297 = vpop.f32.mrb[0].mxu0
      %v2298 = vadd.f32 %v2105, %v2297
      %v2299 = vpop.f32.mrb[0].mxu0
      %v2300 = vadd.f32 %v2107, %v2299
      %v2301 = vpop.f32.mrb[0].mxu0
      %v2302 = vadd.f32 %v2109, %v2301
      %2303 = vmatprep.mubr.bf16.mxu0 0
      %2304 = vmatmul.mubr.bf16.gmra.mrb[0].mxu0 %v1952
      %v2305 = vpop.f32.mrb[0].mxu0
      %v2306 = vadd.f32 %v2113, %v2305
      %v2307 = vpop.f32.mrb[0].mxu0
      %v2308 = vadd.f32 %v2115, %v2307
      %v2309 = vpop.f32.mrb[0].mxu0
      %v2310 = vadd.f32 %v2117, %v2309
      %v2311 = vpop.f32.mrb[0].mxu0
      %v2312 = vadd.f32 %v2119, %v2311
      %2313 = vmatprep.mubr.bf16.mxu0 0
      %2314 = vmatmul.mubr.bf16.gmra.mrb[0].mxu0 %v1954
      %v2315 = vpop.f32.mrb[0].mxu0
      %v2316 = vadd.f32 %v2123, %v2315
      %v2317 = vpop.f32.mrb[0].mxu0
      %v2318 = vadd.f32 %v2125, %v2317
      %v2319 = vpop.f32.mrb[0].mxu0
      %v2320 = vadd.f32 %v2127, %v2319
      %v2321 = vpop.f32.mrb[0].mxu0
      %v2322 = vadd.f32 %v2129, %v2321
      %2323 = vmatprep.mubr.bf16.mxu0 0
      %2324 = vmatmul.mubr.bf16.gmra.mrb[0].mxu0 %v1956
      %v2325 = vpop.f32.mrb[0].mxu0
      %v2326 = vadd.f32 %v2133, %v2325
      %v2327 = vpop.f32.mrb[0].mxu0
      %v2328 = vadd.f32 %v2135, %v2327
      %v2329 = vpop.f32.mrb[0].mxu0
      %v2330 = vadd.f32 %v2137, %v2329
      %v2331 = vpop.f32.mrb[0].mxu0
      %v2332 = vadd.f32 %v2139, %v2331
      %2333 = vmatprep.mubr.bf16.mxu0 0
      %2334 = vmatmul.mubr.bf16.gmra.mrb[0].mxu0 %v1956
      %v2335 = vpop.f32.mrb[0].mxu0
      %v2336 = vadd.f32 %v2143, %v2335
      %v2337 = vpop.f32.mrb[0].mxu0
      %v2338 = vadd.f32 %v2145, %v2337
      %v2339 = vpop.f32.mrb[0].mxu0
      %v2340 = vadd.f32 %v2147, %v2339
      %v2341 = vpop.f32.mrb[0].mxu0
      %v2342 = vadd.f32 %v2149, %v2341
      %2343 = vdwg.mxu0
      %2344 = vmatprep.subr.bf16.mxu0 0
      %2345 = vmatpush1.bf16.msra.mxu0 %v1810
      %2346 = vmatprep.subr.bf16.mxu0 0
      %2347 = vmatpush1.bf16.msra.mxu0 %v1813
      %2348 = vmatprep.subr.bf16.mxu0 0
      %2349 = vmatpush1.bf16.msra.mxu0 %v1816
      %2350 = vmatprep.subr.bf16.mxu0 0
      %2351 = vmatpush1.bf16.msra.mxu0 %v1819
      %2352 = vmatprep.subr.bf16.mxu0 0
      %2353 = vmatpush1.bf16.msra.mxu0 %v1822
      %2354 = vmatprep.subr.bf16.mxu0 0
      %2355 = vmatpush1.bf16.msra.mxu0 %v1825
      %2356 = vmatprep.subr.bf16.mxu0 0
      %2357 = vmatpush1.bf16.msra.mxu0 %v1828
      %2358 = vmatprep.subr.bf16.mxu0 0
      %2359 = vmatpush1.bf16.msra.mxu0 %v1831
      %2360 = vmatprep.subr.bf16.mxu0 0
      %2361 = vmatpush1.bf16.msra.mxu0 %v1834
      %2362 = vmatprep.subr.bf16.mxu0 0
      %2363 = vmatpush1.bf16.msra.mxu0 %v1837
      %2364 = vmatprep.subr.bf16.mxu0 0
      %2365 = vmatpush1.bf16.msra.mxu0 %v1840
      %2366 = vmatprep.subr.bf16.mxu0 0
      %2367 = vmatpush1.bf16.msra.mxu0 %v1843
      %2368 = vmatprep.subr.bf16.mxu0 0
      %2369 = vmatpush1.bf16.msra.mxu0 %v1846
      %2370 = vmatprep.subr.bf16.mxu0 0
      %2371 = vmatpush1.bf16.msra.mxu0 %v1849
      %2372 = vmatprep.subr.bf16.mxu0 0
      %2373 = vmatpush1.bf16.msra.mxu0 %v1852
      %2374 = vmatprep.subr.bf16.mxu0 0
      %2375 = vmatpush1.bf16.msra.mxu0 %v1855
      %2376 = vmatprep.mubr.bf16.mxu0 %v1547
      %2377 = vmatmul.mubr.bf16.gmra.mrb[0].mxu0 %v1540
      %v2378 = vpop.f32.mrb[0].mxu0
      %v2379 = vadd.f32 0.0, %v2378
      %v2380 = vpop.f32.mrb[0].mxu0
      %v2381 = vpop.f32.mrb[0].mxu0
      %v2382 = vadd.f32 0.0, %v2381
      %v2383 = vpop.f32.mrb[0].mxu0
      %2384 = vmatprep.mubr.bf16.mxu0 %v1551
      %2385 = vmatmul.mubr.bf16.gmra.mrb[0].mxu0 %v1543
      %v2386 = vpop.f32.mrb[0].mxu0
      %v2387 = vadd.f32 0.0, %v2386
      %v2388 = vpop.f32.mrb[0].mxu0
      %v2389 = vpop.f32.mrb[0].mxu0
      %v2390 = vadd.f32 0.0, %v2389
      %v2391 = vpop.f32.mrb[0].mxu0
      %2392 = vmatprep.mubr.bf16.mxu0 %v1555
      %2393 = vmatmul.mubr.bf16.gmra.mrb[0].mxu0 %v1547
      %v2394 = vpop.f32.mrb[0].mxu0
      %v2395 = vadd.f32 0.0, %v2394
      %v2396 = vpop.f32.mrb[0].mxu0
      %v2397 = vpop.f32.mrb[0].mxu0
      %v2398 = vadd.f32 0.0, %v2397
      %v2399 = vpop.f32.mrb[0].mxu0
      %2400 = vmatprep.mubr.bf16.mxu0 %v1559
      %2401 = vmatmul.mubr.bf16.gmra.mrb[0].mxu0 %v1551
      %v2402 = vpop.f32.mrb[0].mxu0
      %v2403 = vadd.f32 0.0, %v2402
      %v2404 = vpop.f32.mrb[0].mxu0
      %v2405 = vpop.f32.mrb[0].mxu0
      %v2406 = vadd.f32 0.0, %v2405
      %v2407 = vpop.f32.mrb[0].mxu0
      %2408 = vmatprep.mubr.bf16.mxu0 %v1563
      %2409 = vmatmul.mubr.bf16.gmra.mrb[0].mxu0 %v1555
      %v2410 = vpop.f32.mrb[0].mxu0
      %v2411 = vadd.f32 0.0, %v2410
      %v2412 = vpop.f32.mrb[0].mxu0
      %v2413 = vpop.f32.mrb[0].mxu0
      %v2414 = vadd.f32 0.0, %v2413
      %v2415 = vpop.f32.mrb[0].mxu0
      %2416 = vmatprep.mubr.bf16.mxu0 %v1567
      %2417 = vmatmul.mubr.bf16.gmra.mrb[0].mxu0 %v1559
      %v2418 = vpop.f32.mrb[0].mxu0
      %v2419 = vadd.f32 0.0, %v2418
      %v2420 = vpop.f32.mrb[0].mxu0
      %v2421 = vpop.f32.mrb[0].mxu0
      %v2422 = vadd.f32 0.0, %v2421
      %v2423 = vpop.f32.mrb[0].mxu0
      %2424 = vmatprep.mubr.bf16.mxu0 %v1571
      %2425 = vmatmul.mubr.bf16.gmra.mrb[0].mxu0 %v1563
      %v2426 = vpop.f32.mrb[0].mxu0
      %v2427 = vadd.f32 0.0, %v2426
      %v2428 = vpop.f32.mrb[0].mxu0
      %v2429 = vpop.f32.mrb[0].mxu0
      %v2430 = vadd.f32 0.0, %v2429
      %v2431 = vpop.f32.mrb[0].mxu0
      %2432 = vmatprep.mubr.bf16.mxu0 %v1575
      %2433 = vmatmul.mubr.bf16.gmra.mrb[0].mxu0 %v1567
      %v2434 = vpop.f32.mrb[0].mxu0
      %v2435 = vadd.f32 0.0, %v2434
      %v2436 = vpop.f32.mrb[0].mxu0
      %v2437 = vpop.f32.mrb[0].mxu0
      %v2438 = vadd.f32 0.0, %v2437
      %v2439 = vpop.f32.mrb[0].mxu0
      %2440 = vmatprep.mubr.bf16.mxu0 %v1579
      %2441 = vmatmul.mubr.bf16.gmra.mrb[0].mxu0 %v1571
      %v2442 = vpop.f32.mrb[0].mxu0
      %v2443 = vadd.f32 0.0, %v2442
      %v2444 = vpop.f32.mrb[0].mxu0
      %v2445 = vpop.f32.mrb[0].mxu0
      %v2446 = vadd.f32 0.0, %v2445
      %v2447 = vpop.f32.mrb[0].mxu0
      %2448 = vmatprep.mubr.bf16.mxu0 %v1583
      %2449 = vmatmul.mubr.bf16.gmra.mrb[0].mxu0 %v1575
      %v2450 = vpop.f32.mrb[0].mxu0
      %v2451 = vadd.f32 0.0, %v2450
      %v2452 = vpop.f32.mrb[0].mxu0
      %v2453 = vpop.f32.mrb[0].mxu0
      %v2454 = vadd.f32 0.0, %v2453
      %v2455 = vpop.f32.mrb[0].mxu0
      %2456 = vmatprep.mubr.bf16.mxu0 %v1587
      %2457 = vmatmul.mubr.bf16.gmra.mrb[0].mxu0 %v1579
      %v2458 = vpop.f32.mrb[0].mxu0
      %v2459 = vadd.f32 0.0, %v2458
      %v2460 = vpop.f32.mrb[0].mxu0
      %v2461 = vpop.f32.mrb[0].mxu0
      %v2462 = vadd.f32 0.0, %v2461
      %v2463 = vpop.f32.mrb[0].mxu0
      %2464 = vmatprep.mubr.bf16.mxu0 %v1591
      %2465 = vmatmul.mubr.bf16.gmra.mrb[0].mxu0 %v1583
      %v2466 = vpop.f32.mrb[0].mxu0
      %v2467 = vadd.f32 0.0, %v2466
      %v2468 = vpop.f32.mrb[0].mxu0
      %v2469 = vpop.f32.mrb[0].mxu0
      %v2470 = vadd.f32 0.0, %v2469
      %v2471 = vpop.f32.mrb[0].mxu0
      %2472 = vmatprep.mubr.bf16.mxu0 %v1595
      %2473 = vmatmul.mubr.bf16.gmra.mrb[0].mxu0 %v1587
      %v2474 = vpop.f32.mrb[0].mxu0
      %v2475 = vadd.f32 0.0, %v2474
      %v2476 = vpop.f32.mrb[0].mxu0
      %v2477 = vpop.f32.mrb[0].mxu0
      %v2478 = vadd.f32 0.0, %v2477
      %v2479 = vpop.f32.mrb[0].mxu0
      %2480 = vmatprep.mubr.bf16.mxu0 %v1599
      %2481 = vmatmul.mubr.bf16.gmra.mrb[0].mxu0 %v1591
      %v2482 = vpop.f32.mrb[0].mxu0
      %v2483 = vadd.f32 0.0, %v2482
      %v2484 = vpop.f32.mrb[0].mxu0
      %v2485 = vpop.f32.mrb[0].mxu0
      %v2486 = vadd.f32 0.0, %v2485
      %v2487 = vpop.f32.mrb[0].mxu0
      %2488 = vmatprep.mubr.bf16.mxu0 %v1603
      %2489 = vmatmul.mubr.bf16.gmra.mrb[0].mxu0 %v1595
      %v2490 = vpop.f32.mrb[0].mxu0
      %v2491 = vadd.f32 0.0, %v2490
      %v2492 = vpop.f32.mrb[0].mxu0
      %v2493 = vpop.f32.mrb[0].mxu0
      %v2494 = vadd.f32 0.0, %v2493
      %v2495 = vpop.f32.mrb[0].mxu0
      %2496 = vmatprep.mubr.bf16.mxu0 %v1606
      %2497 = vmatmul.mubr.bf16.gmra.mrb[0].mxu0 %v1599
      %v2498 = vpop.f32.mrb[0].mxu0
      %v2499 = vadd.f32 0.0, %v2498
      %v2500 = vpop.f32.mrb[0].mxu0
      %v2501 = vpop.f32.mrb[0].mxu0
      %v2502 = vadd.f32 0.0, %v2501
      %v2503 = vpop.f32.mrb[0].mxu0
      %2504 = vdwg.mxu0
      %2505 = vmatprep.subr.bf16.mxu0 0
      %2506 = vmatpush1.bf16.msra.mxu0 %v1858
      %2507 = vmatprep.subr.bf16.mxu0 0
      %2508 = vmatpush1.bf16.msra.mxu0 %v1861
      %2509 = vmatprep.subr.bf16.mxu0 0
      %2510 = vmatpush1.bf16.msra.mxu0 %v1864
      %2511 = vmatprep.subr.bf16.mxu0 0
      %2512 = vmatpush1.bf16.msra.mxu0 %v1867
      %2513 = vmatprep.subr.bf16.mxu0 0
      %2514 = vmatpush1.bf16.msra.mxu0 0
      %2515 = vmatprep.subr.bf16.mxu0 0
      %2516 = vmatpush1.bf16.msra.mxu0 0
      %2517 = vmatprep.subr.bf16.mxu0 0
      %2518 = vmatpush1.bf16.msra.mxu0 0
      %2519 = vmatprep.subr.bf16.mxu0 0
      %2520 = vmatpush1.bf16.msra.mxu0 0
      %2521 = vmatprep.subr.bf16.mxu0 0
      %2522 = vmatpush1.bf16.msra.mxu0 0
      %2523 = vmatprep.subr.bf16.mxu0 0
      %2524 = vmatpush1.bf16.msra.mxu0 0
      %2525 = vmatprep.subr.bf16.mxu0 0
      %2526 = vmatpush1.bf16.msra.mxu0 0
      %2527 = vmatprep.subr.bf16.mxu0 0
      %2528 = vmatpush1.bf16.msra.mxu0 0
      %2529 = vmatprep.subr.bf16.mxu0 0
      %2530 = vmatpush1.bf16.msra.mxu0 0
      %2531 = vmatprep.subr.bf16.mxu0 0
      %2532 = vmatpush1.bf16.msra.mxu0 0
      %2533 = vmatprep.subr.bf16.mxu0 0
      %2534 = vmatpush1.bf16.msra.mxu0 0
      %2535 = vmatprep.subr.bf16.mxu0 0
      %2536 = vmatpush1.bf16.msra.mxu0 0
      %2537 = vmatprep.mubr.bf16.mxu0 0
      %2538 = vmatmul.mubr.bf16.gmra.mrb[0].mxu0 %v1928
      %v2539 = vpop.f32.mrb[0].mxu0
      %v2540 = vadd.f32 %v2379, %v2539
      %v2541 = vpop.f32.mrb[0].mxu0
      %v2542 = vpop.f32.mrb[0].mxu0
      %v2543 = vadd.f32 %v2382, %v2542
      %v2544 = vpop.f32.mrb[0].mxu0
      %2545 = vmatprep.mubr.bf16.mxu0 0
      %2546 = vmatmul.mubr.bf16.gmra.mrb[0].mxu0 %v1930
      %v2547 = vpop.f32.mrb[0].mxu0
      %v2548 = vadd.f32 %v2387, %v2547
      %v2549 = vpop.f32.mrb[0].mxu0
      %v2550 = vpop.f32.mrb[0].mxu0
      %v2551 = vadd.f32 %v2390, %v2550
      %v2552 = vpop.f32.mrb[0].mxu0
      %2553 = vmatprep.mubr.bf16.mxu0 0
      %2554 = vmatmul.mubr.bf16.gmra.mrb[0].mxu0 %v1932
      %v2555 = vpop.f32.mrb[0].mxu0
      %v2556 = vadd.f32 %v2395, %v2555
      %v2557 = vpop.f32.mrb[0].mxu0
      %v2558 = vpop.f32.mrb[0].mxu0
      %v2559 = vadd.f32 %v2398, %v2558
      %v2560 = vpop.f32.mrb[0].mxu0
      %2561 = vmatprep.mubr.bf16.mxu0 0
      %2562 = vmatmul.mubr.bf16.gmra.mrb[0].mxu0 %v1934
      %v2563 = vpop.f32.mrb[0].mxu0
      %v2564 = vadd.f32 %v2403, %v2563
      %v2565 = vpop.f32.mrb[0].mxu0
      %v2566 = vpop.f32.mrb[0].mxu0
      %v2567 = vadd.f32 %v2406, %v2566
      %v2568 = vpop.f32.mrb[0].mxu0
      %2569 = vmatprep.mubr.bf16.mxu0 0
      %2570 = vmatmul.mubr.bf16.gmra.mrb[0].mxu0 %v1936
      %v2571 = vpop.f32.mrb[0].mxu0
      %v2572 = vadd.f32 %v2411, %v2571
      %v2573 = vpop.f32.mrb[0].mxu0
      %v2574 = vpop.f32.mrb[0].mxu0
      %v2575 = vadd.f32 %v2414, %v2574
      %v2576 = vpop.f32.mrb[0].mxu0
      %2577 = vmatprep.mubr.bf16.mxu0 0
      %2578 = vmatmul.mubr.bf16.gmra.mrb[0].mxu0 %v1938
      %v2579 = vpop.f32.mrb[0].mxu0
      %v2580 = vadd.f32 %v2419, %v2579
      %v2581 = vpop.f32.mrb[0].mxu0
      %v2582 = vpop.f32.mrb[0].mxu0
      %v2583 = vadd.f32 %v2422, %v2582
      %v2584 = vpop.f32.mrb[0].mxu0
      %2585 = vmatprep.mubr.bf16.mxu0 0
      %2586 = vmatmul.mubr.bf16.gmra.mrb[0].mxu0 %v1940
      %v2587 = vpop.f32.mrb[0].mxu0
      %v2588 = vadd.f32 %v2427, %v2587
      %v2589 = vpop.f32.mrb[0].mxu0
      %v2590 = vpop.f32.mrb[0].mxu0
      %v2591 = vadd.f32 %v2430, %v2590
      %v2592 = vpop.f32.mrb[0].mxu0
      %2593 = vmatprep.mubr.bf16.mxu0 0
      %2594 = vmatmul.mubr.bf16.gmra.mrb[0].mxu0 %v1942
      %v2595 = vpop.f32.mrb[0].mxu0
      %v2596 = vadd.f32 %v2435, %v2595
      %v2597 = vpop.f32.mrb[0].mxu0
      %v2598 = vpop.f32.mrb[0].mxu0
      %v2599 = vadd.f32 %v2438, %v2598
      %v2600 = vpop.f32.mrb[0].mxu0
      %2601 = vmatprep.mubr.bf16.mxu0 0
      %2602 = vmatmul.mubr.bf16.gmra.mrb[0].mxu0 %v1944
      %v2603 = vpop.f32.mrb[0].mxu0
      %v2604 = vadd.f32 %v2443, %v2603
      %v2605 = vpop.f32.mrb[0].mxu0
      %v2606 = vpop.f32.mrb[0].mxu0
      %v2607 = vadd.f32 %v2446, %v2606
      %v2608 = vpop.f32.mrb[0].mxu0
      %2609 = vmatprep.mubr.bf16.mxu0 0
      %2610 = vmatmul.mubr.bf16.gmra.mrb[0].mxu0 %v1946
      %v2611 = vpop.f32.mrb[0].mxu0
      %v2612 = vadd.f32 %v2451, %v2611
      %v2613 = vpop.f32.mrb[0].mxu0
      %v2614 = vpop.f32.mrb[0].mxu0
      %v2615 = vadd.f32 %v2454, %v2614
      %v2616 = vpop.f32.mrb[0].mxu0
      %2617 = vmatprep.mubr.bf16.mxu0 0
      %2618 = vmatmul.mubr.bf16.gmra.mrb[0].mxu0 %v1948
      %v2619 = vpop.f32.mrb[0].mxu0
      %v2620 = vadd.f32 %v2459, %v2619
      %v2621 = vpop.f32.mrb[0].mxu0
      %v2622 = vpop.f32.mrb[0].mxu0
      %v2623 = vadd.f32 %v2462, %v2622
      %v2624 = vpop.f32.mrb[0].mxu0
      %2625 = vmatprep.mubr.bf16.mxu0 0
      %2626 = vmatmul.mubr.bf16.gmra.mrb[0].mxu0 %v1950
      %v2627 = vpop.f32.mrb[0].mxu0
      %v2628 = vadd.f32 %v2467, %v2627
      %v2629 = vpop.f32.mrb[0].mxu0
      %v2630 = vpop.f32.mrb[0].mxu0
      %v2631 = vadd.f32 %v2470, %v2630
      %v2632 = vpop.f32.mrb[0].mxu0
      %2633 = vmatprep.mubr.bf16.mxu0 0
      %2634 = vmatmul.mubr.bf16.gmra.mrb[0].mxu0 %v1952
      %v2635 = vpop.f32.mrb[0].mxu0
      %v2636 = vadd.f32 %v2475, %v2635
      %v2637 = vpop.f32.mrb[0].mxu0
      %v2638 = vpop.f32.mrb[0].mxu0
      %v2639 = vadd.f32 %v2478, %v2638
      %v2640 = vpop.f32.mrb[0].mxu0
      %2641 = vmatprep.mubr.bf16.mxu0 0
      %2642 = vmatmul.mubr.bf16.gmra.mrb[0].mxu0 %v1954
      %v2643 = vpop.f32.mrb[0].mxu0
      %v2644 = vadd.f32 %v2483, %v2643
      %v2645 = vpop.f32.mrb[0].mxu0
      %v2646 = vpop.f32.mrb[0].mxu0
      %v2647 = vadd.f32 %v2486, %v2646
      %v2648 = vpop.f32.mrb[0].mxu0
      %2649 = vmatprep.mubr.bf16.mxu0 0
      %2650 = vmatmul.mubr.bf16.gmra.mrb[0].mxu0 %v1956
      %v2651 = vpop.f32.mrb[0].mxu0
      %v2652 = vadd.f32 %v2491, %v2651
      %v2653 = vpop.f32.mrb[0].mxu0
      %v2654 = vpop.f32.mrb[0].mxu0
      %v2655 = vadd.f32 %v2494, %v2654
      %v2656 = vpop.f32.mrb[0].mxu0
      %2657 = vmatprep.mubr.bf16.mxu0 0
      %2658 = vmatmul.mubr.bf16.gmra.mrb[0].mxu0 %v1956
      %v2659 = vpop.f32.mrb[0].mxu0
      %v2660 = vadd.f32 %v2499, %v2659
      %v2661 = vpop.f32.mrb[0].mxu0
      %v2662 = vpop.f32.mrb[0].mxu0
      %v2663 = vadd.f32 %v2502, %v2662
      %v2664 = vpop.f32.mrb[0].mxu0
      %2665 = vdwg.mxu0
      %v2666 = vunpack.c.l.b16 %v687
      %v2667 = vunpack.c.l.b16 %v751
      %v2668 = vunpack.c.l.b16 %v691
      %v2669 = vunpack.c.l.b16 %v755
      %v2670 = vunpack.c.l.b16 %v695
      %v2671 = vunpack.c.l.b16 %v759
      %v2672 = vunpack.c.l.b16 %v699
      %v2673 = vunpack.c.l.b16 %v763
      %v2674 = vunpack.c.l.b16 %v703
      %v2675 = vunpack.c.l.b16 %v767
      %v2676 = vunpack.c.l.b16 %v707
      %v2677 = vunpack.c.l.b16 %v771
      %v2678 = vunpack.c.l.b16 %v711
      %v2679 = vunpack.c.l.b16 %v775
      %v2680 = vunpack.c.l.b16 %v715
      %v2681 = vunpack.c.l.b16 %v779
      %v2682 = vunpack.c.l.b16 %v719
      %v2683 = vunpack.c.l.b16 %v783
      %v2684 = vunpack.c.l.b16 %v723
      %v2685 = vunpack.c.l.b16 %v787
      %v2686 = vunpack.c.l.b16 %v727
      %v2687 = vunpack.c.l.b16 %v791
      %v2688 = vunpack.c.l.b16 %v731
      %v2689 = vunpack.c.l.b16 %v795
      %v2690 = vunpack.c.l.b16 %v735
      %v2691 = vunpack.c.l.b16 %v799
      %v2692 = vunpack.c.l.b16 %v739
      %v2693 = vunpack.c.l.b16 %v803
      %v2694 = vunpack.c.l.b16 %v743
      %v2695 = vunpack.c.l.b16 %v807
      %v2696 = vunpack.c.l.b16 %v747
      %v2697 = vunpack.c.l.b16 %v811
      %v2698 = vpack.c.b16 %v2667, %v2666
      %v2699 = vpack.c.b16 %v2669, %v2668
      %v2700 = vpack.c.b16 %v2671, %v2670
      %v2701 = vpack.c.b16 %v2673, %v2672
      %v2702 = vpack.c.b16 %v2675, %v2674
      %v2703 = vpack.c.b16 %v2677, %v2676
      %v2704 = vpack.c.b16 %v2679, %v2678
      %v2705 = vpack.c.b16 %v2681, %v2680
      %v2706 = vpack.c.b16 %v2683, %v2682
      %v2707 = vpack.c.b16 %v2685, %v2684
      %v2708 = vpack.c.b16 %v2687, %v2686
      %v2709 = vpack.c.b16 %v2689, %v2688
      %v2710 = vpack.c.b16 %v2691, %v2690
      %v2711 = vpack.c.b16 %v2693, %v2692
      %v2712 = vpack.c.b16 %v2695, %v2694
      %v2713 = vpack.c.b16 %v2697, %v2696
      %v2810 = vunpack.c.l.b16 %v1213
      %v2811 = vunpack.c.h.b16 %v1213
      %v2812 = vunpack.c.l.b16 %v1214
      %v2813 = vunpack.c.h.b16 %v1214
      %v2814 = vunpack.c.l.b16 %v1215
      %v2815 = vunpack.c.h.b16 %v1215
      %v2816 = vunpack.c.l.b16 %v1216
      %v2817 = vunpack.c.h.b16 %v1216
      %v2818 = vunpack.c.l.b16 %v1217
      %v2819 = vunpack.c.h.b16 %v1217
      %v2820 = vunpack.c.l.b16 %v1218
      %v2821 = vunpack.c.h.b16 %v1218
      %v2822 = vunpack.c.l.b16 %v1219
      %v2823 = vunpack.c.h.b16 %v1219
      %v2824 = vunpack.c.l.b16 %v1220
      %v2825 = vunpack.c.h.b16 %v1220
      %v2826 = vunpack.c.l.b16 %v1221
      %v2827 = vunpack.c.h.b16 %v1221
      %v2828 = vunpack.c.l.b16 %v1222
      %v2829 = vunpack.c.h.b16 %v1222
      %v2830 = vunpack.c.l.b16 %v1223
      %v2831 = vunpack.c.h.b16 %v1223
      %v2832 = vunpack.c.l.b16 %v1224
      %v2833 = vunpack.c.h.b16 %v1224
      %v2834 = vunpack.c.l.b16 %v1225
      %v2835 = vunpack.c.h.b16 %v1225
      %v2836 = vunpack.c.l.b16 %v1226
      %v2837 = vunpack.c.h.b16 %v1226
      %v2838 = vunpack.c.l.b16 %v1227
      %v2839 = vunpack.c.h.b16 %v1227
      %v2840 = vunpack.c.l.b16 %v1228
      %v2841 = vunpack.c.h.b16 %v1228
      %v2842 = vunpack.c.l.b16 %v1229
      %v2843 = vunpack.c.h.b16 %v1229
      %v2844 = vunpack.c.l.b16 %v1230
      %v2845 = vunpack.c.h.b16 %v1230
      %v2846 = vunpack.c.l.b16 %v1231
      %v2847 = vunpack.c.h.b16 %v1231
      %v2848 = vunpack.c.l.b16 %v1232
      %v2849 = vunpack.c.h.b16 %v1232
      %v2850 = vunpack.c.l.b16 %v1233
      %v2851 = vunpack.c.h.b16 %v1233
      %v2852 = vunpack.c.l.b16 %v1234
      %v2853 = vunpack.c.h.b16 %v1234
      %v2854 = vunpack.c.l.b16 %v1235
      %v2855 = vunpack.c.h.b16 %v1235
      %v2856 = vunpack.c.l.b16 %v1236
      %v2857 = vunpack.c.h.b16 %v1236
      %v2858 = vunpack.c.l.b16 %v1237
      %v2859 = vunpack.c.h.b16 %v1237
      %v2860 = vunpack.c.l.b16 %v1238
      %v2861 = vunpack.c.h.b16 %v1238
      %v2862 = vunpack.c.l.b16 %v1239
      %v2863 = vunpack.c.h.b16 %v1239
      %v2864 = vunpack.c.l.b16 %v1240
      %v2865 = vunpack.c.h.b16 %v1240
      %v2866 = vunpack.c.l.b16 %v1241
      %v2867 = vunpack.c.h.b16 %v1241
      %v2868 = vunpack.c.l.b16 %v1242
      %v2869 = vunpack.c.h.b16 %v1242
      %v2870 = vunpack.c.l.b16 %v1243
      %v2871 = vunpack.c.h.b16 %v1243
      %v2872 = vunpack.c.l.b16 %v1244
      %v2873 = vunpack.c.h.b16 %v1244
      %v2874 = vunpack.c.l.b16 %v1245
      %v2875 = vunpack.c.h.b16 %v1245
      %v2876 = vunpack.c.l.b16 %v1246
      %v2877 = vunpack.c.h.b16 %v1246
      %v2878 = vunpack.c.l.b16 %v1247
      %v2879 = vunpack.c.h.b16 %v1247
      %v2880 = vunpack.c.l.b16 %v1248
      %v2881 = vunpack.c.h.b16 %v1248
      %v2882 = vunpack.c.l.b16 %v1249
      %v2883 = vunpack.c.h.b16 %v1249
      %v2884 = vunpack.c.l.b16 %v1250
      %v2885 = vunpack.c.h.b16 %v1250
      %v2886 = vunpack.c.l.b16 %v1251
      %v2887 = vunpack.c.h.b16 %v1251
      %v2888 = vunpack.c.l.b16 %v1252
      %v2889 = vunpack.c.h.b16 %v1252
      %v2890 = vunpack.c.l.b16 %v1253
      %v2891 = vunpack.c.h.b16 %v1253
      %v2892 = vunpack.c.l.b16 %v1254
      %v2893 = vunpack.c.h.b16 %v1254
      %v2894 = vunpack.c.l.b16 %v1255
      %v2895 = vunpack.c.h.b16 %v1255
      %v2896 = vunpack.c.l.b16 %v1256
      %v2897 = vunpack.c.h.b16 %v1256
      %v2898 = vunpack.c.l.b16 %v1257
      %v2899 = vunpack.c.h.b16 %v1257
      %v2900 = vunpack.c.l.b16 %v1258
      %v2901 = vunpack.c.h.b16 %v1258
      %v2902 = vunpack.c.l.b16 %v1259
      %v2903 = vunpack.c.h.b16 %v1259
      %v2904 = vunpack.c.l.b16 %v1260
      %v2905 = vunpack.c.h.b16 %v1260
      %v2906 = vunpack.c.l.b16 %v1261
      %v2907 = vunpack.c.h.b16 %v1261
      %v2908 = vunpack.c.l.b16 %v1262
      %v2909 = vunpack.c.h.b16 %v1262
      %v2910 = vunpack.c.l.b16 %v1263
      %v2911 = vunpack.c.h.b16 %v1263
      %v2912 = vunpack.c.l.b16 %v1264
      %v2913 = vunpack.c.h.b16 %v1264
      %v2914 = vunpack.c.l.b16 %v1265
      %v2915 = vunpack.c.h.b16 %v1265
      %v2916 = vunpack.c.l.b16 %v1266
      %v2917 = vunpack.c.h.b16 %v1266
      %v2918 = vunpack.c.l.b16 %v1267
      %v2919 = vunpack.c.h.b16 %v1267
      %v2920 = vunpack.c.l.b16 %v1268
      %v2921 = vunpack.c.h.b16 %v1268
      %v2922 = vunpack.c.l.b16 %v1269
      %v2923 = vunpack.c.h.b16 %v1269
      %v2924 = vunpack.c.l.b16 %v1270
      %v2925 = vunpack.c.h.b16 %v1270
      %v2926 = vunpack.c.l.b16 %v1271
      %v2927 = vunpack.c.h.b16 %v1271
      %v2928 = vunpack.c.l.b16 %v1272
      %v2929 = vunpack.c.h.b16 %v1272
      %v2930 = vunpack.c.l.b16 %v1273
      %v2931 = vunpack.c.h.b16 %v1273
      %v2932 = vunpack.c.l.b16 %v1274
      %v2933 = vunpack.c.h.b16 %v1274
      %v2934 = vunpack.c.l.b16 %v1275
      %v2935 = vunpack.c.h.b16 %v1275
      %v2936 = vunpack.c.l.b16 %v1276
      %v2937 = vunpack.c.h.b16 %v1276
      %v2938 = vunpack.c.l.b16 %v1277
      %v2939 = vunpack.c.h.b16 %v1277
      %v2940 = vunpack.c.l.b16 %v1278
      %v2941 = vunpack.c.h.b16 %v1278
      %v2942 = vunpack.c.l.b16 %v1279
      %v2943 = vunpack.c.h.b16 %v1279
      %v2944 = vunpack.c.l.b16 %v1280
      %v2945 = vunpack.c.h.b16 %v1280
      %v2946 = vunpack.c.l.b16 %v1281
      %v2947 = vunpack.c.h.b16 %v1281
      %v2948 = vunpack.c.l.b16 %v1282
      %v2949 = vunpack.c.h.b16 %v1282
      %v2950 = vunpack.c.l.b16 %v1283
      %v2951 = vunpack.c.h.b16 %v1283
      %v2952 = vunpack.c.l.b16 %v1284
      %v2953 = vunpack.c.h.b16 %v1284
      %v2954 = vunpack.c.l.b16 %v1285
      %v2955 = vunpack.c.h.b16 %v1285
      %v2956 = vunpack.c.l.b16 %v1286
      %v2957 = vunpack.c.h.b16 %v1286
      %v2958 = vunpack.c.l.b16 %v1287
      %v2959 = vunpack.c.h.b16 %v1287
      %v2960 = vunpack.c.l.b16 %v1288
      %v2961 = vunpack.c.h.b16 %v1288
      %v2962 = vunpack.c.l.b16 %v1289
      %v2963 = vunpack.c.h.b16 %v1289
      %v2964 = vunpack.c.l.b16 %v1290
      %v2965 = vunpack.c.h.b16 %v1290
      %v2966 = vunpack.c.l.b16 %v1291
      %v2967 = vunpack.c.h.b16 %v1291
      %v2968 = vunpack.c.l.b16 %v1292
      %v2969 = vunpack.c.h.b16 %v1292
      %v2970 = vpack.c.b16 %v2812, %v2810
      %v2971 = vpack.c.b16 %v2813, %v2811
      %v2972 = vpack.c.b16 %v2816, %v2814
      %v2973 = vpack.c.b16 %v2817, %v2815
      %v2974 = vpack.c.b16 %v2820, %v2818
      %v2975 = vpack.c.b16 %v2821, %v2819
      %v2976 = vpack.c.b16 %v2824, %v2822
      %v2977 = vpack.c.b16 %v2825, %v2823
      %v2978 = vpack.c.b16 %v2828, %v2826
      %v2979 = vpack.c.b16 %v2829, %v2827
      %v2980 = vpack.c.b16 %v2832, %v2830
      %v2981 = vpack.c.b16 %v2833, %v2831
      %v2982 = vpack.c.b16 %v2836, %v2834
      %v2983 = vpack.c.b16 %v2837, %v2835
      %v2984 = vpack.c.b16 %v2840, %v2838
      %v2985 = vpack.c.b16 %v2841, %v2839
      %v2986 = vpack.c.b16 %v2844, %v2842
      %v2987 = vpack.c.b16 %v2845, %v2843
      %v2988 = vpack.c.b16 %v2848, %v2846
      %v2989 = vpack.c.b16 %v2849, %v2847
      %v2990 = vpack.c.b16 %v2852, %v2850
      %v2991 = vpack.c.b16 %v2853, %v2851
      %v2992 = vpack.c.b16 %v2856, %v2854
      %v2993 = vpack.c.b16 %v2857, %v2855
      %v2994 = vpack.c.b16 %v2860, %v2858
      %v2995 = vpack.c.b16 %v2861, %v2859
      %v2996 = vpack.c.b16 %v2864, %v2862
      %v2997 = vpack.c.b16 %v2865, %v2863
      %v2998 = vpack.c.b16 %v2868, %v2866
      %v2999 = vpack.c.b16 %v2869, %v2867
      %v3000 = vpack.c.b16 %v2872, %v2870
      %v3001 = vpack.c.b16 %v2873, %v2871
      %v3002 = vpack.c.b16 %v2876, %v2874
      %v3003 = vpack.c.b16 %v2877, %v2875
      %v3004 = vpack.c.b16 %v2880, %v2878
      %v3005 = vpack.c.b16 %v2881, %v2879
      %v3006 = vpack.c.b16 %v2884, %v2882
      %v3007 = vpack.c.b16 %v2885, %v2883
      %v3008 = vpack.c.b16 %v2888, %v2886
      %v3009 = vpack.c.b16 %v2889, %v2887
      %v3010 = vpack.c.b16 %v2892, %v2890
      %v3011 = vpack.c.b16 %v2893, %v2891
      %v3012 = vpack.c.b16 %v2896, %v2894
      %v3013 = vpack.c.b16 %v2897, %v2895
      %v3014 = vpack.c.b16 %v2900, %v2898
      %v3015 = vpack.c.b16 %v2901, %v2899
      %v3016 = vpack.c.b16 %v2904, %v2902
      %v3017 = vpack.c.b16 %v2905, %v2903
      %v3018 = vpack.c.b16 %v2908, %v2906
      %v3019 = vpack.c.b16 %v2909, %v2907
      %v3020 = vpack.c.b16 %v2912, %v2910
      %v3021 = vpack.c.b16 %v2913, %v2911
      %v3022 = vpack.c.b16 %v2916, %v2914
      %v3023 = vpack.c.b16 %v2917, %v2915
      %v3024 = vpack.c.b16 %v2920, %v2918
      %v3025 = vpack.c.b16 %v2921, %v2919
      %v3026 = vpack.c.b16 %v2924, %v2922
      %v3027 = vpack.c.b16 %v2925, %v2923
      %v3028 = vpack.c.b16 %v2928, %v2926
      %v3029 = vpack.c.b16 %v2929, %v2927
      %v3030 = vpack.c.b16 %v2932, %v2930
      %v3031 = vpack.c.b16 %v2933, %v2931
      %v3032 = vpack.c.b16 %v2936, %v2934
      %v3033 = vpack.c.b16 %v2937, %v2935
      %v3034 = vpack.c.b16 %v2940, %v2938
      %v3035 = vpack.c.b16 %v2941, %v2939
      %v3036 = vpack.c.b16 %v2944, %v2942
      %v3037 = vpack.c.b16 %v2945, %v2943
      %v3038 = vpack.c.b16 %v2948, %v2946
      %v3039 = vpack.c.b16 %v2949, %v2947
      %v3040 = vpack.c.b16 %v2952, %v2950
      %v3041 = vpack.c.b16 %v2953, %v2951
      %v3042 = vpack.c.b16 %v2956, %v2954
      %v3043 = vpack.c.b16 %v2957, %v2955
      %v3044 = vpack.c.b16 %v2960, %v2958
      %v3045 = vpack.c.b16 %v2961, %v2959
      %v3046 = vpack.c.b16 %v2964, %v2962
      %v3047 = vpack.c.b16 %v2965, %v2963
      %v3048 = vpack.c.b16 %v2968, %v2966
      %v3049 = vpack.c.b16 %v2969, %v2967
      %3130 = vmatprep.subr.bf16.mxu0 %v2971
      %3131 = vmatpush1.bf16.msra.mxu0 %v2970
      %3132 = vmatprep.subr.bf16.mxu0 %v2973
      %3133 = vmatpush1.bf16.msra.mxu0 %v2972
      %3134 = vmatprep.subr.bf16.mxu0 %v2975
      %3135 = vmatpush1.bf16.msra.mxu0 %v2974
      %3136 = vmatprep.subr.bf16.mxu0 %v2977
      %3137 = vmatpush1.bf16.msra.mxu0 %v2976
      %3138 = vmatprep.subr.bf16.mxu0 %v2979
      %3139 = vmatpush1.bf16.msra.mxu0 %v2978
      %3140 = vmatprep.subr.bf16.mxu0 %v2981
      %3141 = vmatpush1.bf16.msra.mxu0 %v2980
      %3142 = vmatprep.subr.bf16.mxu0 %v2983
      %3143 = vmatpush1.bf16.msra.mxu0 %v2982
      %3144 = vmatprep.subr.bf16.mxu0 %v2985
      %3145 = vmatpush1.bf16.msra.mxu0 %v2984
      %3146 = vmatprep.subr.bf16.mxu0 %v2987
      %3147 = vmatpush1.bf16.msra.mxu0 %v2986
      %3148 = vmatprep.subr.bf16.mxu0 %v2989
      %3149 = vmatpush1.bf16.msra.mxu0 %v2988
      %3150 = vmatprep.subr.bf16.mxu0 %v2991
      %3151 = vmatpush1.bf16.msra.mxu0 %v2990
      %3152 = vmatprep.subr.bf16.mxu0 %v2993
      %3153 = vmatpush1.bf16.msra.mxu0 %v2992
      %3154 = vmatprep.subr.bf16.mxu0 %v2995
      %3155 = vmatpush1.bf16.msra.mxu0 %v2994
      %3156 = vmatprep.subr.bf16.mxu0 %v2997
      %3157 = vmatpush1.bf16.msra.mxu0 %v2996
      %3158 = vmatprep.subr.bf16.mxu0 %v2999
      %3159 = vmatpush1.bf16.msra.mxu0 %v2998
      %3160 = vmatprep.subr.bf16.mxu0 %v3001
      %3161 = vmatpush1.bf16.msra.mxu0 %v3000
      %3162 = vmatprep.mubr.bf16.mxu0 0
      %3163 = vmatmul.mubr.bf16.gmra.mrb[0].mxu0 0
      %v3164 = vpop.f32.mrb[0].mxu0
      %v3165 = vadd.f32 %v2186, %v3164
      %v3166 = vpop.f32.mrb[0].mxu0
      %v3167 = vadd.f32 %v2188, %v3166
      %v3168 = vpop.f32.mrb[0].mxu0
      %v3169 = vadd.f32 %v2190, %v3168
      %v3170 = vpop.f32.mrb[0].mxu0
      %v3171 = vadd.f32 %v2192, %v3170
      %3172 = vmatprep.mubr.bf16.mxu0 %v2698
      %3173 = vmatmul.mubr.bf16.gmra.mrb[0].mxu0 0
      %v3174 = vpop.f32.mrb[0].mxu0
      %v3175 = vadd.f32 %v2196, %v3174
      %v3176 = vpop.f32.mrb[0].mxu0
      %v3177 = vadd.f32 %v2198, %v3176
      %v3178 = vpop.f32.mrb[0].mxu0
      %v3179 = vadd.f32 %v2200, %v3178
      %v3180 = vpop.f32.mrb[0].mxu0
      %v3181 = vadd.f32 %v2202, %v3180
      %3182 = vmatprep.mubr.bf16.mxu0 %v2699
      %3183 = vmatmul.mubr.bf16.gmra.mrb[0].mxu0 %v2698
      %v3184 = vpop.f32.mrb[0].mxu0
      %v3185 = vadd.f32 %v2206, %v3184
      %v3186 = vpop.f32.mrb[0].mxu0
      %v3187 = vadd.f32 %v2208, %v3186
      %v3188 = vpop.f32.mrb[0].mxu0
      %v3189 = vadd.f32 %v2210, %v3188
      %v3190 = vpop.f32.mrb[0].mxu0
      %v3191 = vadd.f32 %v2212, %v3190
      %3192 = vmatprep.mubr.bf16.mxu0 %v2700
      %3193 = vmatmul.mubr.bf16.gmra.mrb[0].mxu0 %v2699
      %v3194 = vpop.f32.mrb[0].mxu0
      %v3195 = vadd.f32 %v2216, %v3194
      %v3196 = vpop.f32.mrb[0].mxu0
      %v3197 = vadd.f32 %v2218, %v3196
      %v3198 = vpop.f32.mrb[0].mxu0
      %v3199 = vadd.f32 %v2220, %v3198
      %v3200 = vpop.f32.mrb[0].mxu0
      %v3201 = vadd.f32 %v2222, %v3200
      %3202 = vmatprep.mubr.bf16.mxu0 %v2701
      %3203 = vmatmul.mubr.bf16.gmra.mrb[0].mxu0 %v2700
      %v3204 = vpop.f32.mrb[0].mxu0
      %v3205 = vadd.f32 %v2226, %v3204
      %v3206 = vpop.f32.mrb[0].mxu0
      %v3207 = vadd.f32 %v2228, %v3206
      %v3208 = vpop.f32.mrb[0].mxu0
      %v3209 = vadd.f32 %v2230, %v3208
      %v3210 = vpop.f32.mrb[0].mxu0
      %v3211 = vadd.f32 %v2232, %v3210
      %3212 = vmatprep.mubr.bf16.mxu0 %v2702
      %3213 = vmatmul.mubr.bf16.gmra.mrb[0].mxu0 %v2701
      %v3214 = vpop.f32.mrb[0].mxu0
      %v3215 = vadd.f32 %v2236, %v3214
      %v3216 = vpop.f32.mrb[0].mxu0
      %v3217 = vadd.f32 %v2238, %v3216
      %v3218 = vpop.f32.mrb[0].mxu0
      %v3219 = vadd.f32 %v2240, %v3218
      %v3220 = vpop.f32.mrb[0].mxu0
      %v3221 = vadd.f32 %v2242, %v3220
      %3222 = vmatprep.mubr.bf16.mxu0 %v2703
      %3223 = vmatmul.mubr.bf16.gmra.mrb[0].mxu0 %v2702
      %v3224 = vpop.f32.mrb[0].mxu0
      %v3225 = vadd.f32 %v2246, %v3224
      %v3226 = vpop.f32.mrb[0].mxu0
      %v3227 = vadd.f32 %v2248, %v3226
      %v3228 = vpop.f32.mrb[0].mxu0
      %v3229 = vadd.f32 %v2250, %v3228
      %v3230 = vpop.f32.mrb[0].mxu0
      %v3231 = vadd.f32 %v2252, %v3230
      %3232 = vmatprep.mubr.bf16.mxu0 %v2704
      %3233 = vmatmul.mubr.bf16.gmra.mrb[0].mxu0 %v2703
      %v3234 = vpop.f32.mrb[0].mxu0
      %v3235 = vadd.f32 %v2256, %v3234
      %v3236 = vpop.f32.mrb[0].mxu0
      %v3237 = vadd.f32 %v2258, %v3236
      %v3238 = vpop.f32.mrb[0].mxu0
      %v3239 = vadd.f32 %v2260, %v3238
      %v3240 = vpop.f32.mrb[0].mxu0
      %v3241 = vadd.f32 %v2262, %v3240
      %3242 = vmatprep.mubr.bf16.mxu0 %v2705
      %3243 = vmatmul.mubr.bf16.gmra.mrb[0].mxu0 %v2704
      %v3244 = vpop.f32.mrb[0].mxu0
      %v3245 = vadd.f32 %v2266, %v3244
      %v3246 = vpop.f32.mrb[0].mxu0
      %v3247 = vadd.f32 %v2268, %v3246
      %v3248 = vpop.f32.mrb[0].mxu0
      %v3249 = vadd.f32 %v2270, %v3248
      %v3250 = vpop.f32.mrb[0].mxu0
      %v3251 = vadd.f32 %v2272, %v3250
      %3252 = vmatprep.mubr.bf16.mxu0 %v2706
      %3253 = vmatmul.mubr.bf16.gmra.mrb[0].mxu0 %v2705
      %v3254 = vpop.f32.mrb[0].mxu0
      %v3255 = vadd.f32 %v2276, %v3254
      %v3256 = vpop.f32.mrb[0].mxu0
      %v3257 = vadd.f32 %v2278, %v3256
      %v3258 = vpop.f32.mrb[0].mxu0
      %v3259 = vadd.f32 %v2280, %v3258
      %v3260 = vpop.f32.mrb[0].mxu0
      %v3261 = vadd.f32 %v2282, %v3260
      %3262 = vmatprep.mubr.bf16.mxu0 %v2707
      %3263 = vmatmul.mubr.bf16.gmra.mrb[0].mxu0 %v2706
      %v3264 = vpop.f32.mrb[0].mxu0
      %v3265 = vadd.f32 %v2286, %v3264
      %v3266 = vpop.f32.mrb[0].mxu0
      %v3267 = vadd.f32 %v2288, %v3266
      %v3268 = vpop.f32.mrb[0].mxu0
      %v3269 = vadd.f32 %v2290, %v3268
      %v3270 = vpop.f32.mrb[0].mxu0
      %v3271 = vadd.f32 %v2292, %v3270
      %3272 = vmatprep.mubr.bf16.mxu0 %v2708
      %3273 = vmatmul.mubr.bf16.gmra.mrb[0].mxu0 %v2707
      %v3274 = vpop.f32.mrb[0].mxu0
      %v3275 = vadd.f32 %v2296, %v3274
      %v3276 = vpop.f32.mrb[0].mxu0
      %v3277 = vadd.f32 %v2298, %v3276
      %v3278 = vpop.f32.mrb[0].mxu0
      %v3279 = vadd.f32 %v2300, %v3278
      %v3280 = vpop.f32.mrb[0].mxu0
      %v3281 = vadd.f32 %v2302, %v3280
      %3282 = vmatprep.mubr.bf16.mxu0 %v2709
      %3283 = vmatmul.mubr.bf16.gmra.mrb[0].mxu0 %v2708
      %v3284 = vpop.f32.mrb[0].mxu0
      %v3285 = vadd.f32 %v2306, %v3284
      %v3286 = vpop.f32.mrb[0].mxu0
      %v3287 = vadd.f32 %v2308, %v3286
      %v3288 = vpop.f32.mrb[0].mxu0
      %v3289 = vadd.f32 %v2310, %v3288
      %v3290 = vpop.f32.mrb[0].mxu0
      %v3291 = vadd.f32 %v2312, %v3290
      %3292 = vmatprep.mubr.bf16.mxu0 %v2710
      %3293 = vmatmul.mubr.bf16.gmra.mrb[0].mxu0 %v2709
      %v3294 = vpop.f32.mrb[0].mxu0
      %v3295 = vadd.f32 %v2316, %v3294
      %v3296 = vpop.f32.mrb[0].mxu0
      %v3297 = vadd.f32 %v2318, %v3296
      %v3298 = vpop.f32.mrb[0].mxu0
      %v3299 = vadd.f32 %v2320, %v3298
      %v3300 = vpop.f32.mrb[0].mxu0
      %v3301 = vadd.f32 %v2322, %v3300
      %3302 = vmatprep.mubr.bf16.mxu0 %v2711
      %3303 = vmatmul.mubr.bf16.gmra.mrb[0].mxu0 %v2710
      %v3304 = vpop.f32.mrb[0].mxu0
      %v3305 = vadd.f32 %v2326, %v3304
      %v3306 = vpop.f32.mrb[0].mxu0
      %v3307 = vadd.f32 %v2328, %v3306
      %v3308 = vpop.f32.mrb[0].mxu0
      %v3309 = vadd.f32 %v2330, %v3308
      %v3310 = vpop.f32.mrb[0].mxu0
      %v3311 = vadd.f32 %v2332, %v3310
      %3312 = vmatprep.mubr.bf16.mxu0 %v2712
      %3313 = vmatmul.mubr.bf16.gmra.mrb[0].mxu0 %v2711
      %v3314 = vpop.f32.mrb[0].mxu0
      %v3315 = vadd.f32 %v2336, %v3314
      %v3316 = vpop.f32.mrb[0].mxu0
      %v3317 = vadd.f32 %v2338, %v3316
      %v3318 = vpop.f32.mrb[0].mxu0
      %v3319 = vadd.f32 %v2340, %v3318
      %v3320 = vpop.f32.mrb[0].mxu0
      %v3321 = vadd.f32 %v2342, %v3320
      %3322 = vdwg.mxu0
      %3323 = vmatprep.subr.bf16.mxu0 %v3003
      %3324 = vmatpush1.bf16.msra.mxu0 %v3002
      %3325 = vmatprep.subr.bf16.mxu0 %v3005
      %3326 = vmatpush1.bf16.msra.mxu0 %v3004
      %3327 = vmatprep.subr.bf16.mxu0 %v3007
      %3328 = vmatpush1.bf16.msra.mxu0 %v3006
      %3329 = vmatprep.subr.bf16.mxu0 %v3009
      %3330 = vmatpush1.bf16.msra.mxu0 %v3008
      %3331 = vmatprep.subr.bf16.mxu0 %v3011
      %3332 = vmatpush1.bf16.msra.mxu0 %v3010
      %3333 = vmatprep.subr.bf16.mxu0 %v3013
      %3334 = vmatpush1.bf16.msra.mxu0 %v3012
      %3335 = vmatprep.subr.bf16.mxu0 %v3015
      %3336 = vmatpush1.bf16.msra.mxu0 %v3014
      %3337 = vmatprep.subr.bf16.mxu0 %v3017
      %3338 = vmatpush1.bf16.msra.mxu0 %v3016
      %3339 = vmatprep.subr.bf16.mxu0 %v3019
      %3340 = vmatpush1.bf16.msra.mxu0 %v3018
      %3341 = vmatprep.subr.bf16.mxu0 %v3021
      %3342 = vmatpush1.bf16.msra.mxu0 %v3020
      %3343 = vmatprep.subr.bf16.mxu0 %v3023
      %3344 = vmatpush1.bf16.msra.mxu0 %v3022
      %3345 = vmatprep.subr.bf16.mxu0 %v3025
      %3346 = vmatpush1.bf16.msra.mxu0 %v3024
      %3347 = vmatprep.subr.bf16.mxu0 %v3027
      %3348 = vmatpush1.bf16.msra.mxu0 %v3026
      %3349 = vmatprep.subr.bf16.mxu0 %v3029
      %3350 = vmatpush1.bf16.msra.mxu0 %v3028
      %3351 = vmatprep.subr.bf16.mxu0 %v3031
      %3352 = vmatpush1.bf16.msra.mxu0 %v3030
      %3353 = vmatprep.subr.bf16.mxu0 %v3033
      %3354 = vmatpush1.bf16.msra.mxu0 %v3032
      %3355 = vmatprep.mubr.bf16.mxu0 %v2699
      %3356 = vmatmul.mubr.bf16.gmra.mrb[0].mxu0 %v2698
      %v3357 = vpop.f32.mrb[0].mxu0
      %v3358 = vadd.f32 %v3165, %v3357
      %v3359 = vpop.f32.mrb[0].mxu0
      %v3360 = vadd.f32 %v3167, %v3359
      %v3361 = vpop.f32.mrb[0].mxu0
      %v3362 = vadd.f32 %v3169, %v3361
      %v3363 = vpop.f32.mrb[0].mxu0
      %v3364 = vadd.f32 %v3171, %v3363
      %3365 = vmatprep.mubr.bf16.mxu0 %v2700
      %3366 = vmatmul.mubr.bf16.gmra.mrb[0].mxu0 %v2699
      %v3367 = vpop.f32.mrb[0].mxu0
      %v3368 = vadd.f32 %v3175, %v3367
      %v3369 = vpop.f32.mrb[0].mxu0
      %v3370 = vadd.f32 %v3177, %v3369
      %v3371 = vpop.f32.mrb[0].mxu0
      %v3372 = vadd.f32 %v3179, %v3371
      %v3373 = vpop.f32.mrb[0].mxu0
      %v3374 = vadd.f32 %v3181, %v3373
      %3375 = vmatprep.mubr.bf16.mxu0 %v2701
      %3376 = vmatmul.mubr.bf16.gmra.mrb[0].mxu0 %v2700
      %v3377 = vpop.f32.mrb[0].mxu0
      %v3378 = vadd.f32 %v3185, %v3377
      %v3379 = vpop.f32.mrb[0].mxu0
      %v3380 = vadd.f32 %v3187, %v3379
      %v3381 = vpop.f32.mrb[0].mxu0
      %v3382 = vadd.f32 %v3189, %v3381
      %v3383 = vpop.f32.mrb[0].mxu0
      %v3384 = vadd.f32 %v3191, %v3383
      %3385 = vmatprep.mubr.bf16.mxu0 %v2702
      %3386 = vmatmul.mubr.bf16.gmra.mrb[0].mxu0 %v2701
      %v3387 = vpop.f32.mrb[0].mxu0
      %v3388 = vadd.f32 %v3195, %v3387
      %v3389 = vpop.f32.mrb[0].mxu0
      %v3390 = vadd.f32 %v3197, %v3389
      %v3391 = vpop.f32.mrb[0].mxu0
      %v3392 = vadd.f32 %v3199, %v3391
      %v3393 = vpop.f32.mrb[0].mxu0
      %v3394 = vadd.f32 %v3201, %v3393
      %3395 = vmatprep.mubr.bf16.mxu0 %v2703
      %3396 = vmatmul.mubr.bf16.gmra.mrb[0].mxu0 %v2702
      %v3397 = vpop.f32.mrb[0].mxu0
      %v3398 = vadd.f32 %v3205, %v3397
      %v3399 = vpop.f32.mrb[0].mxu0
      %v3400 = vadd.f32 %v3207, %v3399
      %v3401 = vpop.f32.mrb[0].mxu0
      %v3402 = vadd.f32 %v3209, %v3401
      %v3403 = vpop.f32.mrb[0].mxu0
      %v3404 = vadd.f32 %v3211, %v3403
      %3405 = vmatprep.mubr.bf16.mxu0 %v2704
      %3406 = vmatmul.mubr.bf16.gmra.mrb[0].mxu0 %v2703
      %v3407 = vpop.f32.mrb[0].mxu0
      %v3408 = vadd.f32 %v3215, %v3407
      %v3409 = vpop.f32.mrb[0].mxu0
      %v3410 = vadd.f32 %v3217, %v3409
      %v3411 = vpop.f32.mrb[0].mxu0
      %v3412 = vadd.f32 %v3219, %v3411
      %v3413 = vpop.f32.mrb[0].mxu0
      %v3414 = vadd.f32 %v3221, %v3413
      %3415 = vmatprep.mubr.bf16.mxu0 %v2705
      %3416 = vmatmul.mubr.bf16.gmra.mrb[0].mxu0 %v2704
      %v3417 = vpop.f32.mrb[0].mxu0
      %v3418 = vadd.f32 %v3225, %v3417
      %v3419 = vpop.f32.mrb[0].mxu0
      %v3420 = vadd.f32 %v3227, %v3419
      %v3421 = vpop.f32.mrb[0].mxu0
      %v3422 = vadd.f32 %v3229, %v3421
      %v3423 = vpop.f32.mrb[0].mxu0
      %v3424 = vadd.f32 %v3231, %v3423
      %3425 = vmatprep.mubr.bf16.mxu0 %v2706
      %3426 = vmatmul.mubr.bf16.gmra.mrb[0].mxu0 %v2705
      %v3427 = vpop.f32.mrb[0].mxu0
      %v3428 = vadd.f32 %v3235, %v3427
      %v3429 = vpop.f32.mrb[0].mxu0
      %v3430 = vadd.f32 %v3237, %v3429
      %v3431 = vpop.f32.mrb[0].mxu0
      %v3432 = vadd.f32 %v3239, %v3431
      %v3433 = vpop.f32.mrb[0].mxu0
      %v3434 = vadd.f32 %v3241, %v3433
      %3435 = vmatprep.mubr.bf16.mxu0 %v2707
      %3436 = vmatmul.mubr.bf16.gmra.mrb[0].mxu0 %v2706
      %v3437 = vpop.f32.mrb[0].mxu0
      %v3438 = vadd.f32 %v3245, %v3437
      %v3439 = vpop.f32.mrb[0].mxu0
      %v3440 = vadd.f32 %v3247, %v3439
      %v3441 = vpop.f32.mrb[0].mxu0
      %v3442 = vadd.f32 %v3249, %v3441
      %v3443 = vpop.f32.mrb[0].mxu0
      %v3444 = vadd.f32 %v3251, %v3443
      %3445 = vmatprep.mubr.bf16.mxu0 %v2708
      %3446 = vmatmul.mubr.bf16.gmra.mrb[0].mxu0 %v2707
      %v3447 = vpop.f32.mrb[0].mxu0
      %v3448 = vadd.f32 %v3255, %v3447
      %v3449 = vpop.f32.mrb[0].mxu0
      %v3450 = vadd.f32 %v3257, %v3449
      %v3451 = vpop.f32.mrb[0].mxu0
      %v3452 = vadd.f32 %v3259, %v3451
      %v3453 = vpop.f32.mrb[0].mxu0
      %v3454 = vadd.f32 %v3261, %v3453
      %3455 = vmatprep.mubr.bf16.mxu0 %v2709
      %3456 = vmatmul.mubr.bf16.gmra.mrb[0].mxu0 %v2708
      %v3457 = vpop.f32.mrb[0].mxu0
      %v3458 = vadd.f32 %v3265, %v3457
      %v3459 = vpop.f32.mrb[0].mxu0
      %v3460 = vadd.f32 %v3267, %v3459
      %v3461 = vpop.f32.mrb[0].mxu0
      %v3462 = vadd.f32 %v3269, %v3461
      %v3463 = vpop.f32.mrb[0].mxu0
      %v3464 = vadd.f32 %v3271, %v3463
      %3465 = vmatprep.mubr.bf16.mxu0 %v2710
      %3466 = vmatmul.mubr.bf16.gmra.mrb[0].mxu0 %v2709
      %v3467 = vpop.f32.mrb[0].mxu0
      %v3468 = vadd.f32 %v3275, %v3467
      %v3469 = vpop.f32.mrb[0].mxu0
      %v3470 = vadd.f32 %v3277, %v3469
      %v3471 = vpop.f32.mrb[0].mxu0
      %v3472 = vadd.f32 %v3279, %v3471
      %v3473 = vpop.f32.mrb[0].mxu0
      %v3474 = vadd.f32 %v3281, %v3473
      %3475 = vmatprep.mubr.bf16.mxu0 %v2711
      %3476 = vmatmul.mubr.bf16.gmra.mrb[0].mxu0 %v2710
      %v3477 = vpop.f32.mrb[0].mxu0
      %v3478 = vadd.f32 %v3285, %v3477
      %v3479 = vpop.f32.mrb[0].mxu0
      %v3480 = vadd.f32 %v3287, %v3479
      %v3481 = vpop.f32.mrb[0].mxu0
      %v3482 = vadd.f32 %v3289, %v3481
      %v3483 = vpop.f32.mrb[0].mxu0
      %v3484 = vadd.f32 %v3291, %v3483
      %3485 = vmatprep.mubr.bf16.mxu0 %v2712
      %3486 = vmatmul.mubr.bf16.gmra.mrb[0].mxu0 %v2711
      %v3487 = vpop.f32.mrb[0].mxu0
      %v3488 = vadd.f32 %v3295, %v3487
      %v3489 = vpop.f32.mrb[0].mxu0
      %v3490 = vadd.f32 %v3297, %v3489
      %v3491 = vpop.f32.mrb[0].mxu0
      %v3492 = vadd.f32 %v3299, %v3491
      %v3493 = vpop.f32.mrb[0].mxu0
      %v3494 = vadd.f32 %v3301, %v3493
      %3495 = vmatprep.mubr.bf16.mxu0 %v2713
      %3496 = vmatmul.mubr.bf16.gmra.mrb[0].mxu0 %v2712
      %v3497 = vpop.f32.mrb[0].mxu0
      %v3498 = vadd.f32 %v3305, %v3497
      %v3499 = vpop.f32.mrb[0].mxu0
      %v3500 = vadd.f32 %v3307, %v3499
      %v3501 = vpop.f32.mrb[0].mxu0
      %v3502 = vadd.f32 %v3309, %v3501
      %v3503 = vpop.f32.mrb[0].mxu0
      %v3504 = vadd.f32 %v3311, %v3503
      %3505 = vmatprep.mubr.bf16.mxu0 0
      %3506 = vmatmul.mubr.bf16.gmra.mrb[0].mxu0 %v2713
      %v3507 = vpop.f32.mrb[0].mxu0
      %v3508 = vadd.f32 %v3315, %v3507
      %v3509 = vpop.f32.mrb[0].mxu0
      %v3510 = vadd.f32 %v3317, %v3509
      %v3511 = vpop.f32.mrb[0].mxu0
      %v3512 = vadd.f32 %v3319, %v3511
      %v3513 = vpop.f32.mrb[0].mxu0
      %v3514 = vadd.f32 %v3321, %v3513
      %3515 = vdwg.mxu0
      %3516 = vmatprep.subr.bf16.mxu0 %v3035
      %3517 = vmatpush1.bf16.msra.mxu0 %v3034
      %3518 = vmatprep.subr.bf16.mxu0 %v3037
      %3519 = vmatpush1.bf16.msra.mxu0 %v3036
      %3520 = vmatprep.subr.bf16.mxu0 %v3039
      %3521 = vmatpush1.bf16.msra.mxu0 %v3038
      %3522 = vmatprep.subr.bf16.mxu0 %v3041
      %3523 = vmatpush1.bf16.msra.mxu0 %v3040
      %3524 = vmatprep.subr.bf16.mxu0 %v3043
      %3525 = vmatpush1.bf16.msra.mxu0 %v3042
      %3526 = vmatprep.subr.bf16.mxu0 %v3045
      %3527 = vmatpush1.bf16.msra.mxu0 %v3044
      %3528 = vmatprep.subr.bf16.mxu0 %v3047
      %3529 = vmatpush1.bf16.msra.mxu0 %v3046
      %3530 = vmatprep.subr.bf16.mxu0 %v3049
      %3531 = vmatpush1.bf16.msra.mxu0 %v3048
      %3532 = vmatprep.subr.bf16.mxu0 0
      %3533 = vmatpush1.bf16.msra.mxu0 0
      %3534 = vmatprep.subr.bf16.mxu0 0
      %3535 = vmatpush1.bf16.msra.mxu0 0
      %3536 = vmatprep.subr.bf16.mxu0 0
      %3537 = vmatpush1.bf16.msra.mxu0 0
      %3538 = vmatprep.subr.bf16.mxu0 0
      %3539 = vmatpush1.bf16.msra.mxu0 0
      %3540 = vmatprep.subr.bf16.mxu0 0
      %3541 = vmatpush1.bf16.msra.mxu0 0
      %3542 = vmatprep.subr.bf16.mxu0 0
      %3543 = vmatpush1.bf16.msra.mxu0 0
      %3544 = vmatprep.subr.bf16.mxu0 0
      %3545 = vmatpush1.bf16.msra.mxu0 0
      %3546 = vmatprep.subr.bf16.mxu0 0
      %3547 = vmatpush1.bf16.msra.mxu0 0
      %3548 = vmatprep.mubr.bf16.mxu0 0
      %3549 = vmatmul.mubr.bf16.gmra.mrb[0].mxu0 %v2700
      %v3550 = vpop.f32.mrb[0].mxu0
      %v3551 = vadd.f32 %v3358, %v3550
      %v3552 = vpop.f32.mrb[0].mxu0
      %v3553 = vadd.f32 %v3360, %v3552
      %v3554 = vpop.f32.mrb[0].mxu0
      %v3555 = vadd.f32 %v3362, %v3554
      %v3556 = vpop.f32.mrb[0].mxu0
      %v3557 = vadd.f32 %v3364, %v3556
      %3558 = vmatprep.mubr.bf16.mxu0 0
      %3559 = vmatmul.mubr.bf16.gmra.mrb[0].mxu0 %v2701
      %v3560 = vpop.f32.mrb[0].mxu0
      %v3561 = vadd.f32 %v3368, %v3560
      %v3562 = vpop.f32.mrb[0].mxu0
      %v3563 = vadd.f32 %v3370, %v3562
      %v3564 = vpop.f32.mrb[0].mxu0
      %v3565 = vadd.f32 %v3372, %v3564
      %v3566 = vpop.f32.mrb[0].mxu0
      %v3567 = vadd.f32 %v3374, %v3566
      %3568 = vmatprep.mubr.bf16.mxu0 0
      %3569 = vmatmul.mubr.bf16.gmra.mrb[0].mxu0 %v2702
      %v3570 = vpop.f32.mrb[0].mxu0
      %v3571 = vadd.f32 %v3378, %v3570
      %v3572 = vpop.f32.mrb[0].mxu0
      %v3573 = vadd.f32 %v3380, %v3572
      %v3574 = vpop.f32.mrb[0].mxu0
      %v3575 = vadd.f32 %v3382, %v3574
      %v3576 = vpop.f32.mrb[0].mxu0
      %v3577 = vadd.f32 %v3384, %v3576
      %3578 = vmatprep.mubr.bf16.mxu0 0
      %3579 = vmatmul.mubr.bf16.gmra.mrb[0].mxu0 %v2703
      %v3580 = vpop.f32.mrb[0].mxu0
      %v3581 = vadd.f32 %v3388, %v3580
      %v3582 = vpop.f32.mrb[0].mxu0
      %v3583 = vadd.f32 %v3390, %v3582
      %v3584 = vpop.f32.mrb[0].mxu0
      %v3585 = vadd.f32 %v3392, %v3584
      %v3586 = vpop.f32.mrb[0].mxu0
      %v3587 = vadd.f32 %v3394, %v3586
      %3588 = vmatprep.mubr.bf16.mxu0 0
      %3589 = vmatmul.mubr.bf16.gmra.mrb[0].mxu0 %v2704
      %v3590 = vpop.f32.mrb[0].mxu0
      %v3591 = vadd.f32 %v3398, %v3590
      %v3592 = vpop.f32.mrb[0].mxu0
      %v3593 = vadd.f32 %v3400, %v3592
      %v3594 = vpop.f32.mrb[0].mxu0
      %v3595 = vadd.f32 %v3402, %v3594
      %v3596 = vpop.f32.mrb[0].mxu0
      %v3597 = vadd.f32 %v3404, %v3596
      %3598 = vmatprep.mubr.bf16.mxu0 0
      %3599 = vmatmul.mubr.bf16.gmra.mrb[0].mxu0 %v2705
      %v3600 = vpop.f32.mrb[0].mxu0
      %v3601 = vadd.f32 %v3408, %v3600
      %v3602 = vpop.f32.mrb[0].mxu0
      %v3603 = vadd.f32 %v3410, %v3602
      %v3604 = vpop.f32.mrb[0].mxu0
      %v3605 = vadd.f32 %v3412, %v3604
      %v3606 = vpop.f32.mrb[0].mxu0
      %v3607 = vadd.f32 %v3414, %v3606
      %3608 = vmatprep.mubr.bf16.mxu0 0
      %3609 = vmatmul.mubr.bf16.gmra.mrb[0].mxu0 %v2706
      %v3610 = vpop.f32.mrb[0].mxu0
      %v3611 = vadd.f32 %v3418, %v3610
      %v3612 = vpop.f32.mrb[0].mxu0
      %v3613 = vadd.f32 %v3420, %v3612
      %v3614 = vpop.f32.mrb[0].mxu0
      %v3615 = vadd.f32 %v3422, %v3614
      %v3616 = vpop.f32.mrb[0].mxu0
      %v3617 = vadd.f32 %v3424, %v3616
      %3618 = vmatprep.mubr.bf16.mxu0 0
      %3619 = vmatmul.mubr.bf16.gmra.mrb[0].mxu0 %v2707
      %v3620 = vpop.f32.mrb[0].mxu0
      %v3621 = vadd.f32 %v3428, %v3620
      %v3622 = vpop.f32.mrb[0].mxu0
      %v3623 = vadd.f32 %v3430, %v3622
      %v3624 = vpop.f32.mrb[0].mxu0
      %v3625 = vadd.f32 %v3432, %v3624
      %v3626 = vpop.f32.mrb[0].mxu0
      %v3627 = vadd.f32 %v3434, %v3626
      %3628 = vmatprep.mubr.bf16.mxu0 0
      %3629 = vmatmul.mubr.bf16.gmra.mrb[0].mxu0 %v2708
      %v3630 = vpop.f32.mrb[0].mxu0
      %v3631 = vadd.f32 %v3438, %v3630
      %v3632 = vpop.f32.mrb[0].mxu0
      %v3633 = vadd.f32 %v3440, %v3632
      %v3634 = vpop.f32.mrb[0].mxu0
      %v3635 = vadd.f32 %v3442, %v3634
      %v3636 = vpop.f32.mrb[0].mxu0
      %v3637 = vadd.f32 %v3444, %v3636
      %3638 = vmatprep.mubr.bf16.mxu0 0
      %3639 = vmatmul.mubr.bf16.gmra.mrb[0].mxu0 %v2709
      %v3640 = vpop.f32.mrb[0].mxu0
      %v3641 = vadd.f32 %v3448, %v3640
      %v3642 = vpop.f32.mrb[0].mxu0
      %v3643 = vadd.f32 %v3450, %v3642
      %v3644 = vpop.f32.mrb[0].mxu0
      %v3645 = vadd.f32 %v3452, %v3644
      %v3646 = vpop.f32.mrb[0].mxu0
      %v3647 = vadd.f32 %v3454, %v3646
      %3648 = vmatprep.mubr.bf16.mxu0 0
      %3649 = vmatmul.mubr.bf16.gmra.mrb[0].mxu0 %v2710
      %v3650 = vpop.f32.mrb[0].mxu0
      %v3651 = vadd.f32 %v3458, %v3650
      %v3652 = vpop.f32.mrb[0].mxu0
      %v3653 = vadd.f32 %v3460, %v3652
      %v3654 = vpop.f32.mrb[0].mxu0
      %v3655 = vadd.f32 %v3462, %v3654
      %v3656 = vpop.f32.mrb[0].mxu0
      %v3657 = vadd.f32 %v3464, %v3656
      %3658 = vmatprep.mubr.bf16.mxu0 0
      %3659 = vmatmul.mubr.bf16.gmra.mrb[0].mxu0 %v2711
      %v3660 = vpop.f32.mrb[0].mxu0
      %v3661 = vadd.f32 %v3468, %v3660
      %v3662 = vpop.f32.mrb[0].mxu0
      %v3663 = vadd.f32 %v3470, %v3662
      %v3664 = vpop.f32.mrb[0].mxu0
      %v3665 = vadd.f32 %v3472, %v3664
      %v3666 = vpop.f32.mrb[0].mxu0
      %v3667 = vadd.f32 %v3474, %v3666
      %3668 = vmatprep.mubr.bf16.mxu0 0
      %3669 = vmatmul.mubr.bf16.gmra.mrb[0].mxu0 %v2712
      %v3670 = vpop.f32.mrb[0].mxu0
      %v3671 = vadd.f32 %v3478, %v3670
      %v3672 = vpop.f32.mrb[0].mxu0
      %v3673 = vadd.f32 %v3480, %v3672
      %v3674 = vpop.f32.mrb[0].mxu0
      %v3675 = vadd.f32 %v3482, %v3674
      %v3676 = vpop.f32.mrb[0].mxu0
      %v3677 = vadd.f32 %v3484, %v3676
      %3678 = vmatprep.mubr.bf16.mxu0 0
      %3679 = vmatmul.mubr.bf16.gmra.mrb[0].mxu0 %v2713
      %v3680 = vpop.f32.mrb[0].mxu0
      %v3681 = vadd.f32 %v3488, %v3680
      %v3682 = vpop.f32.mrb[0].mxu0
      %v3683 = vadd.f32 %v3490, %v3682
      %v3684 = vpop.f32.mrb[0].mxu0
      %v3685 = vadd.f32 %v3492, %v3684
      %v3686 = vpop.f32.mrb[0].mxu0
      %v3687 = vadd.f32 %v3494, %v3686
      %3688 = vmatprep.mubr.bf16.mxu0 0
      %3689 = vmatmul.mubr.bf16.gmra.mrb[0].mxu0 0
      %v3690 = vpop.f32.mrb[0].mxu0
      %v3691 = vadd.f32 %v3498, %v3690
      %v3692 = vpop.f32.mrb[0].mxu0
      %v3693 = vadd.f32 %v3500, %v3692
      %v3694 = vpop.f32.mrb[0].mxu0
      %v3695 = vadd.f32 %v3502, %v3694
      %v3696 = vpop.f32.mrb[0].mxu0
      %v3697 = vadd.f32 %v3504, %v3696
      %3698 = vmatprep.mubr.bf16.mxu0 0
      %3699 = vmatmul.mubr.bf16.gmra.mrb[0].mxu0 0
      %v3700 = vpop.f32.mrb[0].mxu0
      %v3701 = vadd.f32 %v3508, %v3700
      %v3702 = vpop.f32.mrb[0].mxu0
      %v3703 = vadd.f32 %v3510, %v3702
      %v3704 = vpop.f32.mrb[0].mxu0
      %v3705 = vadd.f32 %v3512, %v3704
      %v3706 = vpop.f32.mrb[0].mxu0
      %v3707 = vadd.f32 %v3514, %v3706
      %3708 = vdwg.mxu0
      %v3710 = vlaneseq
      %v3711 = vshrl.u32 %v3710, 7
      %v3712 = vsub.s32 0, %v3711
      %v3713 = vrot.slane %v1453, %v3712
      %v3714 = vlaneseq
      %v3715 = vshrl.u32 %v3714, 7
      %v3716 = vsub.s32 1, %v3715
      %v3717 = vrot.slane %v1453, %v3716
      %v3720 = vadd.f32 %v3551, %v3713
      %v3721 = vadd.f32 %v3553, %v3717
      %v3722 = vadd.f32 %v3555, %v3713
      %v3723 = vadd.f32 %v3557, %v3717
      %v3724 = vadd.f32 %v3561, %v3713
      %v3725 = vadd.f32 %v3563, %v3717
      %v3726 = vadd.f32 %v3565, %v3713
      %v3727 = vadd.f32 %v3567, %v3717
      %v3728 = vadd.f32 %v3571, %v3713
      %v3729 = vadd.f32 %v3573, %v3717
      %v3730 = vadd.f32 %v3575, %v3713
      %v3731 = vadd.f32 %v3577, %v3717
      %v3732 = vadd.f32 %v3581, %v3713
      %v3733 = vadd.f32 %v3583, %v3717
      %v3734 = vadd.f32 %v3585, %v3713
      %v3735 = vadd.f32 %v3587, %v3717
      %v3736 = vadd.f32 %v3591, %v3713
      %v3737 = vadd.f32 %v3593, %v3717
      %v3738 = vadd.f32 %v3595, %v3713
      %v3739 = vadd.f32 %v3597, %v3717
      %v3740 = vadd.f32 %v3601, %v3713
      %v3741 = vadd.f32 %v3603, %v3717
      %v3742 = vadd.f32 %v3605, %v3713
      %v3743 = vadd.f32 %v3607, %v3717
      %v3744 = vadd.f32 %v3611, %v3713
      %v3745 = vadd.f32 %v3613, %v3717
      %v3746 = vadd.f32 %v3615, %v3713
      %v3747 = vadd.f32 %v3617, %v3717
      %v3748 = vadd.f32 %v3621, %v3713
      %v3749 = vadd.f32 %v3623, %v3717
      %v3750 = vadd.f32 %v3625, %v3713
      %v3751 = vadd.f32 %v3627, %v3717
      %v3752 = vadd.f32 %v3631, %v3713
      %v3753 = vadd.f32 %v3633, %v3717
      %v3754 = vadd.f32 %v3635, %v3713
      %v3755 = vadd.f32 %v3637, %v3717
      %v3756 = vadd.f32 %v3641, %v3713
      %v3757 = vadd.f32 %v3643, %v3717
      %v3758 = vadd.f32 %v3645, %v3713
      %v3759 = vadd.f32 %v3647, %v3717
      %v3760 = vadd.f32 %v3651, %v3713
      %v3761 = vadd.f32 %v3653, %v3717
      %v3762 = vadd.f32 %v3655, %v3713
      %v3763 = vadd.f32 %v3657, %v3717
      %v3764 = vadd.f32 %v3661, %v3713
      %v3765 = vadd.f32 %v3663, %v3717
      %v3766 = vadd.f32 %v3665, %v3713
      %v3767 = vadd.f32 %v3667, %v3717
      %v3768 = vadd.f32 %v3671, %v3713
      %v3769 = vadd.f32 %v3673, %v3717
      %v3770 = vadd.f32 %v3675, %v3713
      %v3771 = vadd.f32 %v3677, %v3717
      %v3772 = vadd.f32 %v3681, %v3713
      %v3773 = vadd.f32 %v3683, %v3717
      %v3774 = vadd.f32 %v3685, %v3713
      %v3775 = vadd.f32 %v3687, %v3717
      %v3776 = vadd.f32 %v3691, %v3713
      %v3777 = vadd.f32 %v3693, %v3717
      %v3778 = vadd.f32 %v3695, %v3713
      %v3779 = vadd.f32 %v3697, %v3717
      %v3780 = vadd.f32 %v3701, %v3713
      %v3781 = vadd.f32 %v3703, %v3717
      %v3782 = vadd.f32 %v3705, %v3713
      %v3783 = vadd.f32 %v3707, %v3717
      %v3784 = vxor.u32 %v3720, 2147483648
      %v3785 = vxor.u32 %v3721, 2147483648
      %v3786 = vxor.u32 %v3722, 2147483648
      %v3787 = vxor.u32 %v3723, 2147483648
      %v3788 = vxor.u32 %v3724, 2147483648
      %v3789 = vxor.u32 %v3725, 2147483648
      %v3790 = vxor.u32 %v3726, 2147483648
      %v3791 = vxor.u32 %v3727, 2147483648
      %v3792 = vxor.u32 %v3728, 2147483648
      %v3793 = vxor.u32 %v3729, 2147483648
      %v3794 = vxor.u32 %v3730, 2147483648
      %v3795 = vxor.u32 %v3731, 2147483648
      %v3796 = vxor.u32 %v3732, 2147483648
      %v3797 = vxor.u32 %v3733, 2147483648
      %v3798 = vxor.u32 %v3734, 2147483648
      %v3799 = vxor.u32 %v3735, 2147483648
      %v3800 = vxor.u32 %v3736, 2147483648
      %v3801 = vxor.u32 %v3737, 2147483648
      %v3802 = vxor.u32 %v3738, 2147483648
      %v3803 = vxor.u32 %v3739, 2147483648
      %v3804 = vxor.u32 %v3740, 2147483648
      %v3805 = vxor.u32 %v3741, 2147483648
      %v3806 = vxor.u32 %v3742, 2147483648
      %v3807 = vxor.u32 %v3743, 2147483648
      %v3808 = vxor.u32 %v3744, 2147483648
      %v3809 = vxor.u32 %v3745, 2147483648
      %v3810 = vxor.u32 %v3746, 2147483648
      %v3811 = vxor.u32 %v3747, 2147483648
      %v3812 = vxor.u32 %v3748, 2147483648
      %v3813 = vxor.u32 %v3749, 2147483648
      %v3814 = vxor.u32 %v3750, 2147483648
      %v3815 = vxor.u32 %v3751, 2147483648
      %v3816 = vxor.u32 %v3752, 2147483648
      %v3817 = vxor.u32 %v3753, 2147483648
      %v3818 = vxor.u32 %v3754, 2147483648
      %v3819 = vxor.u32 %v3755, 2147483648
      %v3820 = vxor.u32 %v3756, 2147483648
      %v3821 = vxor.u32 %v3757, 2147483648
      %v3822 = vxor.u32 %v3758, 2147483648
      %v3823 = vxor.u32 %v3759, 2147483648
      %v3824 = vxor.u32 %v3760, 2147483648
      %v3825 = vxor.u32 %v3761, 2147483648
      %v3826 = vxor.u32 %v3762, 2147483648
      %v3827 = vxor.u32 %v3763, 2147483648
      %v3828 = vxor.u32 %v3764, 2147483648
      %v3829 = vxor.u32 %v3765, 2147483648
      %v3830 = vxor.u32 %v3766, 2147483648
      %v3831 = vxor.u32 %v3767, 2147483648
      %v3832 = vxor.u32 %v3768, 2147483648
      %v3833 = vxor.u32 %v3769, 2147483648
      %v3834 = vxor.u32 %v3770, 2147483648
      %v3835 = vxor.u32 %v3771, 2147483648
      %v3836 = vxor.u32 %v3772, 2147483648
      %v3837 = vxor.u32 %v3773, 2147483648
      %v3838 = vxor.u32 %v3774, 2147483648
      %v3839 = vxor.u32 %v3775, 2147483648
      %v3840 = vxor.u32 %v3776, 2147483648
      %v3841 = vxor.u32 %v3777, 2147483648
      %v3842 = vxor.u32 %v3778, 2147483648
      %v3843 = vxor.u32 %v3779, 2147483648
      %v3844 = vxor.u32 %v3780, 2147483648
      %v3845 = vxor.u32 %v3781, 2147483648
      %v3846 = vxor.u32 %v3782, 2147483648
      %v3847 = vxor.u32 %v3783, 2147483648
      %v3848 = vmul.f32 %v3784, 1.442695
      %v3849 = vpow.pop %v3848
      %v3850 = vmul.f32 %v3785, 1.442695
      %v3851 = vpow.pop %v3850
      %v3852 = vmul.f32 %v3786, 1.442695
      %v3853 = vpow.pop %v3852
      %v3854 = vmul.f32 %v3787, 1.442695
      %v3855 = vpow.pop %v3854
      %v3856 = vmul.f32 %v3788, 1.442695
      %v3857 = vpow.pop %v3856
      %v3858 = vmul.f32 %v3789, 1.442695
      %v3859 = vpow.pop %v3858
      %v3860 = vmul.f32 %v3790, 1.442695
      %v3861 = vpow.pop %v3860
      %v3862 = vmul.f32 %v3791, 1.442695
      %v3863 = vpow.pop %v3862
      %v3864 = vmul.f32 %v3792, 1.442695
      %v3865 = vpow.pop %v3864
      %v3866 = vmul.f32 %v3793, 1.442695
      %v3867 = vpow.pop %v3866
      %v3868 = vmul.f32 %v3794, 1.442695
      %v3869 = vpow.pop %v3868
      %v3870 = vmul.f32 %v3795, 1.442695
      %v3871 = vpow.pop %v3870
      %v3872 = vmul.f32 %v3796, 1.442695
      %v3873 = vpow.pop %v3872
      %v3874 = vmul.f32 %v3797, 1.442695
      %v3875 = vpow.pop %v3874
      %v3876 = vmul.f32 %v3798, 1.442695
      %v3877 = vpow.pop %v3876
      %v3878 = vmul.f32 %v3799, 1.442695
      %v3879 = vpow.pop %v3878
      %v3880 = vmul.f32 %v3800, 1.442695
      %v3881 = vpow.pop %v3880
      %v3882 = vmul.f32 %v3801, 1.442695
      %v3883 = vpow.pop %v3882
      %v3884 = vmul.f32 %v3802, 1.442695
      %v3885 = vpow.pop %v3884
      %v3886 = vmul.f32 %v3803, 1.442695
      %v3887 = vpow.pop %v3886
      %v3888 = vmul.f32 %v3804, 1.442695
      %v3889 = vpow.pop %v3888
      %v3890 = vmul.f32 %v3805, 1.442695
      %v3891 = vpow.pop %v3890
      %v3892 = vmul.f32 %v3806, 1.442695
      %v3893 = vpow.pop %v3892
      %v3894 = vmul.f32 %v3807, 1.442695
      %v3895 = vpow.pop %v3894
      %v3896 = vmul.f32 %v3808, 1.442695
      %v3897 = vpow.pop %v3896
      %v3898 = vmul.f32 %v3809, 1.442695
      %v3899 = vpow.pop %v3898
      %v3900 = vmul.f32 %v3810, 1.442695
      %v3901 = vpow.pop %v3900
      %v3902 = vmul.f32 %v3811, 1.442695
      %v3903 = vpow.pop %v3902
      %v3904 = vmul.f32 %v3812, 1.442695
      %v3905 = vpow.pop %v3904
      %v3906 = vmul.f32 %v3813, 1.442695
      %v3907 = vpow.pop %v3906
      %v3908 = vmul.f32 %v3814, 1.442695
      %v3909 = vpow.pop %v3908
      %v3910 = vmul.f32 %v3815, 1.442695
      %v3911 = vpow.pop %v3910
      %v3912 = vmul.f32 %v3816, 1.442695
      %v3913 = vpow.pop %v3912
      %v3914 = vmul.f32 %v3817, 1.442695
      %v3915 = vpow.pop %v3914
      %v3916 = vmul.f32 %v3818, 1.442695
      %v3917 = vpow.pop %v3916
      %v3918 = vmul.f32 %v3819, 1.442695
      %v3919 = vpow.pop %v3918
      %v3920 = vmul.f32 %v3820, 1.442695
      %v3921 = vpow.pop %v3920
      %v3922 = vmul.f32 %v3821, 1.442695
      %v3923 = vpow.pop %v3922
      %v3924 = vmul.f32 %v3822, 1.442695
      %v3925 = vpow.pop %v3924
      %v3926 = vmul.f32 %v3823, 1.442695
      %v3927 = vpow.pop %v3926
      %v3928 = vmul.f32 %v3824, 1.442695
      %v3929 = vpow.pop %v3928
      %v3930 = vmul.f32 %v3825, 1.442695
      %v3931 = vpow.pop %v3930
      %v3932 = vmul.f32 %v3826, 1.442695
      %v3933 = vpow.pop %v3932
      %v3934 = vmul.f32 %v3827, 1.442695
      %v3935 = vpow.pop %v3934
      %v3936 = vmul.f32 %v3828, 1.442695
      %v3937 = vpow.pop %v3936
      %v3938 = vmul.f32 %v3829, 1.442695
      %v3939 = vpow.pop %v3938
      %v3940 = vmul.f32 %v3830, 1.442695
      %v3941 = vpow.pop %v3940
      %v3942 = vmul.f32 %v3831, 1.442695
      %v3943 = vpow.pop %v3942
      %v3944 = vmul.f32 %v3832, 1.442695
      %v3945 = vpow.pop %v3944
      %v3946 = vmul.f32 %v3833, 1.442695
      %v3947 = vpow.pop %v3946
      %v3948 = vmul.f32 %v3834, 1.442695
      %v3949 = vpow.pop %v3948
      %v3950 = vmul.f32 %v3835, 1.442695
      %v3951 = vpow.pop %v3950
      %v3952 = vmul.f32 %v3836, 1.442695
      %v3953 = vpow.pop %v3952
      %v3954 = vmul.f32 %v3837, 1.442695
      %v3955 = vpow.pop %v3954
      %v3956 = vmul.f32 %v3838, 1.442695
      %v3957 = vpow.pop %v3956
      %v3958 = vmul.f32 %v3839, 1.442695
      %v3959 = vpow.pop %v3958
      %v3960 = vmul.f32 %v3840, 1.442695
      %v3961 = vpow.pop %v3960
      %v3962 = vmul.f32 %v3841, 1.442695
      %v3963 = vpow.pop %v3962
      %v3964 = vmul.f32 %v3842, 1.442695
      %v3965 = vpow.pop %v3964
      %v3966 = vmul.f32 %v3843, 1.442695
      %v3967 = vpow.pop %v3966
      %v3968 = vmul.f32 %v3844, 1.442695
      %v3969 = vpow.pop %v3968
      %v3970 = vmul.f32 %v3845, 1.442695
      %v3971 = vpow.pop %v3970
      %v3972 = vmul.f32 %v3846, 1.442695
      %v3973 = vpow.pop %v3972
      %v3974 = vmul.f32 %v3847, 1.442695
      %v3975 = vpow.pop %v3974
      %v3976 = vadd.f32 %v3849, 1.0
      %v3977 = vadd.f32 %v3851, 1.0
      %v3978 = vadd.f32 %v3853, 1.0
      %v3979 = vadd.f32 %v3855, 1.0
      %v3980 = vadd.f32 %v3857, 1.0
      %v3981 = vadd.f32 %v3859, 1.0
      %v3982 = vadd.f32 %v3861, 1.0
      %v3983 = vadd.f32 %v3863, 1.0
      %v3984 = vadd.f32 %v3865, 1.0
      %v3985 = vadd.f32 %v3867, 1.0
      %v3986 = vadd.f32 %v3869, 1.0
      %v3987 = vadd.f32 %v3871, 1.0
      %v3988 = vadd.f32 %v3873, 1.0
      %v3989 = vadd.f32 %v3875, 1.0
      %v3990 = vadd.f32 %v3877, 1.0
      %v3991 = vadd.f32 %v3879, 1.0
      %v3992 = vadd.f32 %v3881, 1.0
      %v3993 = vadd.f32 %v3883, 1.0
      %v3994 = vadd.f32 %v3885, 1.0
      %v3995 = vadd.f32 %v3887, 1.0
      %v3996 = vadd.f32 %v3889, 1.0
      %v3997 = vadd.f32 %v3891, 1.0
      %v3998 = vadd.f32 %v3893, 1.0
      %v3999 = vadd.f32 %v3895, 1.0
      %v4000 = vadd.f32 %v3897, 1.0
      %v4001 = vadd.f32 %v3899, 1.0
      %v4002 = vadd.f32 %v3901, 1.0
      %v4003 = vadd.f32 %v3903, 1.0
      %v4004 = vadd.f32 %v3905, 1.0
      %v4005 = vadd.f32 %v3907, 1.0
      %v4006 = vadd.f32 %v3909, 1.0
      %v4007 = vadd.f32 %v3911, 1.0
      %v4008 = vadd.f32 %v3913, 1.0
      %v4009 = vadd.f32 %v3915, 1.0
      %v4010 = vadd.f32 %v3917, 1.0
      %v4011 = vadd.f32 %v3919, 1.0
      %v4012 = vadd.f32 %v3921, 1.0
      %v4013 = vadd.f32 %v3923, 1.0
      %v4014 = vadd.f32 %v3925, 1.0
      %v4015 = vadd.f32 %v3927, 1.0
      %v4016 = vadd.f32 %v3929, 1.0
      %v4017 = vadd.f32 %v3931, 1.0
      %v4018 = vadd.f32 %v3933, 1.0
      %v4019 = vadd.f32 %v3935, 1.0
      %v4020 = vadd.f32 %v3937, 1.0
      %v4021 = vadd.f32 %v3939, 1.0
      %v4022 = vadd.f32 %v3941, 1.0
      %v4023 = vadd.f32 %v3943, 1.0
      %v4024 = vadd.f32 %v3945, 1.0
      %v4025 = vadd.f32 %v3947, 1.0
      %v4026 = vadd.f32 %v3949, 1.0
      %v4027 = vadd.f32 %v3951, 1.0
      %v4028 = vadd.f32 %v3953, 1.0
      %v4029 = vadd.f32 %v3955, 1.0
      %v4030 = vadd.f32 %v3957, 1.0
      %v4031 = vadd.f32 %v3959, 1.0
      %v4032 = vadd.f32 %v3961, 1.0
      %v4033 = vadd.f32 %v3963, 1.0
      %v4034 = vadd.f32 %v3965, 1.0
      %v4035 = vadd.f32 %v3967, 1.0
      %v4036 = vadd.f32 %v3969, 1.0
      %v4037 = vadd.f32 %v3971, 1.0
      %v4038 = vadd.f32 %v3973, 1.0
      %v4039 = vadd.f32 %v3975, 1.0
      %v4040 = vrcp.pop %v3976
      %v4041 = vmul.f32 1.0, %v4040
      %v4042 = vrcp.pop %v3977
      %v4043 = vmul.f32 1.0, %v4042
      %v4044 = vrcp.pop %v3978
      %v4045 = vmul.f32 1.0, %v4044
      %v4046 = vrcp.pop %v3979
      %v4047 = vmul.f32 1.0, %v4046
      %v4048 = vrcp.pop %v3980
      %v4049 = vmul.f32 1.0, %v4048
      %v4050 = vrcp.pop %v3981
      %v4051 = vmul.f32 1.0, %v4050
      %v4052 = vrcp.pop %v3982
      %v4053 = vmul.f32 1.0, %v4052
      %v4054 = vrcp.pop %v3983
      %v4055 = vmul.f32 1.0, %v4054
      %v4056 = vrcp.pop %v3984
      %v4057 = vmul.f32 1.0, %v4056
      %v4058 = vrcp.pop %v3985
      %v4059 = vmul.f32 1.0, %v4058
      %v4060 = vrcp.pop %v3986
      %v4061 = vmul.f32 1.0, %v4060
      %v4062 = vrcp.pop %v3987
      %v4063 = vmul.f32 1.0, %v4062
      %v4064 = vrcp.pop %v3988
      %v4065 = vmul.f32 1.0, %v4064
      %v4066 = vrcp.pop %v3989
      %v4067 = vmul.f32 1.0, %v4066
      %v4068 = vrcp.pop %v3990
      %v4069 = vmul.f32 1.0, %v4068
      %v4070 = vrcp.pop %v3991
      %v4071 = vmul.f32 1.0, %v4070
      %v4072 = vrcp.pop %v3992
      %v4073 = vmul.f32 1.0, %v4072
      %v4074 = vrcp.pop %v3993
      %v4075 = vmul.f32 1.0, %v4074
      %v4076 = vrcp.pop %v3994
      %v4077 = vmul.f32 1.0, %v4076
      %v4078 = vrcp.pop %v3995
      %v4079 = vmul.f32 1.0, %v4078
      %v4080 = vrcp.pop %v3996
      %v4081 = vmul.f32 1.0, %v4080
      %v4082 = vrcp.pop %v3997
      %v4083 = vmul.f32 1.0, %v4082
      %v4084 = vrcp.pop %v3998
      %v4085 = vmul.f32 1.0, %v4084
      %v4086 = vrcp.pop %v3999
      %v4087 = vmul.f32 1.0, %v4086
      %v4088 = vrcp.pop %v4000
      %v4089 = vmul.f32 1.0, %v4088
      %v4090 = vrcp.pop %v4001
      %v4091 = vmul.f32 1.0, %v4090
      %v4092 = vrcp.pop %v4002
      %v4093 = vmul.f32 1.0, %v4092
      %v4094 = vrcp.pop %v4003
      %v4095 = vmul.f32 1.0, %v4094
      %v4096 = vrcp.pop %v4004
      %v4097 = vmul.f32 1.0, %v4096
      %v4098 = vrcp.pop %v4005
      %v4099 = vmul.f32 1.0, %v4098
      %v4100 = vrcp.pop %v4006
      %v4101 = vmul.f32 1.0, %v4100
      %v4102 = vrcp.pop %v4007
      %v4103 = vmul.f32 1.0, %v4102
      %v4104 = vrcp.pop %v4008
      %v4105 = vmul.f32 1.0, %v4104
      %v4106 = vrcp.pop %v4009
      %v4107 = vmul.f32 1.0, %v4106
      %v4108 = vrcp.pop %v4010
      %v4109 = vmul.f32 1.0, %v4108
      %v4110 = vrcp.pop %v4011
      %v4111 = vmul.f32 1.0, %v4110
      %v4112 = vrcp.pop %v4012
      %v4113 = vmul.f32 1.0, %v4112
      %v4114 = vrcp.pop %v4013
      %v4115 = vmul.f32 1.0, %v4114
      %v4116 = vrcp.pop %v4014
      %v4117 = vmul.f32 1.0, %v4116
      %v4118 = vrcp.pop %v4015
      %v4119 = vmul.f32 1.0, %v4118
      %v4120 = vrcp.pop %v4016
      %v4121 = vmul.f32 1.0, %v4120
      %v4122 = vrcp.pop %v4017
      %v4123 = vmul.f32 1.0, %v4122
      %v4124 = vrcp.pop %v4018
      %v4125 = vmul.f32 1.0, %v4124
      %v4126 = vrcp.pop %v4019
      %v4127 = vmul.f32 1.0, %v4126
      %v4128 = vrcp.pop %v4020
      %v4129 = vmul.f32 1.0, %v4128
      %v4130 = vrcp.pop %v4021
      %v4131 = vmul.f32 1.0, %v4130
      %v4132 = vrcp.pop %v4022
      %v4133 = vmul.f32 1.0, %v4132
      %v4134 = vrcp.pop %v4023
      %v4135 = vmul.f32 1.0, %v4134
      %v4136 = vrcp.pop %v4024
      %v4137 = vmul.f32 1.0, %v4136
      %v4138 = vrcp.pop %v4025
      %v4139 = vmul.f32 1.0, %v4138
      %v4140 = vrcp.pop %v4026
      %v4141 = vmul.f32 1.0, %v4140
      %v4142 = vrcp.pop %v4027
      %v4143 = vmul.f32 1.0, %v4142
      %v4144 = vrcp.pop %v4028
      %v4145 = vmul.f32 1.0, %v4144
      %v4146 = vrcp.pop %v4029
      %v4147 = vmul.f32 1.0, %v4146
      %v4148 = vrcp.pop %v4030
      %v4149 = vmul.f32 1.0, %v4148
      %v4150 = vrcp.pop %v4031
      %v4151 = vmul.f32 1.0, %v4150
      %v4152 = vrcp.pop %v4032
      %v4153 = vmul.f32 1.0, %v4152
      %v4154 = vrcp.pop %v4033
      %v4155 = vmul.f32 1.0, %v4154
      %v4156 = vrcp.pop %v4034
      %v4157 = vmul.f32 1.0, %v4156
      %v4158 = vrcp.pop %v4035
      %v4159 = vmul.f32 1.0, %v4158
      %v4160 = vrcp.pop %v4036
      %v4161 = vmul.f32 1.0, %v4160
      %v4162 = vrcp.pop %v4037
      %v4163 = vmul.f32 1.0, %v4162
      %v4164 = vrcp.pop %v4038
      %v4165 = vmul.f32 1.0, %v4164
      %v4166 = vrcp.pop %v4039
      %v4167 = vmul.f32 1.0, %v4166
      %v4168 = vpack.c.bf16 %v4047, %v4043
      %v4169 = vpack.c.bf16 %v4055, %v4051
      %v4170 = vpack.c.bf16 %v4063, %v4059
      %v4171 = vpack.c.bf16 %v4071, %v4067
      %v4172 = vpack.c.bf16 %v4079, %v4075
      %v4173 = vpack.c.bf16 %v4087, %v4083
      %v4174 = vpack.c.bf16 %v4095, %v4091
      %v4175 = vpack.c.bf16 %v4103, %v4099
      %v4176 = vpack.c.bf16 %v4111, %v4107
      %v4177 = vpack.c.bf16 %v4119, %v4115
      %v4178 = vpack.c.bf16 %v4127, %v4123
      %v4179 = vpack.c.bf16 %v4135, %v4131
      %v4180 = vpack.c.bf16 %v4143, %v4139
      %v4181 = vpack.c.bf16 %v4151, %v4147
      %v4182 = vpack.c.bf16 %v4159, %v4155
      %v4183 = vpack.c.bf16 %v4167, %v4163
      %v4184 = vmul.bf16 %v4168, %v2698
      %v4185 = vmul.bf16 %v4169, %v2699
      %v4186 = vmul.bf16 %v4170, %v2700
      %v4187 = vmul.bf16 %v4171, %v2701
      %v4188 = vmul.bf16 %v4172, %v2702
      %v4189 = vmul.bf16 %v4173, %v2703
      %v4190 = vmul.bf16 %v4174, %v2704
      %v4191 = vmul.bf16 %v4175, %v2705
      %v4192 = vmul.bf16 %v4176, %v2706
      %v4193 = vmul.bf16 %v4177, %v2707
      %v4194 = vmul.bf16 %v4178, %v2708
      %v4195 = vmul.bf16 %v4179, %v2709
      %v4196 = vmul.bf16 %v4180, %v2710
      %v4197 = vmul.bf16 %v4181, %v2711
      %v4198 = vmul.bf16 %v4182, %v2712
      %v4199 = vmul.bf16 %v4183, %v2713
      %v4280 = vunpack.c.l.b16 %v1293
      %v4281 = vunpack.c.l.b16 %v1294
      %v4282 = vunpack.c.l.b16 %v1295
      %v4283 = vunpack.c.l.b16 %v1296
      %v4284 = vunpack.c.l.b16 %v1297
      %v4285 = vunpack.c.l.b16 %v1298
      %v4286 = vunpack.c.l.b16 %v1299
      %v4287 = vunpack.c.l.b16 %v1300
      %v4288 = vunpack.c.l.b16 %v1301
      %v4289 = vunpack.c.l.b16 %v1302
      %v4290 = vunpack.c.l.b16 %v1303
      %v4291 = vunpack.c.l.b16 %v1304
      %v4292 = vunpack.c.l.b16 %v1305
      %v4293 = vunpack.c.l.b16 %v1306
      %v4294 = vunpack.c.l.b16 %v1307
      %v4295 = vunpack.c.l.b16 %v1308
      %v4296 = vunpack.c.l.b16 %v1309
      %v4297 = vunpack.c.l.b16 %v1310
      %v4298 = vunpack.c.l.b16 %v1311
      %v4299 = vunpack.c.l.b16 %v1312
      %v4300 = vunpack.c.l.b16 %v1313
      %v4301 = vunpack.c.l.b16 %v1314
      %v4302 = vunpack.c.l.b16 %v1315
      %v4303 = vunpack.c.l.b16 %v1316
      %v4304 = vunpack.c.l.b16 %v1317
      %v4305 = vunpack.c.l.b16 %v1318
      %v4306 = vunpack.c.l.b16 %v1319
      %v4307 = vunpack.c.l.b16 %v1320
      %v4308 = vunpack.c.l.b16 %v1321
      %v4309 = vunpack.c.l.b16 %v1322
      %v4310 = vunpack.c.l.b16 %v1323
      %v4311 = vunpack.c.l.b16 %v1324
      %v4312 = vunpack.c.l.b16 %v1325
      %v4313 = vunpack.c.l.b16 %v1326
      %v4314 = vunpack.c.l.b16 %v1327
      %v4315 = vunpack.c.l.b16 %v1328
      %v4316 = vunpack.c.l.b16 %v1329
      %v4317 = vunpack.c.l.b16 %v1330
      %v4318 = vunpack.c.l.b16 %v1331
      %v4319 = vunpack.c.l.b16 %v1332
      %v4320 = vunpack.c.l.b16 %v1333
      %v4321 = vunpack.c.l.b16 %v1334
      %v4322 = vunpack.c.l.b16 %v1335
      %v4323 = vunpack.c.l.b16 %v1336
      %v4324 = vunpack.c.l.b16 %v1337
      %v4325 = vunpack.c.l.b16 %v1338
      %v4326 = vunpack.c.l.b16 %v1339
      %v4327 = vunpack.c.l.b16 %v1340
      %v4328 = vunpack.c.l.b16 %v1341
      %v4329 = vunpack.c.l.b16 %v1342
      %v4330 = vunpack.c.l.b16 %v1343
      %v4331 = vunpack.c.l.b16 %v1344
      %v4332 = vunpack.c.l.b16 %v1345
      %v4333 = vunpack.c.l.b16 %v1346
      %v4334 = vunpack.c.l.b16 %v1347
      %v4335 = vunpack.c.l.b16 %v1348
      %v4336 = vunpack.c.l.b16 %v1349
      %v4337 = vunpack.c.l.b16 %v1350
      %v4338 = vunpack.c.l.b16 %v1351
      %v4339 = vunpack.c.l.b16 %v1352
      %v4340 = vunpack.c.l.b16 %v1353
      %v4341 = vunpack.c.l.b16 %v1354
      %v4342 = vunpack.c.l.b16 %v1355
      %v4343 = vunpack.c.l.b16 %v1356
      %v4344 = vunpack.c.l.b16 %v1357
      %v4345 = vunpack.c.l.b16 %v1358
      %v4346 = vunpack.c.l.b16 %v1359
      %v4347 = vunpack.c.l.b16 %v1360
      %v4348 = vunpack.c.l.b16 %v1361
      %v4349 = vunpack.c.l.b16 %v1362
      %v4350 = vunpack.c.l.b16 %v1363
      %v4351 = vunpack.c.l.b16 %v1364
      %v4352 = vunpack.c.l.b16 %v1365
      %v4353 = vunpack.c.l.b16 %v1366
      %v4354 = vunpack.c.l.b16 %v1367
      %v4355 = vunpack.c.l.b16 %v1368
      %v4356 = vunpack.c.l.b16 %v1369
      %v4357 = vunpack.c.l.b16 %v1370
      %v4358 = vunpack.c.l.b16 %v1371
      %v4359 = vunpack.c.l.b16 %v1372
      %v4360 = vpack.c.b16 %v4281, %v4280
      %v4361 = vpack.c.b16 %v4283, %v4282
      %v4362 = vpack.c.b16 %v4285, %v4284
      %v4363 = vpack.c.b16 %v4287, %v4286
      %v4364 = vpack.c.b16 %v4289, %v4288
      %v4365 = vpack.c.b16 %v4291, %v4290
      %v4366 = vpack.c.b16 %v4293, %v4292
      %v4367 = vpack.c.b16 %v4295, %v4294
      %v4368 = vpack.c.b16 %v4297, %v4296
      %v4369 = vpack.c.b16 %v4299, %v4298
      %v4370 = vpack.c.b16 %v4301, %v4300
      %v4371 = vpack.c.b16 %v4303, %v4302
      %v4372 = vpack.c.b16 %v4305, %v4304
      %v4373 = vpack.c.b16 %v4307, %v4306
      %v4374 = vpack.c.b16 %v4309, %v4308
      %v4375 = vpack.c.b16 %v4311, %v4310
      %v4376 = vpack.c.b16 %v4313, %v4312
      %v4377 = vpack.c.b16 %v4315, %v4314
      %v4378 = vpack.c.b16 %v4317, %v4316
      %v4379 = vpack.c.b16 %v4319, %v4318
      %v4380 = vpack.c.b16 %v4321, %v4320
      %v4381 = vpack.c.b16 %v4323, %v4322
      %v4382 = vpack.c.b16 %v4325, %v4324
      %v4383 = vpack.c.b16 %v4327, %v4326
      %v4384 = vpack.c.b16 %v4329, %v4328
      %v4385 = vpack.c.b16 %v4331, %v4330
      %v4386 = vpack.c.b16 %v4333, %v4332
      %v4387 = vpack.c.b16 %v4335, %v4334
      %v4388 = vpack.c.b16 %v4337, %v4336
      %v4389 = vpack.c.b16 %v4339, %v4338
      %v4390 = vpack.c.b16 %v4341, %v4340
      %v4391 = vpack.c.b16 %v4343, %v4342
      %v4392 = vpack.c.b16 %v4345, %v4344
      %v4393 = vpack.c.b16 %v4347, %v4346
      %v4394 = vpack.c.b16 %v4349, %v4348
      %v4395 = vpack.c.b16 %v4351, %v4350
      %v4396 = vpack.c.b16 %v4353, %v4352
      %v4397 = vpack.c.b16 %v4355, %v4354
      %v4398 = vpack.c.b16 %v4357, %v4356
      %v4399 = vpack.c.b16 %v4359, %v4358
      %4440 = vmatprep.subr.bf16.mxu0 0
      %4441 = vmatpush1.bf16.msra.mxu0 %v4360
      %4442 = vmatprep.subr.bf16.mxu0 0
      %4443 = vmatpush1.bf16.msra.mxu0 %v4361
      %4444 = vmatprep.subr.bf16.mxu0 0
      %4445 = vmatpush1.bf16.msra.mxu0 %v4362
      %4446 = vmatprep.subr.bf16.mxu0 0
      %4447 = vmatpush1.bf16.msra.mxu0 %v4363
      %4448 = vmatprep.subr.bf16.mxu0 0
      %4449 = vmatpush1.bf16.msra.mxu0 %v4364
      %4450 = vmatprep.subr.bf16.mxu0 0
      %4451 = vmatpush1.bf16.msra.mxu0 %v4365
      %4452 = vmatprep.subr.bf16.mxu0 0
      %4453 = vmatpush1.bf16.msra.mxu0 %v4366
      %4454 = vmatprep.subr.bf16.mxu0 0
      %4455 = vmatpush1.bf16.msra.mxu0 %v4367
      %4456 = vmatprep.subr.bf16.mxu0 0
      %4457 = vmatpush1.bf16.msra.mxu0 %v4368
      %4458 = vmatprep.subr.bf16.mxu0 0
      %4459 = vmatpush1.bf16.msra.mxu0 %v4369
      %4460 = vmatprep.subr.bf16.mxu0 0
      %4461 = vmatpush1.bf16.msra.mxu0 %v4370
      %4462 = vmatprep.subr.bf16.mxu0 0
      %4463 = vmatpush1.bf16.msra.mxu0 %v4371
      %4464 = vmatprep.subr.bf16.mxu0 0
      %4465 = vmatpush1.bf16.msra.mxu0 %v4372
      %4466 = vmatprep.subr.bf16.mxu0 0
      %4467 = vmatpush1.bf16.msra.mxu0 %v4373
      %4468 = vmatprep.subr.bf16.mxu0 0
      %4469 = vmatpush1.bf16.msra.mxu0 %v4374
      %4470 = vmatprep.subr.bf16.mxu0 0
      %4471 = vmatpush1.bf16.msra.mxu0 %v4375
      %4472 = vmatprep.mubr.bf16.mxu0 0
      %4473 = vmatmul.mubr.bf16.gmra.mrb[0].mxu0 0
      %v4474 = vpop.f32.mrb[0].mxu0
      %v4475 = vadd.f32 %v2540, %v4474
      %v4476 = vpop.f32.mrb[0].mxu0
      %v4477 = vpop.f32.mrb[0].mxu0
      %v4478 = vadd.f32 %v2543, %v4477
      %v4479 = vpop.f32.mrb[0].mxu0
      %4480 = vmatprep.mubr.bf16.mxu0 %v4184
      %4481 = vmatmul.mubr.bf16.gmra.mrb[0].mxu0 0
      %v4482 = vpop.f32.mrb[0].mxu0
      %v4483 = vadd.f32 %v2548, %v4482
      %v4484 = vpop.f32.mrb[0].mxu0
      %v4485 = vpop.f32.mrb[0].mxu0
      %v4486 = vadd.f32 %v2551, %v4485
      %v4487 = vpop.f32.mrb[0].mxu0
      %4488 = vmatprep.mubr.bf16.mxu0 %v4185
      %4489 = vmatmul.mubr.bf16.gmra.mrb[0].mxu0 %v4184
      %v4490 = vpop.f32.mrb[0].mxu0
      %v4491 = vadd.f32 %v2556, %v4490
      %v4492 = vpop.f32.mrb[0].mxu0
      %v4493 = vpop.f32.mrb[0].mxu0
      %v4494 = vadd.f32 %v2559, %v4493
      %v4495 = vpop.f32.mrb[0].mxu0
      %4496 = vmatprep.mubr.bf16.mxu0 %v4186
      %4497 = vmatmul.mubr.bf16.gmra.mrb[0].mxu0 %v4185
      %v4498 = vpop.f32.mrb[0].mxu0
      %v4499 = vadd.f32 %v2564, %v4498
      %v4500 = vpop.f32.mrb[0].mxu0
      %v4501 = vpop.f32.mrb[0].mxu0
      %v4502 = vadd.f32 %v2567, %v4501
      %v4503 = vpop.f32.mrb[0].mxu0
      %4504 = vmatprep.mubr.bf16.mxu0 %v4187
      %4505 = vmatmul.mubr.bf16.gmra.mrb[0].mxu0 %v4186
      %v4506 = vpop.f32.mrb[0].mxu0
      %v4507 = vadd.f32 %v2572, %v4506
      %v4508 = vpop.f32.mrb[0].mxu0
      %v4509 = vpop.f32.mrb[0].mxu0
      %v4510 = vadd.f32 %v2575, %v4509
      %v4511 = vpop.f32.mrb[0].mxu0
      %4512 = vmatprep.mubr.bf16.mxu0 %v4188
      %4513 = vmatmul.mubr.bf16.gmra.mrb[0].mxu0 %v4187
      %v4514 = vpop.f32.mrb[0].mxu0
      %v4515 = vadd.f32 %v2580, %v4514
      %v4516 = vpop.f32.mrb[0].mxu0
      %v4517 = vpop.f32.mrb[0].mxu0
      %v4518 = vadd.f32 %v2583, %v4517
      %v4519 = vpop.f32.mrb[0].mxu0
      %4520 = vmatprep.mubr.bf16.mxu0 %v4189
      %4521 = vmatmul.mubr.bf16.gmra.mrb[0].mxu0 %v4188
      %v4522 = vpop.f32.mrb[0].mxu0
      %v4523 = vadd.f32 %v2588, %v4522
      %v4524 = vpop.f32.mrb[0].mxu0
      %v4525 = vpop.f32.mrb[0].mxu0
      %v4526 = vadd.f32 %v2591, %v4525
      %v4527 = vpop.f32.mrb[0].mxu0
      %4528 = vmatprep.mubr.bf16.mxu0 %v4190
      %4529 = vmatmul.mubr.bf16.gmra.mrb[0].mxu0 %v4189
      %v4530 = vpop.f32.mrb[0].mxu0
      %v4531 = vadd.f32 %v2596, %v4530
      %v4532 = vpop.f32.mrb[0].mxu0
      %v4533 = vpop.f32.mrb[0].mxu0
      %v4534 = vadd.f32 %v2599, %v4533
      %v4535 = vpop.f32.mrb[0].mxu0
      %4536 = vmatprep.mubr.bf16.mxu0 %v4191
      %4537 = vmatmul.mubr.bf16.gmra.mrb[0].mxu0 %v4190
      %v4538 = vpop.f32.mrb[0].mxu0
      %v4539 = vadd.f32 %v2604, %v4538
      %v4540 = vpop.f32.mrb[0].mxu0
      %v4541 = vpop.f32.mrb[0].mxu0
      %v4542 = vadd.f32 %v2607, %v4541
      %v4543 = vpop.f32.mrb[0].mxu0
      %4544 = vmatprep.mubr.bf16.mxu0 %v4192
      %4545 = vmatmul.mubr.bf16.gmra.mrb[0].mxu0 %v4191
      %v4546 = vpop.f32.mrb[0].mxu0
      %v4547 = vadd.f32 %v2612, %v4546
      %v4548 = vpop.f32.mrb[0].mxu0
      %v4549 = vpop.f32.mrb[0].mxu0
      %v4550 = vadd.f32 %v2615, %v4549
      %v4551 = vpop.f32.mrb[0].mxu0
      %4552 = vmatprep.mubr.bf16.mxu0 %v4193
      %4553 = vmatmul.mubr.bf16.gmra.mrb[0].mxu0 %v4192
      %v4554 = vpop.f32.mrb[0].mxu0
      %v4555 = vadd.f32 %v2620, %v4554
      %v4556 = vpop.f32.mrb[0].mxu0
      %v4557 = vpop.f32.mrb[0].mxu0
      %v4558 = vadd.f32 %v2623, %v4557
      %v4559 = vpop.f32.mrb[0].mxu0
      %4560 = vmatprep.mubr.bf16.mxu0 %v4194
      %4561 = vmatmul.mubr.bf16.gmra.mrb[0].mxu0 %v4193
      %v4562 = vpop.f32.mrb[0].mxu0
      %v4563 = vadd.f32 %v2628, %v4562
      %v4564 = vpop.f32.mrb[0].mxu0
      %v4565 = vpop.f32.mrb[0].mxu0
      %v4566 = vadd.f32 %v2631, %v4565
      %v4567 = vpop.f32.mrb[0].mxu0
      %4568 = vmatprep.mubr.bf16.mxu0 %v4195
      %4569 = vmatmul.mubr.bf16.gmra.mrb[0].mxu0 %v4194
      %v4570 = vpop.f32.mrb[0].mxu0
      %v4571 = vadd.f32 %v2636, %v4570
      %v4572 = vpop.f32.mrb[0].mxu0
      %v4573 = vpop.f32.mrb[0].mxu0
      %v4574 = vadd.f32 %v2639, %v4573
      %v4575 = vpop.f32.mrb[0].mxu0
      %4576 = vmatprep.mubr.bf16.mxu0 %v4196
      %4577 = vmatmul.mubr.bf16.gmra.mrb[0].mxu0 %v4195
      %v4578 = vpop.f32.mrb[0].mxu0
      %v4579 = vadd.f32 %v2644, %v4578
      %v4580 = vpop.f32.mrb[0].mxu0
      %v4581 = vpop.f32.mrb[0].mxu0
      %v4582 = vadd.f32 %v2647, %v4581
      %v4583 = vpop.f32.mrb[0].mxu0
      %4584 = vmatprep.mubr.bf16.mxu0 %v4197
      %4585 = vmatmul.mubr.bf16.gmra.mrb[0].mxu0 %v4196
      %v4586 = vpop.f32.mrb[0].mxu0
      %v4587 = vadd.f32 %v2652, %v4586
      %v4588 = vpop.f32.mrb[0].mxu0
      %v4589 = vpop.f32.mrb[0].mxu0
      %v4590 = vadd.f32 %v2655, %v4589
      %v4591 = vpop.f32.mrb[0].mxu0
      %4592 = vmatprep.mubr.bf16.mxu0 %v4198
      %4593 = vmatmul.mubr.bf16.gmra.mrb[0].mxu0 %v4197
      %v4594 = vpop.f32.mrb[0].mxu0
      %v4595 = vadd.f32 %v2660, %v4594
      %v4596 = vpop.f32.mrb[0].mxu0
      %v4597 = vpop.f32.mrb[0].mxu0
      %v4598 = vadd.f32 %v2663, %v4597
      %v4599 = vpop.f32.mrb[0].mxu0
      %4600 = vdwg.mxu0
      %4601 = vmatprep.subr.bf16.mxu0 0
      %4602 = vmatpush1.bf16.msra.mxu0 %v4376
      %4603 = vmatprep.subr.bf16.mxu0 0
      %4604 = vmatpush1.bf16.msra.mxu0 %v4377
      %4605 = vmatprep.subr.bf16.mxu0 0
      %4606 = vmatpush1.bf16.msra.mxu0 %v4378
      %4607 = vmatprep.subr.bf16.mxu0 0
      %4608 = vmatpush1.bf16.msra.mxu0 %v4379
      %4609 = vmatprep.subr.bf16.mxu0 0
      %4610 = vmatpush1.bf16.msra.mxu0 %v4380
      %4611 = vmatprep.subr.bf16.mxu0 0
      %4612 = vmatpush1.bf16.msra.mxu0 %v4381
      %4613 = vmatprep.subr.bf16.mxu0 0
      %4614 = vmatpush1.bf16.msra.mxu0 %v4382
      %4615 = vmatprep.subr.bf16.mxu0 0
      %4616 = vmatpush1.bf16.msra.mxu0 %v4383
      %4617 = vmatprep.subr.bf16.mxu0 0
      %4618 = vmatpush1.bf16.msra.mxu0 %v4384
      %4619 = vmatprep.subr.bf16.mxu0 0
      %4620 = vmatpush1.bf16.msra.mxu0 %v4385
      %4621 = vmatprep.subr.bf16.mxu0 0
      %4622 = vmatpush1.bf16.msra.mxu0 %v4386
      %4623 = vmatprep.subr.bf16.mxu0 0
      %4624 = vmatpush1.bf16.msra.mxu0 %v4387
      %4625 = vmatprep.subr.bf16.mxu0 0
      %4626 = vmatpush1.bf16.msra.mxu0 %v4388
      %4627 = vmatprep.subr.bf16.mxu0 0
      %4628 = vmatpush1.bf16.msra.mxu0 %v4389
      %4629 = vmatprep.subr.bf16.mxu0 0
      %4630 = vmatpush1.bf16.msra.mxu0 %v4390
      %4631 = vmatprep.subr.bf16.mxu0 0
      %4632 = vmatpush1.bf16.msra.mxu0 %v4391
      %4633 = vmatprep.mubr.bf16.mxu0 %v4185
      %4634 = vmatmul.mubr.bf16.gmra.mrb[0].mxu0 %v4184
      %v4635 = vpop.f32.mrb[0].mxu0
      %v4636 = vadd.f32 %v4475, %v4635
      %v4637 = vpop.f32.mrb[0].mxu0
      %v4638 = vpop.f32.mrb[0].mxu0
      %v4639 = vadd.f32 %v4478, %v4638
      %v4640 = vpop.f32.mrb[0].mxu0
      %4641 = vmatprep.mubr.bf16.mxu0 %v4186
      %4642 = vmatmul.mubr.bf16.gmra.mrb[0].mxu0 %v4185
      %v4643 = vpop.f32.mrb[0].mxu0
      %v4644 = vadd.f32 %v4483, %v4643
      %v4645 = vpop.f32.mrb[0].mxu0
      %v4646 = vpop.f32.mrb[0].mxu0
      %v4647 = vadd.f32 %v4486, %v4646
      %v4648 = vpop.f32.mrb[0].mxu0
      %4649 = vmatprep.mubr.bf16.mxu0 %v4187
      %4650 = vmatmul.mubr.bf16.gmra.mrb[0].mxu0 %v4186
      %v4651 = vpop.f32.mrb[0].mxu0
      %v4652 = vadd.f32 %v4491, %v4651
      %v4653 = vpop.f32.mrb[0].mxu0
      %v4654 = vpop.f32.mrb[0].mxu0
      %v4655 = vadd.f32 %v4494, %v4654
      %v4656 = vpop.f32.mrb[0].mxu0
      %4657 = vmatprep.mubr.bf16.mxu0 %v4188
      %4658 = vmatmul.mubr.bf16.gmra.mrb[0].mxu0 %v4187
      %v4659 = vpop.f32.mrb[0].mxu0
      %v4660 = vadd.f32 %v4499, %v4659
      %v4661 = vpop.f32.mrb[0].mxu0
      %v4662 = vpop.f32.mrb[0].mxu0
      %v4663 = vadd.f32 %v4502, %v4662
      %v4664 = vpop.f32.mrb[0].mxu0
      %4665 = vmatprep.mubr.bf16.mxu0 %v4189
      %4666 = vmatmul.mubr.bf16.gmra.mrb[0].mxu0 %v4188
      %v4667 = vpop.f32.mrb[0].mxu0
      %v4668 = vadd.f32 %v4507, %v4667
      %v4669 = vpop.f32.mrb[0].mxu0
      %v4670 = vpop.f32.mrb[0].mxu0
      %v4671 = vadd.f32 %v4510, %v4670
      %v4672 = vpop.f32.mrb[0].mxu0
      %4673 = vmatprep.mubr.bf16.mxu0 %v4190
      %4674 = vmatmul.mubr.bf16.gmra.mrb[0].mxu0 %v4189
      %v4675 = vpop.f32.mrb[0].mxu0
      %v4676 = vadd.f32 %v4515, %v4675
      %v4677 = vpop.f32.mrb[0].mxu0
      %v4678 = vpop.f32.mrb[0].mxu0
      %v4679 = vadd.f32 %v4518, %v4678
      %v4680 = vpop.f32.mrb[0].mxu0
      %4681 = vmatprep.mubr.bf16.mxu0 %v4191
      %4682 = vmatmul.mubr.bf16.gmra.mrb[0].mxu0 %v4190
      %v4683 = vpop.f32.mrb[0].mxu0
      %v4684 = vadd.f32 %v4523, %v4683
      %v4685 = vpop.f32.mrb[0].mxu0
      %v4686 = vpop.f32.mrb[0].mxu0
      %v4687 = vadd.f32 %v4526, %v4686
      %v4688 = vpop.f32.mrb[0].mxu0
      %4689 = vmatprep.mubr.bf16.mxu0 %v4192
      %4690 = vmatmul.mubr.bf16.gmra.mrb[0].mxu0 %v4191
      %v4691 = vpop.f32.mrb[0].mxu0
      %v4692 = vadd.f32 %v4531, %v4691
      %v4693 = vpop.f32.mrb[0].mxu0
      %v4694 = vpop.f32.mrb[0].mxu0
      %v4695 = vadd.f32 %v4534, %v4694
      %v4696 = vpop.f32.mrb[0].mxu0
      %4697 = vmatprep.mubr.bf16.mxu0 %v4193
      %4698 = vmatmul.mubr.bf16.gmra.mrb[0].mxu0 %v4192
      %v4699 = vpop.f32.mrb[0].mxu0
      %v4700 = vadd.f32 %v4539, %v4699
      %v4701 = vpop.f32.mrb[0].mxu0
      %v4702 = vpop.f32.mrb[0].mxu0
      %v4703 = vadd.f32 %v4542, %v4702
      %v4704 = vpop.f32.mrb[0].mxu0
      %4705 = vmatprep.mubr.bf16.mxu0 %v4194
      %4706 = vmatmul.mubr.bf16.gmra.mrb[0].mxu0 %v4193
      %v4707 = vpop.f32.mrb[0].mxu0
      %v4708 = vadd.f32 %v4547, %v4707
      %v4709 = vpop.f32.mrb[0].mxu0
      %v4710 = vpop.f32.mrb[0].mxu0
      %v4711 = vadd.f32 %v4550, %v4710
      %v4712 = vpop.f32.mrb[0].mxu0
      %4713 = vmatprep.mubr.bf16.mxu0 %v4195
      %4714 = vmatmul.mubr.bf16.gmra.mrb[0].mxu0 %v4194
      %v4715 = vpop.f32.mrb[0].mxu0
      %v4716 = vadd.f32 %v4555, %v4715
      %v4717 = vpop.f32.mrb[0].mxu0
      %v4718 = vpop.f32.mrb[0].mxu0
      %v4719 = vadd.f32 %v4558, %v4718
      %v4720 = vpop.f32.mrb[0].mxu0
      %4721 = vmatprep.mubr.bf16.mxu0 %v4196
      %4722 = vmatmul.mubr.bf16.gmra.mrb[0].mxu0 %v4195
      %v4723 = vpop.f32.mrb[0].mxu0
      %v4724 = vadd.f32 %v4563, %v4723
      %v4725 = vpop.f32.mrb[0].mxu0
      %v4726 = vpop.f32.mrb[0].mxu0
      %v4727 = vadd.f32 %v4566, %v4726
      %v4728 = vpop.f32.mrb[0].mxu0
      %4729 = vmatprep.mubr.bf16.mxu0 %v4197
      %4730 = vmatmul.mubr.bf16.gmra.mrb[0].mxu0 %v4196
      %v4731 = vpop.f32.mrb[0].mxu0
      %v4732 = vadd.f32 %v4571, %v4731
      %v4733 = vpop.f32.mrb[0].mxu0
      %v4734 = vpop.f32.mrb[0].mxu0
      %v4735 = vadd.f32 %v4574, %v4734
      %v4736 = vpop.f32.mrb[0].mxu0
      %4737 = vmatprep.mubr.bf16.mxu0 %v4198
      %4738 = vmatmul.mubr.bf16.gmra.mrb[0].mxu0 %v4197
      %v4739 = vpop.f32.mrb[0].mxu0
      %v4740 = vadd.f32 %v4579, %v4739
      %v4741 = vpop.f32.mrb[0].mxu0
      %v4742 = vpop.f32.mrb[0].mxu0
      %v4743 = vadd.f32 %v4582, %v4742
      %v4744 = vpop.f32.mrb[0].mxu0
      %4745 = vmatprep.mubr.bf16.mxu0 %v4199
      %4746 = vmatmul.mubr.bf16.gmra.mrb[0].mxu0 %v4198
      %v4747 = vpop.f32.mrb[0].mxu0
      %v4748 = vadd.f32 %v4587, %v4747
      %v4749 = vpop.f32.mrb[0].mxu0
      %v4750 = vpop.f32.mrb[0].mxu0
      %v4751 = vadd.f32 %v4590, %v4750
      %v4752 = vpop.f32.mrb[0].mxu0
      %4753 = vmatprep.mubr.bf16.mxu0 0
      %4754 = vmatmul.mubr.bf16.gmra.mrb[0].mxu0 %v4199
      %v4755 = vpop.f32.mrb[0].mxu0
      %v4756 = vadd.f32 %v4595, %v4755
      %v4757 = vpop.f32.mrb[0].mxu0
      %v4758 = vpop.f32.mrb[0].mxu0
      %v4759 = vadd.f32 %v4598, %v4758
      %v4760 = vpop.f32.mrb[0].mxu0
      %4761 = vdwg.mxu0
      %4762 = vmatprep.subr.bf16.mxu0 0
      %4763 = vmatpush1.bf16.msra.mxu0 %v4392
      %4764 = vmatprep.subr.bf16.mxu0 0
      %4765 = vmatpush1.bf16.msra.mxu0 %v4393
      %4766 = vmatprep.subr.bf16.mxu0 0
      %4767 = vmatpush1.bf16.msra.mxu0 %v4394
      %4768 = vmatprep.subr.bf16.mxu0 0
      %4769 = vmatpush1.bf16.msra.mxu0 %v4395
      %4770 = vmatprep.subr.bf16.mxu0 0
      %4771 = vmatpush1.bf16.msra.mxu0 %v4396
      %4772 = vmatprep.subr.bf16.mxu0 0
      %4773 = vmatpush1.bf16.msra.mxu0 %v4397
      %4774 = vmatprep.subr.bf16.mxu0 0
      %4775 = vmatpush1.bf16.msra.mxu0 %v4398
      %4776 = vmatprep.subr.bf16.mxu0 0
      %4777 = vmatpush1.bf16.msra.mxu0 %v4399
      %4778 = vmatprep.subr.bf16.mxu0 0
      %4779 = vmatpush1.bf16.msra.mxu0 0
      %4780 = vmatprep.subr.bf16.mxu0 0
      %4781 = vmatpush1.bf16.msra.mxu0 0
      %4782 = vmatprep.subr.bf16.mxu0 0
      %4783 = vmatpush1.bf16.msra.mxu0 0
      %4784 = vmatprep.subr.bf16.mxu0 0
      %4785 = vmatpush1.bf16.msra.mxu0 0
      %4786 = vmatprep.subr.bf16.mxu0 0
      %4787 = vmatpush1.bf16.msra.mxu0 0
      %4788 = vmatprep.subr.bf16.mxu0 0
      %4789 = vmatpush1.bf16.msra.mxu0 0
      %4790 = vmatprep.subr.bf16.mxu0 0
      %4791 = vmatpush1.bf16.msra.mxu0 0
      %4792 = vmatprep.subr.bf16.mxu0 0
      %4793 = vmatpush1.bf16.msra.mxu0 0
      %4794 = vmatprep.mubr.bf16.mxu0 0
      %4795 = vmatmul.mubr.bf16.gmra.mrb[0].mxu0 %v4186
      %v4796 = vpop.f32.mrb[0].mxu0
      %v4797 = vadd.f32 %v4636, %v4796
      %v4798 = vpop.f32.mrb[0].mxu0
      %v4799 = vpop.f32.mrb[0].mxu0
      %v4800 = vadd.f32 %v4639, %v4799
      %v4801 = vpop.f32.mrb[0].mxu0
      %4802 = vmatprep.mubr.bf16.mxu0 0
      %4803 = vmatmul.mubr.bf16.gmra.mrb[0].mxu0 %v4187
      %v4804 = vpop.f32.mrb[0].mxu0
      %v4805 = vadd.f32 %v4644, %v4804
      %v4806 = vpop.f32.mrb[0].mxu0
      %v4807 = vpop.f32.mrb[0].mxu0
      %v4808 = vadd.f32 %v4647, %v4807
      %v4809 = vpop.f32.mrb[0].mxu0
      %4810 = vmatprep.mubr.bf16.mxu0 0
      %4811 = vmatmul.mubr.bf16.gmra.mrb[0].mxu0 %v4188
      %v4812 = vpop.f32.mrb[0].mxu0
      %v4813 = vadd.f32 %v4652, %v4812
      %v4814 = vpop.f32.mrb[0].mxu0
      %v4815 = vpop.f32.mrb[0].mxu0
      %v4816 = vadd.f32 %v4655, %v4815
      %v4817 = vpop.f32.mrb[0].mxu0
      %4818 = vmatprep.mubr.bf16.mxu0 0
      %4819 = vmatmul.mubr.bf16.gmra.mrb[0].mxu0 %v4189
      %v4820 = vpop.f32.mrb[0].mxu0
      %v4821 = vadd.f32 %v4660, %v4820
      %v4822 = vpop.f32.mrb[0].mxu0
      %v4823 = vpop.f32.mrb[0].mxu0
      %v4824 = vadd.f32 %v4663, %v4823
      %v4825 = vpop.f32.mrb[0].mxu0
      %4826 = vmatprep.mubr.bf16.mxu0 0
      %4827 = vmatmul.mubr.bf16.gmra.mrb[0].mxu0 %v4190
      %v4828 = vpop.f32.mrb[0].mxu0
      %v4829 = vadd.f32 %v4668, %v4828
      %v4830 = vpop.f32.mrb[0].mxu0
      %v4831 = vpop.f32.mrb[0].mxu0
      %v4832 = vadd.f32 %v4671, %v4831
      %v4833 = vpop.f32.mrb[0].mxu0
      %4834 = vmatprep.mubr.bf16.mxu0 0
      %4835 = vmatmul.mubr.bf16.gmra.mrb[0].mxu0 %v4191
      %v4836 = vpop.f32.mrb[0].mxu0
      %v4837 = vadd.f32 %v4676, %v4836
      %v4838 = vpop.f32.mrb[0].mxu0
      %v4839 = vpop.f32.mrb[0].mxu0
      %v4840 = vadd.f32 %v4679, %v4839
      %v4841 = vpop.f32.mrb[0].mxu0
      %4842 = vmatprep.mubr.bf16.mxu0 0
      %4843 = vmatmul.mubr.bf16.gmra.mrb[0].mxu0 %v4192
      %v4844 = vpop.f32.mrb[0].mxu0
      %v4845 = vadd.f32 %v4684, %v4844
      %v4846 = vpop.f32.mrb[0].mxu0
      %v4847 = vpop.f32.mrb[0].mxu0
      %v4848 = vadd.f32 %v4687, %v4847
      %v4849 = vpop.f32.mrb[0].mxu0
      %4850 = vmatprep.mubr.bf16.mxu0 0
      %4851 = vmatmul.mubr.bf16.gmra.mrb[0].mxu0 %v4193
      %v4852 = vpop.f32.mrb[0].mxu0
      %v4853 = vadd.f32 %v4692, %v4852
      %v4854 = vpop.f32.mrb[0].mxu0
      %v4855 = vpop.f32.mrb[0].mxu0
      %v4856 = vadd.f32 %v4695, %v4855
      %v4857 = vpop.f32.mrb[0].mxu0
      %4858 = vmatprep.mubr.bf16.mxu0 0
      %4859 = vmatmul.mubr.bf16.gmra.mrb[0].mxu0 %v4194
      %v4860 = vpop.f32.mrb[0].mxu0
      %v4861 = vadd.f32 %v4700, %v4860
      %v4862 = vpop.f32.mrb[0].mxu0
      %v4863 = vpop.f32.mrb[0].mxu0
      %v4864 = vadd.f32 %v4703, %v4863
      %v4865 = vpop.f32.mrb[0].mxu0
      %4866 = vmatprep.mubr.bf16.mxu0 0
      %4867 = vmatmul.mubr.bf16.gmra.mrb[0].mxu0 %v4195
      %v4868 = vpop.f32.mrb[0].mxu0
      %v4869 = vadd.f32 %v4708, %v4868
      %v4870 = vpop.f32.mrb[0].mxu0
      %v4871 = vpop.f32.mrb[0].mxu0
      %v4872 = vadd.f32 %v4711, %v4871
      %v4873 = vpop.f32.mrb[0].mxu0
      %4874 = vmatprep.mubr.bf16.mxu0 0
      %4875 = vmatmul.mubr.bf16.gmra.mrb[0].mxu0 %v4196
      %v4876 = vpop.f32.mrb[0].mxu0
      %v4877 = vadd.f32 %v4716, %v4876
      %v4878 = vpop.f32.mrb[0].mxu0
      %v4879 = vpop.f32.mrb[0].mxu0
      %v4880 = vadd.f32 %v4719, %v4879
      %v4881 = vpop.f32.mrb[0].mxu0
      %4882 = vmatprep.mubr.bf16.mxu0 0
      %4883 = vmatmul.mubr.bf16.gmra.mrb[0].mxu0 %v4197
      %v4884 = vpop.f32.mrb[0].mxu0
      %v4885 = vadd.f32 %v4724, %v4884
      %v4886 = vpop.f32.mrb[0].mxu0
      %v4887 = vpop.f32.mrb[0].mxu0
      %v4888 = vadd.f32 %v4727, %v4887
      %v4889 = vpop.f32.mrb[0].mxu0
      %4890 = vmatprep.mubr.bf16.mxu0 0
      %4891 = vmatmul.mubr.bf16.gmra.mrb[0].mxu0 %v4198
      %v4892 = vpop.f32.mrb[0].mxu0
      %v4893 = vadd.f32 %v4732, %v4892
      %v4894 = vpop.f32.mrb[0].mxu0
      %v4895 = vpop.f32.mrb[0].mxu0
      %v4896 = vadd.f32 %v4735, %v4895
      %v4897 = vpop.f32.mrb[0].mxu0
      %4898 = vmatprep.mubr.bf16.mxu0 0
      %4899 = vmatmul.mubr.bf16.gmra.mrb[0].mxu0 %v4199
      %v4900 = vpop.f32.mrb[0].mxu0
      %v4901 = vadd.f32 %v4740, %v4900
      %v4902 = vpop.f32.mrb[0].mxu0
      %v4903 = vpop.f32.mrb[0].mxu0
      %v4904 = vadd.f32 %v4743, %v4903
      %v4905 = vpop.f32.mrb[0].mxu0
      %4906 = vmatprep.mubr.bf16.mxu0 0
      %4907 = vmatmul.mubr.bf16.gmra.mrb[0].mxu0 0
      %v4908 = vpop.f32.mrb[0].mxu0
      %v4909 = vadd.f32 %v4748, %v4908
      %v4910 = vpop.f32.mrb[0].mxu0
      %v4911 = vpop.f32.mrb[0].mxu0
      %v4912 = vadd.f32 %v4751, %v4911
      %v4913 = vpop.f32.mrb[0].mxu0
      %4914 = vmatprep.mubr.bf16.mxu0 0
      %4915 = vmatmul.mubr.bf16.gmra.mrb[0].mxu0 0
      %v4916 = vpop.f32.mrb[0].mxu0
      %v4917 = vadd.f32 %v4756, %v4916
      %v4918 = vpop.f32.mrb[0].mxu0
      %v4919 = vpop.f32.mrb[0].mxu0
      %v4920 = vadd.f32 %v4759, %v4919
      %v4921 = vpop.f32.mrb[0].mxu0
      %4922 = vdwg.mxu0
      %v4923 = vrot.slane %v1453, 2
      %v4924 = vlaneseq
      %v4925 = vshrl.u32 %v4924, 7
      %v4926 = vsub.s32 0, %v4925
      %v4927 = vrot.slane %v4923, %v4926
      %v4929 = vadd.f32 %v4797, %v4927
      %v4930 = vadd.f32 %v4800, %v4927
      %v4931 = vadd.f32 %v4805, %v4927
      %v4932 = vadd.f32 %v4808, %v4927
      %v4933 = vadd.f32 %v4813, %v4927
      %v4934 = vadd.f32 %v4816, %v4927
      %v4935 = vadd.f32 %v4821, %v4927
      %v4936 = vadd.f32 %v4824, %v4927
      %v4937 = vadd.f32 %v4829, %v4927
      %v4938 = vadd.f32 %v4832, %v4927
      %v4939 = vadd.f32 %v4837, %v4927
      %v4940 = vadd.f32 %v4840, %v4927
      %v4941 = vadd.f32 %v4845, %v4927
      %v4942 = vadd.f32 %v4848, %v4927
      %v4943 = vadd.f32 %v4853, %v4927
      %v4944 = vadd.f32 %v4856, %v4927
      %v4945 = vadd.f32 %v4861, %v4927
      %v4946 = vadd.f32 %v4864, %v4927
      %v4947 = vadd.f32 %v4869, %v4927
      %v4948 = vadd.f32 %v4872, %v4927
      %v4949 = vadd.f32 %v4877, %v4927
      %v4950 = vadd.f32 %v4880, %v4927
      %v4951 = vadd.f32 %v4885, %v4927
      %v4952 = vadd.f32 %v4888, %v4927
      %v4953 = vadd.f32 %v4893, %v4927
      %v4954 = vadd.f32 %v4896, %v4927
      %v4955 = vadd.f32 %v4901, %v4927
      %v4956 = vadd.f32 %v4904, %v4927
      %v4957 = vadd.f32 %v4909, %v4927
      %v4958 = vadd.f32 %v4912, %v4927
      %v4959 = vadd.f32 %v4917, %v4927
      %v4960 = vadd.f32 %v4920, %v4927
      %v4961 = vtanh.pop %v4929
      %v4962 = vtanh.pop %v4930
      %v4963 = vtanh.pop %v4931
      %v4964 = vtanh.pop %v4932
      %v4965 = vtanh.pop %v4933
      %v4966 = vtanh.pop %v4934
      %v4967 = vtanh.pop %v4935
      %v4968 = vtanh.pop %v4936
      %v4969 = vtanh.pop %v4937
      %v4970 = vtanh.pop %v4938
      %v4971 = vtanh.pop %v4939
      %v4972 = vtanh.pop %v4940
      %v4973 = vtanh.pop %v4941
      %v4974 = vtanh.pop %v4942
      %v4975 = vtanh.pop %v4943
      %v4976 = vtanh.pop %v4944
      %v4977 = vtanh.pop %v4945
      %v4978 = vtanh.pop %v4946
      %v4979 = vtanh.pop %v4947
      %v4980 = vtanh.pop %v4948
      %v4981 = vtanh.pop %v4949
      %v4982 = vtanh.pop %v4950
      %v4983 = vtanh.pop %v4951
      %v4984 = vtanh.pop %v4952
      %v4985 = vtanh.pop %v4953
      %v4986 = vtanh.pop %v4954
      %v4987 = vtanh.pop %v4955
      %v4988 = vtanh.pop %v4956
      %v4989 = vtanh.pop %v4957
      %v4990 = vtanh.pop %v4958
      %v4991 = vtanh.pop %v4959
      %v4992 = vtanh.pop %v4960
      %v4993 = vunpack.c.l.bf16 %v687
      %v4994 = vunpack.c.l.bf16 %v751
      %v4995 = vunpack.c.l.bf16 %v691
      %v4996 = vunpack.c.l.bf16 %v755
      %v4997 = vunpack.c.l.bf16 %v695
      %v4998 = vunpack.c.l.bf16 %v759
      %v4999 = vunpack.c.l.bf16 %v699
      %v5000 = vunpack.c.l.bf16 %v763
      %v5001 = vunpack.c.l.bf16 %v703
      %v5002 = vunpack.c.l.bf16 %v767
      %v5003 = vunpack.c.l.bf16 %v707
      %v5004 = vunpack.c.l.bf16 %v771
      %v5005 = vunpack.c.l.bf16 %v711
      %v5006 = vunpack.c.l.bf16 %v775
      %v5007 = vunpack.c.l.bf16 %v715
      %v5008 = vunpack.c.l.bf16 %v779
      %v5009 = vunpack.c.l.bf16 %v719
      %v5010 = vunpack.c.l.bf16 %v783
      %v5011 = vunpack.c.l.bf16 %v723
      %v5012 = vunpack.c.l.bf16 %v787
      %v5013 = vunpack.c.l.bf16 %v727
      %v5014 = vunpack.c.l.bf16 %v791
      %v5015 = vunpack.c.l.bf16 %v731
      %v5016 = vunpack.c.l.bf16 %v795
      %v5017 = vunpack.c.l.bf16 %v735
      %v5018 = vunpack.c.l.bf16 %v799
      %v5019 = vunpack.c.l.bf16 %v739
      %v5020 = vunpack.c.l.bf16 %v803
      %v5021 = vunpack.c.l.bf16 %v743
      %v5022 = vunpack.c.l.bf16 %v807
      %v5023 = vunpack.c.l.bf16 %v747
      %v5024 = vunpack.c.l.bf16 %v811
      %v5025 = vsub.f32 %v4961, %v4993
      %v5026 = vsub.f32 %v4962, %v4994
      %v5027 = vsub.f32 %v4963, %v4995
      %v5028 = vsub.f32 %v4964, %v4996
      %v5029 = vsub.f32 %v4965, %v4997
      %v5030 = vsub.f32 %v4966, %v4998
      %v5031 = vsub.f32 %v4967, %v4999
      %v5032 = vsub.f32 %v4968, %v5000
      %v5033 = vsub.f32 %v4969, %v5001
      %v5034 = vsub.f32 %v4970, %v5002
      %v5035 = vsub.f32 %v4971, %v5003
      %v5036 = vsub.f32 %v4972, %v5004
      %v5037 = vsub.f32 %v4973, %v5005
      %v5038 = vsub.f32 %v4974, %v5006
      %v5039 = vsub.f32 %v4975, %v5007
      %v5040 = vsub.f32 %v4976, %v5008
      %v5041 = vsub.f32 %v4977, %v5009
      %v5042 = vsub.f32 %v4978, %v5010
      %v5043 = vsub.f32 %v4979, %v5011
      %v5044 = vsub.f32 %v4980, %v5012
      %v5045 = vsub.f32 %v4981, %v5013
      %v5046 = vsub.f32 %v4982, %v5014
      %v5047 = vsub.f32 %v4983, %v5015
      %v5048 = vsub.f32 %v4984, %v5016
      %v5049 = vsub.f32 %v4985, %v5017
      %v5050 = vsub.f32 %v4986, %v5018
      %v5051 = vsub.f32 %v4987, %v5019
      %v5052 = vsub.f32 %v4988, %v5020
      %v5053 = vsub.f32 %v4989, %v5021
      %v5054 = vsub.f32 %v4990, %v5022
      %v5055 = vsub.f32 %v4991, %v5023
      %v5056 = vsub.f32 %v4992, %v5024
      %v5057 = vmul.f32 %v4041, %v5025
      %v5058 = vmul.f32 %v4045, %v5026
      %v5059 = vmul.f32 %v4049, %v5027
      %v5060 = vmul.f32 %v4053, %v5028
      %v5061 = vmul.f32 %v4057, %v5029
      %v5062 = vmul.f32 %v4061, %v5030
      %v5063 = vmul.f32 %v4065, %v5031
      %v5064 = vmul.f32 %v4069, %v5032
      %v5065 = vmul.f32 %v4073, %v5033
      %v5066 = vmul.f32 %v4077, %v5034
      %v5067 = vmul.f32 %v4081, %v5035
      %v5068 = vmul.f32 %v4085, %v5036
      %v5069 = vmul.f32 %v4089, %v5037
      %v5070 = vmul.f32 %v4093, %v5038
      %v5071 = vmul.f32 %v4097, %v5039
      %v5072 = vmul.f32 %v4101, %v5040
      %v5073 = vmul.f32 %v4105, %v5041
      %v5074 = vmul.f32 %v4109, %v5042
      %v5075 = vmul.f32 %v4113, %v5043
      %v5076 = vmul.f32 %v4117, %v5044
      %v5077 = vmul.f32 %v4121, %v5045
      %v5078 = vmul.f32 %v4125, %v5046
      %v5079 = vmul.f32 %v4129, %v5047
      %v5080 = vmul.f32 %v4133, %v5048
      %v5081 = vmul.f32 %v4137, %v5049
      %v5082 = vmul.f32 %v4141, %v5050
      %v5083 = vmul.f32 %v4145, %v5051
      %v5084 = vmul.f32 %v4149, %v5052
      %v5085 = vmul.f32 %v4153, %v5053
      %v5086 = vmul.f32 %v4157, %v5054
      %v5087 = vmul.f32 %v4161, %v5055
      %v5088 = vmul.f32 %v4165, %v5056
      %v5089 = vadd.f32 %v4993, %v5057
      %v5090 = vadd.f32 %v4994, %v5058
      %v5091 = vadd.f32 %v4995, %v5059
      %v5092 = vadd.f32 %v4996, %v5060
      %v5093 = vadd.f32 %v4997, %v5061
      %v5094 = vadd.f32 %v4998, %v5062
      %v5095 = vadd.f32 %v4999, %v5063
      %v5096 = vadd.f32 %v5000, %v5064
      %v5097 = vadd.f32 %v5001, %v5065
      %v5098 = vadd.f32 %v5002, %v5066
      %v5099 = vadd.f32 %v5003, %v5067
      %v5100 = vadd.f32 %v5004, %v5068
      %v5101 = vadd.f32 %v5005, %v5069
      %v5102 = vadd.f32 %v5006, %v5070
      %v5103 = vadd.f32 %v5007, %v5071
      %v5104 = vadd.f32 %v5008, %v5072
      %v5105 = vadd.f32 %v5009, %v5073
      %v5106 = vadd.f32 %v5010, %v5074
      %v5107 = vadd.f32 %v5011, %v5075
      %v5108 = vadd.f32 %v5012, %v5076
      %v5109 = vadd.f32 %v5013, %v5077
      %v5110 = vadd.f32 %v5014, %v5078
      %v5111 = vadd.f32 %v5015, %v5079
      %v5112 = vadd.f32 %v5016, %v5080
      %v5113 = vadd.f32 %v5017, %v5081
      %v5114 = vadd.f32 %v5018, %v5082
      %v5115 = vadd.f32 %v5019, %v5083
      %v5116 = vadd.f32 %v5020, %v5084
      %v5117 = vadd.f32 %v5021, %v5085
      %v5118 = vadd.f32 %v5022, %v5086
      %v5119 = vadd.f32 %v5023, %v5087
      %v5120 = vadd.f32 %v5024, %v5088
      %v5121 = vpack.c.bf16 %v5090, %v5089
      %v5122 = vpack.c.bf16 %v5092, %v5091
      %v5123 = vpack.c.bf16 %v5094, %v5093
      %v5124 = vpack.c.bf16 %v5096, %v5095
      %v5125 = vpack.c.bf16 %v5098, %v5097
      %v5126 = vpack.c.bf16 %v5100, %v5099
      %v5127 = vpack.c.bf16 %v5102, %v5101
      %v5128 = vpack.c.bf16 %v5104, %v5103
      %v5129 = vpack.c.bf16 %v5106, %v5105
      %v5130 = vpack.c.bf16 %v5108, %v5107
      %v5131 = vpack.c.bf16 %v5110, %v5109
      %v5132 = vpack.c.bf16 %v5112, %v5111
      %v5133 = vpack.c.bf16 %v5114, %v5113
      %v5134 = vpack.c.bf16 %v5116, %v5115
      %v5135 = vpack.c.bf16 %v5118, %v5117
      %v5136 = vpack.c.bf16 %v5120, %v5119
      %v5137 = vcombine.low %v5121, %v5125
      %v5138 = vcombine.high %v5121, %v5125
      %v5140 = vunpack.c.l.s4 1983009808
      %v5141 = vunpack.c.0.s8 %v5140
      %v5142 = vlaneseq
      %v5143 = vshrl.u32 %v5142, 7
      %v5144 = vsub.s32 %v5141, %v5143
      %v5145 = vrot.slane %v5137, %v5144
      %v5147 = vunpack.c.l.s4 1983009808
      %v5148 = vunpack.c.0.s8 %v5147
      %v5149 = vlaneseq
      %v5150 = vshrl.u32 %v5149, 7
      %v5151 = vsub.s32 %v5148, %v5150
      %v5152 = vrot.slane %v5138, %v5151
      %v5153 = vcombine.low %v5123, %v5127
      %v5154 = vcombine.high %v5123, %v5127
      %v5156 = vunpack.c.l.s4 1983009808
      %v5157 = vunpack.c.0.s8 %v5156
      %v5158 = vlaneseq
      %v5159 = vshrl.u32 %v5158, 7
      %v5160 = vsub.s32 %v5157, %v5159
      %v5161 = vrot.slane %v5153, %v5160
      %v5163 = vunpack.c.l.s4 1983009808
      %v5164 = vunpack.c.0.s8 %v5163
      %v5165 = vlaneseq
      %v5166 = vshrl.u32 %v5165, 7
      %v5167 = vsub.s32 %v5164, %v5166
      %v5168 = vrot.slane %v5154, %v5167
      %v5169 = vcombine.low %v5129, %v5133
      %v5170 = vcombine.high %v5129, %v5133
      %v5172 = vunpack.c.l.s4 1983009808
      %v5173 = vunpack.c.0.s8 %v5172
      %v5174 = vlaneseq
      %v5175 = vshrl.u32 %v5174, 7
      %v5176 = vsub.s32 %v5173, %v5175
      %v5177 = vrot.slane %v5169, %v5176
      %v5179 = vunpack.c.l.s4 1983009808
      %v5180 = vunpack.c.0.s8 %v5179
      %v5181 = vlaneseq
      %v5182 = vshrl.u32 %v5181, 7
      %v5183 = vsub.s32 %v5180, %v5182
      %v5184 = vrot.slane %v5170, %v5183
      %v5185 = vcombine.low %v5131, %v5135
      %v5186 = vcombine.high %v5131, %v5135
      %v5188 = vunpack.c.l.s4 1983009808
      %v5189 = vunpack.c.0.s8 %v5188
      %v5190 = vlaneseq
      %v5191 = vshrl.u32 %v5190, 7
      %v5192 = vsub.s32 %v5189, %v5191
      %v5193 = vrot.slane %v5185, %v5192
      %v5195 = vunpack.c.l.s4 1983009808
      %v5196 = vunpack.c.0.s8 %v5195
      %v5197 = vlaneseq
      %v5198 = vshrl.u32 %v5197, 7
      %v5199 = vsub.s32 %v5196, %v5198
      %v5200 = vrot.slane %v5186, %v5199
      %v5201 = vcombine.low %v5145, %v5161
      %v5202 = vcombine.high %v5145, %v5161
      %v5204 = vunpack.c.l.s4 1934713408
      %v5205 = vunpack.c.0.s8 %v5204
      %v5206 = vlaneseq
      %v5207 = vshrl.u32 %v5206, 7
      %v5208 = vsub.s32 %v5205, %v5207
      %v5209 = vrot.slane %v5201, %v5208
      %v5211 = vunpack.c.l.s4 1934713408
      %v5212 = vunpack.c.0.s8 %v5211
      %v5213 = vlaneseq
      %v5214 = vshrl.u32 %v5213, 7
      %v5215 = vsub.s32 %v5212, %v5214
      %v5216 = vrot.slane %v5202, %v5215
      %v5217 = vcombine.low %v5152, %v5168
      %v5218 = vcombine.high %v5152, %v5168
      %v5220 = vunpack.c.l.s4 1934713408
      %v5221 = vunpack.c.0.s8 %v5220
      %v5222 = vlaneseq
      %v5223 = vshrl.u32 %v5222, 7
      %v5224 = vsub.s32 %v5221, %v5223
      %v5225 = vrot.slane %v5217, %v5224
      %v5227 = vunpack.c.l.s4 1934713408
      %v5228 = vunpack.c.0.s8 %v5227
      %v5229 = vlaneseq
      %v5230 = vshrl.u32 %v5229, 7
      %v5231 = vsub.s32 %v5228, %v5230
      %v5232 = vrot.slane %v5218, %v5231
      %v5233 = vcombine.low %v5177, %v5193
      %v5234 = vcombine.high %v5177, %v5193
      %v5236 = vunpack.c.l.s4 1934713408
      %v5237 = vunpack.c.0.s8 %v5236
      %v5238 = vlaneseq
      %v5239 = vshrl.u32 %v5238, 7
      %v5240 = vsub.s32 %v5237, %v5239
      %v5241 = vrot.slane %v5233, %v5240
      %v5243 = vunpack.c.l.s4 1934713408
      %v5244 = vunpack.c.0.s8 %v5243
      %v5245 = vlaneseq
      %v5246 = vshrl.u32 %v5245, 7
      %v5247 = vsub.s32 %v5244, %v5246
      %v5248 = vrot.slane %v5234, %v5247
      %v5249 = vcombine.low %v5184, %v5200
      %v5250 = vcombine.high %v5184, %v5200
      %v5252 = vunpack.c.l.s4 1934713408
      %v5253 = vunpack.c.0.s8 %v5252
      %v5254 = vlaneseq
      %v5255 = vshrl.u32 %v5254, 7
      %v5256 = vsub.s32 %v5253, %v5255
      %v5257 = vrot.slane %v5249, %v5256
      %v5259 = vunpack.c.l.s4 1934713408
      %v5260 = vunpack.c.0.s8 %v5259
      %v5261 = vlaneseq
      %v5262 = vshrl.u32 %v5261, 7
      %v5263 = vsub.s32 %v5260, %v5262
      %v5264 = vrot.slane %v5250, %v5263
      %v5265 = vcombine.low %v5209, %v5241
      %v5266 = vcombine.high %v5209, %v5241
      %v5267 = vcombine.low %v5216, %v5248
      %v5268 = vcombine.high %v5216, %v5248
      %v5269 = vcombine.low %v5225, %v5257
      %v5270 = vcombine.high %v5225, %v5257
      %v5271 = vcombine.low %v5232, %v5264
      %v5272 = vcombine.high %v5232, %v5264
      %v5273 = vcombine.low %v5122, %v5126
      %v5274 = vcombine.high %v5122, %v5126
      %v5276 = vunpack.c.l.s4 1983009808
      %v5277 = vunpack.c.0.s8 %v5276
      %v5278 = vlaneseq
      %v5279 = vshrl.u32 %v5278, 7
      %v5280 = vsub.s32 %v5277, %v5279
      %v5281 = vrot.slane %v5273, %v5280
      %v5283 = vunpack.c.l.s4 1983009808
      %v5284 = vunpack.c.0.s8 %v5283
      %v5285 = vlaneseq
      %v5286 = vshrl.u32 %v5285, 7
      %v5287 = vsub.s32 %v5284, %v5286
      %v5288 = vrot.slane %v5274, %v5287
      %v5289 = vcombine.low %v5124, %v5128
      %v5290 = vcombine.high %v5124, %v5128
      %v5292 = vunpack.c.l.s4 1983009808
      %v5293 = vunpack.c.0.s8 %v5292
      %v5294 = vlaneseq
      %v5295 = vshrl.u32 %v5294, 7
      %v5296 = vsub.s32 %v5293, %v5295
      %v5297 = vrot.slane %v5289, %v5296
      %v5299 = vunpack.c.l.s4 1983009808
      %v5300 = vunpack.c.0.s8 %v5299
      %v5301 = vlaneseq
      %v5302 = vshrl.u32 %v5301, 7
      %v5303 = vsub.s32 %v5300, %v5302
      %v5304 = vrot.slane %v5290, %v5303
      %v5305 = vcombine.low %v5130, %v5134
      %v5306 = vcombine.high %v5130, %v5134
      %v5308 = vunpack.c.l.s4 1983009808
      %v5309 = vunpack.c.0.s8 %v5308
      %v5310 = vlaneseq
      %v5311 = vshrl.u32 %v5310, 7
      %v5312 = vsub.s32 %v5309, %v5311
      %v5313 = vrot.slane %v5305, %v5312
      %v5315 = vunpack.c.l.s4 1983009808
      %v5316 = vunpack.c.0.s8 %v5315
      %v5317 = vlaneseq
      %v5318 = vshrl.u32 %v5317, 7
      %v5319 = vsub.s32 %v5316, %v5318
      %v5320 = vrot.slane %v5306, %v5319
      %v5321 = vcombine.low %v5132, %v5136
      %v5322 = vcombine.high %v5132, %v5136
      %v5324 = vunpack.c.l.s4 1983009808
      %v5325 = vunpack.c.0.s8 %v5324
      %v5326 = vlaneseq
      %v5327 = vshrl.u32 %v5326, 7
      %v5328 = vsub.s32 %v5325, %v5327
      %v5329 = vrot.slane %v5321, %v5328
      %v5331 = vunpack.c.l.s4 1983009808
      %v5332 = vunpack.c.0.s8 %v5331
      %v5333 = vlaneseq
      %v5334 = vshrl.u32 %v5333, 7
      %v5335 = vsub.s32 %v5332, %v5334
      %v5336 = vrot.slane %v5322, %v5335
      %v5337 = vcombine.low %v5281, %v5297
      %v5338 = vcombine.high %v5281, %v5297
      %v5340 = vunpack.c.l.s4 1934713408
      %v5341 = vunpack.c.0.s8 %v5340
      %v5342 = vlaneseq
      %v5343 = vshrl.u32 %v5342, 7
      %v5344 = vsub.s32 %v5341, %v5343
      %v5345 = vrot.slane %v5337, %v5344
      %v5347 = vunpack.c.l.s4 1934713408
      %v5348 = vunpack.c.0.s8 %v5347
      %v5349 = vlaneseq
      %v5350 = vshrl.u32 %v5349, 7
      %v5351 = vsub.s32 %v5348, %v5350
      %v5352 = vrot.slane %v5338, %v5351
      %v5353 = vcombine.low %v5288, %v5304
      %v5354 = vcombine.high %v5288, %v5304
      %v5356 = vunpack.c.l.s4 1934713408
      %v5357 = vunpack.c.0.s8 %v5356
      %v5358 = vlaneseq
      %v5359 = vshrl.u32 %v5358, 7
      %v5360 = vsub.s32 %v5357, %v5359
      %v5361 = vrot.slane %v5353, %v5360
      %v5363 = vunpack.c.l.s4 1934713408
      %v5364 = vunpack.c.0.s8 %v5363
      %v5365 = vlaneseq
      %v5366 = vshrl.u32 %v5365, 7
      %v5367 = vsub.s32 %v5364, %v5366
      %v5368 = vrot.slane %v5354, %v5367
      %v5369 = vcombine.low %v5313, %v5329
      %v5370 = vcombine.high %v5313, %v5329
      %v5372 = vunpack.c.l.s4 1934713408
      %v5373 = vunpack.c.0.s8 %v5372
      %v5374 = vlaneseq
      %v5375 = vshrl.u32 %v5374, 7
      %v5376 = vsub.s32 %v5373, %v5375
      %v5377 = vrot.slane %v5369, %v5376
      %v5379 = vunpack.c.l.s4 1934713408
      %v5380 = vunpack.c.0.s8 %v5379
      %v5381 = vlaneseq
      %v5382 = vshrl.u32 %v5381, 7
      %v5383 = vsub.s32 %v5380, %v5382
      %v5384 = vrot.slane %v5370, %v5383
      %v5385 = vcombine.low %v5320, %v5336
      %v5386 = vcombine.high %v5320, %v5336
      %v5388 = vunpack.c.l.s4 1934713408
      %v5389 = vunpack.c.0.s8 %v5388
      %v5390 = vlaneseq
      %v5391 = vshrl.u32 %v5390, 7
      %v5392 = vsub.s32 %v5389, %v5391
      %v5393 = vrot.slane %v5385, %v5392
      %v5395 = vunpack.c.l.s4 1934713408
      %v5396 = vunpack.c.0.s8 %v5395
      %v5397 = vlaneseq
      %v5398 = vshrl.u32 %v5397, 7
      %v5399 = vsub.s32 %v5396, %v5398
      %v5400 = vrot.slane %v5386, %v5399
      %v5401 = vcombine.low %v5345, %v5377
      %v5402 = vcombine.high %v5345, %v5377
      %v5403 = vcombine.low %v5352, %v5384
      %v5404 = vcombine.high %v5352, %v5384
      %v5405 = vcombine.low %v5361, %v5393
      %v5406 = vcombine.high %v5361, %v5393
      %v5407 = vcombine.low %v5368, %v5400
      %v5408 = vcombine.high %v5368, %v5400
      %v5411 = vpack.i.b16 %v5401, %v5265
      %v5413 = vshrl.u32 %v5265, 16
      %v5414 = vshrl.u32 %v5401, 16
      %v5415 = vpack.i.b16 %v5414, %v5413
      %v5419 = vpack.i.b16 %v5402, %v5266
      %v5421 = vshrl.u32 %v5266, 16
      %v5422 = vshrl.u32 %v5402, 16
      %v5423 = vpack.i.b16 %v5422, %v5421
      %v5427 = vpack.i.b16 %v5403, %v5267
      %v5429 = vshrl.u32 %v5267, 16
      %v5430 = vshrl.u32 %v5403, 16
      %v5431 = vpack.i.b16 %v5430, %v5429
      %v5435 = vpack.i.b16 %v5404, %v5268
      %v5437 = vshrl.u32 %v5268, 16
      %v5438 = vshrl.u32 %v5404, 16
      %v5439 = vpack.i.b16 %v5438, %v5437
      %v5443 = vpack.i.b16 %v5405, %v5269
      %v5445 = vshrl.u32 %v5269, 16
      %v5446 = vshrl.u32 %v5405, 16
      %v5447 = vpack.i.b16 %v5446, %v5445
      %v5451 = vpack.i.b16 %v5406, %v5270
      %v5453 = vshrl.u32 %v5270, 16
      %v5454 = vshrl.u32 %v5406, 16
      %v5455 = vpack.i.b16 %v5454, %v5453
      %v5459 = vpack.i.b16 %v5407, %v5271
      %v5461 = vshrl.u32 %v5271, 16
      %v5462 = vshrl.u32 %v5407, 16
      %v5463 = vpack.i.b16 %v5462, %v5461
      %v5467 = vpack.i.b16 %v5408, %v5272
      %v5469 = vshrl.u32 %v5272, 16
      %v5470 = vshrl.u32 %v5408, 16
      %v5471 = vpack.i.b16 %v5470, %v5469
      %v5473 = vld [vmem:[%s6] sm:$0xff]
      %v5474 = vld [vmem:[%s6 + $0x8] sm:$0xff]
      %v5475 = vld [vmem:[%s6 + $0x10] sm:$0xff]
      %v5476 = vld [vmem:[%s6 + $0x18] sm:$0xff]
      %v5477 = vld [vmem:[%s6 + $0x20] sm:$0xff]
      %v5478 = vld [vmem:[%s6 + $0x28] sm:$0xff]
      %v5479 = vld [vmem:[%s6 + $0x30] sm:$0xff]
      %v5480 = vld [vmem:[%s6 + $0x38] sm:$0xff]
      %v5481 = vld [vmem:[%s6 + $0x40] sm:$0xff]
      %v5482 = vld [vmem:[%s6 + $0x48] sm:$0xff]
      %v5483 = vld [vmem:[%s6 + $0x50] sm:$0xff]
      %v5484 = vld [vmem:[%s6 + $0x58] sm:$0xff]
      %v5485 = vld [vmem:[%s6 + $0x60] sm:$0xff]
      %v5486 = vld [vmem:[%s6 + $0x68] sm:$0xff]
      %v5487 = vld [vmem:[%s6 + $0x70] sm:$0xff]
      %v5488 = vld [vmem:[%s6 + $0x78] sm:$0xff]
      %v5489 = vld [vmem:[%s6 + $0x80] sm:$0xff]
      %v5490 = vld [vmem:[%s6 + $0x88] sm:$0xff]
      %v5491 = vld [vmem:[%s6 + $0x90] sm:$0xff]
      %v5492 = vld [vmem:[%s6 + $0x98] sm:$0xff]
      %v5493 = vld [vmem:[%s6 + $0xa0] sm:$0xff]
      %v5494 = vld [vmem:[%s6 + $0xa8] sm:$0xff]
      %v5495 = vld [vmem:[%s6 + $0xb0] sm:$0xff]
      %v5496 = vld [vmem:[%s6 + $0xb8] sm:$0xff]
      %v5497 = vld [vmem:[%s6 + $0xc0] sm:$0xff]
      %v5498 = vld [vmem:[%s6 + $0xc8] sm:$0xff]
      %v5499 = vld [vmem:[%s6 + $0xd0] sm:$0xff]
      %v5500 = vld [vmem:[%s6 + $0xd8] sm:$0xff]
      %v5501 = vld [vmem:[%s6 + $0xe0] sm:$0xff]
      %v5502 = vld [vmem:[%s6 + $0xe8] sm:$0xff]
      %v5503 = vld [vmem:[%s6 + $0xf0] sm:$0xff]
      %v5504 = vld [vmem:[%s6 + $0xf8] sm:$0xff]
      %v5505 = vld [vmem:[%s6 + $0x100] sm:$0xff]
      %v5506 = vld [vmem:[%s6 + $0x108] sm:$0xff]
      %v5507 = vld [vmem:[%s6 + $0x110] sm:$0xff]
      %v5508 = vld [vmem:[%s6 + $0x118] sm:$0xff]
      %v5509 = vld [vmem:[%s6 + $0x120] sm:$0xff]
      %v5510 = vld [vmem:[%s6 + $0x128] sm:$0xff]
      %v5511 = vld [vmem:[%s6 + $0x130] sm:$0xff]
      %v5512 = vld [vmem:[%s6 + $0x138] sm:$0xff]
      %v5513 = vld [vmem:[%s6 + $0x140] sm:$0xff]
      %v5514 = vld [vmem:[%s6 + $0x148] sm:$0xff]
      %v5515 = vld [vmem:[%s6 + $0x150] sm:$0xff]
      %v5516 = vld [vmem:[%s6 + $0x158] sm:$0xff]
      %v5517 = vld [vmem:[%s6 + $0x160] sm:$0xff]
      %v5518 = vld [vmem:[%s6 + $0x168] sm:$0xff]
      %v5519 = vld [vmem:[%s6 + $0x170] sm:$0xff]
      %v5520 = vld [vmem:[%s6 + $0x178] sm:$0xff]
      %v5521 = vld [vmem:[%s6 + $0x180] sm:$0xff]
      %v5522 = vld [vmem:[%s6 + $0x188] sm:$0xff]
      %v5523 = vld [vmem:[%s6 + $0x190] sm:$0xff]
      %v5524 = vld [vmem:[%s6 + $0x198] sm:$0xff]
      %v5525 = vld [vmem:[%s6 + $0x1a0] sm:$0xff]
      %v5526 = vld [vmem:[%s6 + $0x1a8] sm:$0xff]
      %v5527 = vld [vmem:[%s6 + $0x1b0] sm:$0xff]
      %v5528 = vld [vmem:[%s6 + $0x1b8] sm:$0xff]
      %v5529 = vld [vmem:[%s6 + $0x1c0] sm:$0xff]
      %v5530 = vld [vmem:[%s6 + $0x1c8] sm:$0xff]
      %v5531 = vld [vmem:[%s6 + $0x1d0] sm:$0xff]
      %v5532 = vld [vmem:[%s6 + $0x1d8] sm:$0xff]
      %v5533 = vld [vmem:[%s6 + $0x1e0] sm:$0xff]
      %v5534 = vld [vmem:[%s6 + $0x1e8] sm:$0xff]
      %v5535 = vld [vmem:[%s6 + $0x1f0] sm:$0xff]
      %v5536 = vld [vmem:[%s6 + $0x1f8] sm:$0xff]
      %v5537 = vld [vmem:[%s6 + $0x200] sm:$0xff]
      %v5538 = vld [vmem:[%s6 + $0x208] sm:$0xff]
      %v5539 = vld [vmem:[%s6 + $0x210] sm:$0xff]
      %v5540 = vld [vmem:[%s6 + $0x218] sm:$0xff]
      %v5541 = vld [vmem:[%s6 + $0x220] sm:$0xff]
      %v5542 = vld [vmem:[%s6 + $0x228] sm:$0xff]
      %v5543 = vld [vmem:[%s6 + $0x230] sm:$0xff]
      %v5544 = vld [vmem:[%s6 + $0x238] sm:$0xff]
      %v5545 = vld [vmem:[%s6 + $0x240] sm:$0xff]
      %v5546 = vld [vmem:[%s6 + $0x248] sm:$0xff]
      %v5547 = vld [vmem:[%s6 + $0x250] sm:$0xff]
      %v5548 = vld [vmem:[%s6 + $0x258] sm:$0xff]
      %v5549 = vld [vmem:[%s6 + $0x260] sm:$0xff]
      %v5550 = vld [vmem:[%s6 + $0x268] sm:$0xff]
      %v5551 = vld [vmem:[%s6 + $0x270] sm:$0xff]
      %v5552 = vld [vmem:[%s6 + $0x278] sm:$0xff]
      %v5553 = vld [vmem:[%s7] sm:$0xf]
      %v5554 = vld [vmem:[%s7 + $0x4] sm:$0xf]
      %v5555 = vld [vmem:[%s7 + $0x8] sm:$0xf]
      %v5556 = vld [vmem:[%s7 + $0xc] sm:$0xf]
      %v5557 = vld [vmem:[%s7 + $0x10] sm:$0xf]
      %v5558 = vld [vmem:[%s7 + $0x14] sm:$0xf]
      %v5559 = vld [vmem:[%s7 + $0x18] sm:$0xf]
      %v5560 = vld [vmem:[%s7 + $0x1c] sm:$0xf]
      %v5561 = vld [vmem:[%s7 + $0x20] sm:$0xf]
      %v5562 = vld [vmem:[%s7 + $0x24] sm:$0xf]
      %v5563 = vld [vmem:[%s7 + $0x28] sm:$0xf]
      %v5564 = vld [vmem:[%s7 + $0x2c] sm:$0xf]
      %v5565 = vld [vmem:[%s7 + $0x30] sm:$0xf]
      %v5566 = vld [vmem:[%s7 + $0x34] sm:$0xf]
      %v5567 = vld [vmem:[%s7 + $0x38] sm:$0xf]
      %v5568 = vld [vmem:[%s7 + $0x3c] sm:$0xf]
      %v5569 = vld [vmem:[%s7 + $0x40] sm:$0xf]
      %v5570 = vld [vmem:[%s7 + $0x44] sm:$0xf]
      %v5571 = vld [vmem:[%s7 + $0x48] sm:$0xf]
      %v5572 = vld [vmem:[%s7 + $0x4c] sm:$0xf]
      %v5573 = vld [vmem:[%s7 + $0x50] sm:$0xf]
      %v5574 = vld [vmem:[%s7 + $0x54] sm:$0xf]
      %v5575 = vld [vmem:[%s7 + $0x58] sm:$0xf]
      %v5576 = vld [vmem:[%s7 + $0x5c] sm:$0xf]
      %v5577 = vld [vmem:[%s7 + $0x60] sm:$0xf]
      %v5578 = vld [vmem:[%s7 + $0x64] sm:$0xf]
      %v5579 = vld [vmem:[%s7 + $0x68] sm:$0xf]
      %v5580 = vld [vmem:[%s7 + $0x6c] sm:$0xf]
      %v5581 = vld [vmem:[%s7 + $0x70] sm:$0xf]
      %v5582 = vld [vmem:[%s7 + $0x74] sm:$0xf]
      %v5583 = vld [vmem:[%s7 + $0x78] sm:$0xf]
      %v5584 = vld [vmem:[%s7 + $0x7c] sm:$0xf]
      %v5585 = vld [vmem:[%s7 + $0x80] sm:$0xf]
      %v5586 = vld [vmem:[%s7 + $0x84] sm:$0xf]
      %v5587 = vld [vmem:[%s7 + $0x88] sm:$0xf]
      %v5588 = vld [vmem:[%s7 + $0x8c] sm:$0xf]
      %v5589 = vld [vmem:[%s7 + $0x90] sm:$0xf]
      %v5590 = vld [vmem:[%s7 + $0x94] sm:$0xf]
      %v5591 = vld [vmem:[%s7 + $0x98] sm:$0xf]
      %v5592 = vld [vmem:[%s7 + $0x9c] sm:$0xf]
      %v5593 = vld [vmem:[%s7 + $0xa0] sm:$0xf]
      %v5594 = vld [vmem:[%s7 + $0xa4] sm:$0xf]
      %v5595 = vld [vmem:[%s7 + $0xa8] sm:$0xf]
      %v5596 = vld [vmem:[%s7 + $0xac] sm:$0xf]
      %v5597 = vld [vmem:[%s7 + $0xb0] sm:$0xf]
      %v5598 = vld [vmem:[%s7 + $0xb4] sm:$0xf]
      %v5599 = vld [vmem:[%s7 + $0xb8] sm:$0xf]
      %v5600 = vld [vmem:[%s7 + $0xbc] sm:$0xf]
      %v5601 = vld [vmem:[%s7 + $0xc0] sm:$0xf]
      %v5602 = vld [vmem:[%s7 + $0xc4] sm:$0xf]
      %v5603 = vld [vmem:[%s7 + $0xc8] sm:$0xf]
      %v5604 = vld [vmem:[%s7 + $0xcc] sm:$0xf]
      %v5605 = vld [vmem:[%s7 + $0xd0] sm:$0xf]
      %v5606 = vld [vmem:[%s7 + $0xd4] sm:$0xf]
      %v5607 = vld [vmem:[%s7 + $0xd8] sm:$0xf]
      %v5608 = vld [vmem:[%s7 + $0xdc] sm:$0xf]
      %v5609 = vld [vmem:[%s7 + $0xe0] sm:$0xf]
      %v5610 = vld [vmem:[%s7 + $0xe4] sm:$0xf]
      %v5611 = vld [vmem:[%s7 + $0xe8] sm:$0xf]
      %v5612 = vld [vmem:[%s7 + $0xec] sm:$0xf]
      %v5613 = vld [vmem:[%s7 + $0xf0] sm:$0xf]
      %v5614 = vld [vmem:[%s7 + $0xf4] sm:$0xf]
      %v5615 = vld [vmem:[%s7 + $0xf8] sm:$0xf]
      %v5616 = vld [vmem:[%s7 + $0xfc] sm:$0xf]
      %v5617 = vld [vmem:[%s7 + $0x100] sm:$0xf]
      %v5618 = vld [vmem:[%s7 + $0x104] sm:$0xf]
      %v5619 = vld [vmem:[%s7 + $0x108] sm:$0xf]
      %v5620 = vld [vmem:[%s7 + $0x10c] sm:$0xf]
      %v5621 = vld [vmem:[%s7 + $0x110] sm:$0xf]
      %v5622 = vld [vmem:[%s7 + $0x114] sm:$0xf]
      %v5623 = vld [vmem:[%s7 + $0x118] sm:$0xf]
      %v5624 = vld [vmem:[%s7 + $0x11c] sm:$0xf]
      %v5625 = vld [vmem:[%s7 + $0x120] sm:$0xf]
      %v5626 = vld [vmem:[%s7 + $0x124] sm:$0xf]
      %v5627 = vld [vmem:[%s7 + $0x128] sm:$0xf]
      %v5628 = vld [vmem:[%s7 + $0x12c] sm:$0xf]
      %v5629 = vld [vmem:[%s7 + $0x130] sm:$0xf]
      %v5630 = vld [vmem:[%s7 + $0x134] sm:$0xf]
      %v5631 = vld [vmem:[%s7 + $0x138] sm:$0xf]
      %v5632 = vld [vmem:[%s7 + $0x13c] sm:$0xf]
      %v5633 = vld [vmem:[%s8] sm:$0xff]
      %v5634 = vld [vmem:[%s8 + $0x8] sm:$0xf]
      %v5635 = vld [vmem:[%s8 + $0xc] sm:$0xff]
      %v5636 = vld [vmem:[%s8 + $0x14] sm:$0xf]
      %v5637 = vld [vmem:[%s8 + $0x18] sm:$0xff]
      %v5638 = vld [vmem:[%s8 + $0x20] sm:$0xf]
      %v5639 = vld [vmem:[%s8 + $0x24] sm:$0xff]
      %v5640 = vld [vmem:[%s8 + $0x2c] sm:$0xf]
      %v5641 = vld [vmem:[%s8 + $0x30] sm:$0xff]
      %v5642 = vld [vmem:[%s8 + $0x38] sm:$0xf]
      %v5643 = vld [vmem:[%s8 + $0x3c] sm:$0xff]
      %v5644 = vld [vmem:[%s8 + $0x44] sm:$0xf]
      %v5645 = vld [vmem:[%s8 + $0x48] sm:$0xff]
      %v5646 = vld [vmem:[%s8 + $0x50] sm:$0xf]
      %v5647 = vld [vmem:[%s8 + $0x54] sm:$0xff]
      %v5648 = vld [vmem:[%s8 + $0x5c] sm:$0xf]
      %v5649 = vld [vmem:[%s8 + $0x60] sm:$0xff]
      %v5650 = vld [vmem:[%s8 + $0x68] sm:$0xf]
      %v5651 = vld [vmem:[%s8 + $0x6c] sm:$0xff]
      %v5652 = vld [vmem:[%s8 + $0x74] sm:$0xf]
      %v5653 = vld [vmem:[%s8 + $0x78] sm:$0xff]
      %v5654 = vld [vmem:[%s8 + $0x80] sm:$0xf]
      %v5655 = vld [vmem:[%s8 + $0x84] sm:$0xff]
      %v5656 = vld [vmem:[%s8 + $0x8c] sm:$0xf]
      %v5657 = vld [vmem:[%s8 + $0x90] sm:$0xff]
      %v5658 = vld [vmem:[%s8 + $0x98] sm:$0xf]
      %v5659 = vld [vmem:[%s8 + $0x9c] sm:$0xff]
      %v5660 = vld [vmem:[%s8 + $0xa4] sm:$0xf]
      %v5661 = vld [vmem:[%s8 + $0xa8] sm:$0xff]
      %v5662 = vld [vmem:[%s8 + $0xb0] sm:$0xf]
      %v5663 = vld [vmem:[%s8 + $0xb4] sm:$0xff]
      %v5664 = vld [vmem:[%s8 + $0xbc] sm:$0xf]
      %v5665 = vld [vmem:[%s8 + $0xc0] sm:$0xff]
      %v5666 = vld [vmem:[%s8 + $0xc8] sm:$0xf]
      %v5667 = vld [vmem:[%s8 + $0xcc] sm:$0xff]
      %v5668 = vld [vmem:[%s8 + $0xd4] sm:$0xf]
      %v5669 = vld [vmem:[%s8 + $0xd8] sm:$0xff]
      %v5670 = vld [vmem:[%s8 + $0xe0] sm:$0xf]
      %v5671 = vld [vmem:[%s8 + $0xe4] sm:$0xff]
      %v5672 = vld [vmem:[%s8 + $0xec] sm:$0xf]
      %v5673 = vld [vmem:[%s8 + $0xf0] sm:$0xff]
      %v5674 = vld [vmem:[%s8 + $0xf8] sm:$0xf]
      %v5675 = vld [vmem:[%s8 + $0xfc] sm:$0xff]
      %v5676 = vld [vmem:[%s8 + $0x104] sm:$0xf]
      %v5677 = vld [vmem:[%s8 + $0x108] sm:$0xff]
      %v5678 = vld [vmem:[%s8 + $0x110] sm:$0xf]
      %v5679 = vld [vmem:[%s8 + $0x114] sm:$0xff]
      %v5680 = vld [vmem:[%s8 + $0x11c] sm:$0xf]
      %v5681 = vld [vmem:[%s8 + $0x120] sm:$0xff]
      %v5682 = vld [vmem:[%s8 + $0x128] sm:$0xf]
      %v5683 = vld [vmem:[%s8 + $0x12c] sm:$0xff]
      %v5684 = vld [vmem:[%s8 + $0x134] sm:$0xf]
      %v5685 = vld [vmem:[%s8 + $0x138] sm:$0xff]
      %v5686 = vld [vmem:[%s8 + $0x140] sm:$0xf]
      %v5687 = vld [vmem:[%s8 + $0x144] sm:$0xff]
      %v5688 = vld [vmem:[%s8 + $0x14c] sm:$0xf]
      %v5689 = vld [vmem:[%s8 + $0x150] sm:$0xff]
      %v5690 = vld [vmem:[%s8 + $0x158] sm:$0xf]
      %v5691 = vld [vmem:[%s8 + $0x15c] sm:$0xff]
      %v5692 = vld [vmem:[%s8 + $0x164] sm:$0xf]
      %v5693 = vld [vmem:[%s8 + $0x168] sm:$0xff]
      %v5694 = vld [vmem:[%s8 + $0x170] sm:$0xf]
      %v5695 = vld [vmem:[%s8 + $0x174] sm:$0xff]
      %v5696 = vld [vmem:[%s8 + $0x17c] sm:$0xf]
      %v5697 = vld [vmem:[%s8 + $0x180] sm:$0xff]
      %v5698 = vld [vmem:[%s8 + $0x188] sm:$0xf]
      %v5699 = vld [vmem:[%s8 + $0x18c] sm:$0xff]
      %v5700 = vld [vmem:[%s8 + $0x194] sm:$0xf]
      %v5701 = vld [vmem:[%s8 + $0x198] sm:$0xff]
      %v5702 = vld [vmem:[%s8 + $0x1a0] sm:$0xf]
      %v5703 = vld [vmem:[%s8 + $0x1a4] sm:$0xff]
      %v5704 = vld [vmem:[%s8 + $0x1ac] sm:$0xf]
      %v5705 = vld [vmem:[%s8 + $0x1b0] sm:$0xff]
      %v5706 = vld [vmem:[%s8 + $0x1b8] sm:$0xf]
      %v5707 = vld [vmem:[%s8 + $0x1bc] sm:$0xff]
      %v5708 = vld [vmem:[%s8 + $0x1c4] sm:$0xf]
      %v5709 = vld [vmem:[%s8 + $0x1c8] sm:$0xff]
      %v5710 = vld [vmem:[%s8 + $0x1d0] sm:$0xf]
      %v5711 = vld [vmem:[%s8 + $0x1d4] sm:$0xff]
      %v5712 = vld [vmem:[%s8 + $0x1dc] sm:$0xf]
      %v5713 = vld [vmem:[%s9] sm:$0x7]
      %v5746 = vunpack.c.l.b16 %v813
      %v5747 = vunpack.c.l.b16 %v814
      %v5748 = vunpack.c.l.b16 %v815
      %v5749 = vunpack.c.l.b16 %v816
      %v5750 = vunpack.c.l.b16 %v817
      %v5751 = vunpack.c.l.b16 %v818
      %v5752 = vunpack.c.l.b16 %v819
      %v5753 = vunpack.c.l.b16 %v820
      %v5754 = vunpack.c.l.b16 %v821
      %v5755 = vunpack.c.l.b16 %v822
      %v5756 = vunpack.c.l.b16 %v823
      %v5757 = vunpack.c.l.b16 %v824
      %v5758 = vunpack.c.l.b16 %v825
      %v5759 = vunpack.c.l.b16 %v826
      %v5760 = vunpack.c.l.b16 %v827
      %v5761 = vunpack.c.l.b16 %v828
      %v5762 = vunpack.c.l.b16 %v829
      %v5763 = vunpack.c.l.b16 %v830
      %v5764 = vunpack.c.l.b16 %v831
      %v5765 = vunpack.c.l.b16 %v832
      %v5766 = vunpack.c.l.b16 %v833
      %v5767 = vunpack.c.l.b16 %v834
      %v5768 = vunpack.c.l.b16 %v835
      %v5769 = vunpack.c.l.b16 %v836
      %v5770 = vunpack.c.l.b16 %v837
      %v5771 = vunpack.c.l.b16 %v838
      %v5772 = vunpack.c.l.b16 %v839
      %v5773 = vunpack.c.l.b16 %v840
      %v5774 = vunpack.c.l.b16 %v841
      %v5775 = vunpack.c.l.b16 %v842
      %v5776 = vunpack.c.l.b16 %v843
      %v5777 = vunpack.c.l.b16 %v844
      %v5778 = vpack.c.b16 %v5747, %v5746
      %v5779 = vpack.c.b16 %v5749, %v5748
      %v5780 = vpack.c.b16 %v5751, %v5750
      %v5781 = vpack.c.b16 %v5753, %v5752
      %v5782 = vpack.c.b16 %v5755, %v5754
      %v5783 = vpack.c.b16 %v5757, %v5756
      %v5784 = vpack.c.b16 %v5759, %v5758
      %v5785 = vpack.c.b16 %v5761, %v5760
      %v5786 = vpack.c.b16 %v5763, %v5762
      %v5787 = vpack.c.b16 %v5765, %v5764
      %v5788 = vpack.c.b16 %v5767, %v5766
      %v5789 = vpack.c.b16 %v5769, %v5768
      %v5790 = vpack.c.b16 %v5771, %v5770
      %v5791 = vpack.c.b16 %v5773, %v5772
      %v5792 = vpack.c.b16 %v5775, %v5774
      %v5793 = vpack.c.b16 %v5777, %v5776
      %5794 = vrot.lane.b32.xlu0 %v5778, 64
      %v5795 = vpop.permute.xlu0 %5794
      %5796 = vrot.lane.b32.xlu0 %v5779, 64
      %v5797 = vpop.permute.xlu0 %5796
      %5798 = vrot.lane.b32.xlu0 %v5780, 64
      %v5799 = vpop.permute.xlu0 %5798
      %5800 = vrot.lane.b32.xlu0 %v5781, 64
      %v5801 = vpop.permute.xlu0 %5800
      %5802 = vrot.lane.b32.xlu0 %v5782, 64
      %v5803 = vpop.permute.xlu0 %5802
      %5804 = vrot.lane.b32.xlu0 %v5783, 64
      %v5805 = vpop.permute.xlu0 %5804
      %5806 = vrot.lane.b32.xlu0 %v5784, 64
      %v5807 = vpop.permute.xlu0 %5806
      %5808 = vrot.lane.b32.xlu0 %v5785, 64
      %v5809 = vpop.permute.xlu0 %5808
      %5810 = vrot.lane.b32.xlu0 %v5786, 64
      %v5811 = vpop.permute.xlu0 %5810
      %5812 = vrot.lane.b32.xlu0 %v5787, 64
      %v5813 = vpop.permute.xlu0 %5812
      %5814 = vrot.lane.b32.xlu0 %v5788, 64
      %v5815 = vpop.permute.xlu0 %5814
      %5816 = vrot.lane.b32.xlu0 %v5789, 64
      %v5817 = vpop.permute.xlu0 %5816
      %5818 = vrot.lane.b32.xlu0 %v5790, 64
      %v5819 = vpop.permute.xlu0 %5818
      %5820 = vrot.lane.b32.xlu0 %v5791, 64
      %v5821 = vpop.permute.xlu0 %5820
      %5822 = vrot.lane.b32.xlu0 %v5792, 64
      %v5823 = vpop.permute.xlu0 %5822
      %5824 = vrot.lane.b32.xlu0 %v5793, 64
      %v5825 = vpop.permute.xlu0 %5824
      %v5827 = vsel %vm1537, 0, %v5795
      %v5831 = vsel %vm1537, %v5778, %v5797
      %v5835 = vsel %vm1537, %v5779, %v5799
      %v5839 = vsel %vm1537, %v5780, %v5801
      %v5843 = vsel %vm1537, %v5781, %v5803
      %v5847 = vsel %vm1537, %v5782, %v5805
      %v5851 = vsel %vm1537, %v5783, %v5807
      %v5855 = vsel %vm1537, %v5784, %v5809
      %v5859 = vsel %vm1537, %v5785, %v5811
      %v5863 = vsel %vm1537, %v5786, %v5813
      %v5867 = vsel %vm1537, %v5787, %v5815
      %v5871 = vsel %vm1537, %v5788, %v5817
      %v5875 = vsel %vm1537, %v5789, %v5819
      %v5879 = vsel %vm1537, %v5790, %v5821
      %v5883 = vsel %vm1537, %v5791, %v5823
      %v5887 = vsel %vm1537, %v5792, %v5825
      %v5890 = vsel %vm1537, %v5793, %v1504
      %v5972 = vunpack.c.l.b16 %v5633
      %v5973 = vunpack.c.h.b16 %v5633
      %v5974 = vunpack.c.l.b16 %v5634
      %v5975 = vunpack.c.l.b16 %v5635
      %v5976 = vunpack.c.h.b16 %v5635
      %v5977 = vunpack.c.l.b16 %v5636
      %v5978 = vunpack.c.l.b16 %v5637
      %v5979 = vunpack.c.h.b16 %v5637
      %v5980 = vunpack.c.l.b16 %v5638
      %v5981 = vunpack.c.l.b16 %v5639
      %v5982 = vunpack.c.h.b16 %v5639
      %v5983 = vunpack.c.l.b16 %v5640
      %v5984 = vunpack.c.l.b16 %v5641
      %v5985 = vunpack.c.h.b16 %v5641
      %v5986 = vunpack.c.l.b16 %v5642
      %v5987 = vunpack.c.l.b16 %v5643
      %v5988 = vunpack.c.h.b16 %v5643
      %v5989 = vunpack.c.l.b16 %v5644
      %v5990 = vunpack.c.l.b16 %v5645
      %v5991 = vunpack.c.h.b16 %v5645
      %v5992 = vunpack.c.l.b16 %v5646
      %v5993 = vunpack.c.l.b16 %v5647
      %v5994 = vunpack.c.h.b16 %v5647
      %v5995 = vunpack.c.l.b16 %v5648
      %v5996 = vunpack.c.l.b16 %v5649
      %v5997 = vunpack.c.h.b16 %v5649
      %v5998 = vunpack.c.l.b16 %v5650
      %v5999 = vunpack.c.l.b16 %v5651
      %v6000 = vunpack.c.h.b16 %v5651
      %v6001 = vunpack.c.l.b16 %v5652
      %v6002 = vunpack.c.l.b16 %v5653
      %v6003 = vunpack.c.h.b16 %v5653
      %v6004 = vunpack.c.l.b16 %v5654
      %v6005 = vunpack.c.l.b16 %v5655
      %v6006 = vunpack.c.h.b16 %v5655
      %v6007 = vunpack.c.l.b16 %v5656
      %v6008 = vunpack.c.l.b16 %v5657
      %v6009 = vunpack.c.h.b16 %v5657
      %v6010 = vunpack.c.l.b16 %v5658
      %v6011 = vunpack.c.l.b16 %v5659
      %v6012 = vunpack.c.h.b16 %v5659
      %v6013 = vunpack.c.l.b16 %v5660
      %v6014 = vunpack.c.l.b16 %v5661
      %v6015 = vunpack.c.h.b16 %v5661
      %v6016 = vunpack.c.l.b16 %v5662
      %v6017 = vunpack.c.l.b16 %v5663
      %v6018 = vunpack.c.h.b16 %v5663
      %v6019 = vunpack.c.l.b16 %v5664
      %v6020 = vunpack.c.l.b16 %v5665
      %v6021 = vunpack.c.h.b16 %v5665
      %v6022 = vunpack.c.l.b16 %v5666
      %v6023 = vunpack.c.l.b16 %v5667
      %v6024 = vunpack.c.h.b16 %v5667
      %v6025 = vunpack.c.l.b16 %v5668
      %v6026 = vunpack.c.l.b16 %v5669
      %v6027 = vunpack.c.h.b16 %v5669
      %v6028 = vunpack.c.l.b16 %v5670
      %v6029 = vunpack.c.l.b16 %v5671
      %v6030 = vunpack.c.h.b16 %v5671
      %v6031 = vunpack.c.l.b16 %v5672
      %v6032 = vunpack.c.l.b16 %v5673
      %v6033 = vunpack.c.h.b16 %v5673
      %v6034 = vunpack.c.l.b16 %v5674
      %v6035 = vunpack.c.l.b16 %v5675
      %v6036 = vunpack.c.h.b16 %v5675
      %v6037 = vunpack.c.l.b16 %v5676
      %v6038 = vunpack.c.l.b16 %v5677
      %v6039 = vunpack.c.h.b16 %v5677
      %v6040 = vunpack.c.l.b16 %v5678
      %v6041 = vunpack.c.l.b16 %v5679
      %v6042 = vunpack.c.h.b16 %v5679
      %v6043 = vunpack.c.l.b16 %v5680
      %v6044 = vunpack.c.l.b16 %v5681
      %v6045 = vunpack.c.h.b16 %v5681
      %v6046 = vunpack.c.l.b16 %v5682
      %v6047 = vunpack.c.l.b16 %v5683
      %v6048 = vunpack.c.h.b16 %v5683
      %v6049 = vunpack.c.l.b16 %v5684
      %v6050 = vunpack.c.l.b16 %v5685
      %v6051 = vunpack.c.h.b16 %v5685
      %v6052 = vunpack.c.l.b16 %v5686
      %v6053 = vunpack.c.l.b16 %v5687
      %v6054 = vunpack.c.h.b16 %v5687
      %v6055 = vunpack.c.l.b16 %v5688
      %v6056 = vunpack.c.l.b16 %v5689
      %v6057 = vunpack.c.h.b16 %v5689
      %v6058 = vunpack.c.l.b16 %v5690
      %v6059 = vunpack.c.l.b16 %v5691
      %v6060 = vunpack.c.h.b16 %v5691
      %v6061 = vunpack.c.l.b16 %v5692
      %v6062 = vunpack.c.l.b16 %v5693
      %v6063 = vunpack.c.h.b16 %v5693
      %v6064 = vunpack.c.l.b16 %v5694
      %v6065 = vunpack.c.l.b16 %v5695
      %v6066 = vunpack.c.h.b16 %v5695
      %v6067 = vunpack.c.l.b16 %v5696
      %v6068 = vunpack.c.l.b16 %v5697
      %v6069 = vunpack.c.h.b16 %v5697
      %v6070 = vunpack.c.l.b16 %v5698
      %v6071 = vunpack.c.l.b16 %v5699
      %v6072 = vunpack.c.h.b16 %v5699
      %v6073 = vunpack.c.l.b16 %v5700
      %v6074 = vunpack.c.l.b16 %v5701
      %v6075 = vunpack.c.h.b16 %v5701
      %v6076 = vunpack.c.l.b16 %v5702
      %v6077 = vunpack.c.l.b16 %v5703
      %v6078 = vunpack.c.h.b16 %v5703
      %v6079 = vunpack.c.l.b16 %v5704
      %v6080 = vunpack.c.l.b16 %v5705
      %v6081 = vunpack.c.h.b16 %v5705
      %v6082 = vunpack.c.l.b16 %v5706
      %v6083 = vunpack.c.l.b16 %v5707
      %v6084 = vunpack.c.h.b16 %v5707
      %v6085 = vunpack.c.l.b16 %v5708
      %v6086 = vunpack.c.l.b16 %v5709
      %v6087 = vunpack.c.h.b16 %v5709
      %v6088 = vunpack.c.l.b16 %v5710
      %v6089 = vunpack.c.l.b16 %v5711
      %v6090 = vunpack.c.h.b16 %v5711
      %v6091 = vunpack.c.l.b16 %v5712
      %v6092 = vpack.c.b16 %v5975, %v5972
      %v6093 = vpack.c.b16 %v5976, %v5973
      %v6094 = vpack.c.b16 %v5977, %v5974
      %v6095 = vpack.c.b16 %v5981, %v5978
      %v6096 = vpack.c.b16 %v5982, %v5979
      %v6097 = vpack.c.b16 %v5983, %v5980
      %v6098 = vpack.c.b16 %v5987, %v5984
      %v6099 = vpack.c.b16 %v5988, %v5985
      %v6100 = vpack.c.b16 %v5989, %v5986
      %v6101 = vpack.c.b16 %v5993, %v5990
      %v6102 = vpack.c.b16 %v5994, %v5991
      %v6103 = vpack.c.b16 %v5995, %v5992
      %v6104 = vpack.c.b16 %v5999, %v5996
      %v6105 = vpack.c.b16 %v6000, %v5997
      %v6106 = vpack.c.b16 %v6001, %v5998
      %v6107 = vpack.c.b16 %v6005, %v6002
      %v6108 = vpack.c.b16 %v6006, %v6003
      %v6109 = vpack.c.b16 %v6007, %v6004
      %v6110 = vpack.c.b16 %v6011, %v6008
      %v6111 = vpack.c.b16 %v6012, %v6009
      %v6112 = vpack.c.b16 %v6013, %v6010
      %v6113 = vpack.c.b16 %v6017, %v6014
      %v6114 = vpack.c.b16 %v6018, %v6015
      %v6115 = vpack.c.b16 %v6019, %v6016
      %v6116 = vpack.c.b16 %v6023, %v6020
      %v6117 = vpack.c.b16 %v6024, %v6021
      %v6118 = vpack.c.b16 %v6025, %v6022
      %v6119 = vpack.c.b16 %v6029, %v6026
      %v6120 = vpack.c.b16 %v6030, %v6027
      %v6121 = vpack.c.b16 %v6031, %v6028
      %v6122 = vpack.c.b16 %v6035, %v6032
      %v6123 = vpack.c.b16 %v6036, %v6033
      %v6124 = vpack.c.b16 %v6037, %v6034
      %v6125 = vpack.c.b16 %v6041, %v6038
      %v6126 = vpack.c.b16 %v6042, %v6039
      %v6127 = vpack.c.b16 %v6043, %v6040
      %v6128 = vpack.c.b16 %v6047, %v6044
      %v6129 = vpack.c.b16 %v6048, %v6045
      %v6130 = vpack.c.b16 %v6049, %v6046
      %v6131 = vpack.c.b16 %v6053, %v6050
      %v6132 = vpack.c.b16 %v6054, %v6051
      %v6133 = vpack.c.b16 %v6055, %v6052
      %v6134 = vpack.c.b16 %v6059, %v6056
      %v6135 = vpack.c.b16 %v6060, %v6057
      %v6136 = vpack.c.b16 %v6061, %v6058
      %v6137 = vpack.c.b16 %v6065, %v6062
      %v6138 = vpack.c.b16 %v6066, %v6063
      %v6139 = vpack.c.b16 %v6067, %v6064
      %v6140 = vpack.c.b16 %v6071, %v6068
      %v6141 = vpack.c.b16 %v6072, %v6069
      %v6142 = vpack.c.b16 %v6073, %v6070
      %v6143 = vpack.c.b16 %v6077, %v6074
      %v6144 = vpack.c.b16 %v6078, %v6075
      %v6145 = vpack.c.b16 %v6079, %v6076
      %v6146 = vpack.c.b16 %v6083, %v6080
      %v6147 = vpack.c.b16 %v6084, %v6081
      %v6148 = vpack.c.b16 %v6085, %v6082
      %v6149 = vpack.c.b16 %v6089, %v6086
      %v6150 = vpack.c.b16 %v6090, %v6087
      %v6151 = vpack.c.b16 %v6091, %v6088
      %v6212 = vsel %vm1537, %v5780, 0
      %v6214 = vsel %vm1537, %v5781, 0
      %v6216 = vsel %vm1537, %v5782, 0
      %v6218 = vsel %vm1537, %v5783, 0
      %v6220 = vsel %vm1537, %v5784, 0
      %v6222 = vsel %vm1537, %v5785, 0
      %v6224 = vsel %vm1537, %v5786, 0
      %v6226 = vsel %vm1537, %v5787, 0
      %v6228 = vsel %vm1537, %v5788, 0
      %v6230 = vsel %vm1537, %v5789, 0
      %v6232 = vsel %vm1537, %v5790, 0
      %v6234 = vsel %vm1537, %v5791, 0
      %v6236 = vsel %vm1537, %v5792, 0
      %v6238 = vsel %vm1537, %v5793, 0
      %6240 = vmatprep.subr.bf16.mxu0 %v6093
      %6241 = vmatpush1.bf16.msra.mxu0 %v6092
      %6242 = vmatprep.subr.bf16.mxu0 %v6096
      %6243 = vmatpush1.bf16.msra.mxu0 %v6095
      %6244 = vmatprep.subr.bf16.mxu0 %v6099
      %6245 = vmatpush1.bf16.msra.mxu0 %v6098
      %6246 = vmatprep.subr.bf16.mxu0 %v6102
      %6247 = vmatpush1.bf16.msra.mxu0 %v6101
      %6248 = vmatprep.subr.bf16.mxu0 %v6105
      %6249 = vmatpush1.bf16.msra.mxu0 %v6104
      %6250 = vmatprep.subr.bf16.mxu0 %v6108
      %6251 = vmatpush1.bf16.msra.mxu0 %v6107
      %6252 = vmatprep.subr.bf16.mxu0 %v6111
      %6253 = vmatpush1.bf16.msra.mxu0 %v6110
      %6254 = vmatprep.subr.bf16.mxu0 %v6114
      %6255 = vmatpush1.bf16.msra.mxu0 %v6113
      %6256 = vmatprep.subr.bf16.mxu0 %v6117
      %6257 = vmatpush1.bf16.msra.mxu0 %v6116
      %6258 = vmatprep.subr.bf16.mxu0 %v6120
      %6259 = vmatpush1.bf16.msra.mxu0 %v6119
      %6260 = vmatprep.subr.bf16.mxu0 %v6123
      %6261 = vmatpush1.bf16.msra.mxu0 %v6122
      %6262 = vmatprep.subr.bf16.mxu0 %v6126
      %6263 = vmatpush1.bf16.msra.mxu0 %v6125
      %6264 = vmatprep.subr.bf16.mxu0 %v6129
      %6265 = vmatpush1.bf16.msra.mxu0 %v6128
      %6266 = vmatprep.subr.bf16.mxu0 %v6132
      %6267 = vmatpush1.bf16.msra.mxu0 %v6131
      %6268 = vmatprep.subr.bf16.mxu0 %v6135
      %6269 = vmatpush1.bf16.msra.mxu0 %v6134
      %6270 = vmatprep.subr.bf16.mxu0 %v6138
      %6271 = vmatpush1.bf16.msra.mxu0 %v6137
      %6272 = vmatprep.mubr.bf16.mxu0 %v5831
      %6273 = vmatmul.mubr.bf16.gmra.mrb[0].mxu0 %v1540
      %v6274 = vpop.f32.mrb[0].mxu0
      %v6275 = vadd.f32 0.0, %v6274
      %v6276 = vpop.f32.mrb[0].mxu0
      %v6277 = vadd.f32 0.0, %v6276
      %v6278 = vpop.f32.mrb[0].mxu0
      %v6279 = vadd.f32 0.0, %v6278
      %v6280 = vpop.f32.mrb[0].mxu0
      %v6281 = vadd.f32 0.0, %v6280
      %6282 = vmatprep.mubr.bf16.mxu0 %v5835
      %6283 = vmatmul.mubr.bf16.gmra.mrb[0].mxu0 %v5827
      %v6284 = vpop.f32.mrb[0].mxu0
      %v6285 = vadd.f32 0.0, %v6284
      %v6286 = vpop.f32.mrb[0].mxu0
      %v6287 = vadd.f32 0.0, %v6286
      %v6288 = vpop.f32.mrb[0].mxu0
      %v6289 = vadd.f32 0.0, %v6288
      %v6290 = vpop.f32.mrb[0].mxu0
      %v6291 = vadd.f32 0.0, %v6290
      %6292 = vmatprep.mubr.bf16.mxu0 %v5839
      %6293 = vmatmul.mubr.bf16.gmra.mrb[0].mxu0 %v5831
      %v6294 = vpop.f32.mrb[0].mxu0
      %v6295 = vadd.f32 0.0, %v6294
      %v6296 = vpop.f32.mrb[0].mxu0
      %v6297 = vadd.f32 0.0, %v6296
      %v6298 = vpop.f32.mrb[0].mxu0
      %v6299 = vadd.f32 0.0, %v6298
      %v6300 = vpop.f32.mrb[0].mxu0
      %v6301 = vadd.f32 0.0, %v6300
      %6302 = vmatprep.mubr.bf16.mxu0 %v5843
      %6303 = vmatmul.mubr.bf16.gmra.mrb[0].mxu0 %v5835
      %v6304 = vpop.f32.mrb[0].mxu0
      %v6305 = vadd.f32 0.0, %v6304
      %v6306 = vpop.f32.mrb[0].mxu0
      %v6307 = vadd.f32 0.0, %v6306
      %v6308 = vpop.f32.mrb[0].mxu0
      %v6309 = vadd.f32 0.0, %v6308
      %v6310 = vpop.f32.mrb[0].mxu0
      %v6311 = vadd.f32 0.0, %v6310
      %6312 = vmatprep.mubr.bf16.mxu0 %v5847
      %6313 = vmatmul.mubr.bf16.gmra.mrb[0].mxu0 %v5839
      %v6314 = vpop.f32.mrb[0].mxu0
      %v6315 = vadd.f32 0.0, %v6314
      %v6316 = vpop.f32.mrb[0].mxu0
      %v6317 = vadd.f32 0.0, %v6316
      %v6318 = vpop.f32.mrb[0].mxu0
      %v6319 = vadd.f32 0.0, %v6318
      %v6320 = vpop.f32.mrb[0].mxu0
      %v6321 = vadd.f32 0.0, %v6320
      %6322 = vmatprep.mubr.bf16.mxu0 %v5851
      %6323 = vmatmul.mubr.bf16.gmra.mrb[0].mxu0 %v5843
      %v6324 = vpop.f32.mrb[0].mxu0
      %v6325 = vadd.f32 0.0, %v6324
      %v6326 = vpop.f32.mrb[0].mxu0
      %v6327 = vadd.f32 0.0, %v6326
      %v6328 = vpop.f32.mrb[0].mxu0
      %v6329 = vadd.f32 0.0, %v6328
      %v6330 = vpop.f32.mrb[0].mxu0
      %v6331 = vadd.f32 0.0, %v6330
      %6332 = vmatprep.mubr.bf16.mxu0 %v5855
      %6333 = vmatmul.mubr.bf16.gmra.mrb[0].mxu0 %v5847
      %v6334 = vpop.f32.mrb[0].mxu0
      %v6335 = vadd.f32 0.0, %v6334
      %v6336 = vpop.f32.mrb[0].mxu0
      %v6337 = vadd.f32 0.0, %v6336
      %v6338 = vpop.f32.mrb[0].mxu0
      %v6339 = vadd.f32 0.0, %v6338
      %v6340 = vpop.f32.mrb[0].mxu0
      %v6341 = vadd.f32 0.0, %v6340
      %6342 = vmatprep.mubr.bf16.mxu0 %v5859
      %6343 = vmatmul.mubr.bf16.gmra.mrb[0].mxu0 %v5851
      %v6344 = vpop.f32.mrb[0].mxu0
      %v6345 = vadd.f32 0.0, %v6344
      %v6346 = vpop.f32.mrb[0].mxu0
      %v6347 = vadd.f32 0.0, %v6346
      %v6348 = vpop.f32.mrb[0].mxu0
      %v6349 = vadd.f32 0.0, %v6348
      %v6350 = vpop.f32.mrb[0].mxu0
      %v6351 = vadd.f32 0.0, %v6350
      %6352 = vmatprep.mubr.bf16.mxu0 %v5863
      %6353 = vmatmul.mubr.bf16.gmra.mrb[0].mxu0 %v5855
      %v6354 = vpop.f32.mrb[0].mxu0
      %v6355 = vadd.f32 0.0, %v6354
      %v6356 = vpop.f32.mrb[0].mxu0
      %v6357 = vadd.f32 0.0, %v6356
      %v6358 = vpop.f32.mrb[0].mxu0
      %v6359 = vadd.f32 0.0, %v6358
      %v6360 = vpop.f32.mrb[0].mxu0
      %v6361 = vadd.f32 0.0, %v6360
      %6362 = vmatprep.mubr.bf16.mxu0 %v5867
      %6363 = vmatmul.mubr.bf16.gmra.mrb[0].mxu0 %v5859
      %v6364 = vpop.f32.mrb[0].mxu0
      %v6365 = vadd.f32 0.0, %v6364
      %v6366 = vpop.f32.mrb[0].mxu0
      %v6367 = vadd.f32 0.0, %v6366
      %v6368 = vpop.f32.mrb[0].mxu0
      %v6369 = vadd.f32 0.0, %v6368
      %v6370 = vpop.f32.mrb[0].mxu0
      %v6371 = vadd.f32 0.0, %v6370
      %6372 = vmatprep.mubr.bf16.mxu0 %v5871
      %6373 = vmatmul.mubr.bf16.gmra.mrb[0].mxu0 %v5863
      %v6374 = vpop.f32.mrb[0].mxu0
      %v6375 = vadd.f32 0.0, %v6374
      %v6376 = vpop.f32.mrb[0].mxu0
      %v6377 = vadd.f32 0.0, %v6376
      %v6378 = vpop.f32.mrb[0].mxu0
      %v6379 = vadd.f32 0.0, %v6378
      %v6380 = vpop.f32.mrb[0].mxu0
      %v6381 = vadd.f32 0.0, %v6380
      %6382 = vmatprep.mubr.bf16.mxu0 %v5875
      %6383 = vmatmul.mubr.bf16.gmra.mrb[0].mxu0 %v5867
      %v6384 = vpop.f32.mrb[0].mxu0
      %v6385 = vadd.f32 0.0, %v6384
      %v6386 = vpop.f32.mrb[0].mxu0
      %v6387 = vadd.f32 0.0, %v6386
      %v6388 = vpop.f32.mrb[0].mxu0
      %v6389 = vadd.f32 0.0, %v6388
      %v6390 = vpop.f32.mrb[0].mxu0
      %v6391 = vadd.f32 0.0, %v6390
      %6392 = vmatprep.mubr.bf16.mxu0 %v5879
      %6393 = vmatmul.mubr.bf16.gmra.mrb[0].mxu0 %v5871
      %v6394 = vpop.f32.mrb[0].mxu0
      %v6395 = vadd.f32 0.0, %v6394
      %v6396 = vpop.f32.mrb[0].mxu0
      %v6397 = vadd.f32 0.0, %v6396
      %v6398 = vpop.f32.mrb[0].mxu0
      %v6399 = vadd.f32 0.0, %v6398
      %v6400 = vpop.f32.mrb[0].mxu0
      %v6401 = vadd.f32 0.0, %v6400
      %6402 = vmatprep.mubr.bf16.mxu0 %v5883
      %6403 = vmatmul.mubr.bf16.gmra.mrb[0].mxu0 %v5875
      %v6404 = vpop.f32.mrb[0].mxu0
      %v6405 = vadd.f32 0.0, %v6404
      %v6406 = vpop.f32.mrb[0].mxu0
      %v6407 = vadd.f32 0.0, %v6406
      %v6408 = vpop.f32.mrb[0].mxu0
      %v6409 = vadd.f32 0.0, %v6408
      %v6410 = vpop.f32.mrb[0].mxu0
      %v6411 = vadd.f32 0.0, %v6410
      %6412 = vmatprep.mubr.bf16.mxu0 %v5887
      %6413 = vmatmul.mubr.bf16.gmra.mrb[0].mxu0 %v5879
      %v6414 = vpop.f32.mrb[0].mxu0
      %v6415 = vadd.f32 0.0, %v6414
      %v6416 = vpop.f32.mrb[0].mxu0
      %v6417 = vadd.f32 0.0, %v6416
      %v6418 = vpop.f32.mrb[0].mxu0
      %v6419 = vadd.f32 0.0, %v6418
      %v6420 = vpop.f32.mrb[0].mxu0
      %v6421 = vadd.f32 0.0, %v6420
      %6422 = vmatprep.mubr.bf16.mxu0 %v5890
      %6423 = vmatmul.mubr.bf16.gmra.mrb[0].mxu0 %v5883
      %v6424 = vpop.f32.mrb[0].mxu0
      %v6425 = vadd.f32 0.0, %v6424
      %v6426 = vpop.f32.mrb[0].mxu0
      %v6427 = vadd.f32 0.0, %v6426
      %v6428 = vpop.f32.mrb[0].mxu0
      %v6429 = vadd.f32 0.0, %v6428
      %v6430 = vpop.f32.mrb[0].mxu0
      %v6431 = vadd.f32 0.0, %v6430
      %6432 = vdwg.mxu0
      %6433 = vmatprep.subr.bf16.mxu0 %v6141
      %6434 = vmatpush1.bf16.msra.mxu0 %v6140
      %6435 = vmatprep.subr.bf16.mxu0 %v6144
      %6436 = vmatpush1.bf16.msra.mxu0 %v6143
      %6437 = vmatprep.subr.bf16.mxu0 %v6147
      %6438 = vmatpush1.bf16.msra.mxu0 %v6146
      %6439 = vmatprep.subr.bf16.mxu0 %v6150
      %6440 = vmatpush1.bf16.msra.mxu0 %v6149
      %6441 = vmatprep.subr.bf16.mxu0 0
      %6442 = vmatpush1.bf16.msra.mxu0 0
      %6443 = vmatprep.subr.bf16.mxu0 0
      %6444 = vmatpush1.bf16.msra.mxu0 0
      %6445 = vmatprep.subr.bf16.mxu0 0
      %6446 = vmatpush1.bf16.msra.mxu0 0
      %6447 = vmatprep.subr.bf16.mxu0 0
      %6448 = vmatpush1.bf16.msra.mxu0 0
      %6449 = vmatprep.subr.bf16.mxu0 0
      %6450 = vmatpush1.bf16.msra.mxu0 0
      %6451 = vmatprep.subr.bf16.mxu0 0
      %6452 = vmatpush1.bf16.msra.mxu0 0
      %6453 = vmatprep.subr.bf16.mxu0 0
      %6454 = vmatpush1.bf16.msra.mxu0 0
      %6455 = vmatprep.subr.bf16.mxu0 0
      %6456 = vmatpush1.bf16.msra.mxu0 0
      %6457 = vmatprep.subr.bf16.mxu0 0
      %6458 = vmatpush1.bf16.msra.mxu0 0
      %6459 = vmatprep.subr.bf16.mxu0 0
      %6460 = vmatpush1.bf16.msra.mxu0 0
      %6461 = vmatprep.subr.bf16.mxu0 0
      %6462 = vmatpush1.bf16.msra.mxu0 0
      %6463 = vmatprep.subr.bf16.mxu0 0
      %6464 = vmatpush1.bf16.msra.mxu0 0
      %6465 = vmatprep.mubr.bf16.mxu0 0
      %6466 = vmatmul.mubr.bf16.gmra.mrb[0].mxu0 %v6212
      %v6467 = vpop.f32.mrb[0].mxu0
      %v6468 = vadd.f32 %v6275, %v6467
      %v6469 = vpop.f32.mrb[0].mxu0
      %v6470 = vadd.f32 %v6277, %v6469
      %v6471 = vpop.f32.mrb[0].mxu0
      %v6472 = vadd.f32 %v6279, %v6471
      %v6473 = vpop.f32.mrb[0].mxu0
      %v6474 = vadd.f32 %v6281, %v6473
      %6475 = vmatprep.mubr.bf16.mxu0 0
      %6476 = vmatmul.mubr.bf16.gmra.mrb[0].mxu0 %v6214
      %v6477 = vpop.f32.mrb[0].mxu0
      %v6478 = vadd.f32 %v6285, %v6477
      %v6479 = vpop.f32.mrb[0].mxu0
      %v6480 = vadd.f32 %v6287, %v6479
      %v6481 = vpop.f32.mrb[0].mxu0
      %v6482 = vadd.f32 %v6289, %v6481
      %v6483 = vpop.f32.mrb[0].mxu0
      %v6484 = vadd.f32 %v6291, %v6483
      %6485 = vmatprep.mubr.bf16.mxu0 0
      %6486 = vmatmul.mubr.bf16.gmra.mrb[0].mxu0 %v6216
      %v6487 = vpop.f32.mrb[0].mxu0
      %v6488 = vadd.f32 %v6295, %v6487
      %v6489 = vpop.f32.mrb[0].mxu0
      %v6490 = vadd.f32 %v6297, %v6489
      %v6491 = vpop.f32.mrb[0].mxu0
      %v6492 = vadd.f32 %v6299, %v6491
      %v6493 = vpop.f32.mrb[0].mxu0
      %v6494 = vadd.f32 %v6301, %v6493
      %6495 = vmatprep.mubr.bf16.mxu0 0
      %6496 = vmatmul.mubr.bf16.gmra.mrb[0].mxu0 %v6218
      %v6497 = vpop.f32.mrb[0].mxu0
      %v6498 = vadd.f32 %v6305, %v6497
      %v6499 = vpop.f32.mrb[0].mxu0
      %v6500 = vadd.f32 %v6307, %v6499
      %v6501 = vpop.f32.mrb[0].mxu0
      %v6502 = vadd.f32 %v6309, %v6501
      %v6503 = vpop.f32.mrb[0].mxu0
      %v6504 = vadd.f32 %v6311, %v6503
      %6505 = vmatprep.mubr.bf16.mxu0 0
      %6506 = vmatmul.mubr.bf16.gmra.mrb[0].mxu0 %v6220
      %v6507 = vpop.f32.mrb[0].mxu0
      %v6508 = vadd.f32 %v6315, %v6507
      %v6509 = vpop.f32.mrb[0].mxu0
      %v6510 = vadd.f32 %v6317, %v6509
      %v6511 = vpop.f32.mrb[0].mxu0
      %v6512 = vadd.f32 %v6319, %v6511
      %v6513 = vpop.f32.mrb[0].mxu0
      %v6514 = vadd.f32 %v6321, %v6513
      %6515 = vmatprep.mubr.bf16.mxu0 0
      %6516 = vmatmul.mubr.bf16.gmra.mrb[0].mxu0 %v6222
      %v6517 = vpop.f32.mrb[0].mxu0
      %v6518 = vadd.f32 %v6325, %v6517
      %v6519 = vpop.f32.mrb[0].mxu0
      %v6520 = vadd.f32 %v6327, %v6519
      %v6521 = vpop.f32.mrb[0].mxu0
      %v6522 = vadd.f32 %v6329, %v6521
      %v6523 = vpop.f32.mrb[0].mxu0
      %v6524 = vadd.f32 %v6331, %v6523
      %6525 = vmatprep.mubr.bf16.mxu0 0
      %6526 = vmatmul.mubr.bf16.gmra.mrb[0].mxu0 %v6224
      %v6527 = vpop.f32.mrb[0].mxu0
      %v6528 = vadd.f32 %v6335, %v6527
      %v6529 = vpop.f32.mrb[0].mxu0
      %v6530 = vadd.f32 %v6337, %v6529
      %v6531 = vpop.f32.mrb[0].mxu0
      %v6532 = vadd.f32 %v6339, %v6531
      %v6533 = vpop.f32.mrb[0].mxu0
      %v6534 = vadd.f32 %v6341, %v6533
      %6535 = vmatprep.mubr.bf16.mxu0 0
      %6536 = vmatmul.mubr.bf16.gmra.mrb[0].mxu0 %v6226
      %v6537 = vpop.f32.mrb[0].mxu0
      %v6538 = vadd.f32 %v6345, %v6537
      %v6539 = vpop.f32.mrb[0].mxu0
      %v6540 = vadd.f32 %v6347, %v6539
      %v6541 = vpop.f32.mrb[0].mxu0
      %v6542 = vadd.f32 %v6349, %v6541
      %v6543 = vpop.f32.mrb[0].mxu0
      %v6544 = vadd.f32 %v6351, %v6543
      %6545 = vmatprep.mubr.bf16.mxu0 0
      %6546 = vmatmul.mubr.bf16.gmra.mrb[0].mxu0 %v6228
      %v6547 = vpop.f32.mrb[0].mxu0
      %v6548 = vadd.f32 %v6355, %v6547
      %v6549 = vpop.f32.mrb[0].mxu0
      %v6550 = vadd.f32 %v6357, %v6549
      %v6551 = vpop.f32.mrb[0].mxu0
      %v6552 = vadd.f32 %v6359, %v6551
      %v6553 = vpop.f32.mrb[0].mxu0
      %v6554 = vadd.f32 %v6361, %v6553
      %6555 = vmatprep.mubr.bf16.mxu0 0
      %6556 = vmatmul.mubr.bf16.gmra.mrb[0].mxu0 %v6230
      %v6557 = vpop.f32.mrb[0].mxu0
      %v6558 = vadd.f32 %v6365, %v6557
      %v6559 = vpop.f32.mrb[0].mxu0
      %v6560 = vadd.f32 %v6367, %v6559
      %v6561 = vpop.f32.mrb[0].mxu0
      %v6562 = vadd.f32 %v6369, %v6561
      %v6563 = vpop.f32.mrb[0].mxu0
      %v6564 = vadd.f32 %v6371, %v6563
      %6565 = vmatprep.mubr.bf16.mxu0 0
      %6566 = vmatmul.mubr.bf16.gmra.mrb[0].mxu0 %v6232
      %v6567 = vpop.f32.mrb[0].mxu0
      %v6568 = vadd.f32 %v6375, %v6567
      %v6569 = vpop.f32.mrb[0].mxu0
      %v6570 = vadd.f32 %v6377, %v6569
      %v6571 = vpop.f32.mrb[0].mxu0
      %v6572 = vadd.f32 %v6379, %v6571
      %v6573 = vpop.f32.mrb[0].mxu0
      %v6574 = vadd.f32 %v6381, %v6573
      %6575 = vmatprep.mubr.bf16.mxu0 0
      %6576 = vmatmul.mubr.bf16.gmra.mrb[0].mxu0 %v6234
      %v6577 = vpop.f32.mrb[0].mxu0
      %v6578 = vadd.f32 %v6385, %v6577
      %v6579 = vpop.f32.mrb[0].mxu0
      %v6580 = vadd.f32 %v6387, %v6579
      %v6581 = vpop.f32.mrb[0].mxu0
      %v6582 = vadd.f32 %v6389, %v6581
      %v6583 = vpop.f32.mrb[0].mxu0
      %v6584 = vadd.f32 %v6391, %v6583
      %6585 = vmatprep.mubr.bf16.mxu0 0
      %6586 = vmatmul.mubr.bf16.gmra.mrb[0].mxu0 %v6236
      %v6587 = vpop.f32.mrb[0].mxu0
      %v6588 = vadd.f32 %v6395, %v6587
      %v6589 = vpop.f32.mrb[0].mxu0
      %v6590 = vadd.f32 %v6397, %v6589
      %v6591 = vpop.f32.mrb[0].mxu0
      %v6592 = vadd.f32 %v6399, %v6591
      %v6593 = vpop.f32.mrb[0].mxu0
      %v6594 = vadd.f32 %v6401, %v6593
      %6595 = vmatprep.mubr.bf16.mxu0 0
      %6596 = vmatmul.mubr.bf16.gmra.mrb[0].mxu0 %v6238
      %v6597 = vpop.f32.mrb[0].mxu0
      %v6598 = vadd.f32 %v6405, %v6597
      %v6599 = vpop.f32.mrb[0].mxu0
      %v6600 = vadd.f32 %v6407, %v6599
      %v6601 = vpop.f32.mrb[0].mxu0
      %v6602 = vadd.f32 %v6409, %v6601
      %v6603 = vpop.f32.mrb[0].mxu0
      %v6604 = vadd.f32 %v6411, %v6603
      %6605 = vmatprep.mubr.bf16.mxu0 0
      %6606 = vmatmul.mubr.bf16.gmra.mrb[0].mxu0 %v1956
      %v6607 = vpop.f32.mrb[0].mxu0
      %v6608 = vadd.f32 %v6415, %v6607
      %v6609 = vpop.f32.mrb[0].mxu0
      %v6610 = vadd.f32 %v6417, %v6609
      %v6611 = vpop.f32.mrb[0].mxu0
      %v6612 = vadd.f32 %v6419, %v6611
      %v6613 = vpop.f32.mrb[0].mxu0
      %v6614 = vadd.f32 %v6421, %v6613
      %6615 = vmatprep.mubr.bf16.mxu0 0
      %6616 = vmatmul.mubr.bf16.gmra.mrb[0].mxu0 %v1956
      %v6617 = vpop.f32.mrb[0].mxu0
      %v6618 = vadd.f32 %v6425, %v6617
      %v6619 = vpop.f32.mrb[0].mxu0
      %v6620 = vadd.f32 %v6427, %v6619
      %v6621 = vpop.f32.mrb[0].mxu0
      %v6622 = vadd.f32 %v6429, %v6621
      %v6623 = vpop.f32.mrb[0].mxu0
      %v6624 = vadd.f32 %v6431, %v6623
      %6625 = vdwg.mxu0
      %6626 = vmatprep.subr.bf16.mxu0 0
      %6627 = vmatpush1.bf16.msra.mxu0 %v6094
      %6628 = vmatprep.subr.bf16.mxu0 0
      %6629 = vmatpush1.bf16.msra.mxu0 %v6097
      %6630 = vmatprep.subr.bf16.mxu0 0
      %6631 = vmatpush1.bf16.msra.mxu0 %v6100
      %6632 = vmatprep.subr.bf16.mxu0 0
      %6633 = vmatpush1.bf16.msra.mxu0 %v6103
      %6634 = vmatprep.subr.bf16.mxu0 0
      %6635 = vmatpush1.bf16.msra.mxu0 %v6106
      %6636 = vmatprep.subr.bf16.mxu0 0
      %6637 = vmatpush1.bf16.msra.mxu0 %v6109
      %6638 = vmatprep.subr.bf16.mxu0 0
      %6639 = vmatpush1.bf16.msra.mxu0 %v6112
      %6640 = vmatprep.subr.bf16.mxu0 0
      %6641 = vmatpush1.bf16.msra.mxu0 %v6115
      %6642 = vmatprep.subr.bf16.mxu0 0
      %6643 = vmatpush1.bf16.msra.mxu0 %v6118
      %6644 = vmatprep.subr.bf16.mxu0 0
      %6645 = vmatpush1.bf16.msra.mxu0 %v6121
      %6646 = vmatprep.subr.bf16.mxu0 0
      %6647 = vmatpush1.bf16.msra.mxu0 %v6124
      %6648 = vmatprep.subr.bf16.mxu0 0
      %6649 = vmatpush1.bf16.msra.mxu0 %v6127
      %6650 = vmatprep.subr.bf16.mxu0 0
      %6651 = vmatpush1.bf16.msra.mxu0 %v6130
      %6652 = vmatprep.subr.bf16.mxu0 0
      %6653 = vmatpush1.bf16.msra.mxu0 %v6133
      %6654 = vmatprep.subr.bf16.mxu0 0
      %6655 = vmatpush1.bf16.msra.mxu0 %v6136
      %6656 = vmatprep.subr.bf16.mxu0 0
      %6657 = vmatpush1.bf16.msra.mxu0 %v6139
      %6658 = vmatprep.mubr.bf16.mxu0 %v5831
      %6659 = vmatmul.mubr.bf16.gmra.mrb[0].mxu0 %v1540
      %v6660 = vpop.f32.mrb[0].mxu0
      %v6661 = vadd.f32 0.0, %v6660
      %v6662 = vpop.f32.mrb[0].mxu0
      %v6663 = vpop.f32.mrb[0].mxu0
      %v6664 = vadd.f32 0.0, %v6663
      %v6665 = vpop.f32.mrb[0].mxu0
      %6666 = vmatprep.mubr.bf16.mxu0 %v5835
      %6667 = vmatmul.mubr.bf16.gmra.mrb[0].mxu0 %v5827
      %v6668 = vpop.f32.mrb[0].mxu0
      %v6669 = vadd.f32 0.0, %v6668
      %v6670 = vpop.f32.mrb[0].mxu0
      %v6671 = vpop.f32.mrb[0].mxu0
      %v6672 = vadd.f32 0.0, %v6671
      %v6673 = vpop.f32.mrb[0].mxu0
      %6674 = vmatprep.mubr.bf16.mxu0 %v5839
      %6675 = vmatmul.mubr.bf16.gmra.mrb[0].mxu0 %v5831
      %v6676 = vpop.f32.mrb[0].mxu0
      %v6677 = vadd.f32 0.0, %v6676
      %v6678 = vpop.f32.mrb[0].mxu0
      %v6679 = vpop.f32.mrb[0].mxu0
      %v6680 = vadd.f32 0.0, %v6679
      %v6681 = vpop.f32.mrb[0].mxu0
      %6682 = vmatprep.mubr.bf16.mxu0 %v5843
      %6683 = vmatmul.mubr.bf16.gmra.mrb[0].mxu0 %v5835
      %v6684 = vpop.f32.mrb[0].mxu0
      %v6685 = vadd.f32 0.0, %v6684
      %v6686 = vpop.f32.mrb[0].mxu0
      %v6687 = vpop.f32.mrb[0].mxu0
      %v6688 = vadd.f32 0.0, %v6687
      %v6689 = vpop.f32.mrb[0].mxu0
      %6690 = vmatprep.mubr.bf16.mxu0 %v5847
      %6691 = vmatmul.mubr.bf16.gmra.mrb[0].mxu0 %v5839
      %v6692 = vpop.f32.mrb[0].mxu0
      %v6693 = vadd.f32 0.0, %v6692
      %v6694 = vpop.f32.mrb[0].mxu0
      %v6695 = vpop.f32.mrb[0].mxu0
      %v6696 = vadd.f32 0.0, %v6695
      %v6697 = vpop.f32.mrb[0].mxu0
      %6698 = vmatprep.mubr.bf16.mxu0 %v5851
      %6699 = vmatmul.mubr.bf16.gmra.mrb[0].mxu0 %v5843
      %v6700 = vpop.f32.mrb[0].mxu0
      %v6701 = vadd.f32 0.0, %v6700
      %v6702 = vpop.f32.mrb[0].mxu0
      %v6703 = vpop.f32.mrb[0].mxu0
      %v6704 = vadd.f32 0.0, %v6703
      %v6705 = vpop.f32.mrb[0].mxu0
      %6706 = vmatprep.mubr.bf16.mxu0 %v5855
      %6707 = vmatmul.mubr.bf16.gmra.mrb[0].mxu0 %v5847
      %v6708 = vpop.f32.mrb[0].mxu0
      %v6709 = vadd.f32 0.0, %v6708
      %v6710 = vpop.f32.mrb[0].mxu0
      %v6711 = vpop.f32.mrb[0].mxu0
      %v6712 = vadd.f32 0.0, %v6711
      %v6713 = vpop.f32.mrb[0].mxu0
      %6714 = vmatprep.mubr.bf16.mxu0 %v5859
      %6715 = vmatmul.mubr.bf16.gmra.mrb[0].mxu0 %v5851
      %v6716 = vpop.f32.mrb[0].mxu0
      %v6717 = vadd.f32 0.0, %v6716
      %v6718 = vpop.f32.mrb[0].mxu0
      %v6719 = vpop.f32.mrb[0].mxu0
      %v6720 = vadd.f32 0.0, %v6719
      %v6721 = vpop.f32.mrb[0].mxu0
      %6722 = vmatprep.mubr.bf16.mxu0 %v5863
      %6723 = vmatmul.mubr.bf16.gmra.mrb[0].mxu0 %v5855
      %v6724 = vpop.f32.mrb[0].mxu0
      %v6725 = vadd.f32 0.0, %v6724
      %v6726 = vpop.f32.mrb[0].mxu0
      %v6727 = vpop.f32.mrb[0].mxu0
      %v6728 = vadd.f32 0.0, %v6727
      %v6729 = vpop.f32.mrb[0].mxu0
      %6730 = vmatprep.mubr.bf16.mxu0 %v5867
      %6731 = vmatmul.mubr.bf16.gmra.mrb[0].mxu0 %v5859
      %v6732 = vpop.f32.mrb[0].mxu0
      %v6733 = vadd.f32 0.0, %v6732
      %v6734 = vpop.f32.mrb[0].mxu0
      %v6735 = vpop.f32.mrb[0].mxu0
      %v6736 = vadd.f32 0.0, %v6735
      %v6737 = vpop.f32.mrb[0].mxu0
      %6738 = vmatprep.mubr.bf16.mxu0 %v5871
      %6739 = vmatmul.mubr.bf16.gmra.mrb[0].mxu0 %v5863
      %v6740 = vpop.f32.mrb[0].mxu0
      %v6741 = vadd.f32 0.0, %v6740
      %v6742 = vpop.f32.mrb[0].mxu0
      %v6743 = vpop.f32.mrb[0].mxu0
      %v6744 = vadd.f32 0.0, %v6743
      %v6745 = vpop.f32.mrb[0].mxu0
      %6746 = vmatprep.mubr.bf16.mxu0 %v5875
      %6747 = vmatmul.mubr.bf16.gmra.mrb[0].mxu0 %v5867
      %v6748 = vpop.f32.mrb[0].mxu0
      %v6749 = vadd.f32 0.0, %v6748
      %v6750 = vpop.f32.mrb[0].mxu0
      %v6751 = vpop.f32.mrb[0].mxu0
      %v6752 = vadd.f32 0.0, %v6751
      %v6753 = vpop.f32.mrb[0].mxu0
      %6754 = vmatprep.mubr.bf16.mxu0 %v5879
      %6755 = vmatmul.mubr.bf16.gmra.mrb[0].mxu0 %v5871
      %v6756 = vpop.f32.mrb[0].mxu0
      %v6757 = vadd.f32 0.0, %v6756
      %v6758 = vpop.f32.mrb[0].mxu0
      %v6759 = vpop.f32.mrb[0].mxu0
      %v6760 = vadd.f32 0.0, %v6759
      %v6761 = vpop.f32.mrb[0].mxu0
      %6762 = vmatprep.mubr.bf16.mxu0 %v5883
      %6763 = vmatmul.mubr.bf16.gmra.mrb[0].mxu0 %v5875
      %v6764 = vpop.f32.mrb[0].mxu0
      %v6765 = vadd.f32 0.0, %v6764
      %v6766 = vpop.f32.mrb[0].mxu0
      %v6767 = vpop.f32.mrb[0].mxu0
      %v6768 = vadd.f32 0.0, %v6767
      %v6769 = vpop.f32.mrb[0].mxu0
      %6770 = vmatprep.mubr.bf16.mxu0 %v5887
      %6771 = vmatmul.mubr.bf16.gmra.mrb[0].mxu0 %v5879
      %v6772 = vpop.f32.mrb[0].mxu0
      %v6773 = vadd.f32 0.0, %v6772
      %v6774 = vpop.f32.mrb[0].mxu0
      %v6775 = vpop.f32.mrb[0].mxu0
      %v6776 = vadd.f32 0.0, %v6775
      %v6777 = vpop.f32.mrb[0].mxu0
      %6778 = vmatprep.mubr.bf16.mxu0 %v5890
      %6779 = vmatmul.mubr.bf16.gmra.mrb[0].mxu0 %v5883
      %v6780 = vpop.f32.mrb[0].mxu0
      %v6781 = vadd.f32 0.0, %v6780
      %v6782 = vpop.f32.mrb[0].mxu0
      %v6783 = vpop.f32.mrb[0].mxu0
      %v6784 = vadd.f32 0.0, %v6783
      %v6785 = vpop.f32.mrb[0].mxu0
      %6786 = vdwg.mxu0
      %6787 = vmatprep.subr.bf16.mxu0 0
      %6788 = vmatpush1.bf16.msra.mxu0 %v6142
      %6789 = vmatprep.subr.bf16.mxu0 0
      %6790 = vmatpush1.bf16.msra.mxu0 %v6145
      %6791 = vmatprep.subr.bf16.mxu0 0
      %6792 = vmatpush1.bf16.msra.mxu0 %v6148
      %6793 = vmatprep.subr.bf16.mxu0 0
      %6794 = vmatpush1.bf16.msra.mxu0 %v6151
      %6795 = vmatprep.subr.bf16.mxu0 0
      %6796 = vmatpush1.bf16.msra.mxu0 0
      %6797 = vmatprep.subr.bf16.mxu0 0
      %6798 = vmatpush1.bf16.msra.mxu0 0
      %6799 = vmatprep.subr.bf16.mxu0 0
      %6800 = vmatpush1.bf16.msra.mxu0 0
      %6801 = vmatprep.subr.bf16.mxu0 0
      %6802 = vmatpush1.bf16.msra.mxu0 0
      %6803 = vmatprep.subr.bf16.mxu0 0
      %6804 = vmatpush1.bf16.msra.mxu0 0
      %6805 = vmatprep.subr.bf16.mxu0 0
      %6806 = vmatpush1.bf16.msra.mxu0 0
      %6807 = vmatprep.subr.bf16.mxu0 0
      %6808 = vmatpush1.bf16.msra.mxu0 0
      %6809 = vmatprep.subr.bf16.mxu0 0
      %6810 = vmatpush1.bf16.msra.mxu0 0
      %6811 = vmatprep.subr.bf16.mxu0 0
      %6812 = vmatpush1.bf16.msra.mxu0 0
      %6813 = vmatprep.subr.bf16.mxu0 0
      %6814 = vmatpush1.bf16.msra.mxu0 0
      %6815 = vmatprep.subr.bf16.mxu0 0
      %6816 = vmatpush1.bf16.msra.mxu0 0
      %6817 = vmatprep.subr.bf16.mxu0 0
      %6818 = vmatpush1.bf16.msra.mxu0 0
      %6819 = vmatprep.mubr.bf16.mxu0 0
      %6820 = vmatmul.mubr.bf16.gmra.mrb[0].mxu0 %v6212
      %v6821 = vpop.f32.mrb[0].mxu0
      %v6822 = vadd.f32 %v6661, %v6821
      %v6823 = vpop.f32.mrb[0].mxu0
      %v6824 = vpop.f32.mrb[0].mxu0
      %v6825 = vadd.f32 %v6664, %v6824
      %v6826 = vpop.f32.mrb[0].mxu0
      %6827 = vmatprep.mubr.bf16.mxu0 0
      %6828 = vmatmul.mubr.bf16.gmra.mrb[0].mxu0 %v6214
      %v6829 = vpop.f32.mrb[0].mxu0
      %v6830 = vadd.f32 %v6669, %v6829
      %v6831 = vpop.f32.mrb[0].mxu0
      %v6832 = vpop.f32.mrb[0].mxu0
      %v6833 = vadd.f32 %v6672, %v6832
      %v6834 = vpop.f32.mrb[0].mxu0
      %6835 = vmatprep.mubr.bf16.mxu0 0
      %6836 = vmatmul.mubr.bf16.gmra.mrb[0].mxu0 %v6216
      %v6837 = vpop.f32.mrb[0].mxu0
      %v6838 = vadd.f32 %v6677, %v6837
      %v6839 = vpop.f32.mrb[0].mxu0
      %v6840 = vpop.f32.mrb[0].mxu0
      %v6841 = vadd.f32 %v6680, %v6840
      %v6842 = vpop.f32.mrb[0].mxu0
      %6843 = vmatprep.mubr.bf16.mxu0 0
      %6844 = vmatmul.mubr.bf16.gmra.mrb[0].mxu0 %v6218
      %v6845 = vpop.f32.mrb[0].mxu0
      %v6846 = vadd.f32 %v6685, %v6845
      %v6847 = vpop.f32.mrb[0].mxu0
      %v6848 = vpop.f32.mrb[0].mxu0
      %v6849 = vadd.f32 %v6688, %v6848
      %v6850 = vpop.f32.mrb[0].mxu0
      %6851 = vmatprep.mubr.bf16.mxu0 0
      %6852 = vmatmul.mubr.bf16.gmra.mrb[0].mxu0 %v6220
      %v6853 = vpop.f32.mrb[0].mxu0
      %v6854 = vadd.f32 %v6693, %v6853
      %v6855 = vpop.f32.mrb[0].mxu0
      %v6856 = vpop.f32.mrb[0].mxu0
      %v6857 = vadd.f32 %v6696, %v6856
      %v6858 = vpop.f32.mrb[0].mxu0
      %6859 = vmatprep.mubr.bf16.mxu0 0
      %6860 = vmatmul.mubr.bf16.gmra.mrb[0].mxu0 %v6222
      %v6861 = vpop.f32.mrb[0].mxu0
      %v6862 = vadd.f32 %v6701, %v6861
      %v6863 = vpop.f32.mrb[0].mxu0
      %v6864 = vpop.f32.mrb[0].mxu0
      %v6865 = vadd.f32 %v6704, %v6864
      %v6866 = vpop.f32.mrb[0].mxu0
      %6867 = vmatprep.mubr.bf16.mxu0 0
      %6868 = vmatmul.mubr.bf16.gmra.mrb[0].mxu0 %v6224
      %v6869 = vpop.f32.mrb[0].mxu0
      %v6870 = vadd.f32 %v6709, %v6869
      %v6871 = vpop.f32.mrb[0].mxu0
      %v6872 = vpop.f32.mrb[0].mxu0
      %v6873 = vadd.f32 %v6712, %v6872
      %v6874 = vpop.f32.mrb[0].mxu0
      %6875 = vmatprep.mubr.bf16.mxu0 0
      %6876 = vmatmul.mubr.bf16.gmra.mrb[0].mxu0 %v6226
      %v6877 = vpop.f32.mrb[0].mxu0
      %v6878 = vadd.f32 %v6717, %v6877
      %v6879 = vpop.f32.mrb[0].mxu0
      %v6880 = vpop.f32.mrb[0].mxu0
      %v6881 = vadd.f32 %v6720, %v6880
      %v6882 = vpop.f32.mrb[0].mxu0
      %6883 = vmatprep.mubr.bf16.mxu0 0
      %6884 = vmatmul.mubr.bf16.gmra.mrb[0].mxu0 %v6228
      %v6885 = vpop.f32.mrb[0].mxu0
      %v6886 = vadd.f32 %v6725, %v6885
      %v6887 = vpop.f32.mrb[0].mxu0
      %v6888 = vpop.f32.mrb[0].mxu0
      %v6889 = vadd.f32 %v6728, %v6888
      %v6890 = vpop.f32.mrb[0].mxu0
      %6891 = vmatprep.mubr.bf16.mxu0 0
      %6892 = vmatmul.mubr.bf16.gmra.mrb[0].mxu0 %v6230
      %v6893 = vpop.f32.mrb[0].mxu0
      %v6894 = vadd.f32 %v6733, %v6893
      %v6895 = vpop.f32.mrb[0].mxu0
      %v6896 = vpop.f32.mrb[0].mxu0
      %v6897 = vadd.f32 %v6736, %v6896
      %v6898 = vpop.f32.mrb[0].mxu0
      %6899 = vmatprep.mubr.bf16.mxu0 0
      %6900 = vmatmul.mubr.bf16.gmra.mrb[0].mxu0 %v6232
      %v6901 = vpop.f32.mrb[0].mxu0
      %v6902 = vadd.f32 %v6741, %v6901
      %v6903 = vpop.f32.mrb[0].mxu0
      %v6904 = vpop.f32.mrb[0].mxu0
      %v6905 = vadd.f32 %v6744, %v6904
      %v6906 = vpop.f32.mrb[0].mxu0
      %6907 = vmatprep.mubr.bf16.mxu0 0
      %6908 = vmatmul.mubr.bf16.gmra.mrb[0].mxu0 %v6234
      %v6909 = vpop.f32.mrb[0].mxu0
      %v6910 = vadd.f32 %v6749, %v6909
      %v6911 = vpop.f32.mrb[0].mxu0
      %v6912 = vpop.f32.mrb[0].mxu0
      %v6913 = vadd.f32 %v6752, %v6912
      %v6914 = vpop.f32.mrb[0].mxu0
      %6915 = vmatprep.mubr.bf16.mxu0 0
      %6916 = vmatmul.mubr.bf16.gmra.mrb[0].mxu0 %v6236
      %v6917 = vpop.f32.mrb[0].mxu0
      %v6918 = vadd.f32 %v6757, %v6917
      %v6919 = vpop.f32.mrb[0].mxu0
      %v6920 = vpop.f32.mrb[0].mxu0
      %v6921 = vadd.f32 %v6760, %v6920
      %v6922 = vpop.f32.mrb[0].mxu0
      %6923 = vmatprep.mubr.bf16.mxu0 0
      %6924 = vmatmul.mubr.bf16.gmra.mrb[0].mxu0 %v6238
      %v6925 = vpop.f32.mrb[0].mxu0
      %v6926 = vadd.f32 %v6765, %v6925
      %v6927 = vpop.f32.mrb[0].mxu0
      %v6928 = vpop.f32.mrb[0].mxu0
      %v6929 = vadd.f32 %v6768, %v6928
      %v6930 = vpop.f32.mrb[0].mxu0
      %6931 = vmatprep.mubr.bf16.mxu0 0
      %6932 = vmatmul.mubr.bf16.gmra.mrb[0].mxu0 %v1956
      %v6933 = vpop.f32.mrb[0].mxu0
      %v6934 = vadd.f32 %v6773, %v6933
      %v6935 = vpop.f32.mrb[0].mxu0
      %v6936 = vpop.f32.mrb[0].mxu0
      %v6937 = vadd.f32 %v6776, %v6936
      %v6938 = vpop.f32.mrb[0].mxu0
      %6939 = vmatprep.mubr.bf16.mxu0 0
      %6940 = vmatmul.mubr.bf16.gmra.mrb[0].mxu0 %v1956
      %v6941 = vpop.f32.mrb[0].mxu0
      %v6942 = vadd.f32 %v6781, %v6941
      %v6943 = vpop.f32.mrb[0].mxu0
      %v6944 = vpop.f32.mrb[0].mxu0
      %v6945 = vadd.f32 %v6784, %v6944
      %v6946 = vpop.f32.mrb[0].mxu0
      %6947 = vdwg.mxu0
      %v7028 = vunpack.c.l.b16 %v5473
      %v7029 = vunpack.c.h.b16 %v5473
      %v7030 = vunpack.c.l.b16 %v5474
      %v7031 = vunpack.c.h.b16 %v5474
      %v7032 = vunpack.c.l.b16 %v5475
      %v7033 = vunpack.c.h.b16 %v5475
      %v7034 = vunpack.c.l.b16 %v5476
      %v7035 = vunpack.c.h.b16 %v5476
      %v7036 = vunpack.c.l.b16 %v5477
      %v7037 = vunpack.c.h.b16 %v5477
      %v7038 = vunpack.c.l.b16 %v5478
      %v7039 = vunpack.c.h.b16 %v5478
      %v7040 = vunpack.c.l.b16 %v5479
      %v7041 = vunpack.c.h.b16 %v5479
      %v7042 = vunpack.c.l.b16 %v5480
      %v7043 = vunpack.c.h.b16 %v5480
      %v7044 = vunpack.c.l.b16 %v5481
      %v7045 = vunpack.c.h.b16 %v5481
      %v7046 = vunpack.c.l.b16 %v5482
      %v7047 = vunpack.c.h.b16 %v5482
      %v7048 = vunpack.c.l.b16 %v5483
      %v7049 = vunpack.c.h.b16 %v5483
      %v7050 = vunpack.c.l.b16 %v5484
      %v7051 = vunpack.c.h.b16 %v5484
      %v7052 = vunpack.c.l.b16 %v5485
      %v7053 = vunpack.c.h.b16 %v5485
      %v7054 = vunpack.c.l.b16 %v5486
      %v7055 = vunpack.c.h.b16 %v5486
      %v7056 = vunpack.c.l.b16 %v5487
      %v7057 = vunpack.c.h.b16 %v5487
      %v7058 = vunpack.c.l.b16 %v5488
      %v7059 = vunpack.c.h.b16 %v5488
      %v7060 = vunpack.c.l.b16 %v5489
      %v7061 = vunpack.c.h.b16 %v5489
      %v7062 = vunpack.c.l.b16 %v5490
      %v7063 = vunpack.c.h.b16 %v5490
      %v7064 = vunpack.c.l.b16 %v5491
      %v7065 = vunpack.c.h.b16 %v5491
      %v7066 = vunpack.c.l.b16 %v5492
      %v7067 = vunpack.c.h.b16 %v5492
      %v7068 = vunpack.c.l.b16 %v5493
      %v7069 = vunpack.c.h.b16 %v5493
      %v7070 = vunpack.c.l.b16 %v5494
      %v7071 = vunpack.c.h.b16 %v5494
      %v7072 = vunpack.c.l.b16 %v5495
      %v7073 = vunpack.c.h.b16 %v5495
      %v7074 = vunpack.c.l.b16 %v5496
      %v7075 = vunpack.c.h.b16 %v5496
      %v7076 = vunpack.c.l.b16 %v5497
      %v7077 = vunpack.c.h.b16 %v5497
      %v7078 = vunpack.c.l.b16 %v5498
      %v7079 = vunpack.c.h.b16 %v5498
      %v7080 = vunpack.c.l.b16 %v5499
      %v7081 = vunpack.c.h.b16 %v5499
      %v7082 = vunpack.c.l.b16 %v5500
      %v7083 = vunpack.c.h.b16 %v5500
      %v7084 = vunpack.c.l.b16 %v5501
      %v7085 = vunpack.c.h.b16 %v5501
      %v7086 = vunpack.c.l.b16 %v5502
      %v7087 = vunpack.c.h.b16 %v5502
      %v7088 = vunpack.c.l.b16 %v5503
      %v7089 = vunpack.c.h.b16 %v5503
      %v7090 = vunpack.c.l.b16 %v5504
      %v7091 = vunpack.c.h.b16 %v5504
      %v7092 = vunpack.c.l.b16 %v5505
      %v7093 = vunpack.c.h.b16 %v5505
      %v7094 = vunpack.c.l.b16 %v5506
      %v7095 = vunpack.c.h.b16 %v5506
      %v7096 = vunpack.c.l.b16 %v5507
      %v7097 = vunpack.c.h.b16 %v5507
      %v7098 = vunpack.c.l.b16 %v5508
      %v7099 = vunpack.c.h.b16 %v5508
      %v7100 = vunpack.c.l.b16 %v5509
      %v7101 = vunpack.c.h.b16 %v5509
      %v7102 = vunpack.c.l.b16 %v5510
      %v7103 = vunpack.c.h.b16 %v5510
      %v7104 = vunpack.c.l.b16 %v5511
      %v7105 = vunpack.c.h.b16 %v5511
      %v7106 = vunpack.c.l.b16 %v5512
      %v7107 = vunpack.c.h.b16 %v5512
      %v7108 = vunpack.c.l.b16 %v5513
      %v7109 = vunpack.c.h.b16 %v5513
      %v7110 = vunpack.c.l.b16 %v5514
      %v7111 = vunpack.c.h.b16 %v5514
      %v7112 = vunpack.c.l.b16 %v5515
      %v7113 = vunpack.c.h.b16 %v5515
      %v7114 = vunpack.c.l.b16 %v5516
      %v7115 = vunpack.c.h.b16 %v5516
      %v7116 = vunpack.c.l.b16 %v5517
      %v7117 = vunpack.c.h.b16 %v5517
      %v7118 = vunpack.c.l.b16 %v5518
      %v7119 = vunpack.c.h.b16 %v5518
      %v7120 = vunpack.c.l.b16 %v5519
      %v7121 = vunpack.c.h.b16 %v5519
      %v7122 = vunpack.c.l.b16 %v5520
      %v7123 = vunpack.c.h.b16 %v5520
      %v7124 = vunpack.c.l.b16 %v5521
      %v7125 = vunpack.c.h.b16 %v5521
      %v7126 = vunpack.c.l.b16 %v5522
      %v7127 = vunpack.c.h.b16 %v5522
      %v7128 = vunpack.c.l.b16 %v5523
      %v7129 = vunpack.c.h.b16 %v5523
      %v7130 = vunpack.c.l.b16 %v5524
      %v7131 = vunpack.c.h.b16 %v5524
      %v7132 = vunpack.c.l.b16 %v5525
      %v7133 = vunpack.c.h.b16 %v5525
      %v7134 = vunpack.c.l.b16 %v5526
      %v7135 = vunpack.c.h.b16 %v5526
      %v7136 = vunpack.c.l.b16 %v5527
      %v7137 = vunpack.c.h.b16 %v5527
      %v7138 = vunpack.c.l.b16 %v5528
      %v7139 = vunpack.c.h.b16 %v5528
      %v7140 = vunpack.c.l.b16 %v5529
      %v7141 = vunpack.c.h.b16 %v5529
      %v7142 = vunpack.c.l.b16 %v5530
      %v7143 = vunpack.c.h.b16 %v5530
      %v7144 = vunpack.c.l.b16 %v5531
      %v7145 = vunpack.c.h.b16 %v5531
      %v7146 = vunpack.c.l.b16 %v5532
      %v7147 = vunpack.c.h.b16 %v5532
      %v7148 = vunpack.c.l.b16 %v5533
      %v7149 = vunpack.c.h.b16 %v5533
      %v7150 = vunpack.c.l.b16 %v5534
      %v7151 = vunpack.c.h.b16 %v5534
      %v7152 = vunpack.c.l.b16 %v5535
      %v7153 = vunpack.c.h.b16 %v5535
      %v7154 = vunpack.c.l.b16 %v5536
      %v7155 = vunpack.c.h.b16 %v5536
      %v7156 = vunpack.c.l.b16 %v5537
      %v7157 = vunpack.c.h.b16 %v5537
      %v7158 = vunpack.c.l.b16 %v5538
      %v7159 = vunpack.c.h.b16 %v5538
      %v7160 = vunpack.c.l.b16 %v5539
      %v7161 = vunpack.c.h.b16 %v5539
      %v7162 = vunpack.c.l.b16 %v5540
      %v7163 = vunpack.c.h.b16 %v5540
      %v7164 = vunpack.c.l.b16 %v5541
      %v7165 = vunpack.c.h.b16 %v5541
      %v7166 = vunpack.c.l.b16 %v5542
      %v7167 = vunpack.c.h.b16 %v5542
      %v7168 = vunpack.c.l.b16 %v5543
      %v7169 = vunpack.c.h.b16 %v5543
      %v7170 = vunpack.c.l.b16 %v5544
      %v7171 = vunpack.c.h.b16 %v5544
      %v7172 = vunpack.c.l.b16 %v5545
      %v7173 = vunpack.c.h.b16 %v5545
      %v7174 = vunpack.c.l.b16 %v5546
      %v7175 = vunpack.c.h.b16 %v5546
      %v7176 = vunpack.c.l.b16 %v5547
      %v7177 = vunpack.c.h.b16 %v5547
      %v7178 = vunpack.c.l.b16 %v5548
      %v7179 = vunpack.c.h.b16 %v5548
      %v7180 = vunpack.c.l.b16 %v5549
      %v7181 = vunpack.c.h.b16 %v5549
      %v7182 = vunpack.c.l.b16 %v5550
      %v7183 = vunpack.c.h.b16 %v5550
      %v7184 = vunpack.c.l.b16 %v5551
      %v7185 = vunpack.c.h.b16 %v5551
      %v7186 = vunpack.c.l.b16 %v5552
      %v7187 = vunpack.c.h.b16 %v5552
      %v7188 = vpack.c.b16 %v7030, %v7028
      %v7189 = vpack.c.b16 %v7031, %v7029
      %v7190 = vpack.c.b16 %v7034, %v7032
      %v7191 = vpack.c.b16 %v7035, %v7033
      %v7192 = vpack.c.b16 %v7038, %v7036
      %v7193 = vpack.c.b16 %v7039, %v7037
      %v7194 = vpack.c.b16 %v7042, %v7040
      %v7195 = vpack.c.b16 %v7043, %v7041
      %v7196 = vpack.c.b16 %v7046, %v7044
      %v7197 = vpack.c.b16 %v7047, %v7045
      %v7198 = vpack.c.b16 %v7050, %v7048
      %v7199 = vpack.c.b16 %v7051, %v7049
      %v7200 = vpack.c.b16 %v7054, %v7052
      %v7201 = vpack.c.b16 %v7055, %v7053
      %v7202 = vpack.c.b16 %v7058, %v7056
      %v7203 = vpack.c.b16 %v7059, %v7057
      %v7204 = vpack.c.b16 %v7062, %v7060
      %v7205 = vpack.c.b16 %v7063, %v7061
      %v7206 = vpack.c.b16 %v7066, %v7064
      %v7207 = vpack.c.b16 %v7067, %v7065
      %v7208 = vpack.c.b16 %v7070, %v7068
      %v7209 = vpack.c.b16 %v7071, %v7069
      %v7210 = vpack.c.b16 %v7074, %v7072
      %v7211 = vpack.c.b16 %v7075, %v7073
      %v7212 = vpack.c.b16 %v7078, %v7076
      %v7213 = vpack.c.b16 %v7079, %v7077
      %v7214 = vpack.c.b16 %v7082, %v7080
      %v7215 = vpack.c.b16 %v7083, %v7081
      %v7216 = vpack.c.b16 %v7086, %v7084
      %v7217 = vpack.c.b16 %v7087, %v7085
      %v7218 = vpack.c.b16 %v7090, %v7088
      %v7219 = vpack.c.b16 %v7091, %v7089
      %v7220 = vpack.c.b16 %v7094, %v7092
      %v7221 = vpack.c.b16 %v7095, %v7093
      %v7222 = vpack.c.b16 %v7098, %v7096
      %v7223 = vpack.c.b16 %v7099, %v7097
      %v7224 = vpack.c.b16 %v7102, %v7100
      %v7225 = vpack.c.b16 %v7103, %v7101
      %v7226 = vpack.c.b16 %v7106, %v7104
      %v7227 = vpack.c.b16 %v7107, %v7105
      %v7228 = vpack.c.b16 %v7110, %v7108
      %v7229 = vpack.c.b16 %v7111, %v7109
      %v7230 = vpack.c.b16 %v7114, %v7112
      %v7231 = vpack.c.b16 %v7115, %v7113
      %v7232 = vpack.c.b16 %v7118, %v7116
      %v7233 = vpack.c.b16 %v7119, %v7117
      %v7234 = vpack.c.b16 %v7122, %v7120
      %v7235 = vpack.c.b16 %v7123, %v7121
      %v7236 = vpack.c.b16 %v7126, %v7124
      %v7237 = vpack.c.b16 %v7127, %v7125
      %v7238 = vpack.c.b16 %v7130, %v7128
      %v7239 = vpack.c.b16 %v7131, %v7129
      %v7240 = vpack.c.b16 %v7134, %v7132
      %v7241 = vpack.c.b16 %v7135, %v7133
      %v7242 = vpack.c.b16 %v7138, %v7136
      %v7243 = vpack.c.b16 %v7139, %v7137
      %v7244 = vpack.c.b16 %v7142, %v7140
      %v7245 = vpack.c.b16 %v7143, %v7141
      %v7246 = vpack.c.b16 %v7146, %v7144
      %v7247 = vpack.c.b16 %v7147, %v7145
      %v7248 = vpack.c.b16 %v7150, %v7148
      %v7249 = vpack.c.b16 %v7151, %v7149
      %v7250 = vpack.c.b16 %v7154, %v7152
      %v7251 = vpack.c.b16 %v7155, %v7153
      %v7252 = vpack.c.b16 %v7158, %v7156
      %v7253 = vpack.c.b16 %v7159, %v7157
      %v7254 = vpack.c.b16 %v7162, %v7160
      %v7255 = vpack.c.b16 %v7163, %v7161
      %v7256 = vpack.c.b16 %v7166, %v7164
      %v7257 = vpack.c.b16 %v7167, %v7165
      %v7258 = vpack.c.b16 %v7170, %v7168
      %v7259 = vpack.c.b16 %v7171, %v7169
      %v7260 = vpack.c.b16 %v7174, %v7172
      %v7261 = vpack.c.b16 %v7175, %v7173
      %v7262 = vpack.c.b16 %v7178, %v7176
      %v7263 = vpack.c.b16 %v7179, %v7177
      %v7264 = vpack.c.b16 %v7182, %v7180
      %v7265 = vpack.c.b16 %v7183, %v7181
      %v7266 = vpack.c.b16 %v7186, %v7184
      %v7267 = vpack.c.b16 %v7187, %v7185
      %7348 = vmatprep.subr.bf16.mxu0 %v7189
      %7349 = vmatpush1.bf16.msra.mxu0 %v7188
      %7350 = vmatprep.subr.bf16.mxu0 %v7191
      %7351 = vmatpush1.bf16.msra.mxu0 %v7190
      %7352 = vmatprep.subr.bf16.mxu0 %v7193
      %7353 = vmatpush1.bf16.msra.mxu0 %v7192
      %7354 = vmatprep.subr.bf16.mxu0 %v7195
      %7355 = vmatpush1.bf16.msra.mxu0 %v7194
      %7356 = vmatprep.subr.bf16.mxu0 %v7197
      %7357 = vmatpush1.bf16.msra.mxu0 %v7196
      %7358 = vmatprep.subr.bf16.mxu0 %v7199
      %7359 = vmatpush1.bf16.msra.mxu0 %v7198
      %7360 = vmatprep.subr.bf16.mxu0 %v7201
      %7361 = vmatpush1.bf16.msra.mxu0 %v7200
      %7362 = vmatprep.subr.bf16.mxu0 %v7203
      %7363 = vmatpush1.bf16.msra.mxu0 %v7202
      %7364 = vmatprep.subr.bf16.mxu0 %v7205
      %7365 = vmatpush1.bf16.msra.mxu0 %v7204
      %7366 = vmatprep.subr.bf16.mxu0 %v7207
      %7367 = vmatpush1.bf16.msra.mxu0 %v7206
      %7368 = vmatprep.subr.bf16.mxu0 %v7209
      %7369 = vmatpush1.bf16.msra.mxu0 %v7208
      %7370 = vmatprep.subr.bf16.mxu0 %v7211
      %7371 = vmatpush1.bf16.msra.mxu0 %v7210
      %7372 = vmatprep.subr.bf16.mxu0 %v7213
      %7373 = vmatpush1.bf16.msra.mxu0 %v7212
      %7374 = vmatprep.subr.bf16.mxu0 %v7215
      %7375 = vmatpush1.bf16.msra.mxu0 %v7214
      %7376 = vmatprep.subr.bf16.mxu0 %v7217
      %7377 = vmatpush1.bf16.msra.mxu0 %v7216
      %7378 = vmatprep.subr.bf16.mxu0 %v7219
      %7379 = vmatpush1.bf16.msra.mxu0 %v7218
      %7380 = vmatprep.mubr.bf16.mxu0 0
      %7381 = vmatmul.mubr.bf16.gmra.mrb[0].mxu0 0
      %v7382 = vpop.f32.mrb[0].mxu0
      %v7383 = vadd.f32 %v6468, %v7382
      %v7384 = vpop.f32.mrb[0].mxu0
      %v7385 = vadd.f32 %v6470, %v7384
      %v7386 = vpop.f32.mrb[0].mxu0
      %v7387 = vadd.f32 %v6472, %v7386
      %v7388 = vpop.f32.mrb[0].mxu0
      %v7389 = vadd.f32 %v6474, %v7388
      %7390 = vmatprep.mubr.bf16.mxu0 %v5411
      %7391 = vmatmul.mubr.bf16.gmra.mrb[0].mxu0 0
      %v7392 = vpop.f32.mrb[0].mxu0
      %v7393 = vadd.f32 %v6478, %v7392
      %v7394 = vpop.f32.mrb[0].mxu0
      %v7395 = vadd.f32 %v6480, %v7394
      %v7396 = vpop.f32.mrb[0].mxu0
      %v7397 = vadd.f32 %v6482, %v7396
      %v7398 = vpop.f32.mrb[0].mxu0
      %v7399 = vadd.f32 %v6484, %v7398
      %7400 = vmatprep.mubr.bf16.mxu0 %v5415
      %7401 = vmatmul.mubr.bf16.gmra.mrb[0].mxu0 %v5411
      %v7402 = vpop.f32.mrb[0].mxu0
      %v7403 = vadd.f32 %v6488, %v7402
      %v7404 = vpop.f32.mrb[0].mxu0
      %v7405 = vadd.f32 %v6490, %v7404
      %v7406 = vpop.f32.mrb[0].mxu0
      %v7407 = vadd.f32 %v6492, %v7406
      %v7408 = vpop.f32.mrb[0].mxu0
      %v7409 = vadd.f32 %v6494, %v7408
      %7410 = vmatprep.mubr.bf16.mxu0 %v5419
      %7411 = vmatmul.mubr.bf16.gmra.mrb[0].mxu0 %v5415
      %v7412 = vpop.f32.mrb[0].mxu0
      %v7413 = vadd.f32 %v6498, %v7412
      %v7414 = vpop.f32.mrb[0].mxu0
      %v7415 = vadd.f32 %v6500, %v7414
      %v7416 = vpop.f32.mrb[0].mxu0
      %v7417 = vadd.f32 %v6502, %v7416
      %v7418 = vpop.f32.mrb[0].mxu0
      %v7419 = vadd.f32 %v6504, %v7418
      %7420 = vmatprep.mubr.bf16.mxu0 %v5423
      %7421 = vmatmul.mubr.bf16.gmra.mrb[0].mxu0 %v5419
      %v7422 = vpop.f32.mrb[0].mxu0
      %v7423 = vadd.f32 %v6508, %v7422
      %v7424 = vpop.f32.mrb[0].mxu0
      %v7425 = vadd.f32 %v6510, %v7424
      %v7426 = vpop.f32.mrb[0].mxu0
      %v7427 = vadd.f32 %v6512, %v7426
      %v7428 = vpop.f32.mrb[0].mxu0
      %v7429 = vadd.f32 %v6514, %v7428
      %7430 = vmatprep.mubr.bf16.mxu0 %v5427
      %7431 = vmatmul.mubr.bf16.gmra.mrb[0].mxu0 %v5423
      %v7432 = vpop.f32.mrb[0].mxu0
      %v7433 = vadd.f32 %v6518, %v7432
      %v7434 = vpop.f32.mrb[0].mxu0
      %v7435 = vadd.f32 %v6520, %v7434
      %v7436 = vpop.f32.mrb[0].mxu0
      %v7437 = vadd.f32 %v6522, %v7436
      %v7438 = vpop.f32.mrb[0].mxu0
      %v7439 = vadd.f32 %v6524, %v7438
      %7440 = vmatprep.mubr.bf16.mxu0 %v5431
      %7441 = vmatmul.mubr.bf16.gmra.mrb[0].mxu0 %v5427
      %v7442 = vpop.f32.mrb[0].mxu0
      %v7443 = vadd.f32 %v6528, %v7442
      %v7444 = vpop.f32.mrb[0].mxu0
      %v7445 = vadd.f32 %v6530, %v7444
      %v7446 = vpop.f32.mrb[0].mxu0
      %v7447 = vadd.f32 %v6532, %v7446
      %v7448 = vpop.f32.mrb[0].mxu0
      %v7449 = vadd.f32 %v6534, %v7448
      %7450 = vmatprep.mubr.bf16.mxu0 %v5435
      %7451 = vmatmul.mubr.bf16.gmra.mrb[0].mxu0 %v5431
      %v7452 = vpop.f32.mrb[0].mxu0
      %v7453 = vadd.f32 %v6538, %v7452
      %v7454 = vpop.f32.mrb[0].mxu0
      %v7455 = vadd.f32 %v6540, %v7454
      %v7456 = vpop.f32.mrb[0].mxu0
      %v7457 = vadd.f32 %v6542, %v7456
      %v7458 = vpop.f32.mrb[0].mxu0
      %v7459 = vadd.f32 %v6544, %v7458
      %7460 = vmatprep.mubr.bf16.mxu0 %v5439
      %7461 = vmatmul.mubr.bf16.gmra.mrb[0].mxu0 %v5435
      %v7462 = vpop.f32.mrb[0].mxu0
      %v7463 = vadd.f32 %v6548, %v7462
      %v7464 = vpop.f32.mrb[0].mxu0
      %v7465 = vadd.f32 %v6550, %v7464
      %v7466 = vpop.f32.mrb[0].mxu0
      %v7467 = vadd.f32 %v6552, %v7466
      %v7468 = vpop.f32.mrb[0].mxu0
      %v7469 = vadd.f32 %v6554, %v7468
      %7470 = vmatprep.mubr.bf16.mxu0 %v5443
      %7471 = vmatmul.mubr.bf16.gmra.mrb[0].mxu0 %v5439
      %v7472 = vpop.f32.mrb[0].mxu0
      %v7473 = vadd.f32 %v6558, %v7472
      %v7474 = vpop.f32.mrb[0].mxu0
      %v7475 = vadd.f32 %v6560, %v7474
      %v7476 = vpop.f32.mrb[0].mxu0
      %v7477 = vadd.f32 %v6562, %v7476
      %v7478 = vpop.f32.mrb[0].mxu0
      %v7479 = vadd.f32 %v6564, %v7478
      %7480 = vmatprep.mubr.bf16.mxu0 %v5447
      %7481 = vmatmul.mubr.bf16.gmra.mrb[0].mxu0 %v5443
      %v7482 = vpop.f32.mrb[0].mxu0
      %v7483 = vadd.f32 %v6568, %v7482
      %v7484 = vpop.f32.mrb[0].mxu0
      %v7485 = vadd.f32 %v6570, %v7484
      %v7486 = vpop.f32.mrb[0].mxu0
      %v7487 = vadd.f32 %v6572, %v7486
      %v7488 = vpop.f32.mrb[0].mxu0
      %v7489 = vadd.f32 %v6574, %v7488
      %7490 = vmatprep.mubr.bf16.mxu0 %v5451
      %7491 = vmatmul.mubr.bf16.gmra.mrb[0].mxu0 %v5447
      %v7492 = vpop.f32.mrb[0].mxu0
      %v7493 = vadd.f32 %v6578, %v7492
      %v7494 = vpop.f32.mrb[0].mxu0
      %v7495 = vadd.f32 %v6580, %v7494
      %v7496 = vpop.f32.mrb[0].mxu0
      %v7497 = vadd.f32 %v6582, %v7496
      %v7498 = vpop.f32.mrb[0].mxu0
      %v7499 = vadd.f32 %v6584, %v7498
      %7500 = vmatprep.mubr.bf16.mxu0 %v5455
      %7501 = vmatmul.mubr.bf16.gmra.mrb[0].mxu0 %v5451
      %v7502 = vpop.f32.mrb[0].mxu0
      %v7503 = vadd.f32 %v6588, %v7502
      %v7504 = vpop.f32.mrb[0].mxu0
      %v7505 = vadd.f32 %v6590, %v7504
      %v7506 = vpop.f32.mrb[0].mxu0
      %v7507 = vadd.f32 %v6592, %v7506
      %v7508 = vpop.f32.mrb[0].mxu0
      %v7509 = vadd.f32 %v6594, %v7508
      %7510 = vmatprep.mubr.bf16.mxu0 %v5459
      %7511 = vmatmul.mubr.bf16.gmra.mrb[0].mxu0 %v5455
      %v7512 = vpop.f32.mrb[0].mxu0
      %v7513 = vadd.f32 %v6598, %v7512
      %v7514 = vpop.f32.mrb[0].mxu0
      %v7515 = vadd.f32 %v6600, %v7514
      %v7516 = vpop.f32.mrb[0].mxu0
      %v7517 = vadd.f32 %v6602, %v7516
      %v7518 = vpop.f32.mrb[0].mxu0
      %v7519 = vadd.f32 %v6604, %v7518
      %7520 = vmatprep.mubr.bf16.mxu0 %v5463
      %7521 = vmatmul.mubr.bf16.gmra.mrb[0].mxu0 %v5459
      %v7522 = vpop.f32.mrb[0].mxu0
      %v7523 = vadd.f32 %v6608, %v7522
      %v7524 = vpop.f32.mrb[0].mxu0
      %v7525 = vadd.f32 %v6610, %v7524
      %v7526 = vpop.f32.mrb[0].mxu0
      %v7527 = vadd.f32 %v6612, %v7526
      %v7528 = vpop.f32.mrb[0].mxu0
      %v7529 = vadd.f32 %v6614, %v7528
      %7530 = vmatprep.mubr.bf16.mxu0 %v5467
      %7531 = vmatmul.mubr.bf16.gmra.mrb[0].mxu0 %v5463
      %v7532 = vpop.f32.mrb[0].mxu0
      %v7533 = vadd.f32 %v6618, %v7532
      %v7534 = vpop.f32.mrb[0].mxu0
      %v7535 = vadd.f32 %v6620, %v7534
      %v7536 = vpop.f32.mrb[0].mxu0
      %v7537 = vadd.f32 %v6622, %v7536
      %v7538 = vpop.f32.mrb[0].mxu0
      %v7539 = vadd.f32 %v6624, %v7538
      %7540 = vdwg.mxu0
      %7541 = vmatprep.subr.bf16.mxu0 %v7221
      %7542 = vmatpush1.bf16.msra.mxu0 %v7220
      %7543 = vmatprep.subr.bf16.mxu0 %v7223
      %7544 = vmatpush1.bf16.msra.mxu0 %v7222
      %7545 = vmatprep.subr.bf16.mxu0 %v7225
      %7546 = vmatpush1.bf16.msra.mxu0 %v7224
      %7547 = vmatprep.subr.bf16.mxu0 %v7227
      %7548 = vmatpush1.bf16.msra.mxu0 %v7226
      %7549 = vmatprep.subr.bf16.mxu0 %v7229
      %7550 = vmatpush1.bf16.msra.mxu0 %v7228
      %7551 = vmatprep.subr.bf16.mxu0 %v7231
      %7552 = vmatpush1.bf16.msra.mxu0 %v7230
      %7553 = vmatprep.subr.bf16.mxu0 %v7233
      %7554 = vmatpush1.bf16.msra.mxu0 %v7232
      %7555 = vmatprep.subr.bf16.mxu0 %v7235
      %7556 = vmatpush1.bf16.msra.mxu0 %v7234
      %7557 = vmatprep.subr.bf16.mxu0 %v7237
      %7558 = vmatpush1.bf16.msra.mxu0 %v7236
      %7559 = vmatprep.subr.bf16.mxu0 %v7239
      %7560 = vmatpush1.bf16.msra.mxu0 %v7238
      %7561 = vmatprep.subr.bf16.mxu0 %v7241
      %7562 = vmatpush1.bf16.msra.mxu0 %v7240
      %7563 = vmatprep.subr.bf16.mxu0 %v7243
      %7564 = vmatpush1.bf16.msra.mxu0 %v7242
      %7565 = vmatprep.subr.bf16.mxu0 %v7245
      %7566 = vmatpush1.bf16.msra.mxu0 %v7244
      %7567 = vmatprep.subr.bf16.mxu0 %v7247
      %7568 = vmatpush1.bf16.msra.mxu0 %v7246
      %7569 = vmatprep.subr.bf16.mxu0 %v7249
      %7570 = vmatpush1.bf16.msra.mxu0 %v7248
      %7571 = vmatprep.subr.bf16.mxu0 %v7251
      %7572 = vmatpush1.bf16.msra.mxu0 %v7250
      %7573 = vmatprep.mubr.bf16.mxu0 %v5415
      %7574 = vmatmul.mubr.bf16.gmra.mrb[0].mxu0 %v5411
      %v7575 = vpop.f32.mrb[0].mxu0
      %v7576 = vadd.f32 %v7383, %v7575
      %v7577 = vpop.f32.mrb[0].mxu0
      %v7578 = vadd.f32 %v7385, %v7577
      %v7579 = vpop.f32.mrb[0].mxu0
      %v7580 = vadd.f32 %v7387, %v7579
      %v7581 = vpop.f32.mrb[0].mxu0
      %v7582 = vadd.f32 %v7389, %v7581
      %7583 = vmatprep.mubr.bf16.mxu0 %v5419
      %7584 = vmatmul.mubr.bf16.gmra.mrb[0].mxu0 %v5415
      %v7585 = vpop.f32.mrb[0].mxu0
      %v7586 = vadd.f32 %v7393, %v7585
      %v7587 = vpop.f32.mrb[0].mxu0
      %v7588 = vadd.f32 %v7395, %v7587
      %v7589 = vpop.f32.mrb[0].mxu0
      %v7590 = vadd.f32 %v7397, %v7589
      %v7591 = vpop.f32.mrb[0].mxu0
      %v7592 = vadd.f32 %v7399, %v7591
      %7593 = vmatprep.mubr.bf16.mxu0 %v5423
      %7594 = vmatmul.mubr.bf16.gmra.mrb[0].mxu0 %v5419
      %v7595 = vpop.f32.mrb[0].mxu0
      %v7596 = vadd.f32 %v7403, %v7595
      %v7597 = vpop.f32.mrb[0].mxu0
      %v7598 = vadd.f32 %v7405, %v7597
      %v7599 = vpop.f32.mrb[0].mxu0
      %v7600 = vadd.f32 %v7407, %v7599
      %v7601 = vpop.f32.mrb[0].mxu0
      %v7602 = vadd.f32 %v7409, %v7601
      %7603 = vmatprep.mubr.bf16.mxu0 %v5427
      %7604 = vmatmul.mubr.bf16.gmra.mrb[0].mxu0 %v5423
      %v7605 = vpop.f32.mrb[0].mxu0
      %v7606 = vadd.f32 %v7413, %v7605
      %v7607 = vpop.f32.mrb[0].mxu0
      %v7608 = vadd.f32 %v7415, %v7607
      %v7609 = vpop.f32.mrb[0].mxu0
      %v7610 = vadd.f32 %v7417, %v7609
      %v7611 = vpop.f32.mrb[0].mxu0
      %v7612 = vadd.f32 %v7419, %v7611
      %7613 = vmatprep.mubr.bf16.mxu0 %v5431
      %7614 = vmatmul.mubr.bf16.gmra.mrb[0].mxu0 %v5427
      %v7615 = vpop.f32.mrb[0].mxu0
      %v7616 = vadd.f32 %v7423, %v7615
      %v7617 = vpop.f32.mrb[0].mxu0
      %v7618 = vadd.f32 %v7425, %v7617
      %v7619 = vpop.f32.mrb[0].mxu0
      %v7620 = vadd.f32 %v7427, %v7619
      %v7621 = vpop.f32.mrb[0].mxu0
      %v7622 = vadd.f32 %v7429, %v7621
      %7623 = vmatprep.mubr.bf16.mxu0 %v5435
      %7624 = vmatmul.mubr.bf16.gmra.mrb[0].mxu0 %v5431
      %v7625 = vpop.f32.mrb[0].mxu0
      %v7626 = vadd.f32 %v7433, %v7625
      %v7627 = vpop.f32.mrb[0].mxu0
      %v7628 = vadd.f32 %v7435, %v7627
      %v7629 = vpop.f32.mrb[0].mxu0
      %v7630 = vadd.f32 %v7437, %v7629
      %v7631 = vpop.f32.mrb[0].mxu0
      %v7632 = vadd.f32 %v7439, %v7631
      %7633 = vmatprep.mubr.bf16.mxu0 %v5439
      %7634 = vmatmul.mubr.bf16.gmra.mrb[0].mxu0 %v5435
      %v7635 = vpop.f32.mrb[0].mxu0
      %v7636 = vadd.f32 %v7443, %v7635
      %v7637 = vpop.f32.mrb[0].mxu0
      %v7638 = vadd.f32 %v7445, %v7637
      %v7639 = vpop.f32.mrb[0].mxu0
      %v7640 = vadd.f32 %v7447, %v7639
      %v7641 = vpop.f32.mrb[0].mxu0
      %v7642 = vadd.f32 %v7449, %v7641
      %7643 = vmatprep.mubr.bf16.mxu0 %v5443
      %7644 = vmatmul.mubr.bf16.gmra.mrb[0].mxu0 %v5439
      %v7645 = vpop.f32.mrb[0].mxu0
      %v7646 = vadd.f32 %v7453, %v7645
      %v7647 = vpop.f32.mrb[0].mxu0
      %v7648 = vadd.f32 %v7455, %v7647
      %v7649 = vpop.f32.mrb[0].mxu0
      %v7650 = vadd.f32 %v7457, %v7649
      %v7651 = vpop.f32.mrb[0].mxu0
      %v7652 = vadd.f32 %v7459, %v7651
      %7653 = vmatprep.mubr.bf16.mxu0 %v5447
      %7654 = vmatmul.mubr.bf16.gmra.mrb[0].mxu0 %v5443
      %v7655 = vpop.f32.mrb[0].mxu0
      %v7656 = vadd.f32 %v7463, %v7655
      %v7657 = vpop.f32.mrb[0].mxu0
      %v7658 = vadd.f32 %v7465, %v7657
      %v7659 = vpop.f32.mrb[0].mxu0
      %v7660 = vadd.f32 %v7467, %v7659
      %v7661 = vpop.f32.mrb[0].mxu0
      %v7662 = vadd.f32 %v7469, %v7661
      %7663 = vmatprep.mubr.bf16.mxu0 %v5451
      %7664 = vmatmul.mubr.bf16.gmra.mrb[0].mxu0 %v5447
      %v7665 = vpop.f32.mrb[0].mxu0
      %v7666 = vadd.f32 %v7473, %v7665
      %v7667 = vpop.f32.mrb[0].mxu0
      %v7668 = vadd.f32 %v7475, %v7667
      %v7669 = vpop.f32.mrb[0].mxu0
      %v7670 = vadd.f32 %v7477, %v7669
      %v7671 = vpop.f32.mrb[0].mxu0
      %v7672 = vadd.f32 %v7479, %v7671
      %7673 = vmatprep.mubr.bf16.mxu0 %v5455
      %7674 = vmatmul.mubr.bf16.gmra.mrb[0].mxu0 %v5451
      %v7675 = vpop.f32.mrb[0].mxu0
      %v7676 = vadd.f32 %v7483, %v7675
      %v7677 = vpop.f32.mrb[0].mxu0
      %v7678 = vadd.f32 %v7485, %v7677
      %v7679 = vpop.f32.mrb[0].mxu0
      %v7680 = vadd.f32 %v7487, %v7679
      %v7681 = vpop.f32.mrb[0].mxu0
      %v7682 = vadd.f32 %v7489, %v7681
      %7683 = vmatprep.mubr.bf16.mxu0 %v5459
      %7684 = vmatmul.mubr.bf16.gmra.mrb[0].mxu0 %v5455
      %v7685 = vpop.f32.mrb[0].mxu0
      %v7686 = vadd.f32 %v7493, %v7685
      %v7687 = vpop.f32.mrb[0].mxu0
      %v7688 = vadd.f32 %v7495, %v7687
      %v7689 = vpop.f32.mrb[0].mxu0
      %v7690 = vadd.f32 %v7497, %v7689
      %v7691 = vpop.f32.mrb[0].mxu0
      %v7692 = vadd.f32 %v7499, %v7691
      %7693 = vmatprep.mubr.bf16.mxu0 %v5463
      %7694 = vmatmul.mubr.bf16.gmra.mrb[0].mxu0 %v5459
      %v7695 = vpop.f32.mrb[0].mxu0
      %v7696 = vadd.f32 %v7503, %v7695
      %v7697 = vpop.f32.mrb[0].mxu0
      %v7698 = vadd.f32 %v7505, %v7697
      %v7699 = vpop.f32.mrb[0].mxu0
      %v7700 = vadd.f32 %v7507, %v7699
      %v7701 = vpop.f32.mrb[0].mxu0
      %v7702 = vadd.f32 %v7509, %v7701
      %7703 = vmatprep.mubr.bf16.mxu0 %v5467
      %7704 = vmatmul.mubr.bf16.gmra.mrb[0].mxu0 %v5463
      %v7705 = vpop.f32.mrb[0].mxu0
      %v7706 = vadd.f32 %v7513, %v7705
      %v7707 = vpop.f32.mrb[0].mxu0
      %v7708 = vadd.f32 %v7515, %v7707
      %v7709 = vpop.f32.mrb[0].mxu0
      %v7710 = vadd.f32 %v7517, %v7709
      %v7711 = vpop.f32.mrb[0].mxu0
      %v7712 = vadd.f32 %v7519, %v7711
      %7713 = vmatprep.mubr.bf16.mxu0 %v5471
      %7714 = vmatmul.mubr.bf16.gmra.mrb[0].mxu0 %v5467
      %v7715 = vpop.f32.mrb[0].mxu0
      %v7716 = vadd.f32 %v7523, %v7715
      %v7717 = vpop.f32.mrb[0].mxu0
      %v7718 = vadd.f32 %v7525, %v7717
      %v7719 = vpop.f32.mrb[0].mxu0
      %v7720 = vadd.f32 %v7527, %v7719
      %v7721 = vpop.f32.mrb[0].mxu0
      %v7722 = vadd.f32 %v7529, %v7721
      %7723 = vmatprep.mubr.bf16.mxu0 0
      %7724 = vmatmul.mubr.bf16.gmra.mrb[0].mxu0 %v5471
      %v7725 = vpop.f32.mrb[0].mxu0
      %v7726 = vadd.f32 %v7533, %v7725
      %v7727 = vpop.f32.mrb[0].mxu0
      %v7728 = vadd.f32 %v7535, %v7727
      %v7729 = vpop.f32.mrb[0].mxu0
      %v7730 = vadd.f32 %v7537, %v7729
      %v7731 = vpop.f32.mrb[0].mxu0
      %v7732 = vadd.f32 %v7539, %v7731
      %7733 = vdwg.mxu0
      %7734 = vmatprep.subr.bf16.mxu0 %v7253
      %7735 = vmatpush1.bf16.msra.mxu0 %v7252
      %7736 = vmatprep.subr.bf16.mxu0 %v7255
      %7737 = vmatpush1.bf16.msra.mxu0 %v7254
      %7738 = vmatprep.subr.bf16.mxu0 %v7257
      %7739 = vmatpush1.bf16.msra.mxu0 %v7256
      %7740 = vmatprep.subr.bf16.mxu0 %v7259
      %7741 = vmatpush1.bf16.msra.mxu0 %v7258
      %7742 = vmatprep.subr.bf16.mxu0 %v7261
      %7743 = vmatpush1.bf16.msra.mxu0 %v7260
      %7744 = vmatprep.subr.bf16.mxu0 %v7263
      %7745 = vmatpush1.bf16.msra.mxu0 %v7262
      %7746 = vmatprep.subr.bf16.mxu0 %v7265
      %7747 = vmatpush1.bf16.msra.mxu0 %v7264
      %7748 = vmatprep.subr.bf16.mxu0 %v7267
      %7749 = vmatpush1.bf16.msra.mxu0 %v7266
      %7750 = vmatprep.subr.bf16.mxu0 0
      %7751 = vmatpush1.bf16.msra.mxu0 0
      %7752 = vmatprep.subr.bf16.mxu0 0
      %7753 = vmatpush1.bf16.msra.mxu0 0
      %7754 = vmatprep.subr.bf16.mxu0 0
      %7755 = vmatpush1.bf16.msra.mxu0 0
      %7756 = vmatprep.subr.bf16.mxu0 0
      %7757 = vmatpush1.bf16.msra.mxu0 0
      %7758 = vmatprep.subr.bf16.mxu0 0
      %7759 = vmatpush1.bf16.msra.mxu0 0
      %7760 = vmatprep.subr.bf16.mxu0 0
      %7761 = vmatpush1.bf16.msra.mxu0 0
      %7762 = vmatprep.subr.bf16.mxu0 0
      %7763 = vmatpush1.bf16.msra.mxu0 0
      %7764 = vmatprep.subr.bf16.mxu0 0
      %7765 = vmatpush1.bf16.msra.mxu0 0
      %7766 = vmatprep.mubr.bf16.mxu0 0
      %7767 = vmatmul.mubr.bf16.gmra.mrb[0].mxu0 %v5419
      %v7768 = vpop.f32.mrb[0].mxu0
      %v7769 = vadd.f32 %v7576, %v7768
      %v7770 = vpop.f32.mrb[0].mxu0
      %v7771 = vadd.f32 %v7578, %v7770
      %v7772 = vpop.f32.mrb[0].mxu0
      %v7773 = vadd.f32 %v7580, %v7772
      %v7774 = vpop.f32.mrb[0].mxu0
      %v7775 = vadd.f32 %v7582, %v7774
      %7776 = vmatprep.mubr.bf16.mxu0 0
      %7777 = vmatmul.mubr.bf16.gmra.mrb[0].mxu0 %v5423
      %v7778 = vpop.f32.mrb[0].mxu0
      %v7779 = vadd.f32 %v7586, %v7778
      %v7780 = vpop.f32.mrb[0].mxu0
      %v7781 = vadd.f32 %v7588, %v7780
      %v7782 = vpop.f32.mrb[0].mxu0
      %v7783 = vadd.f32 %v7590, %v7782
      %v7784 = vpop.f32.mrb[0].mxu0
      %v7785 = vadd.f32 %v7592, %v7784
      %7786 = vmatprep.mubr.bf16.mxu0 0
      %7787 = vmatmul.mubr.bf16.gmra.mrb[0].mxu0 %v5427
      %v7788 = vpop.f32.mrb[0].mxu0
      %v7789 = vadd.f32 %v7596, %v7788
      %v7790 = vpop.f32.mrb[0].mxu0
      %v7791 = vadd.f32 %v7598, %v7790
      %v7792 = vpop.f32.mrb[0].mxu0
      %v7793 = vadd.f32 %v7600, %v7792
      %v7794 = vpop.f32.mrb[0].mxu0
      %v7795 = vadd.f32 %v7602, %v7794
      %7796 = vmatprep.mubr.bf16.mxu0 0
      %7797 = vmatmul.mubr.bf16.gmra.mrb[0].mxu0 %v5431
      %v7798 = vpop.f32.mrb[0].mxu0
      %v7799 = vadd.f32 %v7606, %v7798
      %v7800 = vpop.f32.mrb[0].mxu0
      %v7801 = vadd.f32 %v7608, %v7800
      %v7802 = vpop.f32.mrb[0].mxu0
      %v7803 = vadd.f32 %v7610, %v7802
      %v7804 = vpop.f32.mrb[0].mxu0
      %v7805 = vadd.f32 %v7612, %v7804
      %7806 = vmatprep.mubr.bf16.mxu0 0
      %7807 = vmatmul.mubr.bf16.gmra.mrb[0].mxu0 %v5435
      %v7808 = vpop.f32.mrb[0].mxu0
      %v7809 = vadd.f32 %v7616, %v7808
      %v7810 = vpop.f32.mrb[0].mxu0
      %v7811 = vadd.f32 %v7618, %v7810
      %v7812 = vpop.f32.mrb[0].mxu0
      %v7813 = vadd.f32 %v7620, %v7812
      %v7814 = vpop.f32.mrb[0].mxu0
      %v7815 = vadd.f32 %v7622, %v7814
      %7816 = vmatprep.mubr.bf16.mxu0 0
      %7817 = vmatmul.mubr.bf16.gmra.mrb[0].mxu0 %v5439
      %v7818 = vpop.f32.mrb[0].mxu0
      %v7819 = vadd.f32 %v7626, %v7818
      %v7820 = vpop.f32.mrb[0].mxu0
      %v7821 = vadd.f32 %v7628, %v7820
      %v7822 = vpop.f32.mrb[0].mxu0
      %v7823 = vadd.f32 %v7630, %v7822
      %v7824 = vpop.f32.mrb[0].mxu0
      %v7825 = vadd.f32 %v7632, %v7824
      %7826 = vmatprep.mubr.bf16.mxu0 0
      %7827 = vmatmul.mubr.bf16.gmra.mrb[0].mxu0 %v5443
      %v7828 = vpop.f32.mrb[0].mxu0
      %v7829 = vadd.f32 %v7636, %v7828
      %v7830 = vpop.f32.mrb[0].mxu0
      %v7831 = vadd.f32 %v7638, %v7830
      %v7832 = vpop.f32.mrb[0].mxu0
      %v7833 = vadd.f32 %v7640, %v7832
      %v7834 = vpop.f32.mrb[0].mxu0
      %v7835 = vadd.f32 %v7642, %v7834
      %7836 = vmatprep.mubr.bf16.mxu0 0
      %7837 = vmatmul.mubr.bf16.gmra.mrb[0].mxu0 %v5447
      %v7838 = vpop.f32.mrb[0].mxu0
      %v7839 = vadd.f32 %v7646, %v7838
      %v7840 = vpop.f32.mrb[0].mxu0
      %v7841 = vadd.f32 %v7648, %v7840
      %v7842 = vpop.f32.mrb[0].mxu0
      %v7843 = vadd.f32 %v7650, %v7842
      %v7844 = vpop.f32.mrb[0].mxu0
      %v7845 = vadd.f32 %v7652, %v7844
      %7846 = vmatprep.mubr.bf16.mxu0 0
      %7847 = vmatmul.mubr.bf16.gmra.mrb[0].mxu0 %v5451
      %v7848 = vpop.f32.mrb[0].mxu0
      %v7849 = vadd.f32 %v7656, %v7848
      %v7850 = vpop.f32.mrb[0].mxu0
      %v7851 = vadd.f32 %v7658, %v7850
      %v7852 = vpop.f32.mrb[0].mxu0
      %v7853 = vadd.f32 %v7660, %v7852
      %v7854 = vpop.f32.mrb[0].mxu0
      %v7855 = vadd.f32 %v7662, %v7854
      %7856 = vmatprep.mubr.bf16.mxu0 0
      %7857 = vmatmul.mubr.bf16.gmra.mrb[0].mxu0 %v5455
      %v7858 = vpop.f32.mrb[0].mxu0
      %v7859 = vadd.f32 %v7666, %v7858
      %v7860 = vpop.f32.mrb[0].mxu0
      %v7861 = vadd.f32 %v7668, %v7860
      %v7862 = vpop.f32.mrb[0].mxu0
      %v7863 = vadd.f32 %v7670, %v7862
      %v7864 = vpop.f32.mrb[0].mxu0
      %v7865 = vadd.f32 %v7672, %v7864
      %7866 = vmatprep.mubr.bf16.mxu0 0
      %7867 = vmatmul.mubr.bf16.gmra.mrb[0].mxu0 %v5459
      %v7868 = vpop.f32.mrb[0].mxu0
      %v7869 = vadd.f32 %v7676, %v7868
      %v7870 = vpop.f32.mrb[0].mxu0
      %v7871 = vadd.f32 %v7678, %v7870
      %v7872 = vpop.f32.mrb[0].mxu0
      %v7873 = vadd.f32 %v7680, %v7872
      %v7874 = vpop.f32.mrb[0].mxu0
      %v7875 = vadd.f32 %v7682, %v7874
      %7876 = vmatprep.mubr.bf16.mxu0 0
      %7877 = vmatmul.mubr.bf16.gmra.mrb[0].mxu0 %v5463
      %v7878 = vpop.f32.mrb[0].mxu0
      %v7879 = vadd.f32 %v7686, %v7878
      %v7880 = vpop.f32.mrb[0].mxu0
      %v7881 = vadd.f32 %v7688, %v7880
      %v7882 = vpop.f32.mrb[0].mxu0
      %v7883 = vadd.f32 %v7690, %v7882
      %v7884 = vpop.f32.mrb[0].mxu0
      %v7885 = vadd.f32 %v7692, %v7884
      %7886 = vmatprep.mubr.bf16.mxu0 0
      %7887 = vmatmul.mubr.bf16.gmra.mrb[0].mxu0 %v5467
      %v7888 = vpop.f32.mrb[0].mxu0
      %v7889 = vadd.f32 %v7696, %v7888
      %v7890 = vpop.f32.mrb[0].mxu0
      %v7891 = vadd.f32 %v7698, %v7890
      %v7892 = vpop.f32.mrb[0].mxu0
      %v7893 = vadd.f32 %v7700, %v7892
      %v7894 = vpop.f32.mrb[0].mxu0
      %v7895 = vadd.f32 %v7702, %v7894
      %7896 = vmatprep.mubr.bf16.mxu0 0
      %7897 = vmatmul.mubr.bf16.gmra.mrb[0].mxu0 %v5471
      %v7898 = vpop.f32.mrb[0].mxu0
      %v7899 = vadd.f32 %v7706, %v7898
      %v7900 = vpop.f32.mrb[0].mxu0
      %v7901 = vadd.f32 %v7708, %v7900
      %v7902 = vpop.f32.mrb[0].mxu0
      %v7903 = vadd.f32 %v7710, %v7902
      %v7904 = vpop.f32.mrb[0].mxu0
      %v7905 = vadd.f32 %v7712, %v7904
      %7906 = vmatprep.mubr.bf16.mxu0 0
      %7907 = vmatmul.mubr.bf16.gmra.mrb[0].mxu0 0
      %v7908 = vpop.f32.mrb[0].mxu0
      %v7909 = vadd.f32 %v7716, %v7908
      %v7910 = vpop.f32.mrb[0].mxu0
      %v7911 = vadd.f32 %v7718, %v7910
      %v7912 = vpop.f32.mrb[0].mxu0
      %v7913 = vadd.f32 %v7720, %v7912
      %v7914 = vpop.f32.mrb[0].mxu0
      %v7915 = vadd.f32 %v7722, %v7914
      %7916 = vmatprep.mubr.bf16.mxu0 0
      %7917 = vmatmul.mubr.bf16.gmra.mrb[0].mxu0 0
      %v7918 = vpop.f32.mrb[0].mxu0
      %v7919 = vadd.f32 %v7726, %v7918
      %v7920 = vpop.f32.mrb[0].mxu0
      %v7921 = vadd.f32 %v7728, %v7920
      %v7922 = vpop.f32.mrb[0].mxu0
      %v7923 = vadd.f32 %v7730, %v7922
      %v7924 = vpop.f32.mrb[0].mxu0
      %v7925 = vadd.f32 %v7732, %v7924
      %7926 = vdwg.mxu0
      %v7928 = vlaneseq
      %v7929 = vshrl.u32 %v7928, 7
      %v7930 = vsub.s32 0, %v7929
      %v7931 = vrot.slane %v5713, %v7930
      %v7932 = vlaneseq
      %v7933 = vshrl.u32 %v7932, 7
      %v7934 = vsub.s32 1, %v7933
      %v7935 = vrot.slane %v5713, %v7934
      %v7938 = vadd.f32 %v7769, %v7931
      %v7939 = vadd.f32 %v7771, %v7935
      %v7940 = vadd.f32 %v7773, %v7931
      %v7941 = vadd.f32 %v7775, %v7935
      %v7942 = vadd.f32 %v7779, %v7931
      %v7943 = vadd.f32 %v7781, %v7935
      %v7944 = vadd.f32 %v7783, %v7931
      %v7945 = vadd.f32 %v7785, %v7935
      %v7946 = vadd.f32 %v7789, %v7931
      %v7947 = vadd.f32 %v7791, %v7935
      %v7948 = vadd.f32 %v7793, %v7931
      %v7949 = vadd.f32 %v7795, %v7935
      %v7950 = vadd.f32 %v7799, %v7931
      %v7951 = vadd.f32 %v7801, %v7935
      %v7952 = vadd.f32 %v7803, %v7931
      %v7953 = vadd.f32 %v7805, %v7935
      %v7954 = vadd.f32 %v7809, %v7931
      %v7955 = vadd.f32 %v7811, %v7935
      %v7956 = vadd.f32 %v7813, %v7931
      %v7957 = vadd.f32 %v7815, %v7935
      %v7958 = vadd.f32 %v7819, %v7931
      %v7959 = vadd.f32 %v7821, %v7935
      %v7960 = vadd.f32 %v7823, %v7931
      %v7961 = vadd.f32 %v7825, %v7935
      %v7962 = vadd.f32 %v7829, %v7931
      %v7963 = vadd.f32 %v7831, %v7935
      %v7964 = vadd.f32 %v7833, %v7931
      %v7965 = vadd.f32 %v7835, %v7935
      %v7966 = vadd.f32 %v7839, %v7931
      %v7967 = vadd.f32 %v7841, %v7935
      %v7968 = vadd.f32 %v7843, %v7931
      %v7969 = vadd.f32 %v7845, %v7935
      %v7970 = vadd.f32 %v7849, %v7931
      %v7971 = vadd.f32 %v7851, %v7935
      %v7972 = vadd.f32 %v7853, %v7931
      %v7973 = vadd.f32 %v7855, %v7935
      %v7974 = vadd.f32 %v7859, %v7931
      %v7975 = vadd.f32 %v7861, %v7935
      %v7976 = vadd.f32 %v7863, %v7931
      %v7977 = vadd.f32 %v7865, %v7935
      %v7978 = vadd.f32 %v7869, %v7931
      %v7979 = vadd.f32 %v7871, %v7935
      %v7980 = vadd.f32 %v7873, %v7931
      %v7981 = vadd.f32 %v7875, %v7935
      %v7982 = vadd.f32 %v7879, %v7931
      %v7983 = vadd.f32 %v7881, %v7935
      %v7984 = vadd.f32 %v7883, %v7931
      %v7985 = vadd.f32 %v7885, %v7935
      %v7986 = vadd.f32 %v7889, %v7931
      %v7987 = vadd.f32 %v7891, %v7935
      %v7988 = vadd.f32 %v7893, %v7931
      %v7989 = vadd.f32 %v7895, %v7935
      %v7990 = vadd.f32 %v7899, %v7931
      %v7991 = vadd.f32 %v7901, %v7935
      %v7992 = vadd.f32 %v7903, %v7931
      %v7993 = vadd.f32 %v7905, %v7935
      %v7994 = vadd.f32 %v7909, %v7931
      %v7995 = vadd.f32 %v7911, %v7935
      %v7996 = vadd.f32 %v7913, %v7931
      %v7997 = vadd.f32 %v7915, %v7935
      %v7998 = vadd.f32 %v7919, %v7931
      %v7999 = vadd.f32 %v7921, %v7935
      %v8000 = vadd.f32 %v7923, %v7931
      %v8001 = vadd.f32 %v7925, %v7935
      %v8002 = vxor.u32 %v7938, 2147483648
      %v8003 = vxor.u32 %v7939, 2147483648
      %v8004 = vxor.u32 %v7940, 2147483648
      %v8005 = vxor.u32 %v7941, 2147483648
      %v8006 = vxor.u32 %v7942, 2147483648
      %v8007 = vxor.u32 %v7943, 2147483648
      %v8008 = vxor.u32 %v7944, 2147483648
      %v8009 = vxor.u32 %v7945, 2147483648
      %v8010 = vxor.u32 %v7946, 2147483648
      %v8011 = vxor.u32 %v7947, 2147483648
      %v8012 = vxor.u32 %v7948, 2147483648
      %v8013 = vxor.u32 %v7949, 2147483648
      %v8014 = vxor.u32 %v7950, 2147483648
      %v8015 = vxor.u32 %v7951, 2147483648
      %v8016 = vxor.u32 %v7952, 2147483648
      %v8017 = vxor.u32 %v7953, 2147483648
      %v8018 = vxor.u32 %v7954, 2147483648
      %v8019 = vxor.u32 %v7955, 2147483648
      %v8020 = vxor.u32 %v7956, 2147483648
      %v8021 = vxor.u32 %v7957, 2147483648
      %v8022 = vxor.u32 %v7958, 2147483648
      %v8023 = vxor.u32 %v7959, 2147483648
      %v8024 = vxor.u32 %v7960, 2147483648
      %v8025 = vxor.u32 %v7961, 2147483648
      %v8026 = vxor.u32 %v7962, 2147483648
      %v8027 = vxor.u32 %v7963, 2147483648
      %v8028 = vxor.u32 %v7964, 2147483648
      %v8029 = vxor.u32 %v7965, 2147483648
      %v8030 = vxor.u32 %v7966, 2147483648
      %v8031 = vxor.u32 %v7967, 2147483648
      %v8032 = vxor.u32 %v7968, 2147483648
      %v8033 = vxor.u32 %v7969, 2147483648
      %v8034 = vxor.u32 %v7970, 2147483648
      %v8035 = vxor.u32 %v7971, 2147483648
      %v8036 = vxor.u32 %v7972, 2147483648
      %v8037 = vxor.u32 %v7973, 2147483648
      %v8038 = vxor.u32 %v7974, 2147483648
      %v8039 = vxor.u32 %v7975, 2147483648
      %v8040 = vxor.u32 %v7976, 2147483648
      %v8041 = vxor.u32 %v7977, 2147483648
      %v8042 = vxor.u32 %v7978, 2147483648
      %v8043 = vxor.u32 %v7979, 2147483648
      %v8044 = vxor.u32 %v7980, 2147483648
      %v8045 = vxor.u32 %v7981, 2147483648
      %v8046 = vxor.u32 %v7982, 2147483648
      %v8047 = vxor.u32 %v7983, 2147483648
      %v8048 = vxor.u32 %v7984, 2147483648
      %v8049 = vxor.u32 %v7985, 2147483648
      %v8050 = vxor.u32 %v7986, 2147483648
      %v8051 = vxor.u32 %v7987, 2147483648
      %v8052 = vxor.u32 %v7988, 2147483648
      %v8053 = vxor.u32 %v7989, 2147483648
      %v8054 = vxor.u32 %v7990, 2147483648
      %v8055 = vxor.u32 %v7991, 2147483648
      %v8056 = vxor.u32 %v7992, 2147483648
      %v8057 = vxor.u32 %v7993, 2147483648
      %v8058 = vxor.u32 %v7994, 2147483648
      %v8059 = vxor.u32 %v7995, 2147483648
      %v8060 = vxor.u32 %v7996, 2147483648
      %v8061 = vxor.u32 %v7997, 2147483648
      %v8062 = vxor.u32 %v7998, 2147483648
      %v8063 = vxor.u32 %v7999, 2147483648
      %v8064 = vxor.u32 %v8000, 2147483648
      %v8065 = vxor.u32 %v8001, 2147483648
      %v8066 = vmul.f32 %v8002, 1.442695
      %v8067 = vpow.pop %v8066
      %v8068 = vmul.f32 %v8003, 1.442695
      %v8069 = vpow.pop %v8068
      %v8070 = vmul.f32 %v8004, 1.442695
      %v8071 = vpow.pop %v8070
      %v8072 = vmul.f32 %v8005, 1.442695
      %v8073 = vpow.pop %v8072
      %v8074 = vmul.f32 %v8006, 1.442695
      %v8075 = vpow.pop %v8074
      %v8076 = vmul.f32 %v8007, 1.442695
      %v8077 = vpow.pop %v8076
      %v8078 = vmul.f32 %v8008, 1.442695
      %v8079 = vpow.pop %v8078
      %v8080 = vmul.f32 %v8009, 1.442695
      %v8081 = vpow.pop %v8080
      %v8082 = vmul.f32 %v8010, 1.442695
      %v8083 = vpow.pop %v8082
      %v8084 = vmul.f32 %v8011, 1.442695
      %v8085 = vpow.pop %v8084
      %v8086 = vmul.f32 %v8012, 1.442695
      %v8087 = vpow.pop %v8086
      %v8088 = vmul.f32 %v8013, 1.442695
      %v8089 = vpow.pop %v8088
      %v8090 = vmul.f32 %v8014, 1.442695
      %v8091 = vpow.pop %v8090
      %v8092 = vmul.f32 %v8015, 1.442695
      %v8093 = vpow.pop %v8092
      %v8094 = vmul.f32 %v8016, 1.442695
      %v8095 = vpow.pop %v8094
      %v8096 = vmul.f32 %v8017, 1.442695
      %v8097 = vpow.pop %v8096
      %v8098 = vmul.f32 %v8018, 1.442695
      %v8099 = vpow.pop %v8098
      %v8100 = vmul.f32 %v8019, 1.442695
      %v8101 = vpow.pop %v8100
      %v8102 = vmul.f32 %v8020, 1.442695
      %v8103 = vpow.pop %v8102
      %v8104 = vmul.f32 %v8021, 1.442695
      %v8105 = vpow.pop %v8104
      %v8106 = vmul.f32 %v8022, 1.442695
      %v8107 = vpow.pop %v8106
      %v8108 = vmul.f32 %v8023, 1.442695
      %v8109 = vpow.pop %v8108
      %v8110 = vmul.f32 %v8024, 1.442695
      %v8111 = vpow.pop %v8110
      %v8112 = vmul.f32 %v8025, 1.442695
      %v8113 = vpow.pop %v8112
      %v8114 = vmul.f32 %v8026, 1.442695
      %v8115 = vpow.pop %v8114
      %v8116 = vmul.f32 %v8027, 1.442695
      %v8117 = vpow.pop %v8116
      %v8118 = vmul.f32 %v8028, 1.442695
      %v8119 = vpow.pop %v8118
      %v8120 = vmul.f32 %v8029, 1.442695
      %v8121 = vpow.pop %v8120
      %v8122 = vmul.f32 %v8030, 1.442695
      %v8123 = vpow.pop %v8122
      %v8124 = vmul.f32 %v8031, 1.442695
      %v8125 = vpow.pop %v8124
      %v8126 = vmul.f32 %v8032, 1.442695
      %v8127 = vpow.pop %v8126
      %v8128 = vmul.f32 %v8033, 1.442695
      %v8129 = vpow.pop %v8128
      %v8130 = vmul.f32 %v8034, 1.442695
      %v8131 = vpow.pop %v8130
      %v8132 = vmul.f32 %v8035, 1.442695
      %v8133 = vpow.pop %v8132
      %v8134 = vmul.f32 %v8036, 1.442695
      %v8135 = vpow.pop %v8134
      %v8136 = vmul.f32 %v8037, 1.442695
      %v8137 = vpow.pop %v8136
      %v8138 = vmul.f32 %v8038, 1.442695
      %v8139 = vpow.pop %v8138
      %v8140 = vmul.f32 %v8039, 1.442695
      %v8141 = vpow.pop %v8140
      %v8142 = vmul.f32 %v8040, 1.442695
      %v8143 = vpow.pop %v8142
      %v8144 = vmul.f32 %v8041, 1.442695
      %v8145 = vpow.pop %v8144
      %v8146 = vmul.f32 %v8042, 1.442695
      %v8147 = vpow.pop %v8146
      %v8148 = vmul.f32 %v8043, 1.442695
      %v8149 = vpow.pop %v8148
      %v8150 = vmul.f32 %v8044, 1.442695
      %v8151 = vpow.pop %v8150
      %v8152 = vmul.f32 %v8045, 1.442695
      %v8153 = vpow.pop %v8152
      %v8154 = vmul.f32 %v8046, 1.442695
      %v8155 = vpow.pop %v8154
      %v8156 = vmul.f32 %v8047, 1.442695
      %v8157 = vpow.pop %v8156
      %v8158 = vmul.f32 %v8048, 1.442695
      %v8159 = vpow.pop %v8158
      %v8160 = vmul.f32 %v8049, 1.442695
      %v8161 = vpow.pop %v8160
      %v8162 = vmul.f32 %v8050, 1.442695
      %v8163 = vpow.pop %v8162
      %v8164 = vmul.f32 %v8051, 1.442695
      %v8165 = vpow.pop %v8164
      %v8166 = vmul.f32 %v8052, 1.442695
      %v8167 = vpow.pop %v8166
      %v8168 = vmul.f32 %v8053, 1.442695
      %v8169 = vpow.pop %v8168
      %v8170 = vmul.f32 %v8054, 1.442695
      %v8171 = vpow.pop %v8170
      %v8172 = vmul.f32 %v8055, 1.442695
      %v8173 = vpow.pop %v8172
      %v8174 = vmul.f32 %v8056, 1.442695
      %v8175 = vpow.pop %v8174
      %v8176 = vmul.f32 %v8057, 1.442695
      %v8177 = vpow.pop %v8176
      %v8178 = vmul.f32 %v8058, 1.442695
      %v8179 = vpow.pop %v8178
      %v8180 = vmul.f32 %v8059, 1.442695
      %v8181 = vpow.pop %v8180
      %v8182 = vmul.f32 %v8060, 1.442695
      %v8183 = vpow.pop %v8182
      %v8184 = vmul.f32 %v8061, 1.442695
      %v8185 = vpow.pop %v8184
      %v8186 = vmul.f32 %v8062, 1.442695
      %v8187 = vpow.pop %v8186
      %v8188 = vmul.f32 %v8063, 1.442695
      %v8189 = vpow.pop %v8188
      %v8190 = vmul.f32 %v8064, 1.442695
      %v8191 = vpow.pop %v8190
      %v8192 = vmul.f32 %v8065, 1.442695
      %v8193 = vpow.pop %v8192
      %v8194 = vadd.f32 %v8067, 1.0
      %v8195 = vadd.f32 %v8069, 1.0
      %v8196 = vadd.f32 %v8071, 1.0
      %v8197 = vadd.f32 %v8073, 1.0
      %v8198 = vadd.f32 %v8075, 1.0
      %v8199 = vadd.f32 %v8077, 1.0
      %v8200 = vadd.f32 %v8079, 1.0
      %v8201 = vadd.f32 %v8081, 1.0
      %v8202 = vadd.f32 %v8083, 1.0
      %v8203 = vadd.f32 %v8085, 1.0
      %v8204 = vadd.f32 %v8087, 1.0
      %v8205 = vadd.f32 %v8089, 1.0
      %v8206 = vadd.f32 %v8091, 1.0
      %v8207 = vadd.f32 %v8093, 1.0
      %v8208 = vadd.f32 %v8095, 1.0
      %v8209 = vadd.f32 %v8097, 1.0
      %v8210 = vadd.f32 %v8099, 1.0
      %v8211 = vadd.f32 %v8101, 1.0
      %v8212 = vadd.f32 %v8103, 1.0
      %v8213 = vadd.f32 %v8105, 1.0
      %v8214 = vadd.f32 %v8107, 1.0
      %v8215 = vadd.f32 %v8109, 1.0
      %v8216 = vadd.f32 %v8111, 1.0
      %v8217 = vadd.f32 %v8113, 1.0
      %v8218 = vadd.f32 %v8115, 1.0
      %v8219 = vadd.f32 %v8117, 1.0
      %v8220 = vadd.f32 %v8119, 1.0
      %v8221 = vadd.f32 %v8121, 1.0
      %v8222 = vadd.f32 %v8123, 1.0
      %v8223 = vadd.f32 %v8125, 1.0
      %v8224 = vadd.f32 %v8127, 1.0
      %v8225 = vadd.f32 %v8129, 1.0
      %v8226 = vadd.f32 %v8131, 1.0
      %v8227 = vadd.f32 %v8133, 1.0
      %v8228 = vadd.f32 %v8135, 1.0
      %v8229 = vadd.f32 %v8137, 1.0
      %v8230 = vadd.f32 %v8139, 1.0
      %v8231 = vadd.f32 %v8141, 1.0
      %v8232 = vadd.f32 %v8143, 1.0
      %v8233 = vadd.f32 %v8145, 1.0
      %v8234 = vadd.f32 %v8147, 1.0
      %v8235 = vadd.f32 %v8149, 1.0
      %v8236 = vadd.f32 %v8151, 1.0
      %v8237 = vadd.f32 %v8153, 1.0
      %v8238 = vadd.f32 %v8155, 1.0
      %v8239 = vadd.f32 %v8157, 1.0
      %v8240 = vadd.f32 %v8159, 1.0
      %v8241 = vadd.f32 %v8161, 1.0
      %v8242 = vadd.f32 %v8163, 1.0
      %v8243 = vadd.f32 %v8165, 1.0
      %v8244 = vadd.f32 %v8167, 1.0
      %v8245 = vadd.f32 %v8169, 1.0
      %v8246 = vadd.f32 %v8171, 1.0
      %v8247 = vadd.f32 %v8173, 1.0
      %v8248 = vadd.f32 %v8175, 1.0
      %v8249 = vadd.f32 %v8177, 1.0
      %v8250 = vadd.f32 %v8179, 1.0
      %v8251 = vadd.f32 %v8181, 1.0
      %v8252 = vadd.f32 %v8183, 1.0
      %v8253 = vadd.f32 %v8185, 1.0
      %v8254 = vadd.f32 %v8187, 1.0
      %v8255 = vadd.f32 %v8189, 1.0
      %v8256 = vadd.f32 %v8191, 1.0
      %v8257 = vadd.f32 %v8193, 1.0
      %v8258 = vrcp.pop %v8194
      %v8259 = vmul.f32 1.0, %v8258
      %v8260 = vrcp.pop %v8195
      %v8261 = vmul.f32 1.0, %v8260
      %v8262 = vrcp.pop %v8196
      %v8263 = vmul.f32 1.0, %v8262
      %v8264 = vrcp.pop %v8197
      %v8265 = vmul.f32 1.0, %v8264
      %v8266 = vrcp.pop %v8198
      %v8267 = vmul.f32 1.0, %v8266
      %v8268 = vrcp.pop %v8199
      %v8269 = vmul.f32 1.0, %v8268
      %v8270 = vrcp.pop %v8200
      %v8271 = vmul.f32 1.0, %v8270
      %v8272 = vrcp.pop %v8201
      %v8273 = vmul.f32 1.0, %v8272
      %v8274 = vrcp.pop %v8202
      %v8275 = vmul.f32 1.0, %v8274
      %v8276 = vrcp.pop %v8203
      %v8277 = vmul.f32 1.0, %v8276
      %v8278 = vrcp.pop %v8204
      %v8279 = vmul.f32 1.0, %v8278
      %v8280 = vrcp.pop %v8205
      %v8281 = vmul.f32 1.0, %v8280
      %v8282 = vrcp.pop %v8206
      %v8283 = vmul.f32 1.0, %v8282
      %v8284 = vrcp.pop %v8207
      %v8285 = vmul.f32 1.0, %v8284
      %v8286 = vrcp.pop %v8208
      %v8287 = vmul.f32 1.0, %v8286
      %v8288 = vrcp.pop %v8209
      %v8289 = vmul.f32 1.0, %v8288
      %v8290 = vrcp.pop %v8210
      %v8291 = vmul.f32 1.0, %v8290
      %v8292 = vrcp.pop %v8211
      %v8293 = vmul.f32 1.0, %v8292
      %v8294 = vrcp.pop %v8212
      %v8295 = vmul.f32 1.0, %v8294
      %v8296 = vrcp.pop %v8213
      %v8297 = vmul.f32 1.0, %v8296
      %v8298 = vrcp.pop %v8214
      %v8299 = vmul.f32 1.0, %v8298
      %v8300 = vrcp.pop %v8215
      %v8301 = vmul.f32 1.0, %v8300
      %v8302 = vrcp.pop %v8216
      %v8303 = vmul.f32 1.0, %v8302
      %v8304 = vrcp.pop %v8217
      %v8305 = vmul.f32 1.0, %v8304
      %v8306 = vrcp.pop %v8218
      %v8307 = vmul.f32 1.0, %v8306
      %v8308 = vrcp.pop %v8219
      %v8309 = vmul.f32 1.0, %v8308
      %v8310 = vrcp.pop %v8220
      %v8311 = vmul.f32 1.0, %v8310
      %v8312 = vrcp.pop %v8221
      %v8313 = vmul.f32 1.0, %v8312
      %v8314 = vrcp.pop %v8222
      %v8315 = vmul.f32 1.0, %v8314
      %v8316 = vrcp.pop %v8223
      %v8317 = vmul.f32 1.0, %v8316
      %v8318 = vrcp.pop %v8224
      %v8319 = vmul.f32 1.0, %v8318
      %v8320 = vrcp.pop %v8225
      %v8321 = vmul.f32 1.0, %v8320
      %v8322 = vrcp.pop %v8226
      %v8323 = vmul.f32 1.0, %v8322
      %v8324 = vrcp.pop %v8227
      %v8325 = vmul.f32 1.0, %v8324
      %v8326 = vrcp.pop %v8228
      %v8327 = vmul.f32 1.0, %v8326
      %v8328 = vrcp.pop %v8229
      %v8329 = vmul.f32 1.0, %v8328
      %v8330 = vrcp.pop %v8230
      %v8331 = vmul.f32 1.0, %v8330
      %v8332 = vrcp.pop %v8231
      %v8333 = vmul.f32 1.0, %v8332
      %v8334 = vrcp.pop %v8232
      %v8335 = vmul.f32 1.0, %v8334
      %v8336 = vrcp.pop %v8233
      %v8337 = vmul.f32 1.0, %v8336
      %v8338 = vrcp.pop %v8234
      %v8339 = vmul.f32 1.0, %v8338
      %v8340 = vrcp.pop %v8235
      %v8341 = vmul.f32 1.0, %v8340
      %v8342 = vrcp.pop %v8236
      %v8343 = vmul.f32 1.0, %v8342
      %v8344 = vrcp.pop %v8237
      %v8345 = vmul.f32 1.0, %v8344
      %v8346 = vrcp.pop %v8238
      %v8347 = vmul.f32 1.0, %v8346
      %v8348 = vrcp.pop %v8239
      %v8349 = vmul.f32 1.0, %v8348
      %v8350 = vrcp.pop %v8240
      %v8351 = vmul.f32 1.0, %v8350
      %v8352 = vrcp.pop %v8241
      %v8353 = vmul.f32 1.0, %v8352
      %v8354 = vrcp.pop %v8242
      %v8355 = vmul.f32 1.0, %v8354
      %v8356 = vrcp.pop %v8243
      %v8357 = vmul.f32 1.0, %v8356
      %v8358 = vrcp.pop %v8244
      %v8359 = vmul.f32 1.0, %v8358
      %v8360 = vrcp.pop %v8245
      %v8361 = vmul.f32 1.0, %v8360
      %v8362 = vrcp.pop %v8246
      %v8363 = vmul.f32 1.0, %v8362
      %v8364 = vrcp.pop %v8247
      %v8365 = vmul.f32 1.0, %v8364
      %v8366 = vrcp.pop %v8248
      %v8367 = vmul.f32 1.0, %v8366
      %v8368 = vrcp.pop %v8249
      %v8369 = vmul.f32 1.0, %v8368
      %v8370 = vrcp.pop %v8250
      %v8371 = vmul.f32 1.0, %v8370
      %v8372 = vrcp.pop %v8251
      %v8373 = vmul.f32 1.0, %v8372
      %v8374 = vrcp.pop %v8252
      %v8375 = vmul.f32 1.0, %v8374
      %v8376 = vrcp.pop %v8253
      %v8377 = vmul.f32 1.0, %v8376
      %v8378 = vrcp.pop %v8254
      %v8379 = vmul.f32 1.0, %v8378
      %v8380 = vrcp.pop %v8255
      %v8381 = vmul.f32 1.0, %v8380
      %v8382 = vrcp.pop %v8256
      %v8383 = vmul.f32 1.0, %v8382
      %v8384 = vrcp.pop %v8257
      %v8385 = vmul.f32 1.0, %v8384
      %v8386 = vpack.c.bf16 %v8265, %v8261
      %v8387 = vpack.c.bf16 %v8273, %v8269
      %v8388 = vpack.c.bf16 %v8281, %v8277
      %v8389 = vpack.c.bf16 %v8289, %v8285
      %v8390 = vpack.c.bf16 %v8297, %v8293
      %v8391 = vpack.c.bf16 %v8305, %v8301
      %v8392 = vpack.c.bf16 %v8313, %v8309
      %v8393 = vpack.c.bf16 %v8321, %v8317
      %v8394 = vpack.c.bf16 %v8329, %v8325
      %v8395 = vpack.c.bf16 %v8337, %v8333
      %v8396 = vpack.c.bf16 %v8345, %v8341
      %v8397 = vpack.c.bf16 %v8353, %v8349
      %v8398 = vpack.c.bf16 %v8361, %v8357
      %v8399 = vpack.c.bf16 %v8369, %v8365
      %v8400 = vpack.c.bf16 %v8377, %v8373
      %v8401 = vpack.c.bf16 %v8385, %v8381
      %v8402 = vmul.bf16 %v8386, %v5411
      %v8403 = vmul.bf16 %v8387, %v5415
      %v8404 = vmul.bf16 %v8388, %v5419
      %v8405 = vmul.bf16 %v8389, %v5423
      %v8406 = vmul.bf16 %v8390, %v5427
      %v8407 = vmul.bf16 %v8391, %v5431
      %v8408 = vmul.bf16 %v8392, %v5435
      %v8409 = vmul.bf16 %v8393, %v5439
      %v8410 = vmul.bf16 %v8394, %v5443
      %v8411 = vmul.bf16 %v8395, %v5447
      %v8412 = vmul.bf16 %v8396, %v5451
      %v8413 = vmul.bf16 %v8397, %v5455
      %v8414 = vmul.bf16 %v8398, %v5459
      %v8415 = vmul.bf16 %v8399, %v5463
      %v8416 = vmul.bf16 %v8400, %v5467
      %v8417 = vmul.bf16 %v8401, %v5471
      %v8498 = vunpack.c.l.b16 %v5553
      %v8499 = vunpack.c.l.b16 %v5554
      %v8500 = vunpack.c.l.b16 %v5555
      %v8501 = vunpack.c.l.b16 %v5556
      %v8502 = vunpack.c.l.b16 %v5557
      %v8503 = vunpack.c.l.b16 %v5558
      %v8504 = vunpack.c.l.b16 %v5559
      %v8505 = vunpack.c.l.b16 %v5560
      %v8506 = vunpack.c.l.b16 %v5561
      %v8507 = vunpack.c.l.b16 %v5562
      %v8508 = vunpack.c.l.b16 %v5563
      %v8509 = vunpack.c.l.b16 %v5564
      %v8510 = vunpack.c.l.b16 %v5565
      %v8511 = vunpack.c.l.b16 %v5566
      %v8512 = vunpack.c.l.b16 %v5567
      %v8513 = vunpack.c.l.b16 %v5568
      %v8514 = vunpack.c.l.b16 %v5569
      %v8515 = vunpack.c.l.b16 %v5570
      %v8516 = vunpack.c.l.b16 %v5571
      %v8517 = vunpack.c.l.b16 %v5572
      %v8518 = vunpack.c.l.b16 %v5573
      %v8519 = vunpack.c.l.b16 %v5574
      %v8520 = vunpack.c.l.b16 %v5575
      %v8521 = vunpack.c.l.b16 %v5576
      %v8522 = vunpack.c.l.b16 %v5577
      %v8523 = vunpack.c.l.b16 %v5578
      %v8524 = vunpack.c.l.b16 %v5579
      %v8525 = vunpack.c.l.b16 %v5580
      %v8526 = vunpack.c.l.b16 %v5581
      %v8527 = vunpack.c.l.b16 %v5582
      %v8528 = vunpack.c.l.b16 %v5583
      %v8529 = vunpack.c.l.b16 %v5584
      %v8530 = vunpack.c.l.b16 %v5585
      %v8531 = vunpack.c.l.b16 %v5586
      %v8532 = vunpack.c.l.b16 %v5587
      %v8533 = vunpack.c.l.b16 %v5588
      %v8534 = vunpack.c.l.b16 %v5589
      %v8535 = vunpack.c.l.b16 %v5590
      %v8536 = vunpack.c.l.b16 %v5591
      %v8537 = vunpack.c.l.b16 %v5592
      %v8538 = vunpack.c.l.b16 %v5593
      %v8539 = vunpack.c.l.b16 %v5594
      %v8540 = vunpack.c.l.b16 %v5595
      %v8541 = vunpack.c.l.b16 %v5596
      %v8542 = vunpack.c.l.b16 %v5597
      %v8543 = vunpack.c.l.b16 %v5598
      %v8544 = vunpack.c.l.b16 %v5599
      %v8545 = vunpack.c.l.b16 %v5600
      %v8546 = vunpack.c.l.b16 %v5601
      %v8547 = vunpack.c.l.b16 %v5602
      %v8548 = vunpack.c.l.b16 %v5603
      %v8549 = vunpack.c.l.b16 %v5604
      %v8550 = vunpack.c.l.b16 %v5605
      %v8551 = vunpack.c.l.b16 %v5606
      %v8552 = vunpack.c.l.b16 %v5607
      %v8553 = vunpack.c.l.b16 %v5608
      %v8554 = vunpack.c.l.b16 %v5609
      %v8555 = vunpack.c.l.b16 %v5610
      %v8556 = vunpack.c.l.b16 %v5611
      %v8557 = vunpack.c.l.b16 %v5612
      %v8558 = vunpack.c.l.b16 %v5613
      %v8559 = vunpack.c.l.b16 %v5614
      %v8560 = vunpack.c.l.b16 %v5615
      %v8561 = vunpack.c.l.b16 %v5616
      %v8562 = vunpack.c.l.b16 %v5617
      %v8563 = vunpack.c.l.b16 %v5618
      %v8564 = vunpack.c.l.b16 %v5619
      %v8565 = vunpack.c.l.b16 %v5620
      %v8566 = vunpack.c.l.b16 %v5621
      %v8567 = vunpack.c.l.b16 %v5622
      %v8568 = vunpack.c.l.b16 %v5623
      %v8569 = vunpack.c.l.b16 %v5624
      %v8570 = vunpack.c.l.b16 %v5625
      %v8571 = vunpack.c.l.b16 %v5626
      %v8572 = vunpack.c.l.b16 %v5627
      %v8573 = vunpack.c.l.b16 %v5628
      %v8574 = vunpack.c.l.b16 %v5629
      %v8575 = vunpack.c.l.b16 %v5630
      %v8576 = vunpack.c.l.b16 %v5631
      %v8577 = vunpack.c.l.b16 %v5632
      %v8578 = vpack.c.b16 %v8499, %v8498
      %v8579 = vpack.c.b16 %v8501, %v8500
      %v8580 = vpack.c.b16 %v8503, %v8502
      %v8581 = vpack.c.b16 %v8505, %v8504
      %v8582 = vpack.c.b16 %v8507, %v8506
      %v8583 = vpack.c.b16 %v8509, %v8508
      %v8584 = vpack.c.b16 %v8511, %v8510
      %v8585 = vpack.c.b16 %v8513, %v8512
      %v8586 = vpack.c.b16 %v8515, %v8514
      %v8587 = vpack.c.b16 %v8517, %v8516
      %v8588 = vpack.c.b16 %v8519, %v8518
      %v8589 = vpack.c.b16 %v8521, %v8520
      %v8590 = vpack.c.b16 %v8523, %v8522
      %v8591 = vpack.c.b16 %v8525, %v8524
      %v8592 = vpack.c.b16 %v8527, %v8526
      %v8593 = vpack.c.b16 %v8529, %v8528
      %v8594 = vpack.c.b16 %v8531, %v8530
      %v8595 = vpack.c.b16 %v8533, %v8532
      %v8596 = vpack.c.b16 %v8535, %v8534
      %v8597 = vpack.c.b16 %v8537, %v8536
      %v8598 = vpack.c.b16 %v8539, %v8538
      %v8599 = vpack.c.b16 %v8541, %v8540
      %v8600 = vpack.c.b16 %v8543, %v8542
      %v8601 = vpack.c.b16 %v8545, %v8544
      %v8602 = vpack.c.b16 %v8547, %v8546
      %v8603 = vpack.c.b16 %v8549, %v8548
      %v8604 = vpack.c.b16 %v8551, %v8550
      %v8605 = vpack.c.b16 %v8553, %v8552
      %v8606 = vpack.c.b16 %v8555, %v8554
      %v8607 = vpack.c.b16 %v8557, %v8556
      %v8608 = vpack.c.b16 %v8559, %v8558
      %v8609 = vpack.c.b16 %v8561, %v8560
      %v8610 = vpack.c.b16 %v8563, %v8562
      %v8611 = vpack.c.b16 %v8565, %v8564
      %v8612 = vpack.c.b16 %v8567, %v8566
      %v8613 = vpack.c.b16 %v8569, %v8568
      %v8614 = vpack.c.b16 %v8571, %v8570
      %v8615 = vpack.c.b16 %v8573, %v8572
      %v8616 = vpack.c.b16 %v8575, %v8574
      %v8617 = vpack.c.b16 %v8577, %v8576
      %8658 = vmatprep.subr.bf16.mxu0 0
      %8659 = vmatpush1.bf16.msra.mxu0 %v8578
      %8660 = vmatprep.subr.bf16.mxu0 0
      %8661 = vmatpush1.bf16.msra.mxu0 %v8579
      %8662 = vmatprep.subr.bf16.mxu0 0
      %8663 = vmatpush1.bf16.msra.mxu0 %v8580
      %8664 = vmatprep.subr.bf16.mxu0 0
      %8665 = vmatpush1.bf16.msra.mxu0 %v8581
      %8666 = vmatprep.subr.bf16.mxu0 0
      %8667 = vmatpush1.bf16.msra.mxu0 %v8582
      %8668 = vmatprep.subr.bf16.mxu0 0
      %8669 = vmatpush1.bf16.msra.mxu0 %v8583
      %8670 = vmatprep.subr.bf16.mxu0 0
      %8671 = vmatpush1.bf16.msra.mxu0 %v8584
      %8672 = vmatprep.subr.bf16.mxu0 0
      %8673 = vmatpush1.bf16.msra.mxu0 %v8585
      %8674 = vmatprep.subr.bf16.mxu0 0
      %8675 = vmatpush1.bf16.msra.mxu0 %v8586
      %8676 = vmatprep.subr.bf16.mxu0 0
      %8677 = vmatpush1.bf16.msra.mxu0 %v8587
      %8678 = vmatprep.subr.bf16.mxu0 0
      %8679 = vmatpush1.bf16.msra.mxu0 %v8588
      %8680 = vmatprep.subr.bf16.mxu0 0
      %8681 = vmatpush1.bf16.msra.mxu0 %v8589
      %8682 = vmatprep.subr.bf16.mxu0 0
      %8683 = vmatpush1.bf16.msra.mxu0 %v8590
      %8684 = vmatprep.subr.bf16.mxu0 0
      %8685 = vmatpush1.bf16.msra.mxu0 %v8591
      %8686 = vmatprep.subr.bf16.mxu0 0
      %8687 = vmatpush1.bf16.msra.mxu0 %v8592
      %8688 = vmatprep.subr.bf16.mxu0 0
      %8689 = vmatpush1.bf16.msra.mxu0 %v8593
      %8690 = vmatprep.mubr.bf16.mxu0 0
      %8691 = vmatmul.mubr.bf16.gmra.mrb[0].mxu0 0
      %v8692 = vpop.f32.mrb[0].mxu0
      %v8693 = vadd.f32 %v6822, %v8692
      %v8694 = vpop.f32.mrb[0].mxu0
      %v8695 = vpop.f32.mrb[0].mxu0
      %v8696 = vadd.f32 %v6825, %v8695
      %v8697 = vpop.f32.mrb[0].mxu0
      %8698 = vmatprep.mubr.bf16.mxu0 %v8402
      %8699 = vmatmul.mubr.bf16.gmra.mrb[0].mxu0 0
      %v8700 = vpop.f32.mrb[0].mxu0
      %v8701 = vadd.f32 %v6830, %v8700
      %v8702 = vpop.f32.mrb[0].mxu0
      %v8703 = vpop.f32.mrb[0].mxu0
      %v8704 = vadd.f32 %v6833, %v8703
      %v8705 = vpop.f32.mrb[0].mxu0
      %8706 = vmatprep.mubr.bf16.mxu0 %v8403
      %8707 = vmatmul.mubr.bf16.gmra.mrb[0].mxu0 %v8402
      %v8708 = vpop.f32.mrb[0].mxu0
      %v8709 = vadd.f32 %v6838, %v8708
      %v8710 = vpop.f32.mrb[0].mxu0
      %v8711 = vpop.f32.mrb[0].mxu0
      %v8712 = vadd.f32 %v6841, %v8711
      %v8713 = vpop.f32.mrb[0].mxu0
      %8714 = vmatprep.mubr.bf16.mxu0 %v8404
      %8715 = vmatmul.mubr.bf16.gmra.mrb[0].mxu0 %v8403
      %v8716 = vpop.f32.mrb[0].mxu0
      %v8717 = vadd.f32 %v6846, %v8716
      %v8718 = vpop.f32.mrb[0].mxu0
      %v8719 = vpop.f32.mrb[0].mxu0
      %v8720 = vadd.f32 %v6849, %v8719
      %v8721 = vpop.f32.mrb[0].mxu0
      %8722 = vmatprep.mubr.bf16.mxu0 %v8405
      %8723 = vmatmul.mubr.bf16.gmra.mrb[0].mxu0 %v8404
      %v8724 = vpop.f32.mrb[0].mxu0
      %v8725 = vadd.f32 %v6854, %v8724
      %v8726 = vpop.f32.mrb[0].mxu0
      %v8727 = vpop.f32.mrb[0].mxu0
      %v8728 = vadd.f32 %v6857, %v8727
      %v8729 = vpop.f32.mrb[0].mxu0
      %8730 = vmatprep.mubr.bf16.mxu0 %v8406
      %8731 = vmatmul.mubr.bf16.gmra.mrb[0].mxu0 %v8405
      %v8732 = vpop.f32.mrb[0].mxu0
      %v8733 = vadd.f32 %v6862, %v8732
      %v8734 = vpop.f32.mrb[0].mxu0
      %v8735 = vpop.f32.mrb[0].mxu0
      %v8736 = vadd.f32 %v6865, %v8735
      %v8737 = vpop.f32.mrb[0].mxu0
      %8738 = vmatprep.mubr.bf16.mxu0 %v8407
      %8739 = vmatmul.mubr.bf16.gmra.mrb[0].mxu0 %v8406
      %v8740 = vpop.f32.mrb[0].mxu0
      %v8741 = vadd.f32 %v6870, %v8740
      %v8742 = vpop.f32.mrb[0].mxu0
      %v8743 = vpop.f32.mrb[0].mxu0
      %v8744 = vadd.f32 %v6873, %v8743
      %v8745 = vpop.f32.mrb[0].mxu0
      %8746 = vmatprep.mubr.bf16.mxu0 %v8408
      %8747 = vmatmul.mubr.bf16.gmra.mrb[0].mxu0 %v8407
      %v8748 = vpop.f32.mrb[0].mxu0
      %v8749 = vadd.f32 %v6878, %v8748
      %v8750 = vpop.f32.mrb[0].mxu0
      %v8751 = vpop.f32.mrb[0].mxu0
      %v8752 = vadd.f32 %v6881, %v8751
      %v8753 = vpop.f32.mrb[0].mxu0
      %8754 = vmatprep.mubr.bf16.mxu0 %v8409
      %8755 = vmatmul.mubr.bf16.gmra.mrb[0].mxu0 %v8408
      %v8756 = vpop.f32.mrb[0].mxu0
      %v8757 = vadd.f32 %v6886, %v8756
      %v8758 = vpop.f32.mrb[0].mxu0
      %v8759 = vpop.f32.mrb[0].mxu0
      %v8760 = vadd.f32 %v6889, %v8759
      %v8761 = vpop.f32.mrb[0].mxu0
      %8762 = vmatprep.mubr.bf16.mxu0 %v8410
      %8763 = vmatmul.mubr.bf16.gmra.mrb[0].mxu0 %v8409
      %v8764 = vpop.f32.mrb[0].mxu0
      %v8765 = vadd.f32 %v6894, %v8764
      %v8766 = vpop.f32.mrb[0].mxu0
      %v8767 = vpop.f32.mrb[0].mxu0
      %v8768 = vadd.f32 %v6897, %v8767
      %v8769 = vpop.f32.mrb[0].mxu0
      %8770 = vmatprep.mubr.bf16.mxu0 %v8411
      %8771 = vmatmul.mubr.bf16.gmra.mrb[0].mxu0 %v8410
      %v8772 = vpop.f32.mrb[0].mxu0
      %v8773 = vadd.f32 %v6902, %v8772
      %v8774 = vpop.f32.mrb[0].mxu0
      %v8775 = vpop.f32.mrb[0].mxu0
      %v8776 = vadd.f32 %v6905, %v8775
      %v8777 = vpop.f32.mrb[0].mxu0
      %8778 = vmatprep.mubr.bf16.mxu0 %v8412
      %8779 = vmatmul.mubr.bf16.gmra.mrb[0].mxu0 %v8411
      %v8780 = vpop.f32.mrb[0].mxu0
      %v8781 = vadd.f32 %v6910, %v8780
      %v8782 = vpop.f32.mrb[0].mxu0
      %v8783 = vpop.f32.mrb[0].mxu0
      %v8784 = vadd.f32 %v6913, %v8783
      %v8785 = vpop.f32.mrb[0].mxu0
      %8786 = vmatprep.mubr.bf16.mxu0 %v8413
      %8787 = vmatmul.mubr.bf16.gmra.mrb[0].mxu0 %v8412
      %v8788 = vpop.f32.mrb[0].mxu0
      %v8789 = vadd.f32 %v6918, %v8788
      %v8790 = vpop.f32.mrb[0].mxu0
      %v8791 = vpop.f32.mrb[0].mxu0
      %v8792 = vadd.f32 %v6921, %v8791
      %v8793 = vpop.f32.mrb[0].mxu0
      %8794 = vmatprep.mubr.bf16.mxu0 %v8414
      %8795 = vmatmul.mubr.bf16.gmra.mrb[0].mxu0 %v8413
      %v8796 = vpop.f32.mrb[0].mxu0
      %v8797 = vadd.f32 %v6926, %v8796
      %v8798 = vpop.f32.mrb[0].mxu0
      %v8799 = vpop.f32.mrb[0].mxu0
      %v8800 = vadd.f32 %v6929, %v8799
      %v8801 = vpop.f32.mrb[0].mxu0
      %8802 = vmatprep.mubr.bf16.mxu0 %v8415
      %8803 = vmatmul.mubr.bf16.gmra.mrb[0].mxu0 %v8414
      %v8804 = vpop.f32.mrb[0].mxu0
      %v8805 = vadd.f32 %v6934, %v8804
      %v8806 = vpop.f32.mrb[0].mxu0
      %v8807 = vpop.f32.mrb[0].mxu0
      %v8808 = vadd.f32 %v6937, %v8807
      %v8809 = vpop.f32.mrb[0].mxu0
      %8810 = vmatprep.mubr.bf16.mxu0 %v8416
      %8811 = vmatmul.mubr.bf16.gmra.mrb[0].mxu0 %v8415
      %v8812 = vpop.f32.mrb[0].mxu0
      %v8813 = vadd.f32 %v6942, %v8812
      %v8814 = vpop.f32.mrb[0].mxu0
      %v8815 = vpop.f32.mrb[0].mxu0
      %v8816 = vadd.f32 %v6945, %v8815
      %v8817 = vpop.f32.mrb[0].mxu0
      %8818 = vdwg.mxu0
      %8819 = vmatprep.subr.bf16.mxu0 0
      %8820 = vmatpush1.bf16.msra.mxu0 %v8594
      %8821 = vmatprep.subr.bf16.mxu0 0
      %8822 = vmatpush1.bf16.msra.mxu0 %v8595
      %8823 = vmatprep.subr.bf16.mxu0 0
      %8824 = vmatpush1.bf16.msra.mxu0 %v8596
      %8825 = vmatprep.subr.bf16.mxu0 0
      %8826 = vmatpush1.bf16.msra.mxu0 %v8597
      %8827 = vmatprep.subr.bf16.mxu0 0
      %8828 = vmatpush1.bf16.msra.mxu0 %v8598
      %8829 = vmatprep.subr.bf16.mxu0 0
      %8830 = vmatpush1.bf16.msra.mxu0 %v8599
      %8831 = vmatprep.subr.bf16.mxu0 0
      %8832 = vmatpush1.bf16.msra.mxu0 %v8600
      %8833 = vmatprep.subr.bf16.mxu0 0
      %8834 = vmatpush1.bf16.msra.mxu0 %v8601
      %8835 = vmatprep.subr.bf16.mxu0 0
      %8836 = vmatpush1.bf16.msra.mxu0 %v8602
      %8837 = vmatprep.subr.bf16.mxu0 0
      %8838 = vmatpush1.bf16.msra.mxu0 %v8603
      %8839 = vmatprep.subr.bf16.mxu0 0
      %8840 = vmatpush1.bf16.msra.mxu0 %v8604
      %8841 = vmatprep.subr.bf16.mxu0 0
      %8842 = vmatpush1.bf16.msra.mxu0 %v8605
      %8843 = vmatprep.subr.bf16.mxu0 0
      %8844 = vmatpush1.bf16.msra.mxu0 %v8606
      %8845 = vmatprep.subr.bf16.mxu0 0
      %8846 = vmatpush1.bf16.msra.mxu0 %v8607
      %8847 = vmatprep.subr.bf16.mxu0 0
      %8848 = vmatpush1.bf16.msra.mxu0 %v8608
      %8849 = vmatprep.subr.bf16.mxu0 0
      %8850 = vmatpush1.bf16.msra.mxu0 %v8609
      %8851 = vmatprep.mubr.bf16.mxu0 %v8403
      %8852 = vmatmul.mubr.bf16.gmra.mrb[0].mxu0 %v8402
      %v8853 = vpop.f32.mrb[0].mxu0
      %v8854 = vadd.f32 %v8693, %v8853
      %v8855 = vpop.f32.mrb[0].mxu0
      %v8856 = vpop.f32.mrb[0].mxu0
      %v8857 = vadd.f32 %v8696, %v8856
      %v8858 = vpop.f32.mrb[0].mxu0
      %8859 = vmatprep.mubr.bf16.mxu0 %v8404
      %8860 = vmatmul.mubr.bf16.gmra.mrb[0].mxu0 %v8403
      %v8861 = vpop.f32.mrb[0].mxu0
      %v8862 = vadd.f32 %v8701, %v8861
      %v8863 = vpop.f32.mrb[0].mxu0
      %v8864 = vpop.f32.mrb[0].mxu0
      %v8865 = vadd.f32 %v8704, %v8864
      %v8866 = vpop.f32.mrb[0].mxu0
      %8867 = vmatprep.mubr.bf16.mxu0 %v8405
      %8868 = vmatmul.mubr.bf16.gmra.mrb[0].mxu0 %v8404
      %v8869 = vpop.f32.mrb[0].mxu0
      %v8870 = vadd.f32 %v8709, %v8869
      %v8871 = vpop.f32.mrb[0].mxu0
      %v8872 = vpop.f32.mrb[0].mxu0
      %v8873 = vadd.f32 %v8712, %v8872
      %v8874 = vpop.f32.mrb[0].mxu0
      %8875 = vmatprep.mubr.bf16.mxu0 %v8406
      %8876 = vmatmul.mubr.bf16.gmra.mrb[0].mxu0 %v8405
      %v8877 = vpop.f32.mrb[0].mxu0
      %v8878 = vadd.f32 %v8717, %v8877
      %v8879 = vpop.f32.mrb[0].mxu0
      %v8880 = vpop.f32.mrb[0].mxu0
      %v8881 = vadd.f32 %v8720, %v8880
      %v8882 = vpop.f32.mrb[0].mxu0
      %8883 = vmatprep.mubr.bf16.mxu0 %v8407
      %8884 = vmatmul.mubr.bf16.gmra.mrb[0].mxu0 %v8406
      %v8885 = vpop.f32.mrb[0].mxu0
      %v8886 = vadd.f32 %v8725, %v8885
      %v8887 = vpop.f32.mrb[0].mxu0
      %v8888 = vpop.f32.mrb[0].mxu0
      %v8889 = vadd.f32 %v8728, %v8888
      %v8890 = vpop.f32.mrb[0].mxu0
      %8891 = vmatprep.mubr.bf16.mxu0 %v8408
      %8892 = vmatmul.mubr.bf16.gmra.mrb[0].mxu0 %v8407
      %v8893 = vpop.f32.mrb[0].mxu0
      %v8894 = vadd.f32 %v8733, %v8893
      %v8895 = vpop.f32.mrb[0].mxu0
      %v8896 = vpop.f32.mrb[0].mxu0
      %v8897 = vadd.f32 %v8736, %v8896
      %v8898 = vpop.f32.mrb[0].mxu0
      %8899 = vmatprep.mubr.bf16.mxu0 %v8409
      %8900 = vmatmul.mubr.bf16.gmra.mrb[0].mxu0 %v8408
      %v8901 = vpop.f32.mrb[0].mxu0
      %v8902 = vadd.f32 %v8741, %v8901
      %v8903 = vpop.f32.mrb[0].mxu0
      %v8904 = vpop.f32.mrb[0].mxu0
      %v8905 = vadd.f32 %v8744, %v8904
      %v8906 = vpop.f32.mrb[0].mxu0
      %8907 = vmatprep.mubr.bf16.mxu0 %v8410
      %8908 = vmatmul.mubr.bf16.gmra.mrb[0].mxu0 %v8409
      %v8909 = vpop.f32.mrb[0].mxu0
      %v8910 = vadd.f32 %v8749, %v8909
      %v8911 = vpop.f32.mrb[0].mxu0
      %v8912 = vpop.f32.mrb[0].mxu0
      %v8913 = vadd.f32 %v8752, %v8912
      %v8914 = vpop.f32.mrb[0].mxu0
      %8915 = vmatprep.mubr.bf16.mxu0 %v8411
      %8916 = vmatmul.mubr.bf16.gmra.mrb[0].mxu0 %v8410
      %v8917 = vpop.f32.mrb[0].mxu0
      %v8918 = vadd.f32 %v8757, %v8917
      %v8919 = vpop.f32.mrb[0].mxu0
      %v8920 = vpop.f32.mrb[0].mxu0
      %v8921 = vadd.f32 %v8760, %v8920
      %v8922 = vpop.f32.mrb[0].mxu0
      %8923 = vmatprep.mubr.bf16.mxu0 %v8412
      %8924 = vmatmul.mubr.bf16.gmra.mrb[0].mxu0 %v8411
      %v8925 = vpop.f32.mrb[0].mxu0
      %v8926 = vadd.f32 %v8765, %v8925
      %v8927 = vpop.f32.mrb[0].mxu0
      %v8928 = vpop.f32.mrb[0].mxu0
      %v8929 = vadd.f32 %v8768, %v8928
      %v8930 = vpop.f32.mrb[0].mxu0
      %8931 = vmatprep.mubr.bf16.mxu0 %v8413
      %8932 = vmatmul.mubr.bf16.gmra.mrb[0].mxu0 %v8412
      %v8933 = vpop.f32.mrb[0].mxu0
      %v8934 = vadd.f32 %v8773, %v8933
      %v8935 = vpop.f32.mrb[0].mxu0
      %v8936 = vpop.f32.mrb[0].mxu0
      %v8937 = vadd.f32 %v8776, %v8936
      %v8938 = vpop.f32.mrb[0].mxu0
      %8939 = vmatprep.mubr.bf16.mxu0 %v8414
      %8940 = vmatmul.mubr.bf16.gmra.mrb[0].mxu0 %v8413
      %v8941 = vpop.f32.mrb[0].mxu0
      %v8942 = vadd.f32 %v8781, %v8941
      %v8943 = vpop.f32.mrb[0].mxu0
      %v8944 = vpop.f32.mrb[0].mxu0
      %v8945 = vadd.f32 %v8784, %v8944
      %v8946 = vpop.f32.mrb[0].mxu0
      %8947 = vmatprep.mubr.bf16.mxu0 %v8415
      %8948 = vmatmul.mubr.bf16.gmra.mrb[0].mxu0 %v8414
      %v8949 = vpop.f32.mrb[0].mxu0
      %v8950 = vadd.f32 %v8789, %v8949
      %v8951 = vpop.f32.mrb[0].mxu0
      %v8952 = vpop.f32.mrb[0].mxu0
      %v8953 = vadd.f32 %v8792, %v8952
      %v8954 = vpop.f32.mrb[0].mxu0
      %8955 = vmatprep.mubr.bf16.mxu0 %v8416
      %8956 = vmatmul.mubr.bf16.gmra.mrb[0].mxu0 %v8415
      %v8957 = vpop.f32.mrb[0].mxu0
      %v8958 = vadd.f32 %v8797, %v8957
      %v8959 = vpop.f32.mrb[0].mxu0
      %v8960 = vpop.f32.mrb[0].mxu0
      %v8961 = vadd.f32 %v8800, %v8960
      %v8962 = vpop.f32.mrb[0].mxu0
      %8963 = vmatprep.mubr.bf16.mxu0 %v8417
      %8964 = vmatmul.mubr.bf16.gmra.mrb[0].mxu0 %v8416
      %v8965 = vpop.f32.mrb[0].mxu0
      %v8966 = vadd.f32 %v8805, %v8965
      %v8967 = vpop.f32.mrb[0].mxu0
      %v8968 = vpop.f32.mrb[0].mxu0
      %v8969 = vadd.f32 %v8808, %v8968
      %v8970 = vpop.f32.mrb[0].mxu0
      %8971 = vmatprep.mubr.bf16.mxu0 0
      %8972 = vmatmul.mubr.bf16.gmra.mrb[0].mxu0 %v8417
      %v8973 = vpop.f32.mrb[0].mxu0
      %v8974 = vadd.f32 %v8813, %v8973
      %v8975 = vpop.f32.mrb[0].mxu0
      %v8976 = vpop.f32.mrb[0].mxu0
      %v8977 = vadd.f32 %v8816, %v8976
      %v8978 = vpop.f32.mrb[0].mxu0
      %8979 = vdwg.mxu0
      %8980 = vmatprep.subr.bf16.mxu0 0
      %8981 = vmatpush1.bf16.msra.mxu0 %v8610
      %8982 = vmatprep.subr.bf16.mxu0 0
      %8983 = vmatpush1.bf16.msra.mxu0 %v8611
      %8984 = vmatprep.subr.bf16.mxu0 0
      %8985 = vmatpush1.bf16.msra.mxu0 %v8612
      %8986 = vmatprep.subr.bf16.mxu0 0
      %8987 = vmatpush1.bf16.msra.mxu0 %v8613
      %8988 = vmatprep.subr.bf16.mxu0 0
      %8989 = vmatpush1.bf16.msra.mxu0 %v8614
      %8990 = vmatprep.subr.bf16.mxu0 0
      %8991 = vmatpush1.bf16.msra.mxu0 %v8615
      %8992 = vmatprep.subr.bf16.mxu0 0
      %8993 = vmatpush1.bf16.msra.mxu0 %v8616
      %8994 = vmatprep.subr.bf16.mxu0 0
      %8995 = vmatpush1.bf16.msra.mxu0 %v8617
      %8996 = vmatprep.subr.bf16.mxu0 0
      %8997 = vmatpush1.bf16.msra.mxu0 0
      %8998 = vmatprep.subr.bf16.mxu0 0
      %8999 = vmatpush1.bf16.msra.mxu0 0
      %9000 = vmatprep.subr.bf16.mxu0 0
      %9001 = vmatpush1.bf16.msra.mxu0 0
      %9002 = vmatprep.subr.bf16.mxu0 0
      %9003 = vmatpush1.bf16.msra.mxu0 0
      %9004 = vmatprep.subr.bf16.mxu0 0
      %9005 = vmatpush1.bf16.msra.mxu0 0
      %9006 = vmatprep.subr.bf16.mxu0 0
      %9007 = vmatpush1.bf16.msra.mxu0 0
      %9008 = vmatprep.subr.bf16.mxu0 0
      %9009 = vmatpush1.bf16.msra.mxu0 0
      %9010 = vmatprep.subr.bf16.mxu0 0
      %9011 = vmatpush1.bf16.msra.mxu0 0
      %9012 = vmatprep.mubr.bf16.mxu0 0
      %9013 = vmatmul.mubr.bf16.gmra.mrb[0].mxu0 %v8404
      %v9014 = vpop.f32.mrb[0].mxu0
      %v9015 = vadd.f32 %v8854, %v9014
      %v9016 = vpop.f32.mrb[0].mxu0
      %v9017 = vpop.f32.mrb[0].mxu0
      %v9018 = vadd.f32 %v8857, %v9017
      %v9019 = vpop.f32.mrb[0].mxu0
      %9020 = vmatprep.mubr.bf16.mxu0 0
      %9021 = vmatmul.mubr.bf16.gmra.mrb[0].mxu0 %v8405
      %v9022 = vpop.f32.mrb[0].mxu0
      %v9023 = vadd.f32 %v8862, %v9022
      %v9024 = vpop.f32.mrb[0].mxu0
      %v9025 = vpop.f32.mrb[0].mxu0
      %v9026 = vadd.f32 %v8865, %v9025
      %v9027 = vpop.f32.mrb[0].mxu0
      %9028 = vmatprep.mubr.bf16.mxu0 0
      %9029 = vmatmul.mubr.bf16.gmra.mrb[0].mxu0 %v8406
      %v9030 = vpop.f32.mrb[0].mxu0
      %v9031 = vadd.f32 %v8870, %v9030
      %v9032 = vpop.f32.mrb[0].mxu0
      %v9033 = vpop.f32.mrb[0].mxu0
      %v9034 = vadd.f32 %v8873, %v9033
      %v9035 = vpop.f32.mrb[0].mxu0
      %9036 = vmatprep.mubr.bf16.mxu0 0
      %9037 = vmatmul.mubr.bf16.gmra.mrb[0].mxu0 %v8407
      %v9038 = vpop.f32.mrb[0].mxu0
      %v9039 = vadd.f32 %v8878, %v9038
      %v9040 = vpop.f32.mrb[0].mxu0
      %v9041 = vpop.f32.mrb[0].mxu0
      %v9042 = vadd.f32 %v8881, %v9041
      %v9043 = vpop.f32.mrb[0].mxu0
      %9044 = vmatprep.mubr.bf16.mxu0 0
      %9045 = vmatmul.mubr.bf16.gmra.mrb[0].mxu0 %v8408
      %v9046 = vpop.f32.mrb[0].mxu0
      %v9047 = vadd.f32 %v8886, %v9046
      %v9048 = vpop.f32.mrb[0].mxu0
      %v9049 = vpop.f32.mrb[0].mxu0
      %v9050 = vadd.f32 %v8889, %v9049
      %v9051 = vpop.f32.mrb[0].mxu0
      %9052 = vmatprep.mubr.bf16.mxu0 0
      %9053 = vmatmul.mubr.bf16.gmra.mrb[0].mxu0 %v8409
      %v9054 = vpop.f32.mrb[0].mxu0
      %v9055 = vadd.f32 %v8894, %v9054
      %v9056 = vpop.f32.mrb[0].mxu0
      %v9057 = vpop.f32.mrb[0].mxu0
      %v9058 = vadd.f32 %v8897, %v9057
      %v9059 = vpop.f32.mrb[0].mxu0
      %9060 = vmatprep.mubr.bf16.mxu0 0
      %9061 = vmatmul.mubr.bf16.gmra.mrb[0].mxu0 %v8410
      %v9062 = vpop.f32.mrb[0].mxu0
      %v9063 = vadd.f32 %v8902, %v9062
      %v9064 = vpop.f32.mrb[0].mxu0
      %v9065 = vpop.f32.mrb[0].mxu0
      %v9066 = vadd.f32 %v8905, %v9065
      %v9067 = vpop.f32.mrb[0].mxu0
      %9068 = vmatprep.mubr.bf16.mxu0 0
      %9069 = vmatmul.mubr.bf16.gmra.mrb[0].mxu0 %v8411
      %v9070 = vpop.f32.mrb[0].mxu0
      %v9071 = vadd.f32 %v8910, %v9070
      %v9072 = vpop.f32.mrb[0].mxu0
      %v9073 = vpop.f32.mrb[0].mxu0
      %v9074 = vadd.f32 %v8913, %v9073
      %v9075 = vpop.f32.mrb[0].mxu0
      %9076 = vmatprep.mubr.bf16.mxu0 0
      %9077 = vmatmul.mubr.bf16.gmra.mrb[0].mxu0 %v8412
      %v9078 = vpop.f32.mrb[0].mxu0
      %v9079 = vadd.f32 %v8918, %v9078
      %v9080 = vpop.f32.mrb[0].mxu0
      %v9081 = vpop.f32.mrb[0].mxu0
      %v9082 = vadd.f32 %v8921, %v9081
      %v9083 = vpop.f32.mrb[0].mxu0
      %9084 = vmatprep.mubr.bf16.mxu0 0
      %9085 = vmatmul.mubr.bf16.gmra.mrb[0].mxu0 %v8413
      %v9086 = vpop.f32.mrb[0].mxu0
      %v9087 = vadd.f32 %v8926, %v9086
      %v9088 = vpop.f32.mrb[0].mxu0
      %v9089 = vpop.f32.mrb[0].mxu0
      %v9090 = vadd.f32 %v8929, %v9089
      %v9091 = vpop.f32.mrb[0].mxu0
      %9092 = vmatprep.mubr.bf16.mxu0 0
      %9093 = vmatmul.mubr.bf16.gmra.mrb[0].mxu0 %v8414
      %v9094 = vpop.f32.mrb[0].mxu0
      %v9095 = vadd.f32 %v8934, %v9094
      %v9096 = vpop.f32.mrb[0].mxu0
      %v9097 = vpop.f32.mrb[0].mxu0
      %v9098 = vadd.f32 %v8937, %v9097
      %v9099 = vpop.f32.mrb[0].mxu0
      %9100 = vmatprep.mubr.bf16.mxu0 0
      %9101 = vmatmul.mubr.bf16.gmra.mrb[0].mxu0 %v8415
      %v9102 = vpop.f32.mrb[0].mxu0
      %v9103 = vadd.f32 %v8942, %v9102
      %v9104 = vpop.f32.mrb[0].mxu0
      %v9105 = vpop.f32.mrb[0].mxu0
      %v9106 = vadd.f32 %v8945, %v9105
      %v9107 = vpop.f32.mrb[0].mxu0
      %9108 = vmatprep.mubr.bf16.mxu0 0
      %9109 = vmatmul.mubr.bf16.gmra.mrb[0].mxu0 %v8416
      %v9110 = vpop.f32.mrb[0].mxu0
      %v9111 = vadd.f32 %v8950, %v9110
      %v9112 = vpop.f32.mrb[0].mxu0
      %v9113 = vpop.f32.mrb[0].mxu0
      %v9114 = vadd.f32 %v8953, %v9113
      %v9115 = vpop.f32.mrb[0].mxu0
      %9116 = vmatprep.mubr.bf16.mxu0 0
      %9117 = vmatmul.mubr.bf16.gmra.mrb[0].mxu0 %v8417
      %v9118 = vpop.f32.mrb[0].mxu0
      %v9119 = vadd.f32 %v8958, %v9118
      %v9120 = vpop.f32.mrb[0].mxu0
      %v9121 = vpop.f32.mrb[0].mxu0
      %v9122 = vadd.f32 %v8961, %v9121
      %v9123 = vpop.f32.mrb[0].mxu0
      %9124 = vmatprep.mubr.bf16.mxu0 0
      %9125 = vmatmul.mubr.bf16.gmra.mrb[0].mxu0 0
      %v9126 = vpop.f32.mrb[0].mxu0
      %v9127 = vadd.f32 %v8966, %v9126
      %v9128 = vpop.f32.mrb[0].mxu0
      %v9129 = vpop.f32.mrb[0].mxu0
      %v9130 = vadd.f32 %v8969, %v9129
      %v9131 = vpop.f32.mrb[0].mxu0
      %9132 = vmatprep.mubr.bf16.mxu0 0
      %9133 = vmatmul.mubr.bf16.gmra.mrb[0].mxu0 0
      %v9134 = vpop.f32.mrb[0].mxu0
      %v9135 = vadd.f32 %v8974, %v9134
      %v9136 = vpop.f32.mrb[0].mxu0
      %v9137 = vpop.f32.mrb[0].mxu0
      %v9138 = vadd.f32 %v8977, %v9137
      %v9139 = vpop.f32.mrb[0].mxu0
      %9140 = vdwg.mxu0
      %v9141 = vrot.slane %v5713, 2
      %v9142 = vlaneseq
      %v9143 = vshrl.u32 %v9142, 7
      %v9144 = vsub.s32 0, %v9143
      %v9145 = vrot.slane %v9141, %v9144
      %v9147 = vadd.f32 %v9015, %v9145
      %v9148 = vadd.f32 %v9018, %v9145
      %v9149 = vadd.f32 %v9023, %v9145
      %v9150 = vadd.f32 %v9026, %v9145
      %v9151 = vadd.f32 %v9031, %v9145
      %v9152 = vadd.f32 %v9034, %v9145
      %v9153 = vadd.f32 %v9039, %v9145
      %v9154 = vadd.f32 %v9042, %v9145
      %v9155 = vadd.f32 %v9047, %v9145
      %v9156 = vadd.f32 %v9050, %v9145
      %v9157 = vadd.f32 %v9055, %v9145
      %v9158 = vadd.f32 %v9058, %v9145
      %v9159 = vadd.f32 %v9063, %v9145
      %v9160 = vadd.f32 %v9066, %v9145
      %v9161 = vadd.f32 %v9071, %v9145
      %v9162 = vadd.f32 %v9074, %v9145
      %v9163 = vadd.f32 %v9079, %v9145
      %v9164 = vadd.f32 %v9082, %v9145
      %v9165 = vadd.f32 %v9087, %v9145
      %v9166 = vadd.f32 %v9090, %v9145
      %v9167 = vadd.f32 %v9095, %v9145
      %v9168 = vadd.f32 %v9098, %v9145
      %v9169 = vadd.f32 %v9103, %v9145
      %v9170 = vadd.f32 %v9106, %v9145
      %v9171 = vadd.f32 %v9111, %v9145
      %v9172 = vadd.f32 %v9114, %v9145
      %v9173 = vadd.f32 %v9119, %v9145
      %v9174 = vadd.f32 %v9122, %v9145
      %v9175 = vadd.f32 %v9127, %v9145
      %v9176 = vadd.f32 %v9130, %v9145
      %v9177 = vadd.f32 %v9135, %v9145
      %v9178 = vadd.f32 %v9138, %v9145
      %v9179 = vtanh.pop %v9147
      %v9180 = vtanh.pop %v9148
      %v9181 = vtanh.pop %v9149
      %v9182 = vtanh.pop %v9150
      %v9183 = vtanh.pop %v9151
      %v9184 = vtanh.pop %v9152
      %v9185 = vtanh.pop %v9153
      %v9186 = vtanh.pop %v9154
      %v9187 = vtanh.pop %v9155
      %v9188 = vtanh.pop %v9156
      %v9189 = vtanh.pop %v9157
      %v9190 = vtanh.pop %v9158
      %v9191 = vtanh.pop %v9159
      %v9192 = vtanh.pop %v9160
      %v9193 = vtanh.pop %v9161
      %v9194 = vtanh.pop %v9162
      %v9195 = vtanh.pop %v9163
      %v9196 = vtanh.pop %v9164
      %v9197 = vtanh.pop %v9165
      %v9198 = vtanh.pop %v9166
      %v9199 = vtanh.pop %v9167
      %v9200 = vtanh.pop %v9168
      %v9201 = vtanh.pop %v9169
      %v9202 = vtanh.pop %v9170
      %v9203 = vtanh.pop %v9171
      %v9204 = vtanh.pop %v9172
      %v9205 = vtanh.pop %v9173
      %v9206 = vtanh.pop %v9174
      %v9207 = vtanh.pop %v9175
      %v9208 = vtanh.pop %v9176
      %v9209 = vtanh.pop %v9177
      %v9210 = vtanh.pop %v9178
      %v9211 = vunpack.c.l.bf16 %v5411
      %v9212 = vunpack.c.h.bf16 %v5411
      %v9213 = vunpack.c.l.bf16 %v5415
      %v9214 = vunpack.c.h.bf16 %v5415
      %v9215 = vunpack.c.l.bf16 %v5419
      %v9216 = vunpack.c.h.bf16 %v5419
      %v9217 = vunpack.c.l.bf16 %v5423
      %v9218 = vunpack.c.h.bf16 %v5423
      %v9219 = vunpack.c.l.bf16 %v5427
      %v9220 = vunpack.c.h.bf16 %v5427
      %v9221 = vunpack.c.l.bf16 %v5431
      %v9222 = vunpack.c.h.bf16 %v5431
      %v9223 = vunpack.c.l.bf16 %v5435
      %v9224 = vunpack.c.h.bf16 %v5435
      %v9225 = vunpack.c.l.bf16 %v5439
      %v9226 = vunpack.c.h.bf16 %v5439
      %v9227 = vunpack.c.l.bf16 %v5443
      %v9228 = vunpack.c.h.bf16 %v5443
      %v9229 = vunpack.c.l.bf16 %v5447
      %v9230 = vunpack.c.h.bf16 %v5447
      %v9231 = vunpack.c.l.bf16 %v5451
      %v9232 = vunpack.c.h.bf16 %v5451
      %v9233 = vunpack.c.l.bf16 %v5455
      %v9234 = vunpack.c.h.bf16 %v5455
      %v9235 = vunpack.c.l.bf16 %v5459
      %v9236 = vunpack.c.h.bf16 %v5459
      %v9237 = vunpack.c.l.bf16 %v5463
      %v9238 = vunpack.c.h.bf16 %v5463
      %v9239 = vunpack.c.l.bf16 %v5467
      %v9240 = vunpack.c.h.bf16 %v5467
      %v9241 = vunpack.c.l.bf16 %v5471
      %v9242 = vunpack.c.h.bf16 %v5471
      %v9243 = vsub.f32 %v9179, %v9211
      %v9244 = vsub.f32 %v9180, %v9212
      %v9245 = vsub.f32 %v9181, %v9213
      %v9246 = vsub.f32 %v9182, %v9214
      %v9247 = vsub.f32 %v9183, %v9215
      %v9248 = vsub.f32 %v9184, %v9216
      %v9249 = vsub.f32 %v9185, %v9217
      %v9250 = vsub.f32 %v9186, %v9218
      %v9251 = vsub.f32 %v9187, %v9219
      %v9252 = vsub.f32 %v9188, %v9220
      %v9253 = vsub.f32 %v9189, %v9221
      %v9254 = vsub.f32 %v9190, %v9222
      %v9255 = vsub.f32 %v9191, %v9223
      %v9256 = vsub.f32 %v9192, %v9224
      %v9257 = vsub.f32 %v9193, %v9225
      %v9258 = vsub.f32 %v9194, %v9226
      %v9259 = vsub.f32 %v9195, %v9227
      %v9260 = vsub.f32 %v9196, %v9228
      %v9261 = vsub.f32 %v9197, %v9229
      %v9262 = vsub.f32 %v9198, %v9230
      %v9263 = vsub.f32 %v9199, %v9231
      %v9264 = vsub.f32 %v9200, %v9232
      %v9265 = vsub.f32 %v9201, %v9233
      %v9266 = vsub.f32 %v9202, %v9234
      %v9267 = vsub.f32 %v9203, %v9235
      %v9268 = vsub.f32 %v9204, %v9236
      %v9269 = vsub.f32 %v9205, %v9237
      %v9270 = vsub.f32 %v9206, %v9238
      %v9271 = vsub.f32 %v9207, %v9239
      %v9272 = vsub.f32 %v9208, %v9240
      %v9273 = vsub.f32 %v9209, %v9241
      %v9274 = vsub.f32 %v9210, %v9242
      %v9275 = vmul.f32 %v8259, %v9243
      %v9276 = vmul.f32 %v8263, %v9244
      %v9277 = vmul.f32 %v8267, %v9245
      %v9278 = vmul.f32 %v8271, %v9246
      %v9279 = vmul.f32 %v8275, %v9247
      %v9280 = vmul.f32 %v8279, %v9248
      %v9281 = vmul.f32 %v8283, %v9249
      %v9282 = vmul.f32 %v8287, %v9250
      %v9283 = vmul.f32 %v8291, %v9251
      %v9284 = vmul.f32 %v8295, %v9252
      %v9285 = vmul.f32 %v8299, %v9253
      %v9286 = vmul.f32 %v8303, %v9254
      %v9287 = vmul.f32 %v8307, %v9255
      %v9288 = vmul.f32 %v8311, %v9256
      %v9289 = vmul.f32 %v8315, %v9257
      %v9290 = vmul.f32 %v8319, %v9258
      %v9291 = vmul.f32 %v8323, %v9259
      %v9292 = vmul.f32 %v8327, %v9260
      %v9293 = vmul.f32 %v8331, %v9261
      %v9294 = vmul.f32 %v8335, %v9262
      %v9295 = vmul.f32 %v8339, %v9263
      %v9296 = vmul.f32 %v8343, %v9264
      %v9297 = vmul.f32 %v8347, %v9265
      %v9298 = vmul.f32 %v8351, %v9266
      %v9299 = vmul.f32 %v8355, %v9267
      %v9300 = vmul.f32 %v8359, %v9268
      %v9301 = vmul.f32 %v8363, %v9269
      %v9302 = vmul.f32 %v8367, %v9270
      %v9303 = vmul.f32 %v8371, %v9271
      %v9304 = vmul.f32 %v8375, %v9272
      %v9305 = vmul.f32 %v8379, %v9273
      %v9306 = vmul.f32 %v8383, %v9274
      %v9307 = vadd.f32 %v9211, %v9275
      %v9308 = vadd.f32 %v9212, %v9276
      %v9309 = vadd.f32 %v9213, %v9277
      %v9310 = vadd.f32 %v9214, %v9278
      %v9311 = vadd.f32 %v9215, %v9279
      %v9312 = vadd.f32 %v9216, %v9280
      %v9313 = vadd.f32 %v9217, %v9281
      %v9314 = vadd.f32 %v9218, %v9282
      %v9315 = vadd.f32 %v9219, %v9283
      %v9316 = vadd.f32 %v9220, %v9284
      %v9317 = vadd.f32 %v9221, %v9285
      %v9318 = vadd.f32 %v9222, %v9286
      %v9319 = vadd.f32 %v9223, %v9287
      %v9320 = vadd.f32 %v9224, %v9288
      %v9321 = vadd.f32 %v9225, %v9289
      %v9322 = vadd.f32 %v9226, %v9290
      %v9323 = vadd.f32 %v9227, %v9291
      %v9324 = vadd.f32 %v9228, %v9292
      %v9325 = vadd.f32 %v9229, %v9293
      %v9326 = vadd.f32 %v9230, %v9294
      %v9327 = vadd.f32 %v9231, %v9295
      %v9328 = vadd.f32 %v9232, %v9296
      %v9329 = vadd.f32 %v9233, %v9297
      %v9330 = vadd.f32 %v9234, %v9298
      %v9331 = vadd.f32 %v9235, %v9299
      %v9332 = vadd.f32 %v9236, %v9300
      %v9333 = vadd.f32 %v9237, %v9301
      %v9334 = vadd.f32 %v9238, %v9302
      %v9335 = vadd.f32 %v9239, %v9303
      %v9336 = vadd.f32 %v9240, %v9304
      %v9337 = vadd.f32 %v9241, %v9305
      %v9338 = vadd.f32 %v9242, %v9306
      %v9339 = vpack.c.bf16 %v9308, %v9307
      %v9340 = vpack.c.bf16 %v9310, %v9309
      %v9341 = vpack.c.bf16 %v9312, %v9311
      %v9342 = vpack.c.bf16 %v9314, %v9313
      %v9343 = vpack.c.bf16 %v9316, %v9315
      %v9344 = vpack.c.bf16 %v9318, %v9317
      %v9345 = vpack.c.bf16 %v9320, %v9319
      %v9346 = vpack.c.bf16 %v9322, %v9321
      %v9347 = vpack.c.bf16 %v9324, %v9323
      %v9348 = vpack.c.bf16 %v9326, %v9325
      %v9349 = vpack.c.bf16 %v9328, %v9327
      %v9350 = vpack.c.bf16 %v9330, %v9329
      %v9351 = vpack.c.bf16 %v9332, %v9331
      %v9352 = vpack.c.bf16 %v9334, %v9333
      %v9353 = vpack.c.bf16 %v9336, %v9335
      %v9354 = vpack.c.bf16 %v9338, %v9337
      %v9371 = vunpack.c.l.b16 %v9339
      %v9372 = vunpack.c.h.b16 %v9339
      %v9373 = vunpack.c.l.b16 %v9340
      %v9374 = vunpack.c.h.b16 %v9340
      %v9375 = vunpack.c.l.b16 %v9341
      %v9376 = vunpack.c.h.b16 %v9341
      %v9377 = vunpack.c.l.b16 %v9342
      %v9378 = vunpack.c.h.b16 %v9342
      %v9379 = vunpack.c.l.b16 %v9343
      %v9380 = vunpack.c.h.b16 %v9343
      %v9381 = vunpack.c.l.b16 %v9344
      %v9382 = vunpack.c.h.b16 %v9344
      %v9383 = vunpack.c.l.b16 %v9345
      %v9384 = vunpack.c.h.b16 %v9345
      %v9385 = vunpack.c.l.b16 %v9346
      %v9386 = vunpack.c.h.b16 %v9346
      %v9387 = vunpack.c.l.b16 %v9347
      %v9388 = vunpack.c.h.b16 %v9347
      %v9389 = vunpack.c.l.b16 %v9348
      %v9390 = vunpack.c.h.b16 %v9348
      %v9391 = vunpack.c.l.b16 %v9349
      %v9392 = vunpack.c.h.b16 %v9349
      %v9393 = vunpack.c.l.b16 %v9350
      %v9394 = vunpack.c.h.b16 %v9350
      %v9395 = vunpack.c.l.b16 %v9351
      %v9396 = vunpack.c.h.b16 %v9351
      %v9397 = vunpack.c.l.b16 %v9352
      %v9398 = vunpack.c.h.b16 %v9352
      %v9399 = vunpack.c.l.b16 %v9353
      %v9400 = vunpack.c.h.b16 %v9353
      %v9401 = vunpack.c.l.b16 %v9354
      %v9402 = vunpack.c.h.b16 %v9354
      %v9403 = vpack.c.b16 %v9371, %v9371
      %v9404 = vpack.c.b16 %v9372, %v9372
      %v9405 = vpack.c.b16 %v9373, %v9373
      %v9406 = vpack.c.b16 %v9374, %v9374
      %v9407 = vpack.c.b16 %v9375, %v9375
      %v9408 = vpack.c.b16 %v9376, %v9376
      %v9409 = vpack.c.b16 %v9377, %v9377
      %v9410 = vpack.c.b16 %v9378, %v9378
      %v9411 = vpack.c.b16 %v9379, %v9379
      %v9412 = vpack.c.b16 %v9380, %v9380
      %v9413 = vpack.c.b16 %v9381, %v9381
      %v9414 = vpack.c.b16 %v9382, %v9382
      %v9415 = vpack.c.b16 %v9383, %v9383
      %v9416 = vpack.c.b16 %v9384, %v9384
      %v9417 = vpack.c.b16 %v9385, %v9385
      %v9418 = vpack.c.b16 %v9386, %v9386
      %v9419 = vpack.c.b16 %v9387, %v9387
      %v9420 = vpack.c.b16 %v9388, %v9388
      %v9421 = vpack.c.b16 %v9389, %v9389
      %v9422 = vpack.c.b16 %v9390, %v9390
      %v9423 = vpack.c.b16 %v9391, %v9391
      %v9424 = vpack.c.b16 %v9392, %v9392
      %v9425 = vpack.c.b16 %v9393, %v9393
      %v9426 = vpack.c.b16 %v9394, %v9394
      %v9427 = vpack.c.b16 %v9395, %v9395
      %v9428 = vpack.c.b16 %v9396, %v9396
      %v9429 = vpack.c.b16 %v9397, %v9397
      %v9430 = vpack.c.b16 %v9398, %v9398
      %v9431 = vpack.c.b16 %v9399, %v9399
      %v9432 = vpack.c.b16 %v9400, %v9400
      %v9433 = vpack.c.b16 %v9401, %v9401
      %v9434 = vpack.c.b16 %v9402, %v9402
      %9467 = vst [vmem:[%s379] sm:$0xf] %v9403
      %9468 = vst [vmem:[%s379 + $0x4] sm:$0xf] %v9404
      %9469 = vst [vmem:[%s379 + $0x8] sm:$0xf] %v9405
      %9470 = vst [vmem:[%s379 + $0xc] sm:$0xf] %v9406
      %9471 = vst [vmem:[%s379 + $0x10] sm:$0xf] %v9407
      %9472 = vst [vmem:[%s379 + $0x14] sm:$0xf] %v9408
      %9473 = vst [vmem:[%s379 + $0x18] sm:$0xf] %v9409
      %9474 = vst [vmem:[%s379 + $0x1c] sm:$0xf] %v9410
      %9475 = vst [vmem:[%s379 + $0x20] sm:$0xf] %v9411
      %9476 = vst [vmem:[%s379 + $0x24] sm:$0xf] %v9412
      %9477 = vst [vmem:[%s379 + $0x28] sm:$0xf] %v9413
      %9478 = vst [vmem:[%s379 + $0x2c] sm:$0xf] %v9414
      %9479 = vst [vmem:[%s379 + $0x30] sm:$0xf] %v9415
      %9480 = vst [vmem:[%s379 + $0x34] sm:$0xf] %v9416
      %9481 = vst [vmem:[%s379 + $0x38] sm:$0xf] %v9417
      %9482 = vst [vmem:[%s379 + $0x3c] sm:$0xf] %v9418
      %9483 = vst [vmem:[%s379 + $0x40] sm:$0xf] %v9419
      %9484 = vst [vmem:[%s379 + $0x44] sm:$0xf] %v9420
      %9485 = vst [vmem:[%s379 + $0x48] sm:$0xf] %v9421
      %9486 = vst [vmem:[%s379 + $0x4c] sm:$0xf] %v9422
      %9487 = vst [vmem:[%s379 + $0x50] sm:$0xf] %v9423
      %9488 = vst [vmem:[%s379 + $0x54] sm:$0xf] %v9424
      %9489 = vst [vmem:[%s379 + $0x58] sm:$0xf] %v9425
      %9490 = vst [vmem:[%s379 + $0x5c] sm:$0xf] %v9426
      %9491 = vst [vmem:[%s379 + $0x60] sm:$0xf] %v9427
      %9492 = vst [vmem:[%s379 + $0x64] sm:$0xf] %v9428
      %9493 = vst [vmem:[%s379 + $0x68] sm:$0xf] %v9429
      %9494 = vst [vmem:[%s379 + $0x6c] sm:$0xf] %v9430
      %9495 = vst [vmem:[%s379 + $0x70] sm:$0xf] %v9431
      %9496 = vst [vmem:[%s379 + $0x74] sm:$0xf] %v9432
      %9497 = vst [vmem:[%s379 + $0x78] sm:$0xf] %v9433
      %9498 = vst [vmem:[%s379 + $0x7c] sm:$0xf] %v9434
      %p9499 = scmp.lt.s32.totalorder %s21, 1
      %s9500 = scalar_select %p9499, %s21, 1
      %s9501 = smul.addr %s9500, 32
      %s9502 = smul.addr %s9501, 4
      %s9503 = scalar_lea.vmem %s10, %s9502
      // Predicated region
      $region61: #{sep_conv_gru_forward.1} parent=59 // pred_check
        %p9504 = pneg %p259
      $region62: #{sep_conv_gru_forward.1} parent=59 // pred_check_branch
        %9506 = sbr.rel (%p9504) target = $region64
      $region63: #{sep_conv_gru_forward.1} parent=59 // pred_region
        _
      $region64: #{sep_conv_gru_forward.1} parent=59 // pred_fallthru
        _
    $region60: #{sep_conv_gru_forward.1} parent=5 // pred_fallthru
      _
    %p9507 = scmp.le.s32.totalorder 2, %s16
    // Predicated region
    $region65: #{sep_conv_gru_forward.1} parent=5 // pred_check
      %p9508 = pneg %p9507
    $region66: #{sep_conv_gru_forward.1} parent=5 // pred_check_branch
      %9510 = sbr.rel (%p9508) target = $region68
    $region67: #{sep_conv_gru_forward.1} parent=5 // pred_region
      %s9511 = ssub.s32 %s16, 2
      // Predicated region
      $region69: #{sep_conv_gru_forward.1} parent=67 // pred_check
        %p9512 = pneg %p265
      $region70: #{sep_conv_gru_forward.1} parent=67 // pred_check_branch
        %9514 = sbr.rel (%p9512) target = $region72
      $region71: #{sep_conv_gru_forward.1} parent=67 // pred_region
        %p9515 = scmp.lt.s32.totalorder %s22, 1
        %s9516 = scalar_select %p9515, %s22, 1
        %s9517 = smul.addr %s9516, 32
        %s9518 = smul.addr %s9517, 4
        %s9519 = scalar_lea.vmem %s10, %s9518
      $region72: #{sep_conv_gru_forward.1} parent=67 // pred_fallthru
        _
    $region68: #{sep_conv_gru_forward.1} parent=5 // pred_fallthru
      _
  $region6: #{sep_conv_gru_forward.1} parent=0 // loop_footer
    %s20 = sadd.s32 1, %s16
  $region7: #{sep_conv_gru_forward.1} parent=0 // loop_footer_branch
    %15 = sbr.rel target = $region3
  $region8: #{sep_conv_gru_forward.1} parent=0 // loop_exit
    _

</llo_original>
